<compile_context>
chip_gen: v6e
topology: v6e:2x2x1
jax: 0.10.0
libtpu: 0.0.40
codegen_flags: <defaults>
</compile_context>

<pallas_src>
from functools import partial

import jax
import jax.numpy as jnp
from jax.experimental import pallas as pl
from jax.experimental.pallas import tpu as pltpu

EPS = 1e-6


def _stem_kernel(x_ref, w1_ref, p1_ref, w2_ref, p2_ref,
                 o_ref, xpad_ref, apad_ref, *, approx_gelu=True):
    # x_ref   : (TB, H, W, Cin)  f32   input block (NHWC)
    # w1_ref  : (3, 3, Cin, Cmid) bf16 ; w2_ref: (3, 3, Cmid, Cout) bf16  (HWIO)
    # p1_ref  : (3, Cmid) f32 = [bias; gamma; beta]   (packed -> fewer DMAs)
    # p2_ref  : (3, Cout) f32 = [bias; gamma; beta]
    # o_ref   : (TB, H, W, Cout) f32
    # xpad_ref: (TB, H+2, W+2, Cin)  bf16 VMEM scratch (halo for stage 1)
    # apad_ref: (TB, H+2, W+2, Cmid) bf16 VMEM scratch (halo for stage 2; the
    #           intermediate activation never leaves VMEM)
    TB, H, W, Cout = o_ref.shape
    Cmid = apad_ref.shape[-1]
    M = TB * H * W

    def zero_halo(pad_ref):
        # Zero only the 1-pixel border; the interior is fully overwritten below.
        # (Replaces two full-buffer store sweeps per step; per-core-safe on v7x.)
        tb, hp, wp, c = pad_ref.shape
        z_row = jnp.zeros((tb, 1, wp, c), pad_ref.dtype)
        z_col = jnp.zeros((tb, hp, 1, c), pad_ref.dtype)
        pad_ref[:, 0:1, :, :] = z_row
        pad_ref[:, hp - 1:hp, :, :] = z_row
        pad_ref[:, :, 0:1, :] = z_col
        pad_ref[:, :, wp - 1:wp, :] = z_col

    def conv3x3_ln(pad_ref, w_ref, p_ref):
        # 3x3 "same" conv as 9 shifted bf16 matmuls accumulated in f32 on the MXU.
        # NOTE(perf): im2col (K=9*C) deliberately skipped — MXU is <2% utilized at
        # these channel widths and is not the binding unit; the 9-tap form keeps
        # every slice/reshape layout-trivial on the (8,128) grid.
        cin = pad_ref.shape[-1]
        cout = w_ref.shape[-1]
        acc = jnp.zeros((M, cout), dtype=jnp.float32)
        for dy in range(3):
            for dx in range(3):
                # Scratch is already bf16 -> no per-tap cast pass.
                patch = pad_ref[:, pl.ds(dy, H), pl.ds(dx, W), :].reshape(M, cin)
                acc = acc + jnp.dot(patch, w_ref[dy, dx],
                                    preferred_element_type=jnp.float32)
        bias = p_ref[0:1, :]
        gamma = p_ref[1:2, :]
        beta = p_ref[2:3, :]
        acc = acc + bias  # (1, cout) broadcast
        # One-pass LayerNorm stats (eps=1e-6, biased variance), f32:
        # sum and sum-of-squares are independent reductions -> they pipeline on
        # the XLU instead of serializing through mean -> centered -> mean.
        inv_c = 1.0 / cout
        s1 = jnp.sum(acc, axis=-1, keepdims=True)
        s2 = jnp.sum(acc * acc, axis=-1, keepdims=True)
        mean = s1 * inv_c
        var = s2 * inv_c - mean * mean
        return (acc - mean) * jax.lax.rsqrt(var + EPS) * gamma + beta

    # ---- stage 1: conv1 + LN1 + GELU (halo built in VMEM, input cast once) ----
    zero_halo(xpad_ref)
    xpad_ref[:, pl.ds(1, H), pl.ds(1, W), :] = x_ref[...].astype(xpad_ref.dtype)
    y1 = conv3x3_ln(xpad_ref, w1_ref, p1_ref)
    # PyTorch nn.GELU() default is exact erf; tanh (EUP slot) used by default here.
    y1 = jax.nn.gelu(y1, approximate=approx_gelu)

    # ---- stage 2: conv2 + LN2 (intermediate stays resident in VMEM, cast once) -
    zero_halo(apad_ref)
    apad_ref[:, pl.ds(1, H), pl.ds(1, W), :] = (
        y1.reshape(TB, H, W, Cmid).astype(apad_ref.dtype))
    y2 = conv3x3_ln(apad_ref, w2_ref, p2_ref)

    o_ref[...] = y2.reshape(TB, H, W, Cout).astype(o_ref.dtype)


def _auto_block_batch(n, max_tb=16):
    """Largest TB <= max_tb dividing n while keeping >= 2 grid steps, so the
    'parallel' grid axis can span both TensorCores on v7x.  max_tb=16 keeps the
    per-step VMEM footprint (~0.85 MB/TB incl. lane padding + double buffers)
    comfortably inside every generation's scoped VMEM."""
    if n <= 1:
        return 1
    best = 1
    for tb in range(1, min(n, max_tb) + 1):
        if n % tb == 0 and n // tb >= 2:
            best = tb
    return best


@partial(jax.jit, static_argnames=("block_batch", "approx_gelu"))
def stem_layer(x_nchw, params, *, block_batch=None, approx_gelu=True):
    """Fused StemLayer forward. Input NCHW (PyTorch layout), output NHWC."""
    N, Cin, H, W = x_nchw.shape
    Cmid = params["w1"].shape[-1]
    Cout = params["w2"].shape[-1]
    if block_batch is None:
        block_batch = _auto_block_batch(N)
    if N % block_batch != 0:
        raise ValueError("batch must be divisible by block_batch")
    TB = block_batch

    x = jnp.transpose(x_nchw, (0, 2, 3, 1))  # NCHW -> NHWC (layout plumbing only)
    # bf16 MXU operands, f32 accumulation (params stay f32 master copies).
    w1 = params["w1"].astype(jnp.bfloat16)
    w2 = params["w2"].astype(jnp.bfloat16)
    # Pack (bias, gamma, beta) per stage -> one DMA each instead of three.
    p1 = jnp.stack([params["b1"], params["g1"], params["bt1"]])  # (3, Cmid) f32
    p2 = jnp.stack([params["b2"], params["g2"], params["bt2"]])  # (3, Cout) f32

    kernel = partial(_stem_kernel, approx_gelu=approx_gelu)
    out = pl.pallas_call(
        kernel,
        out_shape=jax.ShapeDtypeStruct((N, H, W, Cout), jnp.float32),
        grid=(N // TB,),
        in_specs=[
            pl.BlockSpec((TB, H, W, Cin), lambda i: (i, 0, 0, 0)),
            pl.BlockSpec((3, 3, Cin, Cmid), lambda i: (0, 0, 0, 0)),
            pl.BlockSpec((3, Cmid), lambda i: (0, 0)),
            pl.BlockSpec((3, 3, Cmid, Cout), lambda i: (0, 0, 0, 0)),
            pl.BlockSpec((3, Cout), lambda i: (0, 0)),
        ],
        out_specs=pl.BlockSpec((TB, H, W, Cout), lambda i: (i, 0, 0, 0)),
        scratch_shapes=[
            pltpu.VMEM((TB, H + 2, W + 2, Cin), jnp.bfloat16),
            pltpu.VMEM((TB, H + 2, W + 2, Cmid), jnp.bfloat16),
        ],
        compiler_params=pltpu.CompilerParams(
            # Batch-tile axis kept "parallel" so v7x can shard it over 2 TCs.
            dimension_semantics=("parallel",),
            # Covers v5e's 16 MiB scoped default when TB is large; well under
            # physical VMEM on every generation (incl. v7x's 64 MiB).
            vmem_limit_bytes=48 * 1024 * 1024,
        ),
    )(x, w1, p1, w2, p2)
    return out


def init_stem_params(key, in_channels=3, out_channels=48):
    mid = out_channels // 2
    k1, k2, k3, k4, k5, k6 = jax.random.split(key, 6)
    return dict(
        w1=jax.random.normal(k1, (3, 3, in_channels, mid), jnp.float32) * 0.1,
        b1=jax.random.normal(k2, (mid,), jnp.float32) * 0.01,
        g1=1.0 + 0.1 * jax.random.normal(k5, (mid,), jnp.float32),
        bt1=0.05 * jax.random.normal(k6, (mid,), jnp.float32),
        w2=jax.random.normal(k3, (3, 3, mid, out_channels), jnp.float32) * 0.1,
        b2=jax.random.normal(k4, (out_channels,), jnp.float32) * 0.01,
        g2=jnp.ones((out_channels,), jnp.float32),
        bt2=jnp.zeros((out_channels,), jnp.float32),
    )


def stem_layer_reference(x_nchw, params):
    """Pure-JAX (XLA) reference of the PyTorch forward, f32, exact-erf GELU."""
    x = jnp.transpose(x_nchw, (0, 2, 3, 1)).astype(jnp.float32)

    def stage(x, w, b, g, bt, act):
        y = jax.lax.conv_general_dilated(
            x, w, window_strides=(1, 1), padding=((1, 1), (1, 1)),
            dimension_numbers=("NHWC", "HWIO", "NHWC"))
        y = y + b.reshape(1, 1, 1, -1)
        mean = jnp.mean(y, axis=-1, keepdims=True)
        var = jnp.mean((y - mean) ** 2, axis=-1, keepdims=True)
        y = (y - mean) * jax.lax.rsqrt(var + EPS)
        y = y * g.reshape(1, 1, 1, -1) + bt.reshape(1, 1, 1, -1)
        return jax.nn.gelu(y, approximate=False) if act else y

    y = stage(x, params["w1"], params["b1"], params["g1"], params["bt1"], True)
    return stage(y, params["w2"], params["b2"], params["g2"], params["bt2"], False)


if __name__ == "__main__":
    key = jax.random.PRNGKey(0)
    kx, kp = jax.random.split(key)

    N, Cin, Hs, Ws = 2, 3, 16, 16
    out_channels = 48
    x = jax.random.normal(kx, (N, Cin, Hs, Ws), jnp.float32)
    params = init_stem_params(kp, in_channels=Cin, out_channels=out_channels)

    out = stem_layer(x, params)
    jax.block_until_ready(out)

    assert out.shape == (N, Hs, Ws, out_channels), out.shape
    assert out.dtype == jnp.float32
    assert bool(jnp.all(jnp.isfinite(out)))

    # Per-element (atol + rtol) and mean-error checks vs. f32 exact-GELU reference.
    # Residual error budget: bf16 conv operands (~6e-3 std) + tanh-GELU (~1e-3).
    ref = stem_layer_reference(x, params)
    err = jnp.abs(out - ref)
    tol = 5e-2 + 5e-2 * jnp.abs(ref)
    assert bool(jnp.all(err <= tol)), f"max abs err {float(jnp.max(err))}"
    assert float(jnp.mean(err)) < 1.5e-2, f"mean abs err {float(jnp.mean(err))}"

    print("KERNEL_OK")
</pallas_src>

<mosaic_0001>
module attributes {stable_mosaic.version = 11 : i64} {
  func.func @_stem_kernel(%arg0: i32, %arg1: memref<1x16x16x3xf32, #tpu.memory_space<vmem>>, %arg2: memref<3x3x3x24xbf16, #tpu.memory_space<vmem>>, %arg3: memref<3x24xf32, #tpu.memory_space<vmem>>, %arg4: memref<3x3x24x48xbf16, #tpu.memory_space<vmem>>, %arg5: memref<3x48xf32, #tpu.memory_space<vmem>>, %arg6: memref<1x16x16x48xf32, #tpu.memory_space<vmem>>, %arg7: memref<1x18x18x3xbf16, #tpu.memory_space<vmem>>, %arg8: memref<1x18x18x24xbf16, #tpu.memory_space<vmem>>) attributes {dimension_semantics = [#tpu.dimension_semantics<parallel>], iteration_bounds = array<i64: 2>, scalar_prefetch = 0 : i64, scratch_operands = 2 : i64, tpu.core_type = #tpu.core_type<tc>, window_params = [{transform_indices = @transform_0, window_bounds = array<i64: 1, 16, 16, 3>}, {pipeline_mode = #tpu.pipeline_mode<synchronous>, transform_indices = @transform_1, window_bounds = array<i64: 3, 3, 3, 24>}, {pipeline_mode = #tpu.pipeline_mode<synchronous>, transform_indices = @transform_2, window_bounds = array<i64: 3, 24>}, {pipeline_mode = #tpu.pipeline_mode<synchronous>, transform_indices = @transform_3, window_bounds = array<i64: 3, 3, 24, 48>}, {pipeline_mode = #tpu.pipeline_mode<synchronous>, transform_indices = @transform_4, window_bounds = array<i64: 3, 48>}, {transform_indices = @transform_5, window_bounds = array<i64: 1, 16, 16, 48>}]} {
    %cst = arith.constant 0.000000e+00 : bf16
    %0 = vector.broadcast %cst : bf16 to vector<1x1x18x3xbf16>
    %cst_0 = arith.constant 0.000000e+00 : bf16
    %1 = vector.broadcast %cst_0 : bf16 to vector<1x18x1x3xbf16>
    %c0 = arith.constant 0 : index
    %c0_1 = arith.constant 0 : index
    %c0_2 = arith.constant 0 : index
    %c0_3 = arith.constant 0 : index
    %2 = vector.load %arg7[%c0, %c0_1, %c0_2, %c0_3] : memref<1x18x18x3xbf16, #tpu.memory_space<vmem>>, vector<1x1x18x3xbf16>
    tpu.vector_store %arg7[%c0, %c0_1, %c0_2, %c0_3], %0 {strides = array<i32>} : memref<1x18x18x3xbf16, #tpu.memory_space<vmem>>, vector<1x1x18x3xbf16>,
    %c0_4 = arith.constant 0 : index
    %c17 = arith.constant 17 : index
    %c0_5 = arith.constant 0 : index
    %c0_6 = arith.constant 0 : index
    %3 = vector.load %arg7[%c0_4, %c17, %c0_5, %c0_6] : memref<1x18x18x3xbf16, #tpu.memory_space<vmem>>, vector<1x1x18x3xbf16>
    tpu.vector_store %arg7[%c0_4, %c17, %c0_5, %c0_6], %0 {strides = array<i32>} : memref<1x18x18x3xbf16, #tpu.memory_space<vmem>>, vector<1x1x18x3xbf16>,
    %c0_7 = arith.constant 0 : index
    %c0_8 = arith.constant 0 : index
    %c0_9 = arith.constant 0 : index
    %c0_10 = arith.constant 0 : index
    %4 = vector.load %arg7[%c0_7, %c0_8, %c0_9, %c0_10] : memref<1x18x18x3xbf16, #tpu.memory_space<vmem>>, vector<1x18x1x3xbf16>
    tpu.vector_store %arg7[%c0_7, %c0_8, %c0_9, %c0_10], %1 {strides = array<i32>} : memref<1x18x18x3xbf16, #tpu.memory_space<vmem>>, vector<1x18x1x3xbf16>,
    %c0_11 = arith.constant 0 : index
    %c0_12 = arith.constant 0 : index
    %c17_13 = arith.constant 17 : index
    %c0_14 = arith.constant 0 : index
    %5 = vector.load %arg7[%c0_11, %c0_12, %c17_13, %c0_14] : memref<1x18x18x3xbf16, #tpu.memory_space<vmem>>, vector<1x18x1x3xbf16>
    tpu.vector_store %arg7[%c0_11, %c0_12, %c17_13, %c0_14], %1 {strides = array<i32>} : memref<1x18x18x3xbf16, #tpu.memory_space<vmem>>, vector<1x18x1x3xbf16>,
    %c0_15 = arith.constant 0 : index
    %c0_16 = arith.constant 0 : index
    %c0_17 = arith.constant 0 : index
    %c0_18 = arith.constant 0 : index
    %6 = vector.load %arg1[%c0_15, %c0_16, %c0_17, %c0_18] : memref<1x16x16x3xf32, #tpu.memory_space<vmem>>, vector<1x16x16x3xf32>
    %7 = arith.truncf %6 : vector<1x16x16x3xf32> to vector<1x16x16x3xbf16>
    %c0_19 = arith.constant 0 : index
    %c1 = arith.constant 1 : index
    %c1_20 = arith.constant 1 : index
    %c0_21 = arith.constant 0 : index
    %8 = vector.load %arg7[%c0_19, %c1, %c1_20, %c0_21] : memref<1x18x18x3xbf16, #tpu.memory_space<vmem>>, vector<1x16x16x3xbf16>
    tpu.vector_store %arg7[%c0_19, %c1, %c1_20, %c0_21], %7 {strides = array<i32>} : memref<1x18x18x3xbf16, #tpu.memory_space<vmem>>, vector<1x16x16x3xbf16>,
    %cst_22 = arith.constant 0.000000e+00 : f32
    %9 = vector.broadcast %cst_22 : f32 to vector<256x24xf32>
    %c0_23 = arith.constant 0 : index
    %c0_24 = arith.constant 0 : index
    %c0_25 = arith.constant 0 : index
    %c0_26 = arith.constant 0 : index
    %10 = vector.load %arg7[%c0_23, %c0_24, %c0_25, %c0_26] : memref<1x18x18x3xbf16, #tpu.memory_space<vmem>>, vector<1x16x16x3xbf16>
    %11 = vector.shape_cast %10 : vector<1x16x16x3xbf16> to vector<256x3xbf16>
    %c0_27 = arith.constant 0 : index
    %c0_28 = arith.constant 0 : index
    %c0_29 = arith.constant 0 : index
    %c0_30 = arith.constant 0 : index
    %12 = vector.load %arg2[%c0_27, %c0_28, %c0_29, %c0_30] : memref<3x3x3x24xbf16, #tpu.memory_space<vmem>>, vector<1x1x3x24xbf16>
    %13 = vector.shape_cast %12 : vector<1x1x3x24xbf16> to vector<3x24xbf16>
    %cst_31 = arith.constant dense<0.000000e+00> : vector<256x24xf32>
    %14 = tpu.matmul %11, %13, %cst_31 {dimension_numbers = #tpu.dot_dimension_numbers<[1], [0], [0], [1], [0, 0, 1, 1], [], []>} : vector<256x3xbf16>, vector<3x24xbf16>, vector<256x24xf32> -> vector<256x24xf32>
    %15 = arith.addf %9, %14 : vector<256x24xf32>
    %c0_32 = arith.constant 0 : index
    %c0_33 = arith.constant 0 : index
    %c1_34 = arith.constant 1 : index
    %c0_35 = arith.constant 0 : index
    %16 = vector.load %arg7[%c0_32, %c0_33, %c1_34, %c0_35] : memref<1x18x18x3xbf16, #tpu.memory_space<vmem>>, vector<1x16x16x3xbf16>
    %17 = vector.shape_cast %16 : vector<1x16x16x3xbf16> to vector<256x3xbf16>
    %c0_36 = arith.constant 0 : index
    %c1_37 = arith.constant 1 : index
    %c0_38 = arith.constant 0 : index
    %c0_39 = arith.constant 0 : index
    %18 = vector.load %arg2[%c0_36, %c1_37, %c0_38, %c0_39] : memref<3x3x3x24xbf16, #tpu.memory_space<vmem>>, vector<1x1x3x24xbf16>
    %19 = vector.shape_cast %18 : vector<1x1x3x24xbf16> to vector<3x24xbf16>
    %cst_40 = arith.constant dense<0.000000e+00> : vector<256x24xf32>
    %20 = tpu.matmul %17, %19, %cst_40 {dimension_numbers = #tpu.dot_dimension_numbers<[1], [0], [0], [1], [0, 0, 1, 1], [], []>} : vector<256x3xbf16>, vector<3x24xbf16>, vector<256x24xf32> -> vector<256x24xf32>
    %21 = arith.addf %15, %20 : vector<256x24xf32>
    %c0_41 = arith.constant 0 : index
    %c0_42 = arith.constant 0 : index
    %c2 = arith.constant 2 : index
    %c0_43 = arith.constant 0 : index
    %22 = vector.load %arg7[%c0_41, %c0_42, %c2, %c0_43] : memref<1x18x18x3xbf16, #tpu.memory_space<vmem>>, vector<1x16x16x3xbf16>
    %23 = vector.shape_cast %22 : vector<1x16x16x3xbf16> to vector<256x3xbf16>
    %c0_44 = arith.constant 0 : index
    %c2_45 = arith.constant 2 : index
    %c0_46 = arith.constant 0 : index
    %c0_47 = arith.constant 0 : index
    %24 = vector.load %arg2[%c0_44, %c2_45, %c0_46, %c0_47] : memref<3x3x3x24xbf16, #tpu.memory_space<vmem>>, vector<1x1x3x24xbf16>
    %25 = vector.shape_cast %24 : vector<1x1x3x24xbf16> to vector<3x24xbf16>
    %cst_48 = arith.constant dense<0.000000e+00> : vector<256x24xf32>
    %26 = tpu.matmul %23, %25, %cst_48 {dimension_numbers = #tpu.dot_dimension_numbers<[1], [0], [0], [1], [0, 0, 1, 1], [], []>} : vector<256x3xbf16>, vector<3x24xbf16>, vector<256x24xf32> -> vector<256x24xf32>
    %27 = arith.addf %21, %26 : vector<256x24xf32>
    %c0_49 = arith.constant 0 : index
    %c1_50 = arith.constant 1 : index
    %c0_51 = arith.constant 0 : index
    %c0_52 = arith.constant 0 : index
    %28 = vector.load %arg7[%c0_49, %c1_50, %c0_51, %c0_52] : memref<1x18x18x3xbf16, #tpu.memory_space<vmem>>, vector<1x16x16x3xbf16>
    %29 = vector.shape_cast %28 : vector<1x16x16x3xbf16> to vector<256x3xbf16>
    %c1_53 = arith.constant 1 : index
    %c0_54 = arith.constant 0 : index
    %c0_55 = arith.constant 0 : index
    %c0_56 = arith.constant 0 : index
    %30 = vector.load %arg2[%c1_53, %c0_54, %c0_55, %c0_56] : memref<3x3x3x24xbf16, #tpu.memory_space<vmem>>, vector<1x1x3x24xbf16>
    %31 = vector.shape_cast %30 : vector<1x1x3x24xbf16> to vector<3x24xbf16>
    %cst_57 = arith.constant dense<0.000000e+00> : vector<256x24xf32>
    %32 = tpu.matmul %29, %31, %cst_57 {dimension_numbers = #tpu.dot_dimension_numbers<[1], [0], [0], [1], [0, 0, 1, 1], [], []>} : vector<256x3xbf16>, vector<3x24xbf16>, vector<256x24xf32> -> vector<256x24xf32>
    %33 = arith.addf %27, %32 : vector<256x24xf32>
    %c0_58 = arith.constant 0 : index
    %c1_59 = arith.constant 1 : index
    %c1_60 = arith.constant 1 : index
    %c0_61 = arith.constant 0 : index
    %34 = vector.load %arg7[%c0_58, %c1_59, %c1_60, %c0_61] : memref<1x18x18x3xbf16, #tpu.memory_space<vmem>>, vector<1x16x16x3xbf16>
    %35 = vector.shape_cast %34 : vector<1x16x16x3xbf16> to vector<256x3xbf16>
    %c1_62 = arith.constant 1 : index
    %c1_63 = arith.constant 1 : index
    %c0_64 = arith.constant 0 : index
    %c0_65 = arith.constant 0 : index
    %36 = vector.load %arg2[%c1_62, %c1_63, %c0_64, %c0_65] : memref<3x3x3x24xbf16, #tpu.memory_space<vmem>>, vector<1x1x3x24xbf16>
    %37 = vector.shape_cast %36 : vector<1x1x3x24xbf16> to vector<3x24xbf16>
    %cst_66 = arith.constant dense<0.000000e+00> : vector<256x24xf32>
    %38 = tpu.matmul %35, %37, %cst_66 {dimension_numbers = #tpu.dot_dimension_numbers<[1], [0], [0], [1], [0, 0, 1, 1], [], []>} : vector<256x3xbf16>, vector<3x24xbf16>, vector<256x24xf32> -> vector<256x24xf32>
    %39 = arith.addf %33, %38 : vector<256x24xf32>
    %c0_67 = arith.constant 0 : index
    %c1_68 = arith.constant 1 : index
    %c2_69 = arith.constant 2 : index
    %c0_70 = arith.constant 0 : index
    %40 = vector.load %arg7[%c0_67, %c1_68, %c2_69, %c0_70] : memref<1x18x18x3xbf16, #tpu.memory_space<vmem>>, vector<1x16x16x3xbf16>
    %41 = vector.shape_cast %40 : vector<1x16x16x3xbf16> to vector<256x3xbf16>
    %c1_71 = arith.constant 1 : index
    %c2_72 = arith.constant 2 : index
    %c0_73 = arith.constant 0 : index
    %c0_74 = arith.constant 0 : index
    %42 = vector.load %arg2[%c1_71, %c2_72, %c0_73, %c0_74] : memref<3x3x3x24xbf16, #tpu.memory_space<vmem>>, vector<1x1x3x24xbf16>
    %43 = vector.shape_cast %42 : vector<1x1x3x24xbf16> to vector<3x24xbf16>
    %cst_75 = arith.constant dense<0.000000e+00> : vector<256x24xf32>
    %44 = tpu.matmul %41, %43, %cst_75 {dimension_numbers = #tpu.dot_dimension_numbers<[1], [0], [0], [1], [0, 0, 1, 1], [], []>} : vector<256x3xbf16>, vector<3x24xbf16>, vector<256x24xf32> -> vector<256x24xf32>
    %45 = arith.addf %39, %44 : vector<256x24xf32>
    %c0_76 = arith.constant 0 : index
    %c2_77 = arith.constant 2 : index
    %c0_78 = arith.constant 0 : index
    %c0_79 = arith.constant 0 : index
    %46 = vector.load %arg7[%c0_76, %c2_77, %c0_78, %c0_79] : memref<1x18x18x3xbf16, #tpu.memory_space<vmem>>, vector<1x16x16x3xbf16>
    %47 = vector.shape_cast %46 : vector<1x16x16x3xbf16> to vector<256x3xbf16>
    %c2_80 = arith.constant 2 : index
    %c0_81 = arith.constant 0 : index
    %c0_82 = arith.constant 0 : index
    %c0_83 = arith.constant 0 : index
    %48 = vector.load %arg2[%c2_80, %c0_81, %c0_82, %c0_83] : memref<3x3x3x24xbf16, #tpu.memory_space<vmem>>, vector<1x1x3x24xbf16>
    %49 = vector.shape_cast %48 : vector<1x1x3x24xbf16> to vector<3x24xbf16>
    %cst_84 = arith.constant dense<0.000000e+00> : vector<256x24xf32>
    %50 = tpu.matmul %47, %49, %cst_84 {dimension_numbers = #tpu.dot_dimension_numbers<[1], [0], [0], [1], [0, 0, 1, 1], [], []>} : vector<256x3xbf16>, vector<3x24xbf16>, vector<256x24xf32> -> vector<256x24xf32>
    %51 = arith.addf %45, %50 : vector<256x24xf32>
    %c0_85 = arith.constant 0 : index
    %c2_86 = arith.constant 2 : index
    %c1_87 = arith.constant 1 : index
    %c0_88 = arith.constant 0 : index
    %52 = vector.load %arg7[%c0_85, %c2_86, %c1_87, %c0_88] : memref<1x18x18x3xbf16, #tpu.memory_space<vmem>>, vector<1x16x16x3xbf16>
    %53 = vector.shape_cast %52 : vector<1x16x16x3xbf16> to vector<256x3xbf16>
    %c2_89 = arith.constant 2 : index
    %c1_90 = arith.constant 1 : index
    %c0_91 = arith.constant 0 : index
    %c0_92 = arith.constant 0 : index
    %54 = vector.load %arg2[%c2_89, %c1_90, %c0_91, %c0_92] : memref<3x3x3x24xbf16, #tpu.memory_space<vmem>>, vector<1x1x3x24xbf16>
    %55 = vector.shape_cast %54 : vector<1x1x3x24xbf16> to vector<3x24xbf16>
    %cst_93 = arith.constant dense<0.000000e+00> : vector<256x24xf32>
    %56 = tpu.matmul %53, %55, %cst_93 {dimension_numbers = #tpu.dot_dimension_numbers<[1], [0], [0], [1], [0, 0, 1, 1], [], []>} : vector<256x3xbf16>, vector<3x24xbf16>, vector<256x24xf32> -> vector<256x24xf32>
    %57 = arith.addf %51, %56 : vector<256x24xf32>
    %c0_94 = arith.constant 0 : index
    %c2_95 = arith.constant 2 : index
    %c2_96 = arith.constant 2 : index
    %c0_97 = arith.constant 0 : index
    %58 = vector.load %arg7[%c0_94, %c2_95, %c2_96, %c0_97] : memref<1x18x18x3xbf16, #tpu.memory_space<vmem>>, vector<1x16x16x3xbf16>
    %59 = vector.shape_cast %58 : vector<1x16x16x3xbf16> to vector<256x3xbf16>
    %c2_98 = arith.constant 2 : index
    %c2_99 = arith.constant 2 : index
    %c0_100 = arith.constant 0 : index
    %c0_101 = arith.constant 0 : index
    %60 = vector.load %arg2[%c2_98, %c2_99, %c0_100, %c0_101] : memref<3x3x3x24xbf16, #tpu.memory_space<vmem>>, vector<1x1x3x24xbf16>
    %61 = vector.shape_cast %60 : vector<1x1x3x24xbf16> to vector<3x24xbf16>
    %cst_102 = arith.constant dense<0.000000e+00> : vector<256x24xf32>
    %62 = tpu.matmul %59, %61, %cst_102 {dimension_numbers = #tpu.dot_dimension_numbers<[1], [0], [0], [1], [0, 0, 1, 1], [], []>} : vector<256x3xbf16>, vector<3x24xbf16>, vector<256x24xf32> -> vector<256x24xf32>
    %63 = arith.addf %57, %62 : vector<256x24xf32>
    %c0_103 = arith.constant 0 : index
    %c0_104 = arith.constant 0 : index
    %64 = vector.load %arg3[%c0_103, %c0_104] : memref<3x24xf32, #tpu.memory_space<vmem>>, vector<1x24xf32>
    %c1_105 = arith.constant 1 : index
    %c0_106 = arith.constant 0 : index
    %65 = vector.load %arg3[%c1_105, %c0_106] : memref<3x24xf32, #tpu.memory_space<vmem>>, vector<1x24xf32>
    %c2_107 = arith.constant 2 : index
    %c0_108 = arith.constant 0 : index
    %66 = vector.load %arg3[%c2_107, %c0_108] : memref<3x24xf32, #tpu.memory_space<vmem>>, vector<1x24xf32>
    %67 = vector.broadcast %64 : vector<1x24xf32> to vector<256x24xf32>
    %68 = arith.addf %63, %67 : vector<256x24xf32>
    %cst_109 = arith.constant dense<0.000000e+00> : vector<256xf32>
    %69 = vector.multi_reduction <add>, %68, %cst_109 [1] : vector<256x24xf32> to vector<256xf32>
    %70 = vector.shape_cast %69 : vector<256xf32> to vector<256x1xf32>
    %71 = arith.mulf %68, %68 : vector<256x24xf32>
    %cst_110 = arith.constant dense<0.000000e+00> : vector<256xf32>
    %72 = vector.multi_reduction <add>, %71, %cst_110 [1] : vector<256x24xf32> to vector<256xf32>
    %73 = vector.shape_cast %72 : vector<256xf32> to vector<256x1xf32>
    %cst_111 = arith.constant 0.0416666679 : f32
    %74 = vector.broadcast %cst_111 : f32 to vector<256x1xf32>
    %75 = arith.mulf %70, %74 : vector<256x1xf32>
    %cst_112 = arith.constant 0.0416666679 : f32
    %76 = vector.broadcast %cst_112 : f32 to vector<256x1xf32>
    %77 = arith.mulf %73, %76 : vector<256x1xf32>
    %78 = arith.mulf %75, %75 : vector<256x1xf32>
    %79 = arith.subf %77, %78 : vector<256x1xf32>
    %80 = vector.broadcast %75 : vector<256x1xf32> to vector<256x24xf32>
    %81 = arith.subf %68, %80 : vector<256x24xf32>
    %cst_113 = arith.constant 9.99999997E-7 : f32
    %82 = vector.broadcast %cst_113 : f32 to vector<256x1xf32>
    %83 = arith.addf %79, %82 : vector<256x1xf32>
    %84 = math.rsqrt %83 : vector<256x1xf32>
    %85 = vector.broadcast %84 : vector<256x1xf32> to vector<256x24xf32>
    %86 = arith.mulf %81, %85 : vector<256x24xf32>
    %87 = vector.broadcast %65 : vector<1x24xf32> to vector<256x24xf32>
    %88 = arith.mulf %86, %87 : vector<256x24xf32>
    %89 = vector.broadcast %66 : vector<1x24xf32> to vector<256x24xf32>
    %90 = arith.addf %88, %89 : vector<256x24xf32>
    %91 = arith.mulf %90, %90 : vector<256x24xf32>
    %92 = arith.mulf %90, %91 : vector<256x24xf32>
    %cst_114 = arith.constant 4.471500e-02 : f32
    %93 = vector.broadcast %cst_114 : f32 to vector<256x24xf32>
    %94 = arith.mulf %93, %92 : vector<256x24xf32>
    %95 = arith.addf %90, %94 : vector<256x24xf32>
    %cst_115 = arith.constant 0.797884583 : f32
    %96 = vector.broadcast %cst_115 : f32 to vector<256x24xf32>
    %97 = arith.mulf %96, %95 : vector<256x24xf32>
    %98 = math.tanh %97 : vector<256x24xf32>
    %cst_116 = arith.constant 1.000000e+00 : f32
    %99 = vector.broadcast %cst_116 : f32 to vector<256x24xf32>
    %100 = arith.addf %99, %98 : vector<256x24xf32>
    %cst_117 = arith.constant 5.000000e-01 : f32
    %101 = vector.broadcast %cst_117 : f32 to vector<256x24xf32>
    %102 = arith.mulf %101, %100 : vector<256x24xf32>
    %103 = arith.mulf %90, %102 : vector<256x24xf32>
    %cst_118 = arith.constant 0.000000e+00 : bf16
    %104 = vector.broadcast %cst_118 : bf16 to vector<1x1x18x24xbf16>
    %cst_119 = arith.constant 0.000000e+00 : bf16
    %105 = vector.broadcast %cst_119 : bf16 to vector<1x18x1x24xbf16>
    %c0_120 = arith.constant 0 : index
    %c0_121 = arith.constant 0 : index
    %c0_122 = arith.constant 0 : index
    %c0_123 = arith.constant 0 : index
    %106 = vector.load %arg8[%c0_120, %c0_121, %c0_122, %c0_123] : memref<1x18x18x24xbf16, #tpu.memory_space<vmem>>, vector<1x1x18x24xbf16>
    tpu.vector_store %arg8[%c0_120, %c0_121, %c0_122, %c0_123], %104 {strides = array<i32>} : memref<1x18x18x24xbf16, #tpu.memory_space<vmem>>, vector<1x1x18x24xbf16>,
    %c0_124 = arith.constant 0 : index
    %c17_125 = arith.constant 17 : index
    %c0_126 = arith.constant 0 : index
    %c0_127 = arith.constant 0 : index
    %107 = vector.load %arg8[%c0_124, %c17_125, %c0_126, %c0_127] : memref<1x18x18x24xbf16, #tpu.memory_space<vmem>>, vector<1x1x18x24xbf16>
    tpu.vector_store %arg8[%c0_124, %c17_125, %c0_126, %c0_127], %104 {strides = array<i32>} : memref<1x18x18x24xbf16, #tpu.memory_space<vmem>>, vector<1x1x18x24xbf16>,
    %c0_128 = arith.constant 0 : index
    %c0_129 = arith.constant 0 : index
    %c0_130 = arith.constant 0 : index
    %c0_131 = arith.constant 0 : index
    %108 = vector.load %arg8[%c0_128, %c0_129, %c0_130, %c0_131] : memref<1x18x18x24xbf16, #tpu.memory_space<vmem>>, vector<1x18x1x24xbf16>
    tpu.vector_store %arg8[%c0_128, %c0_129, %c0_130, %c0_131], %105 {strides = array<i32>} : memref<1x18x18x24xbf16, #tpu.memory_space<vmem>>, vector<1x18x1x24xbf16>,
    %c0_132 = arith.constant 0 : index
    %c0_133 = arith.constant 0 : index
    %c17_134 = arith.constant 17 : index
    %c0_135 = arith.constant 0 : index
    %109 = vector.load %arg8[%c0_132, %c0_133, %c17_134, %c0_135] : memref<1x18x18x24xbf16, #tpu.memory_space<vmem>>, vector<1x18x1x24xbf16>
    tpu.vector_store %arg8[%c0_132, %c0_133, %c17_134, %c0_135], %105 {strides = array<i32>} : memref<1x18x18x24xbf16, #tpu.memory_space<vmem>>, vector<1x18x1x24xbf16>,
    %110 = vector.shape_cast %103 : vector<256x24xf32> to vector<1x16x16x24xf32>
    %111 = arith.truncf %110 : vector<1x16x16x24xf32> to vector<1x16x16x24xbf16>
    %c0_136 = arith.constant 0 : index
    %c1_137 = arith.constant 1 : index
    %c1_138 = arith.constant 1 : index
    %c0_139 = arith.constant 0 : index
    %112 = vector.load %arg8[%c0_136, %c1_137, %c1_138, %c0_139] : memref<1x18x18x24xbf16, #tpu.memory_space<vmem>>, vector<1x16x16x24xbf16>
    tpu.vector_store %arg8[%c0_136, %c1_137, %c1_138, %c0_139], %111 {strides = array<i32>} : memref<1x18x18x24xbf16, #tpu.memory_space<vmem>>, vector<1x16x16x24xbf16>,
    %cst_140 = arith.constant 0.000000e+00 : f32
    %113 = vector.broadcast %cst_140 : f32 to vector<256x48xf32>
    %c0_141 = arith.constant 0 : index
    %c0_142 = arith.constant 0 : index
    %c0_143 = arith.constant 0 : index
    %c0_144 = arith.constant 0 : index
    %114 = vector.load %arg8[%c0_141, %c0_142, %c0_143, %c0_144] : memref<1x18x18x24xbf16, #tpu.memory_space<vmem>>, vector<1x16x16x24xbf16>
    %115 = vector.shape_cast %114 : vector<1x16x16x24xbf16> to vector<256x24xbf16>
    %c0_145 = arith.constant 0 : index
    %c0_146 = arith.constant 0 : index
    %c0_147 = arith.constant 0 : index
    %c0_148 = arith.constant 0 : index
    %116 = vector.load %arg4[%c0_145, %c0_146, %c0_147, %c0_148] : memref<3x3x24x48xbf16, #tpu.memory_space<vmem>>, vector<1x1x24x48xbf16>
    %117 = vector.shape_cast %116 : vector<1x1x24x48xbf16> to vector<24x48xbf16>
    %cst_149 = arith.constant dense<0.000000e+00> : vector<256x48xf32>
    %118 = tpu.matmul %115, %117, %cst_149 {dimension_numbers = #tpu.dot_dimension_numbers<[1], [0], [0], [1], [0, 0, 1, 1], [], []>} : vector<256x24xbf16>, vector<24x48xbf16>, vector<256x48xf32> -> vector<256x48xf32>
    %119 = arith.addf %113, %118 : vector<256x48xf32>
    %c0_150 = arith.constant 0 : index
    %c0_151 = arith.constant 0 : index
    %c1_152 = arith.constant 1 : index
    %c0_153 = arith.constant 0 : index
    %120 = vector.load %arg8[%c0_150, %c0_151, %c1_152, %c0_153] : memref<1x18x18x24xbf16, #tpu.memory_space<vmem>>, vector<1x16x16x24xbf16>
    %121 = vector.shape_cast %120 : vector<1x16x16x24xbf16> to vector<256x24xbf16>
    %c0_154 = arith.constant 0 : index
    %c1_155 = arith.constant 1 : index
    %c0_156 = arith.constant 0 : index
    %c0_157 = arith.constant 0 : index
    %122 = vector.load %arg4[%c0_154, %c1_155, %c0_156, %c0_157] : memref<3x3x24x48xbf16, #tpu.memory_space<vmem>>, vector<1x1x24x48xbf16>
    %123 = vector.shape_cast %122 : vector<1x1x24x48xbf16> to vector<24x48xbf16>
    %cst_158 = arith.constant dense<0.000000e+00> : vector<256x48xf32>
    %124 = tpu.matmul %121, %123, %cst_158 {dimension_numbers = #tpu.dot_dimension_numbers<[1], [0], [0], [1], [0, 0, 1, 1], [], []>} : vector<256x24xbf16>, vector<24x48xbf16>, vector<256x48xf32> -> vector<256x48xf32>
    %125 = arith.addf %119, %124 : vector<256x48xf32>
    %c0_159 = arith.constant 0 : index
    %c0_160 = arith.constant 0 : index
    %c2_161 = arith.constant 2 : index
    %c0_162 = arith.constant 0 : index
    %126 = vector.load %arg8[%c0_159, %c0_160, %c2_161, %c0_162] : memref<1x18x18x24xbf16, #tpu.memory_space<vmem>>, vector<1x16x16x24xbf16>
    %127 = vector.shape_cast %126 : vector<1x16x16x24xbf16> to vector<256x24xbf16>
    %c0_163 = arith.constant 0 : index
    %c2_164 = arith.constant 2 : index
    %c0_165 = arith.constant 0 : index
    %c0_166 = arith.constant 0 : index
    %128 = vector.load %arg4[%c0_163, %c2_164, %c0_165, %c0_166] : memref<3x3x24x48xbf16, #tpu.memory_space<vmem>>, vector<1x1x24x48xbf16>
    %129 = vector.shape_cast %128 : vector<1x1x24x48xbf16> to vector<24x48xbf16>
    %cst_167 = arith.constant dense<0.000000e+00> : vector<256x48xf32>
    %130 = tpu.matmul %127, %129, %cst_167 {dimension_numbers = #tpu.dot_dimension_numbers<[1], [0], [0], [1], [0, 0, 1, 1], [], []>} : vector<256x24xbf16>, vector<24x48xbf16>, vector<256x48xf32> -> vector<256x48xf32>
    %131 = arith.addf %125, %130 : vector<256x48xf32>
    %c0_168 = arith.constant 0 : index
    %c1_169 = arith.constant 1 : index
    %c0_170 = arith.constant 0 : index
    %c0_171 = arith.constant 0 : index
    %132 = vector.load %arg8[%c0_168, %c1_169, %c0_170, %c0_171] : memref<1x18x18x24xbf16, #tpu.memory_space<vmem>>, vector<1x16x16x24xbf16>
    %133 = vector.shape_cast %132 : vector<1x16x16x24xbf16> to vector<256x24xbf16>
    %c1_172 = arith.constant 1 : index
    %c0_173 = arith.constant 0 : index
    %c0_174 = arith.constant 0 : index
    %c0_175 = arith.constant 0 : index
    %134 = vector.load %arg4[%c1_172, %c0_173, %c0_174, %c0_175] : memref<3x3x24x48xbf16, #tpu.memory_space<vmem>>, vector<1x1x24x48xbf16>
    %135 = vector.shape_cast %134 : vector<1x1x24x48xbf16> to vector<24x48xbf16>
    %cst_176 = arith.constant dense<0.000000e+00> : vector<256x48xf32>
    %136 = tpu.matmul %133, %135, %cst_176 {dimension_numbers = #tpu.dot_dimension_numbers<[1], [0], [0], [1], [0, 0, 1, 1], [], []>} : vector<256x24xbf16>, vector<24x48xbf16>, vector<256x48xf32> -> vector<256x48xf32>
    %137 = arith.addf %131, %136 : vector<256x48xf32>
    %c0_177 = arith.constant 0 : index
    %c1_178 = arith.constant 1 : index
    %c1_179 = arith.constant 1 : index
    %c0_180 = arith.constant 0 : index
    %138 = vector.load %arg8[%c0_177, %c1_178, %c1_179, %c0_180] : memref<1x18x18x24xbf16, #tpu.memory_space<vmem>>, vector<1x16x16x24xbf16>
    %139 = vector.shape_cast %138 : vector<1x16x16x24xbf16> to vector<256x24xbf16>
    %c1_181 = arith.constant 1 : index
    %c1_182 = arith.constant 1 : index
    %c0_183 = arith.constant 0 : index
    %c0_184 = arith.constant 0 : index
    %140 = vector.load %arg4[%c1_181, %c1_182, %c0_183, %c0_184] : memref<3x3x24x48xbf16, #tpu.memory_space<vmem>>, vector<1x1x24x48xbf16>
    %141 = vector.shape_cast %140 : vector<1x1x24x48xbf16> to vector<24x48xbf16>
    %cst_185 = arith.constant dense<0.000000e+00> : vector<256x48xf32>
    %142 = tpu.matmul %139, %141, %cst_185 {dimension_numbers = #tpu.dot_dimension_numbers<[1], [0], [0], [1], [0, 0, 1, 1], [], []>} : vector<256x24xbf16>, vector<24x48xbf16>, vector<256x48xf32> -> vector<256x48xf32>
    %143 = arith.addf %137, %142 : vector<256x48xf32>
    %c0_186 = arith.constant 0 : index
    %c1_187 = arith.constant 1 : index
    %c2_188 = arith.constant 2 : index
    %c0_189 = arith.constant 0 : index
    %144 = vector.load %arg8[%c0_186, %c1_187, %c2_188, %c0_189] : memref<1x18x18x24xbf16, #tpu.memory_space<vmem>>, vector<1x16x16x24xbf16>
    %145 = vector.shape_cast %144 : vector<1x16x16x24xbf16> to vector<256x24xbf16>
    %c1_190 = arith.constant 1 : index
    %c2_191 = arith.constant 2 : index
    %c0_192 = arith.constant 0 : index
    %c0_193 = arith.constant 0 : index
    %146 = vector.load %arg4[%c1_190, %c2_191, %c0_192, %c0_193] : memref<3x3x24x48xbf16, #tpu.memory_space<vmem>>, vector<1x1x24x48xbf16>
    %147 = vector.shape_cast %146 : vector<1x1x24x48xbf16> to vector<24x48xbf16>
    %cst_194 = arith.constant dense<0.000000e+00> : vector<256x48xf32>
    %148 = tpu.matmul %145, %147, %cst_194 {dimension_numbers = #tpu.dot_dimension_numbers<[1], [0], [0], [1], [0, 0, 1, 1], [], []>} : vector<256x24xbf16>, vector<24x48xbf16>, vector<256x48xf32> -> vector<256x48xf32>
    %149 = arith.addf %143, %148 : vector<256x48xf32>
    %c0_195 = arith.constant 0 : index
    %c2_196 = arith.constant 2 : index
    %c0_197 = arith.constant 0 : index
    %c0_198 = arith.constant 0 : index
    %150 = vector.load %arg8[%c0_195, %c2_196, %c0_197, %c0_198] : memref<1x18x18x24xbf16, #tpu.memory_space<vmem>>, vector<1x16x16x24xbf16>
    %151 = vector.shape_cast %150 : vector<1x16x16x24xbf16> to vector<256x24xbf16>
    %c2_199 = arith.constant 2 : index
    %c0_200 = arith.constant 0 : index
    %c0_201 = arith.constant 0 : index
    %c0_202 = arith.constant 0 : index
    %152 = vector.load %arg4[%c2_199, %c0_200, %c0_201, %c0_202] : memref<3x3x24x48xbf16, #tpu.memory_space<vmem>>, vector<1x1x24x48xbf16>
    %153 = vector.shape_cast %152 : vector<1x1x24x48xbf16> to vector<24x48xbf16>
    %cst_203 = arith.constant dense<0.000000e+00> : vector<256x48xf32>
    %154 = tpu.matmul %151, %153, %cst_203 {dimension_numbers = #tpu.dot_dimension_numbers<[1], [0], [0], [1], [0, 0, 1, 1], [], []>} : vector<256x24xbf16>, vector<24x48xbf16>, vector<256x48xf32> -> vector<256x48xf32>
    %155 = arith.addf %149, %154 : vector<256x48xf32>
    %c0_204 = arith.constant 0 : index
    %c2_205 = arith.constant 2 : index
    %c1_206 = arith.constant 1 : index
    %c0_207 = arith.constant 0 : index
    %156 = vector.load %arg8[%c0_204, %c2_205, %c1_206, %c0_207] : memref<1x18x18x24xbf16, #tpu.memory_space<vmem>>, vector<1x16x16x24xbf16>
    %157 = vector.shape_cast %156 : vector<1x16x16x24xbf16> to vector<256x24xbf16>
    %c2_208 = arith.constant 2 : index
    %c1_209 = arith.constant 1 : index
    %c0_210 = arith.constant 0 : index
    %c0_211 = arith.constant 0 : index
    %158 = vector.load %arg4[%c2_208, %c1_209, %c0_210, %c0_211] : memref<3x3x24x48xbf16, #tpu.memory_space<vmem>>, vector<1x1x24x48xbf16>
    %159 = vector.shape_cast %158 : vector<1x1x24x48xbf16> to vector<24x48xbf16>
    %cst_212 = arith.constant dense<0.000000e+00> : vector<256x48xf32>
    %160 = tpu.matmul %157, %159, %cst_212 {dimension_numbers = #tpu.dot_dimension_numbers<[1], [0], [0], [1], [0, 0, 1, 1], [], []>} : vector<256x24xbf16>, vector<24x48xbf16>, vector<256x48xf32> -> vector<256x48xf32>
    %161 = arith.addf %155, %160 : vector<256x48xf32>
    %c0_213 = arith.constant 0 : index
    %c2_214 = arith.constant 2 : index
    %c2_215 = arith.constant 2 : index
    %c0_216 = arith.constant 0 : index
    %162 = vector.load %arg8[%c0_213, %c2_214, %c2_215, %c0_216] : memref<1x18x18x24xbf16, #tpu.memory_space<vmem>>, vector<1x16x16x24xbf16>
    %163 = vector.shape_cast %162 : vector<1x16x16x24xbf16> to vector<256x24xbf16>
    %c2_217 = arith.constant 2 : index
    %c2_218 = arith.constant 2 : index
    %c0_219 = arith.constant 0 : index
    %c0_220 = arith.constant 0 : index
    %164 = vector.load %arg4[%c2_217, %c2_218, %c0_219, %c0_220] : memref<3x3x24x48xbf16, #tpu.memory_space<vmem>>, vector<1x1x24x48xbf16>
    %165 = vector.shape_cast %164 : vector<1x1x24x48xbf16> to vector<24x48xbf16>
    %cst_221 = arith.constant dense<0.000000e+00> : vector<256x48xf32>
    %166 = tpu.matmul %163, %165, %cst_221 {dimension_numbers = #tpu.dot_dimension_numbers<[1], [0], [0], [1], [0, 0, 1, 1], [], []>} : vector<256x24xbf16>, vector<24x48xbf16>, vector<256x48xf32> -> vector<256x48xf32>
    %167 = arith.addf %161, %166 : vector<256x48xf32>
    %c0_222 = arith.constant 0 : index
    %c0_223 = arith.constant 0 : index
    %168 = vector.load %arg5[%c0_222, %c0_223] : memref<3x48xf32, #tpu.memory_space<vmem>>, vector<1x48xf32>
    %c1_224 = arith.constant 1 : index
    %c0_225 = arith.constant 0 : index
    %169 = vector.load %arg5[%c1_224, %c0_225] : memref<3x48xf32, #tpu.memory_space<vmem>>, vector<1x48xf32>
    %c2_226 = arith.constant 2 : index
    %c0_227 = arith.constant 0 : index
    %170 = vector.load %arg5[%c2_226, %c0_227] : memref<3x48xf32, #tpu.memory_space<vmem>>, vector<1x48xf32>
    %171 = vector.broadcast %168 : vector<1x48xf32> to vector<256x48xf32>
    %172 = arith.addf %167, %171 : vector<256x48xf32>
    %cst_228 = arith.constant dense<0.000000e+00> : vector<256xf32>
    %173 = vector.multi_reduction <add>, %172, %cst_228 [1] : vector<256x48xf32> to vector<256xf32>
    %174 = vector.shape_cast %173 : vector<256xf32> to vector<256x1xf32>
    %175 = arith.mulf %172, %172 : vector<256x48xf32>
    %cst_229 = arith.constant dense<0.000000e+00> : vector<256xf32>
    %176 = vector.multi_reduction <add>, %175, %cst_229 [1] : vector<256x48xf32> to vector<256xf32>
    %177 = vector.shape_cast %176 : vector<256xf32> to vector<256x1xf32>
    %cst_230 = arith.constant 0.020833334 : f32
    %178 = vector.broadcast %cst_230 : f32 to vector<256x1xf32>
    %179 = arith.mulf %174, %178 : vector<256x1xf32>
    %cst_231 = arith.constant 0.020833334 : f32
    %180 = vector.broadcast %cst_231 : f32 to vector<256x1xf32>
    %181 = arith.mulf %177, %180 : vector<256x1xf32>
    %182 = arith.mulf %179, %179 : vector<256x1xf32>
    %183 = arith.subf %181, %182 : vector<256x1xf32>
    %184 = vector.broadcast %179 : vector<256x1xf32> to vector<256x48xf32>
    %185 = arith.subf %172, %184 : vector<256x48xf32>
    %cst_232 = arith.constant 9.99999997E-7 : f32
    %186 = vector.broadcast %cst_232 : f32 to vector<256x1xf32>
    %187 = arith.addf %183, %186 : vector<256x1xf32>
    %188 = math.rsqrt %187 : vector<256x1xf32>
    %189 = vector.broadcast %188 : vector<256x1xf32> to vector<256x48xf32>
    %190 = arith.mulf %185, %189 : vector<256x48xf32>
    %191 = vector.broadcast %169 : vector<1x48xf32> to vector<256x48xf32>
    %192 = arith.mulf %190, %191 : vector<256x48xf32>
    %193 = vector.broadcast %170 : vector<1x48xf32> to vector<256x48xf32>
    %194 = arith.addf %192, %193 : vector<256x48xf32>
    %195 = vector.shape_cast %194 : vector<256x48xf32> to vector<1x16x16x48xf32>
    %c0_233 = arith.constant 0 : index
    %c0_234 = arith.constant 0 : index
    %c0_235 = arith.constant 0 : index
    %c0_236 = arith.constant 0 : index
    %196 = vector.load %arg6[%c0_233, %c0_234, %c0_235, %c0_236] : memref<1x16x16x48xf32, #tpu.memory_space<vmem>>, vector<1x16x16x48xf32>
    tpu.vector_store %arg6[%c0_233, %c0_234, %c0_235, %c0_236], %195 {strides = array<i32>} : memref<1x16x16x48xf32, #tpu.memory_space<vmem>>, vector<1x16x16x48xf32>,
    return
  }
  func.func @transform_0(%arg0: i32) -> (i32, i32, i32, i32) {
    %c0_i32 = arith.constant 0 : i32
    %c0_i32_0 = arith.constant 0 : i32
    %c0_i32_1 = arith.constant 0 : i32
    %c0_i32_2 = arith.constant 0 : i32
    return %arg0, %c0_i32, %c0_i32_0, %c0_i32_1 : i32, i32, i32, i32
  }
  func.func @transform_1(%arg0: i32) -> (i32, i32, i32, i32) {
    %c0_i32 = arith.constant 0 : i32
    %c0_i32_0 = arith.constant 0 : i32
    %c0_i32_1 = arith.constant 0 : i32
    %c0_i32_2 = arith.constant 0 : i32
    %c0_i32_3 = arith.constant 0 : i32
    return %c0_i32, %c0_i32_0, %c0_i32_1, %c0_i32_2 : i32, i32, i32, i32
  }
  func.func @transform_2(%arg0: i32) -> (i32, i32) {
    %c0_i32 = arith.constant 0 : i32
    %c0_i32_0 = arith.constant 0 : i32
    %c0_i32_1 = arith.constant 0 : i32
    return %c0_i32, %c0_i32_0 : i32, i32
  }
  func.func @transform_3(%arg0: i32) -> (i32, i32, i32, i32) {
    %c0_i32 = arith.constant 0 : i32
    %c0_i32_0 = arith.constant 0 : i32
    %c0_i32_1 = arith.constant 0 : i32
    %c0_i32_2 = arith.constant 0 : i32
    %c0_i32_3 = arith.constant 0 : i32
    return %c0_i32, %c0_i32_0, %c0_i32_1, %c0_i32_2 : i32, i32, i32, i32
  }
  func.func @transform_4(%arg0: i32) -> (i32, i32) {
    %c0_i32 = arith.constant 0 : i32
    %c0_i32_0 = arith.constant 0 : i32
    %c0_i32_1 = arith.constant 0 : i32
    return %c0_i32, %c0_i32_0 : i32, i32
  }
  func.func @transform_5(%arg0: i32) -> (i32, i32, i32, i32) {
    %c0_i32 = arith.constant 0 : i32
    %c0_i32_0 = arith.constant 0 : i32
    %c0_i32_1 = arith.constant 0 : i32
    %c0_i32_2 = arith.constant 0 : i32
    return %arg0, %c0_i32, %c0_i32_0, %c0_i32_1 : i32, i32, i32, i32
  }
}

</mosaic_0001>

<llo_original>
// kernel: stem_layer.1
$region0: #{stem_layer.1}
  #allocation0 [shape = 'u32[]', space=smem, size = 0x4, offset = 0x4, fixed_abs, tag = 'smem constant byte address 0x4 - core index']
  #allocation1 [shape = 'u32[144,128]{1,0:T(1,128)}', space=vmem, size = 0x12000, scoped, tag = 'internal scratch']
  #allocation2 [shape = 'bf16[1,18,18,3]{3,2,1,0:T(8,128)(2,1)}', space=vmem, size = 0x1b000, scoped, tag = 'scratch operand']
  #allocation3 [shape = 'bf16[1,18,18,24]{3,2,1,0:T(8,128)(2,1)}', space=vmem, size = 0x1b000, scoped, tag = 'scratch operand']
  %s0 = inlined_call_operand.vmem [shape: f32[2,16,16,3], index: 0, kind: input, shape index: {}]
  %s1 = inlined_call_operand.vmem [shape: bf16[3,3,3,24], index: 1, kind: input, shape index: {}]
  %s2 = inlined_call_operand.vmem [shape: f32[3,24], index: 2, kind: input, shape index: {}]
  %s3 = inlined_call_operand.vmem [shape: bf16[3,3,24,48], index: 3, kind: input, shape index: {}]
  %s4 = inlined_call_operand.vmem [shape: f32[3,48], index: 4, kind: input, shape index: {}]
  %s5 = inlined_call_operand.hbm [shape: f32[2,16,16,48], index: 5, kind: output, shape index: {}]
  %s6 = sld [smem:[#allocation0]]
  $region53: #{stem_layer.1} parent=0
    _
  %s8 = ssub.s32 1, %s6
  %s9 = scalar_select 0, %s8, %s6
  $region1: #{stem_layer.1} parent=0
    #allocation4 [shape = 'u8[262144]{0}', space=vmem, size = 0x40000, scoped, tag = 'output window, operand 0']
    #allocation5 [shape = 's32[2]{0}', space=sflag, size = 0x8, scoped, tag = 'scoped memory for stem_layer.1']
    %10 = vsyncpa [#allocation5], 0
    %s11 = scalar_lea.sflag [#allocation5], 1
    %12 = vsyncpa %s11, 0
    loop: start=0, step=1, limit=4
    $region2: #{stem_layer.1} parent=1 // loop_pre_header
      _
    $region3: #{stem_layer.1} parent=1 // loop_header
      %s14 = sphi 0, %s18
      %p15 = scmp.ge.s32.totalorder %s14, 4
      %s24 = sphi 0, %s26
      %s27 = sphi 0, %s24
      %s28 = sphi 0, %s27
      %s44 = sphi 0, %s28
      %s48 = sphi 0, %s48
      %s50 = sphi 0, %s48
      %s51 = sphi 0, %s50
      %s65 = sphi 0, %s51
      %s69 = sphi 0, %s69
      %s71 = sphi 0, %s69
      %s72 = sphi 0, %s71
      %s86 = sphi 0, %s72
      %s90 = sphi 0, %s90
      %s92 = sphi 0, %s90
      %s93 = sphi 0, %s92
      %s107 = sphi 0, %s93
      %s111 = sphi 0, %s111
      %s113 = sphi 0, %s111
      %s114 = sphi 0, %s113
      %s128 = sphi 0, %s114
      %s134 = sphi 0, %s136
      %s137 = sphi 0, %s134
      %s138 = sphi 0, %s137
      %s154 = sphi 0, %s138
    $region4: #{stem_layer.1} parent=1 // loop_header_branch
      %17 = sbr.rel (%p15) target = $region8
    $region5: #{stem_layer.1} parent=1 // loop_body
      %s19 = ssub.s32 %s14, 1
      %s20 = ssub.s32 %s14, 2
      %s21 = sadd.s32 %s14, 1
      %s22 = ssub.s32 %s14, %s21
      %p23 = scmp.eq.s32.totalorder %s22, 0
      %s25 = sadd.s32 %s24, 1
      %s26 = scalar_select %p23, %s24, %s25
      %p29 = pneg %p23
      %p30 = scmp.eq.s32.totalorder %s14, 1
      %p31 = por %p29, %p30
      %p32 = scmp.ne.s32.totalorder %s24, %s27
      %p33 = scmp.eq.s32.totalorder %s14, 0
      %p34 = por %p32, %p33
      %p35 = scmp.ne.s32.totalorder %s24, %s27
      %p36 = scmp.eq.s32.totalorder %s19, 1
      %p37 = por %p35, %p36
      %p38 = scmp.ne.s32.totalorder %s27, %s28
      %p39 = scmp.eq.s32.totalorder %s19, 0
      %p40 = por %p38, %p39
      %p41 = scmp.ne.s32.totalorder %s27, %s28
      %p42 = scmp.eq.s32.totalorder %s20, 1
      %p43 = por %p41, %p42
      %p45 = scmp.ne.s32.totalorder %s28, %s44
      %p46 = scmp.eq.s32.totalorder %s20, 0
      %p47 = por %p45, %p46
      %s49 = sadd.s32 %s48, 1
      %p52 = scmp.eq.s32.totalorder %s14, 1
      %p53 = scmp.ne.s32.totalorder %s48, %s50
      %p54 = scmp.eq.s32.totalorder %s14, 0
      %p55 = por %p53, %p54
      %p56 = scmp.ne.s32.totalorder %s48, %s50
      %p57 = scmp.eq.s32.totalorder %s19, 1
      %p58 = por %p56, %p57
      %p59 = scmp.ne.s32.totalorder %s50, %s51
      %p60 = scmp.eq.s32.totalorder %s19, 0
      %p61 = por %p59, %p60
      %p62 = scmp.ne.s32.totalorder %s50, %s51
      %p63 = scmp.eq.s32.totalorder %s20, 1
      %p64 = por %p62, %p63
      %p66 = scmp.ne.s32.totalorder %s51, %s65
      %p67 = scmp.eq.s32.totalorder %s20, 0
      %p68 = por %p66, %p67
      %s70 = sadd.s32 %s69, 1
      %p73 = scmp.eq.s32.totalorder %s14, 1
      %p74 = scmp.ne.s32.totalorder %s69, %s71
      %p75 = scmp.eq.s32.totalorder %s14, 0
      %p76 = por %p74, %p75
      %p77 = scmp.ne.s32.totalorder %s69, %s71
      %p78 = scmp.eq.s32.totalorder %s19, 1
      %p79 = por %p77, %p78
      %p80 = scmp.ne.s32.totalorder %s71, %s72
      %p81 = scmp.eq.s32.totalorder %s19, 0
      %p82 = por %p80, %p81
      %p83 = scmp.ne.s32.totalorder %s71, %s72
      %p84 = scmp.eq.s32.totalorder %s20, 1
      %p85 = por %p83, %p84
      %p87 = scmp.ne.s32.totalorder %s72, %s86
      %p88 = scmp.eq.s32.totalorder %s20, 0
      %p89 = por %p87, %p88
      %s91 = sadd.s32 %s90, 1
      %p94 = scmp.eq.s32.totalorder %s14, 1
      %p95 = scmp.ne.s32.totalorder %s90, %s92
      %p96 = scmp.eq.s32.totalorder %s14, 0
      %p97 = por %p95, %p96
      %p98 = scmp.ne.s32.totalorder %s90, %s92
      %p99 = scmp.eq.s32.totalorder %s19, 1
      %p100 = por %p98, %p99
      %p101 = scmp.ne.s32.totalorder %s92, %s93
      %p102 = scmp.eq.s32.totalorder %s19, 0
      %p103 = por %p101, %p102
      %p104 = scmp.ne.s32.totalorder %s92, %s93
      %p105 = scmp.eq.s32.totalorder %s20, 1
      %p106 = por %p104, %p105
      %p108 = scmp.ne.s32.totalorder %s93, %s107
      %p109 = scmp.eq.s32.totalorder %s20, 0
      %p110 = por %p108, %p109
      %s112 = sadd.s32 %s111, 1
      %p115 = scmp.eq.s32.totalorder %s14, 1
      %p116 = scmp.ne.s32.totalorder %s111, %s113
      %p117 = scmp.eq.s32.totalorder %s14, 0
      %p118 = por %p116, %p117
      %p119 = scmp.ne.s32.totalorder %s111, %s113
      %p120 = scmp.eq.s32.totalorder %s19, 1
      %p121 = por %p119, %p120
      %p122 = scmp.ne.s32.totalorder %s113, %s114
      %p123 = scmp.eq.s32.totalorder %s19, 0
      %p124 = por %p122, %p123
      %p125 = scmp.ne.s32.totalorder %s113, %s114
      %p126 = scmp.eq.s32.totalorder %s20, 1
      %p127 = por %p125, %p126
      %p129 = scmp.ne.s32.totalorder %s114, %s128
      %p130 = scmp.eq.s32.totalorder %s20, 0
      %p131 = por %p129, %p130
      %s132 = ssub.s32 %s14, %s21
      %p133 = scmp.eq.s32.totalorder %s132, 0
      %s135 = sadd.s32 %s134, 1
      %s136 = scalar_select %p133, %s134, %s135
      %p139 = pneg %p133
      %p140 = scmp.eq.s32.totalorder %s14, 1
      %p141 = por %p139, %p140
      %p142 = scmp.ne.s32.totalorder %s134, %s137
      %p143 = scmp.eq.s32.totalorder %s14, 0
      %p144 = por %p142, %p143
      %p145 = scmp.ne.s32.totalorder %s134, %s137
      %p146 = scmp.eq.s32.totalorder %s19, 1
      %p147 = por %p145, %p146
      %p148 = scmp.ne.s32.totalorder %s137, %s138
      %p149 = scmp.eq.s32.totalorder %s19, 0
      %p150 = por %p148, %p149
      %p151 = scmp.ne.s32.totalorder %s137, %s138
      %p152 = scmp.eq.s32.totalorder %s20, 1
      %p153 = por %p151, %p152
      %p155 = scmp.ne.s32.totalorder %s138, %s154
      %p156 = scmp.eq.s32.totalorder %s20, 0
      %p157 = por %p155, %p156
      %p158 = scmp.le.s32.totalorder 1, %s14
      %p159 = scmp.lt.s32.totalorder %s14, 3
      %p160 = pnand %p158, %p159
      %p161 = pneg %p160
      // Predicated region
      $region9: #{stem_layer.1} parent=5 // pred_check
        _
      $region10: #{stem_layer.1} parent=5 // pred_check_branch
        %163 = sbr.rel (%p160) target = $region12
      $region11: #{stem_layer.1} parent=5 // pred_region
        %s164 = ssub.s32 %s14, 1
        // Predicated region
        $region13: #{stem_layer.1} parent=11 // pred_check
          %p165 = pneg %p61
        $region14: #{stem_layer.1} parent=11 // pred_check_branch
          %167 = sbr.rel (%p165) target = $region16
        $region15: #{stem_layer.1} parent=11 // pred_region
          _
        $region16: #{stem_layer.1} parent=11 // pred_fallthru
          _
        // Predicated region
        $region17: #{stem_layer.1} parent=11 // pred_check
          %p168 = pneg %p82
        $region18: #{stem_layer.1} parent=11 // pred_check_branch
          %170 = sbr.rel (%p168) target = $region20
        $region19: #{stem_layer.1} parent=11 // pred_region
          _
        $region20: #{stem_layer.1} parent=11 // pred_fallthru
          _
        // Predicated region
        $region21: #{stem_layer.1} parent=11 // pred_check
          %p171 = pneg %p103
        $region22: #{stem_layer.1} parent=11 // pred_check_branch
          %173 = sbr.rel (%p171) target = $region24
        $region23: #{stem_layer.1} parent=11 // pred_region
          _
        $region24: #{stem_layer.1} parent=11 // pred_fallthru
          _
        // Predicated region
        $region25: #{stem_layer.1} parent=11 // pred_check
          %p174 = pneg %p124
        $region26: #{stem_layer.1} parent=11 // pred_check_branch
          %176 = sbr.rel (%p174) target = $region28
        $region27: #{stem_layer.1} parent=11 // pred_region
          _
        $region28: #{stem_layer.1} parent=11 // pred_fallthru
          _
      $region12: #{stem_layer.1} parent=5 // pred_fallthru
        _
      %p177 = scmp.lt.s32.totalorder %s14, 2
      // Predicated region
      $region29: #{stem_layer.1} parent=5 // pred_check
        %p178 = pneg %p177
      $region30: #{stem_layer.1} parent=5 // pred_check_branch
        %180 = sbr.rel (%p178) target = $region32
      $region31: #{stem_layer.1} parent=5 // pred_region
        // Predicated region
        $region33: #{stem_layer.1} parent=31 // pred_check
          %p181 = pneg %p34
        $region34: #{stem_layer.1} parent=31 // pred_check_branch
          %183 = sbr.rel (%p181) target = $region36
        $region35: #{stem_layer.1} parent=31 // pred_region
          %p184 = scmp.lt.s32.totalorder %s14, 1
          %s185 = scalar_select %p184, %s14, 1
          %s186 = smul.addr %s185, 32
          %s187 = smul.addr %s186, 8
          %s188 = scalar_lea.vmem %s0, %s187
        $region36: #{stem_layer.1} parent=31 // pred_fallthru
          _
      $region32: #{stem_layer.1} parent=5 // pred_fallthru
        _
      %p189 = scmp.le.s32.totalorder 1, %s14
      %p190 = scmp.lt.s32.totalorder %s14, 3
      %p191 = pnand %p189, %p190
      %p192 = pneg %p191
      // Predicated region
      $region37: #{stem_layer.1} parent=5 // pred_check
        _
      $region38: #{stem_layer.1} parent=5 // pred_check_branch
        %194 = sbr.rel (%p191) target = $region40
      $region39: #{stem_layer.1} parent=5 // pred_region
        %s195 = ssub.s32 %s14, 1
        %p196 = scmp.lt.s32.totalorder %s19, 1
        %s197 = scalar_select %p196, %s19, 1
        %s198 = smul.addr %s197, 32
        %s199 = smul.addr %s198, 8
        %s200 = scalar_lea.vmem %s0, %s199
        %p201 = pneg %p40
        %p202 = pneg %p37
        %p203 = pneg %p61
        %p204 = pneg %p58
        %p205 = pneg %p82
        %p206 = pneg %p79
        %p207 = pneg %p103
        %p208 = pneg %p100
        %p209 = pneg %p124
        %p210 = pneg %p121
        %p211 = pneg %p150
        %p212 = pneg %p147
        %s213 = sand.u32 %s137, 1
        %s214 = scalar_lea.sflag [#allocation5], %s213
        %s215 = sand.u32 %s137, 1
        %s216 = smul.addr %s215, 256
        %s217 = scalar_lea.vmem [#allocation4], %s216
        %p218 = scmp.lt.s32.totalorder %s19, 1
        %s219 = scalar_select %p218, %s19, 1
        %s220 = smul.addr %s219, 32
        %s221 = smul.addr %s220, 8
        %s222 = scalar_lea.vmem %s0, %s221
        %vm224 = vcmask 19456
        %225 = vst.msk [vmem:[#allocation2] sm:$0xf] %vm224, 0
        %226 = vst.msk [vmem:[#allocation2 + $0x4] sm:$0xf] %vm224, 0
        %vm227 = vcmask 16384
        %228 = vst.msk [vmem:[#allocation2 + $0x8] sm:$0x1] %vm227, 0
        %s229 = scalar_lea.vmem [#allocation2], 204
        %230 = vst.msk [vmem:[%s229] sm:$0xf] %vm224, 0
        %231 = vst.msk [vmem:[%s229 + $0x4] sm:$0xf] %vm224, 0
        %232 = vst.msk [vmem:[%s229 + $0x8] sm:$0x1] %vm227, 0
        %vm233 = vcmask 16384
        %vm234 = vsmask.f32 256
        %vm235 = vmand %vm233, %vm234
        %v236 = vld [vmem:[#allocation2] sm:$0x1]
        %v237 = vsel %vm235, 0, %v236
        %238 = vst [vmem:[#allocation2] sm:$0x1] %v237
        %v239 = vld [vmem:[#allocation2 + $0xc] sm:$0x1]
        %v240 = vsel %vm235, 0, %v239
        %241 = vst [vmem:[#allocation2 + $0xc] sm:$0x1] %v240
        %v242 = vld [vmem:[#allocation2 + $0x18] sm:$0x1]
        %v243 = vsel %vm235, 0, %v242
        %244 = vst [vmem:[#allocation2 + $0x18] sm:$0x1] %v243
        %v245 = vld [vmem:[#allocation2 + $0x24] sm:$0x1]
        %v246 = vsel %vm235, 0, %v245
        %247 = vst [vmem:[#allocation2 + $0x24] sm:$0x1] %v246
        %v248 = vld [vmem:[#allocation2 + $0x30] sm:$0x1]
        %v249 = vsel %vm235, 0, %v248
        %250 = vst [vmem:[#allocation2 + $0x30] sm:$0x1] %v249
        %v251 = vld [vmem:[#allocation2 + $0x3c] sm:$0x1]
        %v252 = vsel %vm235, 0, %v251
        %253 = vst [vmem:[#allocation2 + $0x3c] sm:$0x1] %v252
        %v254 = vld [vmem:[#allocation2 + $0x48] sm:$0x1]
        %v255 = vsel %vm235, 0, %v254
        %256 = vst [vmem:[#allocation2 + $0x48] sm:$0x1] %v255
        %v257 = vld [vmem:[#allocation2 + $0x54] sm:$0x1]
        %v258 = vsel %vm235, 0, %v257
        %259 = vst [vmem:[#allocation2 + $0x54] sm:$0x1] %v258
        %v260 = vld [vmem:[#allocation2 + $0x60] sm:$0x1]
        %v261 = vsel %vm235, 0, %v260
        %262 = vst [vmem:[#allocation2 + $0x60] sm:$0x1] %v261
        %v263 = vld [vmem:[#allocation2 + $0x6c] sm:$0x1]
        %v264 = vsel %vm235, 0, %v263
        %265 = vst [vmem:[#allocation2 + $0x6c] sm:$0x1] %v264
        %v266 = vld [vmem:[#allocation2 + $0x78] sm:$0x1]
        %v267 = vsel %vm235, 0, %v266
        %268 = vst [vmem:[#allocation2 + $0x78] sm:$0x1] %v267
        %v269 = vld [vmem:[#allocation2 + $0x84] sm:$0x1]
        %v270 = vsel %vm235, 0, %v269
        %271 = vst [vmem:[#allocation2 + $0x84] sm:$0x1] %v270
        %v272 = vld [vmem:[#allocation2 + $0x90] sm:$0x1]
        %v273 = vsel %vm235, 0, %v272
        %274 = vst [vmem:[#allocation2 + $0x90] sm:$0x1] %v273
        %v275 = vld [vmem:[#allocation2 + $0x9c] sm:$0x1]
        %v276 = vsel %vm235, 0, %v275
        %277 = vst [vmem:[#allocation2 + $0x9c] sm:$0x1] %v276
        %v278 = vld [vmem:[#allocation2 + $0xa8] sm:$0x1]
        %v279 = vsel %vm235, 0, %v278
        %280 = vst [vmem:[#allocation2 + $0xa8] sm:$0x1] %v279
        %v281 = vld [vmem:[#allocation2 + $0xb4] sm:$0x1]
        %v282 = vsel %vm235, 0, %v281
        %283 = vst [vmem:[#allocation2 + $0xb4] sm:$0x1] %v282
        %v284 = vld [vmem:[#allocation2 + $0xc0] sm:$0x1]
        %v285 = vsel %vm235, 0, %v284
        %286 = vst [vmem:[#allocation2 + $0xc0] sm:$0x1] %v285
        %v287 = vld [vmem:[#allocation2 + $0xcc] sm:$0x1]
        %v288 = vsel %vm235, 0, %v287
        %289 = vst [vmem:[#allocation2 + $0xcc] sm:$0x1] %v288
        %vm290 = vsmask.f32 7938
        %vm291 = vmand %vm233, %vm290
        %v292 = vld [vmem:[#allocation2 + $0x8] sm:$0x1]
        %v293 = vsel %vm291, 0, %v292
        %294 = vst [vmem:[#allocation2 + $0x8] sm:$0x1] %v293
        %v295 = vld [vmem:[#allocation2 + $0x14] sm:$0x1]
        %v296 = vsel %vm291, 0, %v295
        %297 = vst [vmem:[#allocation2 + $0x14] sm:$0x1] %v296
        %v298 = vld [vmem:[#allocation2 + $0x20] sm:$0x1]
        %v299 = vsel %vm291, 0, %v298
        %300 = vst [vmem:[#allocation2 + $0x20] sm:$0x1] %v299
        %v301 = vld [vmem:[#allocation2 + $0x2c] sm:$0x1]
        %v302 = vsel %vm291, 0, %v301
        %303 = vst [vmem:[#allocation2 + $0x2c] sm:$0x1] %v302
        %v304 = vld [vmem:[#allocation2 + $0x38] sm:$0x1]
        %v305 = vsel %vm291, 0, %v304
        %306 = vst [vmem:[#allocation2 + $0x38] sm:$0x1] %v305
        %v307 = vld [vmem:[#allocation2 + $0x44] sm:$0x1]
        %v308 = vsel %vm291, 0, %v307
        %309 = vst [vmem:[#allocation2 + $0x44] sm:$0x1] %v308
        %v310 = vld [vmem:[#allocation2 + $0x50] sm:$0x1]
        %v311 = vsel %vm291, 0, %v310
        %312 = vst [vmem:[#allocation2 + $0x50] sm:$0x1] %v311
        %v313 = vld [vmem:[#allocation2 + $0x5c] sm:$0x1]
        %v314 = vsel %vm291, 0, %v313
        %315 = vst [vmem:[#allocation2 + $0x5c] sm:$0x1] %v314
        %v316 = vld [vmem:[#allocation2 + $0x68] sm:$0x1]
        %v317 = vsel %vm291, 0, %v316
        %318 = vst [vmem:[#allocation2 + $0x68] sm:$0x1] %v317
        %v319 = vld [vmem:[#allocation2 + $0x74] sm:$0x1]
        %v320 = vsel %vm291, 0, %v319
        %321 = vst [vmem:[#allocation2 + $0x74] sm:$0x1] %v320
        %v322 = vld [vmem:[#allocation2 + $0x80] sm:$0x1]
        %v323 = vsel %vm291, 0, %v322
        %324 = vst [vmem:[#allocation2 + $0x80] sm:$0x1] %v323
        %v325 = vld [vmem:[#allocation2 + $0x8c] sm:$0x1]
        %v326 = vsel %vm291, 0, %v325
        %327 = vst [vmem:[#allocation2 + $0x8c] sm:$0x1] %v326
        %v328 = vld [vmem:[#allocation2 + $0x98] sm:$0x1]
        %v329 = vsel %vm291, 0, %v328
        %330 = vst [vmem:[#allocation2 + $0x98] sm:$0x1] %v329
        %v331 = vld [vmem:[#allocation2 + $0xa4] sm:$0x1]
        %v332 = vsel %vm291, 0, %v331
        %333 = vst [vmem:[#allocation2 + $0xa4] sm:$0x1] %v332
        %v334 = vld [vmem:[#allocation2 + $0xb0] sm:$0x1]
        %v335 = vsel %vm291, 0, %v334
        %336 = vst [vmem:[#allocation2 + $0xb0] sm:$0x1] %v335
        %v337 = vld [vmem:[#allocation2 + $0xbc] sm:$0x1]
        %v338 = vsel %vm291, 0, %v337
        %339 = vst [vmem:[#allocation2 + $0xbc] sm:$0x1] %v338
        %v340 = vld [vmem:[#allocation2 + $0xc8] sm:$0x1]
        %v341 = vsel %vm291, 0, %v340
        %342 = vst [vmem:[#allocation2 + $0xc8] sm:$0x1] %v341
        %v343 = vld [vmem:[#allocation2 + $0xd4] sm:$0x1]
        %v344 = vsel %vm291, 0, %v343
        %345 = vst [vmem:[#allocation2 + $0xd4] sm:$0x1] %v344
        %v346 = vld [vmem:[%s222] sm:$0xff]
        %v347 = vld [vmem:[%s222 + $0x8] sm:$0xff]
        %v348 = vld [vmem:[%s222 + $0x10] sm:$0xff]
        %v349 = vld [vmem:[%s222 + $0x18] sm:$0xff]
        %v350 = vld [vmem:[%s222 + $0x20] sm:$0xff]
        %v351 = vld [vmem:[%s222 + $0x28] sm:$0xff]
        %v352 = vld [vmem:[%s222 + $0x30] sm:$0xff]
        %v353 = vld [vmem:[%s222 + $0x38] sm:$0xff]
        %v354 = vld [vmem:[%s222 + $0x40] sm:$0xff]
        %v355 = vld [vmem:[%s222 + $0x48] sm:$0xff]
        %v356 = vld [vmem:[%s222 + $0x50] sm:$0xff]
        %v357 = vld [vmem:[%s222 + $0x58] sm:$0xff]
        %v358 = vld [vmem:[%s222 + $0x60] sm:$0xff]
        %v359 = vld [vmem:[%s222 + $0x68] sm:$0xff]
        %v360 = vld [vmem:[%s222 + $0x70] sm:$0xff]
        %v361 = vld [vmem:[%s222 + $0x78] sm:$0xff]
        %v362 = vld [vmem:[%s222 + $0x80] sm:$0xff]
        %v363 = vld [vmem:[%s222 + $0x88] sm:$0xff]
        %v364 = vld [vmem:[%s222 + $0x90] sm:$0xff]
        %v365 = vld [vmem:[%s222 + $0x98] sm:$0xff]
        %v366 = vld [vmem:[%s222 + $0xa0] sm:$0xff]
        %v367 = vld [vmem:[%s222 + $0xa8] sm:$0xff]
        %v368 = vld [vmem:[%s222 + $0xb0] sm:$0xff]
        %v369 = vld [vmem:[%s222 + $0xb8] sm:$0xff]
        %v370 = vld [vmem:[%s222 + $0xc0] sm:$0xff]
        %v371 = vld [vmem:[%s222 + $0xc8] sm:$0xff]
        %v372 = vld [vmem:[%s222 + $0xd0] sm:$0xff]
        %v373 = vld [vmem:[%s222 + $0xd8] sm:$0xff]
        %v374 = vld [vmem:[%s222 + $0xe0] sm:$0xff]
        %v375 = vld [vmem:[%s222 + $0xe8] sm:$0xff]
        %v376 = vld [vmem:[%s222 + $0xf0] sm:$0xff]
        %v377 = vld [vmem:[%s222 + $0xf8] sm:$0xff]
        %v378 = vpack.c.bf16 %v347, %v346
        %v379 = vpack.c.bf16 %v349, %v348
        %v380 = vpack.c.bf16 %v351, %v350
        %v381 = vpack.c.bf16 %v353, %v352
        %v382 = vpack.c.bf16 %v355, %v354
        %v383 = vpack.c.bf16 %v357, %v356
        %v384 = vpack.c.bf16 %v359, %v358
        %v385 = vpack.c.bf16 %v361, %v360
        %v386 = vpack.c.bf16 %v363, %v362
        %v387 = vpack.c.bf16 %v365, %v364
        %v388 = vpack.c.bf16 %v367, %v366
        %v389 = vpack.c.bf16 %v369, %v368
        %v390 = vpack.c.bf16 %v371, %v370
        %v391 = vpack.c.bf16 %v373, %v372
        %v392 = vpack.c.bf16 %v375, %v374
        %v393 = vpack.c.bf16 %v377, %v376
        %v410 = vunpack.c.l.b16 %v378
        %v411 = vunpack.c.h.b16 %v378
        %v412 = vunpack.c.l.b16 %v379
        %v413 = vunpack.c.h.b16 %v379
        %v414 = vunpack.c.l.b16 %v380
        %v415 = vunpack.c.h.b16 %v380
        %v416 = vunpack.c.l.b16 %v381
        %v417 = vunpack.c.h.b16 %v381
        %v418 = vunpack.c.l.b16 %v382
        %v419 = vunpack.c.h.b16 %v382
        %v420 = vunpack.c.l.b16 %v383
        %v421 = vunpack.c.h.b16 %v383
        %v422 = vunpack.c.l.b16 %v384
        %v423 = vunpack.c.h.b16 %v384
        %v424 = vunpack.c.l.b16 %v385
        %v425 = vunpack.c.h.b16 %v385
        %v426 = vunpack.c.l.b16 %v386
        %v427 = vunpack.c.h.b16 %v386
        %v428 = vunpack.c.l.b16 %v387
        %v429 = vunpack.c.h.b16 %v387
        %v430 = vunpack.c.l.b16 %v388
        %v431 = vunpack.c.h.b16 %v388
        %v432 = vunpack.c.l.b16 %v389
        %v433 = vunpack.c.h.b16 %v389
        %v434 = vunpack.c.l.b16 %v390
        %v435 = vunpack.c.h.b16 %v390
        %v436 = vunpack.c.l.b16 %v391
        %v437 = vunpack.c.h.b16 %v391
        %v438 = vunpack.c.l.b16 %v392
        %v439 = vunpack.c.h.b16 %v392
        %v440 = vunpack.c.l.b16 %v393
        %v441 = vunpack.c.h.b16 %v393
        %v442 = vpack.c.b16 %v410, %v410
        %v443 = vpack.c.b16 %v411, %v411
        %v444 = vpack.c.b16 %v412, %v412
        %v445 = vpack.c.b16 %v413, %v413
        %v446 = vpack.c.b16 %v414, %v414
        %v447 = vpack.c.b16 %v415, %v415
        %v448 = vpack.c.b16 %v416, %v416
        %v449 = vpack.c.b16 %v417, %v417
        %v450 = vpack.c.b16 %v418, %v418
        %v451 = vpack.c.b16 %v419, %v419
        %v452 = vpack.c.b16 %v420, %v420
        %v453 = vpack.c.b16 %v421, %v421
        %v454 = vpack.c.b16 %v422, %v422
        %v455 = vpack.c.b16 %v423, %v423
        %v456 = vpack.c.b16 %v424, %v424
        %v457 = vpack.c.b16 %v425, %v425
        %v458 = vpack.c.b16 %v426, %v426
        %v459 = vpack.c.b16 %v427, %v427
        %v460 = vpack.c.b16 %v428, %v428
        %v461 = vpack.c.b16 %v429, %v429
        %v462 = vpack.c.b16 %v430, %v430
        %v463 = vpack.c.b16 %v431, %v431
        %v464 = vpack.c.b16 %v432, %v432
        %v465 = vpack.c.b16 %v433, %v433
        %v466 = vpack.c.b16 %v434, %v434
        %v467 = vpack.c.b16 %v435, %v435
        %v468 = vpack.c.b16 %v436, %v436
        %v469 = vpack.c.b16 %v437, %v437
        %v470 = vpack.c.b16 %v438, %v438
        %v471 = vpack.c.b16 %v439, %v439
        %v472 = vpack.c.b16 %v440, %v440
        %v473 = vpack.c.b16 %v441, %v441
        %vm474 = vsmask.f32 4368
        %vm475 = vmor %vm234, %vm474
        %v477 = vshrl.u32 %v442, 16
        %v479 = vrot.slane %v477, 7
        %v480 = vshll.u32 %v442, 16
        %v482 = vor.u32 %v479, %v480
        %v483 = vrot.slane %v479, 4
        %v485 = vshrl.u32 %v443, 16
        %v487 = vrot.slane %v485, 7
        %v488 = vshll.u32 %v443, 16
        %v490 = vor.u32 %v487, %v488
        %v491 = vsel %vm475, %v483, %v490
        %v492 = vrot.slane %v487, 4
        %v494 = vshrl.u32 %v444, 16
        %v496 = vrot.slane %v494, 7
        %v497 = vshll.u32 %v444, 16
        %v499 = vor.u32 %v496, %v497
        %v500 = vrot.slane %v496, 4
        %v502 = vshrl.u32 %v445, 16
        %v504 = vrot.slane %v502, 7
        %v505 = vshll.u32 %v445, 16
        %v507 = vor.u32 %v504, %v505
        %v508 = vsel %vm475, %v500, %v507
        %v509 = vrot.slane %v504, 4
        %v511 = vshrl.u32 %v446, 16
        %v513 = vrot.slane %v511, 7
        %v514 = vshll.u32 %v446, 16
        %v516 = vor.u32 %v513, %v514
        %v517 = vrot.slane %v513, 4
        %v519 = vshrl.u32 %v447, 16
        %v521 = vrot.slane %v519, 7
        %v522 = vshll.u32 %v447, 16
        %v524 = vor.u32 %v521, %v522
        %v525 = vsel %vm475, %v517, %v524
        %v526 = vrot.slane %v521, 4
        %v528 = vshrl.u32 %v448, 16
        %v530 = vrot.slane %v528, 7
        %v531 = vshll.u32 %v448, 16
        %v533 = vor.u32 %v530, %v531
        %v534 = vrot.slane %v530, 4
        %v536 = vshrl.u32 %v449, 16
        %v538 = vrot.slane %v536, 7
        %v539 = vshll.u32 %v449, 16
        %v541 = vor.u32 %v538, %v539
        %v542 = vsel %vm475, %v534, %v541
        %v543 = vrot.slane %v538, 4
        %v545 = vshrl.u32 %v450, 16
        %v547 = vrot.slane %v545, 7
        %v548 = vshll.u32 %v450, 16
        %v550 = vor.u32 %v547, %v548
        %v551 = vrot.slane %v547, 4
        %v553 = vshrl.u32 %v451, 16
        %v555 = vrot.slane %v553, 7
        %v556 = vshll.u32 %v451, 16
        %v558 = vor.u32 %v555, %v556
        %v559 = vsel %vm475, %v551, %v558
        %v560 = vrot.slane %v555, 4
        %v562 = vshrl.u32 %v452, 16
        %v564 = vrot.slane %v562, 7
        %v565 = vshll.u32 %v452, 16
        %v567 = vor.u32 %v564, %v565
        %v568 = vrot.slane %v564, 4
        %v570 = vshrl.u32 %v453, 16
        %v572 = vrot.slane %v570, 7
        %v573 = vshll.u32 %v453, 16
        %v575 = vor.u32 %v572, %v573
        %v576 = vsel %vm475, %v568, %v575
        %v577 = vrot.slane %v572, 4
        %v579 = vshrl.u32 %v454, 16
        %v581 = vrot.slane %v579, 7
        %v582 = vshll.u32 %v454, 16
        %v584 = vor.u32 %v581, %v582
        %v585 = vrot.slane %v581, 4
        %v587 = vshrl.u32 %v455, 16
        %v589 = vrot.slane %v587, 7
        %v590 = vshll.u32 %v455, 16
        %v592 = vor.u32 %v589, %v590
        %v593 = vsel %vm475, %v585, %v592
        %v594 = vrot.slane %v589, 4
        %v596 = vshrl.u32 %v456, 16
        %v598 = vrot.slane %v596, 7
        %v599 = vshll.u32 %v456, 16
        %v601 = vor.u32 %v598, %v599
        %v602 = vrot.slane %v598, 4
        %v604 = vshrl.u32 %v457, 16
        %v606 = vrot.slane %v604, 7
        %v607 = vshll.u32 %v457, 16
        %v609 = vor.u32 %v606, %v607
        %v610 = vsel %vm475, %v602, %v609
        %v611 = vrot.slane %v606, 4
        %v613 = vshrl.u32 %v458, 16
        %v615 = vrot.slane %v613, 7
        %v616 = vshll.u32 %v458, 16
        %v618 = vor.u32 %v615, %v616
        %v619 = vrot.slane %v615, 4
        %v621 = vshrl.u32 %v459, 16
        %v623 = vrot.slane %v621, 7
        %v624 = vshll.u32 %v459, 16
        %v626 = vor.u32 %v623, %v624
        %v627 = vsel %vm475, %v619, %v626
        %v628 = vrot.slane %v623, 4
        %v630 = vshrl.u32 %v460, 16
        %v632 = vrot.slane %v630, 7
        %v633 = vshll.u32 %v460, 16
        %v635 = vor.u32 %v632, %v633
        %v636 = vrot.slane %v632, 4
        %v638 = vshrl.u32 %v461, 16
        %v640 = vrot.slane %v638, 7
        %v641 = vshll.u32 %v461, 16
        %v643 = vor.u32 %v640, %v641
        %v644 = vsel %vm475, %v636, %v643
        %v645 = vrot.slane %v640, 4
        %v647 = vshrl.u32 %v462, 16
        %v649 = vrot.slane %v647, 7
        %v650 = vshll.u32 %v462, 16
        %v652 = vor.u32 %v649, %v650
        %v653 = vrot.slane %v649, 4
        %v655 = vshrl.u32 %v463, 16
        %v657 = vrot.slane %v655, 7
        %v658 = vshll.u32 %v463, 16
        %v660 = vor.u32 %v657, %v658
        %v661 = vsel %vm475, %v653, %v660
        %v662 = vrot.slane %v657, 4
        %v664 = vshrl.u32 %v464, 16
        %v666 = vrot.slane %v664, 7
        %v667 = vshll.u32 %v464, 16
        %v669 = vor.u32 %v666, %v667
        %v670 = vrot.slane %v666, 4
        %v672 = vshrl.u32 %v465, 16
        %v674 = vrot.slane %v672, 7
        %v675 = vshll.u32 %v465, 16
        %v677 = vor.u32 %v674, %v675
        %v678 = vsel %vm475, %v670, %v677
        %v679 = vrot.slane %v674, 4
        %v681 = vshrl.u32 %v466, 16
        %v683 = vrot.slane %v681, 7
        %v684 = vshll.u32 %v466, 16
        %v686 = vor.u32 %v683, %v684
        %v687 = vrot.slane %v683, 4
        %v689 = vshrl.u32 %v467, 16
        %v691 = vrot.slane %v689, 7
        %v692 = vshll.u32 %v467, 16
        %v694 = vor.u32 %v691, %v692
        %v695 = vsel %vm475, %v687, %v694
        %v696 = vrot.slane %v691, 4
        %v698 = vshrl.u32 %v468, 16
        %v700 = vrot.slane %v698, 7
        %v701 = vshll.u32 %v468, 16
        %v703 = vor.u32 %v700, %v701
        %v704 = vrot.slane %v700, 4
        %v706 = vshrl.u32 %v469, 16
        %v708 = vrot.slane %v706, 7
        %v709 = vshll.u32 %v469, 16
        %v711 = vor.u32 %v708, %v709
        %v712 = vsel %vm475, %v704, %v711
        %v713 = vrot.slane %v708, 4
        %v715 = vshrl.u32 %v470, 16
        %v717 = vrot.slane %v715, 7
        %v718 = vshll.u32 %v470, 16
        %v720 = vor.u32 %v717, %v718
        %v721 = vrot.slane %v717, 4
        %v723 = vshrl.u32 %v471, 16
        %v725 = vrot.slane %v723, 7
        %v726 = vshll.u32 %v471, 16
        %v728 = vor.u32 %v725, %v726
        %v729 = vsel %vm475, %v721, %v728
        %v730 = vrot.slane %v725, 4
        %v732 = vshrl.u32 %v472, 16
        %v734 = vrot.slane %v732, 7
        %v735 = vshll.u32 %v472, 16
        %v737 = vor.u32 %v734, %v735
        %v738 = vrot.slane %v734, 4
        %v740 = vshrl.u32 %v473, 16
        %v742 = vrot.slane %v740, 7
        %v743 = vshll.u32 %v473, 16
        %v745 = vor.u32 %v742, %v743
        %v746 = vsel %vm475, %v738, %v745
        %v747 = vrot.slane %v742, 4
        %s796 = scalar_lea.vmem [#allocation2], 12
        %vm797 = vcmask 19456
        %vm798 = vmand %vm797, %vm290
        %v799 = vld [vmem:[%s796] sm:$0xf]
        %v800 = vsel %vm798, %v482, %v799
        %801 = vst [vmem:[%s796] sm:$0xf] %v800
        %802 = vst.msk [vmem:[%s796 + $0x4] sm:$0xf] %vm224, %v491
        %v803 = vld [vmem:[%s796 + $0x8] sm:$0x1]
        %v804 = vsel %vm235, %v492, %v803
        %805 = vst [vmem:[%s796 + $0x8] sm:$0x1] %v804
        %v806 = vld [vmem:[%s796 + $0xc] sm:$0xf]
        %v807 = vsel %vm798, %v499, %v806
        %808 = vst [vmem:[%s796 + $0xc] sm:$0xf] %v807
        %809 = vst.msk [vmem:[%s796 + $0x10] sm:$0xf] %vm224, %v508
        %v810 = vld [vmem:[%s796 + $0x14] sm:$0x1]
        %v811 = vsel %vm235, %v509, %v810
        %812 = vst [vmem:[%s796 + $0x14] sm:$0x1] %v811
        %v813 = vld [vmem:[%s796 + $0x18] sm:$0xf]
        %v814 = vsel %vm798, %v516, %v813
        %815 = vst [vmem:[%s796 + $0x18] sm:$0xf] %v814
        %816 = vst.msk [vmem:[%s796 + $0x1c] sm:$0xf] %vm224, %v525
        %v817 = vld [vmem:[%s796 + $0x20] sm:$0x1]
        %v818 = vsel %vm235, %v526, %v817
        %819 = vst [vmem:[%s796 + $0x20] sm:$0x1] %v818
        %v820 = vld [vmem:[%s796 + $0x24] sm:$0xf]
        %v821 = vsel %vm798, %v533, %v820
        %822 = vst [vmem:[%s796 + $0x24] sm:$0xf] %v821
        %823 = vst.msk [vmem:[%s796 + $0x28] sm:$0xf] %vm224, %v542
        %v824 = vld [vmem:[%s796 + $0x2c] sm:$0x1]
        %v825 = vsel %vm235, %v543, %v824
        %826 = vst [vmem:[%s796 + $0x2c] sm:$0x1] %v825
        %v827 = vld [vmem:[%s796 + $0x30] sm:$0xf]
        %v828 = vsel %vm798, %v550, %v827
        %829 = vst [vmem:[%s796 + $0x30] sm:$0xf] %v828
        %830 = vst.msk [vmem:[%s796 + $0x34] sm:$0xf] %vm224, %v559
        %v831 = vld [vmem:[%s796 + $0x38] sm:$0x1]
        %v832 = vsel %vm235, %v560, %v831
        %833 = vst [vmem:[%s796 + $0x38] sm:$0x1] %v832
        %v834 = vld [vmem:[%s796 + $0x3c] sm:$0xf]
        %v835 = vsel %vm798, %v567, %v834
        %836 = vst [vmem:[%s796 + $0x3c] sm:$0xf] %v835
        %837 = vst.msk [vmem:[%s796 + $0x40] sm:$0xf] %vm224, %v576
        %v838 = vld [vmem:[%s796 + $0x44] sm:$0x1]
        %v839 = vsel %vm235, %v577, %v838
        %840 = vst [vmem:[%s796 + $0x44] sm:$0x1] %v839
        %v841 = vld [vmem:[%s796 + $0x48] sm:$0xf]
        %v842 = vsel %vm798, %v584, %v841
        %843 = vst [vmem:[%s796 + $0x48] sm:$0xf] %v842
        %844 = vst.msk [vmem:[%s796 + $0x4c] sm:$0xf] %vm224, %v593
        %v845 = vld [vmem:[%s796 + $0x50] sm:$0x1]
        %v846 = vsel %vm235, %v594, %v845
        %847 = vst [vmem:[%s796 + $0x50] sm:$0x1] %v846
        %v848 = vld [vmem:[%s796 + $0x54] sm:$0xf]
        %v849 = vsel %vm798, %v601, %v848
        %850 = vst [vmem:[%s796 + $0x54] sm:$0xf] %v849
        %851 = vst.msk [vmem:[%s796 + $0x58] sm:$0xf] %vm224, %v610
        %v852 = vld [vmem:[%s796 + $0x5c] sm:$0x1]
        %v853 = vsel %vm235, %v611, %v852
        %854 = vst [vmem:[%s796 + $0x5c] sm:$0x1] %v853
        %v855 = vld [vmem:[%s796 + $0x60] sm:$0xf]
        %v856 = vsel %vm798, %v618, %v855
        %857 = vst [vmem:[%s796 + $0x60] sm:$0xf] %v856
        %858 = vst.msk [vmem:[%s796 + $0x64] sm:$0xf] %vm224, %v627
        %v859 = vld [vmem:[%s796 + $0x68] sm:$0x1]
        %v860 = vsel %vm235, %v628, %v859
        %861 = vst [vmem:[%s796 + $0x68] sm:$0x1] %v860
        %v862 = vld [vmem:[%s796 + $0x6c] sm:$0xf]
        %v863 = vsel %vm798, %v635, %v862
        %864 = vst [vmem:[%s796 + $0x6c] sm:$0xf] %v863
        %865 = vst.msk [vmem:[%s796 + $0x70] sm:$0xf] %vm224, %v644
        %v866 = vld [vmem:[%s796 + $0x74] sm:$0x1]
        %v867 = vsel %vm235, %v645, %v866
        %868 = vst [vmem:[%s796 + $0x74] sm:$0x1] %v867
        %v869 = vld [vmem:[%s796 + $0x78] sm:$0xf]
        %v870 = vsel %vm798, %v652, %v869
        %871 = vst [vmem:[%s796 + $0x78] sm:$0xf] %v870
        %872 = vst.msk [vmem:[%s796 + $0x7c] sm:$0xf] %vm224, %v661
        %v873 = vld [vmem:[%s796 + $0x80] sm:$0x1]
        %v874 = vsel %vm235, %v662, %v873
        %875 = vst [vmem:[%s796 + $0x80] sm:$0x1] %v874
        %v876 = vld [vmem:[%s796 + $0x84] sm:$0xf]
        %v877 = vsel %vm798, %v669, %v876
        %878 = vst [vmem:[%s796 + $0x84] sm:$0xf] %v877
        %879 = vst.msk [vmem:[%s796 + $0x88] sm:$0xf] %vm224, %v678
        %v880 = vld [vmem:[%s796 + $0x8c] sm:$0x1]
        %v881 = vsel %vm235, %v679, %v880
        %882 = vst [vmem:[%s796 + $0x8c] sm:$0x1] %v881
        %v883 = vld [vmem:[%s796 + $0x90] sm:$0xf]
        %v884 = vsel %vm798, %v686, %v883
        %885 = vst [vmem:[%s796 + $0x90] sm:$0xf] %v884
        %886 = vst.msk [vmem:[%s796 + $0x94] sm:$0xf] %vm224, %v695
        %v887 = vld [vmem:[%s796 + $0x98] sm:$0x1]
        %v888 = vsel %vm235, %v696, %v887
        %889 = vst [vmem:[%s796 + $0x98] sm:$0x1] %v888
        %v890 = vld [vmem:[%s796 + $0x9c] sm:$0xf]
        %v891 = vsel %vm798, %v703, %v890
        %892 = vst [vmem:[%s796 + $0x9c] sm:$0xf] %v891
        %893 = vst.msk [vmem:[%s796 + $0xa0] sm:$0xf] %vm224, %v712
        %v894 = vld [vmem:[%s796 + $0xa4] sm:$0x1]
        %v895 = vsel %vm235, %v713, %v894
        %896 = vst [vmem:[%s796 + $0xa4] sm:$0x1] %v895
        %v897 = vld [vmem:[%s796 + $0xa8] sm:$0xf]
        %v898 = vsel %vm798, %v720, %v897
        %899 = vst [vmem:[%s796 + $0xa8] sm:$0xf] %v898
        %900 = vst.msk [vmem:[%s796 + $0xac] sm:$0xf] %vm224, %v729
        %v901 = vld [vmem:[%s796 + $0xb0] sm:$0x1]
        %v902 = vsel %vm235, %v730, %v901
        %903 = vst [vmem:[%s796 + $0xb0] sm:$0x1] %v902
        %v904 = vld [vmem:[%s796 + $0xb4] sm:$0xf]
        %v905 = vsel %vm798, %v737, %v904
        %906 = vst [vmem:[%s796 + $0xb4] sm:$0xf] %v905
        %907 = vst.msk [vmem:[%s796 + $0xb8] sm:$0xf] %vm224, %v746
        %v908 = vld [vmem:[%s796 + $0xbc] sm:$0x1]
        %v909 = vsel %vm235, %v747, %v908
        %910 = vst [vmem:[%s796 + $0xbc] sm:$0x1] %v909
        %v911 = vld [vmem:[#allocation2] sm:$0xf]
        %v912 = vld [vmem:[#allocation2 + $0x4] sm:$0xf]
        %v913 = vld [vmem:[#allocation2 + $0xc] sm:$0xf]
        %v914 = vld [vmem:[#allocation2 + $0x10] sm:$0xf]
        %v915 = vld [vmem:[#allocation2 + $0x18] sm:$0xf]
        %v916 = vld [vmem:[#allocation2 + $0x1c] sm:$0xf]
        %v917 = vld [vmem:[#allocation2 + $0x24] sm:$0xf]
        %v918 = vld [vmem:[#allocation2 + $0x28] sm:$0xf]
        %v919 = vld [vmem:[#allocation2 + $0x30] sm:$0xf]
        %v920 = vld [vmem:[#allocation2 + $0x34] sm:$0xf]
        %v921 = vld [vmem:[#allocation2 + $0x3c] sm:$0xf]
        %v922 = vld [vmem:[#allocation2 + $0x40] sm:$0xf]
        %v923 = vld [vmem:[#allocation2 + $0x48] sm:$0xf]
        %v924 = vld [vmem:[#allocation2 + $0x4c] sm:$0xf]
        %v925 = vld [vmem:[#allocation2 + $0x54] sm:$0xf]
        %v926 = vld [vmem:[#allocation2 + $0x58] sm:$0xf]
        %v927 = vld [vmem:[#allocation2 + $0x60] sm:$0xf]
        %v928 = vld [vmem:[#allocation2 + $0x64] sm:$0xf]
        %v929 = vld [vmem:[#allocation2 + $0x6c] sm:$0xf]
        %v930 = vld [vmem:[#allocation2 + $0x70] sm:$0xf]
        %v931 = vld [vmem:[#allocation2 + $0x78] sm:$0xf]
        %v932 = vld [vmem:[#allocation2 + $0x7c] sm:$0xf]
        %v933 = vld [vmem:[#allocation2 + $0x84] sm:$0xf]
        %v934 = vld [vmem:[#allocation2 + $0x88] sm:$0xf]
        %v935 = vld [vmem:[#allocation2 + $0x90] sm:$0xf]
        %v936 = vld [vmem:[#allocation2 + $0x94] sm:$0xf]
        %v937 = vld [vmem:[#allocation2 + $0x9c] sm:$0xf]
        %v938 = vld [vmem:[#allocation2 + $0xa0] sm:$0xf]
        %v939 = vld [vmem:[#allocation2 + $0xa8] sm:$0xf]
        %v940 = vld [vmem:[#allocation2 + $0xac] sm:$0xf]
        %v941 = vld [vmem:[#allocation2 + $0xb4] sm:$0xf]
        %v942 = vld [vmem:[#allocation2 + $0xb8] sm:$0xf]
        %v943 = vld [vmem:[%s1] sm:$0x3]
        %v944 = vld [vmem:[#allocation2 + $0x8] sm:$0x1]
        %v945 = vld [vmem:[#allocation2 + $0x14] sm:$0x1]
        %v946 = vld [vmem:[#allocation2 + $0x20] sm:$0x1]
        %v947 = vld [vmem:[#allocation2 + $0x2c] sm:$0x1]
        %v948 = vld [vmem:[#allocation2 + $0x38] sm:$0x1]
        %v949 = vld [vmem:[#allocation2 + $0x44] sm:$0x1]
        %v950 = vld [vmem:[#allocation2 + $0x50] sm:$0x1]
        %v951 = vld [vmem:[#allocation2 + $0x5c] sm:$0x1]
        %v952 = vld [vmem:[#allocation2 + $0x68] sm:$0x1]
        %v953 = vld [vmem:[#allocation2 + $0x74] sm:$0x1]
        %v954 = vld [vmem:[#allocation2 + $0x80] sm:$0x1]
        %v955 = vld [vmem:[#allocation2 + $0x8c] sm:$0x1]
        %v956 = vld [vmem:[#allocation2 + $0x98] sm:$0x1]
        %v957 = vld [vmem:[#allocation2 + $0xa4] sm:$0x1]
        %v958 = vld [vmem:[#allocation2 + $0xb0] sm:$0x1]
        %v959 = vld [vmem:[#allocation2 + $0xbc] sm:$0x1]
        %vm960 = vsmask.f32 3328
        %vm961 = vsmask.f32 7440
        %vm962 = vmor %vm960, %vm961
        %v964 = vshrl.u32 %v911, 16
        %v966 = vrot.slane %v964, 4
        %v967 = vshll.u32 %v911, 16
        %v969 = vrot.slane %v967, 5
        %v970 = vor.u32 %v966, %v969
        %v971 = vrot.slane %v970, 4
        %v973 = vshll.u32 %v912, 16
        %v975 = vrot.slane %v973, 5
        %v976 = vsel %vm962, %v971, %v975
        %v977 = vshrl.u32 %v912, 16
        %v979 = vrot.slane %v977, 4
        %v980 = vor.u32 %v979, %v975
        %v981 = vrot.slane %v980, 4
        %v983 = vshll.u32 %v944, 16
        %v985 = vrot.slane %v983, 5
        %v986 = vsel %vm962, %v981, %v985
        %v988 = vshrl.u32 %v913, 16
        %v990 = vrot.slane %v988, 4
        %v991 = vshll.u32 %v913, 16
        %v993 = vrot.slane %v991, 5
        %v994 = vor.u32 %v990, %v993
        %v995 = vrot.slane %v994, 4
        %v997 = vshll.u32 %v914, 16
        %v999 = vrot.slane %v997, 5
        %v1000 = vsel %vm962, %v995, %v999
        %v1001 = vshrl.u32 %v914, 16
        %v1003 = vrot.slane %v1001, 4
        %v1004 = vor.u32 %v1003, %v999
        %v1005 = vrot.slane %v1004, 4
        %v1007 = vshll.u32 %v945, 16
        %v1009 = vrot.slane %v1007, 5
        %v1010 = vsel %vm962, %v1005, %v1009
        %v1012 = vshrl.u32 %v915, 16
        %v1014 = vrot.slane %v1012, 4
        %v1015 = vshll.u32 %v915, 16
        %v1017 = vrot.slane %v1015, 5
        %v1018 = vor.u32 %v1014, %v1017
        %v1019 = vrot.slane %v1018, 4
        %v1021 = vshll.u32 %v916, 16
        %v1023 = vrot.slane %v1021, 5
        %v1024 = vsel %vm962, %v1019, %v1023
        %v1025 = vshrl.u32 %v916, 16
        %v1027 = vrot.slane %v1025, 4
        %v1028 = vor.u32 %v1027, %v1023
        %v1029 = vrot.slane %v1028, 4
        %v1031 = vshll.u32 %v946, 16
        %v1033 = vrot.slane %v1031, 5
        %v1034 = vsel %vm962, %v1029, %v1033
        %v1036 = vshrl.u32 %v917, 16
        %v1038 = vrot.slane %v1036, 4
        %v1039 = vshll.u32 %v917, 16
        %v1041 = vrot.slane %v1039, 5
        %v1042 = vor.u32 %v1038, %v1041
        %v1043 = vrot.slane %v1042, 4
        %v1045 = vshll.u32 %v918, 16
        %v1047 = vrot.slane %v1045, 5
        %v1048 = vsel %vm962, %v1043, %v1047
        %v1049 = vshrl.u32 %v918, 16
        %v1051 = vrot.slane %v1049, 4
        %v1052 = vor.u32 %v1051, %v1047
        %v1053 = vrot.slane %v1052, 4
        %v1055 = vshll.u32 %v947, 16
        %v1057 = vrot.slane %v1055, 5
        %v1058 = vsel %vm962, %v1053, %v1057
        %v1060 = vshrl.u32 %v919, 16
        %v1062 = vrot.slane %v1060, 4
        %v1063 = vshll.u32 %v919, 16
        %v1065 = vrot.slane %v1063, 5
        %v1066 = vor.u32 %v1062, %v1065
        %v1067 = vrot.slane %v1066, 4
        %v1069 = vshll.u32 %v920, 16
        %v1071 = vrot.slane %v1069, 5
        %v1072 = vsel %vm962, %v1067, %v1071
        %v1073 = vshrl.u32 %v920, 16
        %v1075 = vrot.slane %v1073, 4
        %v1076 = vor.u32 %v1075, %v1071
        %v1077 = vrot.slane %v1076, 4
        %v1079 = vshll.u32 %v948, 16
        %v1081 = vrot.slane %v1079, 5
        %v1082 = vsel %vm962, %v1077, %v1081
        %v1084 = vshrl.u32 %v921, 16
        %v1086 = vrot.slane %v1084, 4
        %v1087 = vshll.u32 %v921, 16
        %v1089 = vrot.slane %v1087, 5
        %v1090 = vor.u32 %v1086, %v1089
        %v1091 = vrot.slane %v1090, 4
        %v1093 = vshll.u32 %v922, 16
        %v1095 = vrot.slane %v1093, 5
        %v1096 = vsel %vm962, %v1091, %v1095
        %v1097 = vshrl.u32 %v922, 16
        %v1099 = vrot.slane %v1097, 4
        %v1100 = vor.u32 %v1099, %v1095
        %v1101 = vrot.slane %v1100, 4
        %v1103 = vshll.u32 %v949, 16
        %v1105 = vrot.slane %v1103, 5
        %v1106 = vsel %vm962, %v1101, %v1105
        %v1108 = vshrl.u32 %v923, 16
        %v1110 = vrot.slane %v1108, 4
        %v1111 = vshll.u32 %v923, 16
        %v1113 = vrot.slane %v1111, 5
        %v1114 = vor.u32 %v1110, %v1113
        %v1115 = vrot.slane %v1114, 4
        %v1117 = vshll.u32 %v924, 16
        %v1119 = vrot.slane %v1117, 5
        %v1120 = vsel %vm962, %v1115, %v1119
        %v1121 = vshrl.u32 %v924, 16
        %v1123 = vrot.slane %v1121, 4
        %v1124 = vor.u32 %v1123, %v1119
        %v1125 = vrot.slane %v1124, 4
        %v1127 = vshll.u32 %v950, 16
        %v1129 = vrot.slane %v1127, 5
        %v1130 = vsel %vm962, %v1125, %v1129
        %v1132 = vshrl.u32 %v925, 16
        %v1134 = vrot.slane %v1132, 4
        %v1135 = vshll.u32 %v925, 16
        %v1137 = vrot.slane %v1135, 5
        %v1138 = vor.u32 %v1134, %v1137
        %v1139 = vrot.slane %v1138, 4
        %v1141 = vshll.u32 %v926, 16
        %v1143 = vrot.slane %v1141, 5
        %v1144 = vsel %vm962, %v1139, %v1143
        %v1145 = vshrl.u32 %v926, 16
        %v1147 = vrot.slane %v1145, 4
        %v1148 = vor.u32 %v1147, %v1143
        %v1149 = vrot.slane %v1148, 4
        %v1151 = vshll.u32 %v951, 16
        %v1153 = vrot.slane %v1151, 5
        %v1154 = vsel %vm962, %v1149, %v1153
        %v1156 = vshrl.u32 %v927, 16
        %v1158 = vrot.slane %v1156, 4
        %v1159 = vshll.u32 %v927, 16
        %v1161 = vrot.slane %v1159, 5
        %v1162 = vor.u32 %v1158, %v1161
        %v1163 = vrot.slane %v1162, 4
        %v1165 = vshll.u32 %v928, 16
        %v1167 = vrot.slane %v1165, 5
        %v1168 = vsel %vm962, %v1163, %v1167
        %v1169 = vshrl.u32 %v928, 16
        %v1171 = vrot.slane %v1169, 4
        %v1172 = vor.u32 %v1171, %v1167
        %v1173 = vrot.slane %v1172, 4
        %v1175 = vshll.u32 %v952, 16
        %v1177 = vrot.slane %v1175, 5
        %v1178 = vsel %vm962, %v1173, %v1177
        %v1180 = vshrl.u32 %v929, 16
        %v1182 = vrot.slane %v1180, 4
        %v1183 = vshll.u32 %v929, 16
        %v1185 = vrot.slane %v1183, 5
        %v1186 = vor.u32 %v1182, %v1185
        %v1187 = vrot.slane %v1186, 4
        %v1189 = vshll.u32 %v930, 16
        %v1191 = vrot.slane %v1189, 5
        %v1192 = vsel %vm962, %v1187, %v1191
        %v1193 = vshrl.u32 %v930, 16
        %v1195 = vrot.slane %v1193, 4
        %v1196 = vor.u32 %v1195, %v1191
        %v1197 = vrot.slane %v1196, 4
        %v1199 = vshll.u32 %v953, 16
        %v1201 = vrot.slane %v1199, 5
        %v1202 = vsel %vm962, %v1197, %v1201
        %v1204 = vshrl.u32 %v931, 16
        %v1206 = vrot.slane %v1204, 4
        %v1207 = vshll.u32 %v931, 16
        %v1209 = vrot.slane %v1207, 5
        %v1210 = vor.u32 %v1206, %v1209
        %v1211 = vrot.slane %v1210, 4
        %v1213 = vshll.u32 %v932, 16
        %v1215 = vrot.slane %v1213, 5
        %v1216 = vsel %vm962, %v1211, %v1215
        %v1217 = vshrl.u32 %v932, 16
        %v1219 = vrot.slane %v1217, 4
        %v1220 = vor.u32 %v1219, %v1215
        %v1221 = vrot.slane %v1220, 4
        %v1223 = vshll.u32 %v954, 16
        %v1225 = vrot.slane %v1223, 5
        %v1226 = vsel %vm962, %v1221, %v1225
        %v1228 = vshrl.u32 %v933, 16
        %v1230 = vrot.slane %v1228, 4
        %v1231 = vshll.u32 %v933, 16
        %v1233 = vrot.slane %v1231, 5
        %v1234 = vor.u32 %v1230, %v1233
        %v1235 = vrot.slane %v1234, 4
        %v1237 = vshll.u32 %v934, 16
        %v1239 = vrot.slane %v1237, 5
        %v1240 = vsel %vm962, %v1235, %v1239
        %v1241 = vshrl.u32 %v934, 16
        %v1243 = vrot.slane %v1241, 4
        %v1244 = vor.u32 %v1243, %v1239
        %v1245 = vrot.slane %v1244, 4
        %v1247 = vshll.u32 %v955, 16
        %v1249 = vrot.slane %v1247, 5
        %v1250 = vsel %vm962, %v1245, %v1249
        %v1252 = vshrl.u32 %v935, 16
        %v1254 = vrot.slane %v1252, 4
        %v1255 = vshll.u32 %v935, 16
        %v1257 = vrot.slane %v1255, 5
        %v1258 = vor.u32 %v1254, %v1257
        %v1259 = vrot.slane %v1258, 4
        %v1261 = vshll.u32 %v936, 16
        %v1263 = vrot.slane %v1261, 5
        %v1264 = vsel %vm962, %v1259, %v1263
        %v1265 = vshrl.u32 %v936, 16
        %v1267 = vrot.slane %v1265, 4
        %v1268 = vor.u32 %v1267, %v1263
        %v1269 = vrot.slane %v1268, 4
        %v1271 = vshll.u32 %v956, 16
        %v1273 = vrot.slane %v1271, 5
        %v1274 = vsel %vm962, %v1269, %v1273
        %v1276 = vshrl.u32 %v937, 16
        %v1278 = vrot.slane %v1276, 4
        %v1279 = vshll.u32 %v937, 16
        %v1281 = vrot.slane %v1279, 5
        %v1282 = vor.u32 %v1278, %v1281
        %v1283 = vrot.slane %v1282, 4
        %v1285 = vshll.u32 %v938, 16
        %v1287 = vrot.slane %v1285, 5
        %v1288 = vsel %vm962, %v1283, %v1287
        %v1289 = vshrl.u32 %v938, 16
        %v1291 = vrot.slane %v1289, 4
        %v1292 = vor.u32 %v1291, %v1287
        %v1293 = vrot.slane %v1292, 4
        %v1295 = vshll.u32 %v957, 16
        %v1297 = vrot.slane %v1295, 5
        %v1298 = vsel %vm962, %v1293, %v1297
        %v1300 = vshrl.u32 %v939, 16
        %v1302 = vrot.slane %v1300, 4
        %v1303 = vshll.u32 %v939, 16
        %v1305 = vrot.slane %v1303, 5
        %v1306 = vor.u32 %v1302, %v1305
        %v1307 = vrot.slane %v1306, 4
        %v1309 = vshll.u32 %v940, 16
        %v1311 = vrot.slane %v1309, 5
        %v1312 = vsel %vm962, %v1307, %v1311
        %v1313 = vshrl.u32 %v940, 16
        %v1315 = vrot.slane %v1313, 4
        %v1316 = vor.u32 %v1315, %v1311
        %v1317 = vrot.slane %v1316, 4
        %v1319 = vshll.u32 %v958, 16
        %v1321 = vrot.slane %v1319, 5
        %v1322 = vsel %vm962, %v1317, %v1321
        %v1324 = vshrl.u32 %v941, 16
        %v1326 = vrot.slane %v1324, 4
        %v1327 = vshll.u32 %v941, 16
        %v1329 = vrot.slane %v1327, 5
        %v1330 = vor.u32 %v1326, %v1329
        %v1331 = vrot.slane %v1330, 4
        %v1333 = vshll.u32 %v942, 16
        %v1335 = vrot.slane %v1333, 5
        %v1336 = vsel %vm962, %v1331, %v1335
        %v1337 = vshrl.u32 %v942, 16
        %v1339 = vrot.slane %v1337, 4
        %v1340 = vor.u32 %v1339, %v1335
        %v1341 = vrot.slane %v1340, 4
        %v1343 = vshll.u32 %v959, 16
        %v1345 = vrot.slane %v1343, 5
        %v1346 = vsel %vm962, %v1341, %v1345
        %s1347 = scalar_lea.vmem %s1, 2
        %v1348 = vld [vmem:[%s1347] sm:$0x3]
        %v1349 = vunpack.c.l.b16 %v976
        %v1350 = vunpack.c.l.b16 %v986
        %v1351 = vunpack.c.l.b16 %v1000
        %v1352 = vunpack.c.l.b16 %v1010
        %v1353 = vunpack.c.l.b16 %v1024
        %v1354 = vunpack.c.l.b16 %v1034
        %v1355 = vunpack.c.l.b16 %v1048
        %v1356 = vunpack.c.l.b16 %v1058
        %v1357 = vunpack.c.l.b16 %v1072
        %v1358 = vunpack.c.l.b16 %v1082
        %v1359 = vunpack.c.l.b16 %v1096
        %v1360 = vunpack.c.l.b16 %v1106
        %v1361 = vunpack.c.l.b16 %v1120
        %v1362 = vunpack.c.l.b16 %v1130
        %v1363 = vunpack.c.l.b16 %v1144
        %v1364 = vunpack.c.l.b16 %v1154
        %v1365 = vunpack.c.l.b16 %v1168
        %v1366 = vunpack.c.l.b16 %v1178
        %v1367 = vunpack.c.l.b16 %v1192
        %v1368 = vunpack.c.l.b16 %v1202
        %v1369 = vunpack.c.l.b16 %v1216
        %v1370 = vunpack.c.l.b16 %v1226
        %v1371 = vunpack.c.l.b16 %v1240
        %v1372 = vunpack.c.l.b16 %v1250
        %v1373 = vunpack.c.l.b16 %v1264
        %v1374 = vunpack.c.l.b16 %v1274
        %v1375 = vunpack.c.l.b16 %v1288
        %v1376 = vunpack.c.l.b16 %v1298
        %v1377 = vunpack.c.l.b16 %v1312
        %v1378 = vunpack.c.l.b16 %v1322
        %v1379 = vunpack.c.l.b16 %v1336
        %v1380 = vunpack.c.l.b16 %v1346
        %v1381 = vpack.c.b16 %v1350, %v1349
        %v1382 = vpack.c.b16 %v1352, %v1351
        %v1383 = vpack.c.b16 %v1354, %v1353
        %v1384 = vpack.c.b16 %v1356, %v1355
        %v1385 = vpack.c.b16 %v1358, %v1357
        %v1386 = vpack.c.b16 %v1360, %v1359
        %v1387 = vpack.c.b16 %v1362, %v1361
        %v1388 = vpack.c.b16 %v1364, %v1363
        %v1389 = vpack.c.b16 %v1366, %v1365
        %v1390 = vpack.c.b16 %v1368, %v1367
        %v1391 = vpack.c.b16 %v1370, %v1369
        %v1392 = vpack.c.b16 %v1372, %v1371
        %v1393 = vpack.c.b16 %v1374, %v1373
        %v1394 = vpack.c.b16 %v1376, %v1375
        %v1395 = vpack.c.b16 %v1378, %v1377
        %v1396 = vpack.c.b16 %v1380, %v1379
        %vm1397 = vcmask 23552
        %v1399 = vsel %vm1397, %v1381, 0
        %v1402 = vsel %vm1397, %v1382, 0
        %v1405 = vsel %vm1397, %v1383, 0
        %v1408 = vsel %vm1397, %v1384, 0
        %v1411 = vsel %vm1397, %v1385, 0
        %v1414 = vsel %vm1397, %v1386, 0
        %v1417 = vsel %vm1397, %v1387, 0
        %v1420 = vsel %vm1397, %v1388, 0
        %v1423 = vsel %vm1397, %v1389, 0
        %v1426 = vsel %vm1397, %v1390, 0
        %v1429 = vsel %vm1397, %v1391, 0
        %v1432 = vsel %vm1397, %v1392, 0
        %v1435 = vsel %vm1397, %v1393, 0
        %v1438 = vsel %vm1397, %v1394, 0
        %v1441 = vsel %vm1397, %v1395, 0
        %v1444 = vsel %vm1397, %v1396, 0
        %vm1446 = vcmask 1040384
        %vm1447 = vcmask 1041408
        %v1448 = vsel %vm1446, 4294967295, 65535
        %v1449 = vsel %vm1447, %v1448, 0
        %v1451 = vand.u32 %v1348, %v1449
        %1453 = vmatprep.subr.bf16.mxu0 0
        %1454 = vmatpush1.bf16.msra.mxu0 0
        %1455 = vmatprep.subr.bf16.mxu0 0
        %1456 = vmatpush1.bf16.msra.mxu0 0
        %1457 = vmatprep.subr.bf16.mxu0 0
        %1458 = vmatpush1.bf16.msra.mxu0 0
        %1459 = vmatprep.subr.bf16.mxu0 0
        %1460 = vmatpush1.bf16.msra.mxu0 0
        %1461 = vmatprep.subr.bf16.mxu0 0
        %1462 = vmatpush1.bf16.msra.mxu0 0
        %1463 = vmatprep.subr.bf16.mxu0 0
        %1464 = vmatpush1.bf16.msra.mxu0 0
        %1465 = vmatprep.subr.bf16.mxu0 0
        %1466 = vmatpush1.bf16.msra.mxu0 0
        %1467 = vmatprep.subr.bf16.mxu0 0
        %1468 = vmatpush1.bf16.msra.mxu0 %v1451
        %1469 = vmatprep.subr.bf16.mxu0 0
        %1470 = vmatpush2.bf16.msra.mxu0 0
        %1471 = vmatprep.subr.bf16.mxu0 0
        %1472 = vmatpush2.bf16.msra.mxu0 0
        %1473 = vmatprep.subr.bf16.mxu0 0
        %1474 = vmatpush2.bf16.msra.mxu0 0
        %1475 = vmatprep.subr.bf16.mxu0 0
        %1476 = vmatpush2.bf16.msra.mxu0 0
        %1477 = vmatprep.subr.bf16.mxu0 0
        %1478 = vmatpush2.bf16.msra.mxu0 0
        %1479 = vmatprep.subr.bf16.mxu0 0
        %1480 = vmatpush2.bf16.msra.mxu0 0
        %1481 = vmatprep.subr.bf16.mxu0 0
        %1482 = vmatpush2.bf16.msra.mxu0 0
        %1483 = vmatprep.subr.bf16.mxu0 0
        %1484 = vmatpush2.bf16.msra.mxu0 0
        %1485 = vmatprep.mubr.bf16.mxu0 0
        %1486 = vmatmul.mubr.bf16.gmra.mxu0 %v1399
        %v1487 = vpop.f32.mrf.mxu0
        %v1488 = vadd.f32 0.0, %v1487
        %v1489 = vpop.f32.mrf.mxu0
        %v1490 = vpop.f32.mrf.mxu0
        %v1491 = vadd.f32 0.0, %v1490
        %v1492 = vpop.f32.mrf.mxu0
        %1493 = vmatprep.mubr.bf16.mxu0 0
        %1494 = vmatmul.mubr.bf16.gmra.mxu0 %v1402
        %v1495 = vpop.f32.mrf.mxu0
        %v1496 = vadd.f32 0.0, %v1495
        %v1497 = vpop.f32.mrf.mxu0
        %v1498 = vpop.f32.mrf.mxu0
        %v1499 = vadd.f32 0.0, %v1498
        %v1500 = vpop.f32.mrf.mxu0
        %1501 = vmatprep.mubr.bf16.mxu0 0
        %1502 = vmatmul.mubr.bf16.gmra.mxu0 %v1405
        %v1503 = vpop.f32.mrf.mxu0
        %v1504 = vadd.f32 0.0, %v1503
        %v1505 = vpop.f32.mrf.mxu0
        %v1506 = vpop.f32.mrf.mxu0
        %v1507 = vadd.f32 0.0, %v1506
        %v1508 = vpop.f32.mrf.mxu0
        %1509 = vmatprep.mubr.bf16.mxu0 0
        %1510 = vmatmul.mubr.bf16.gmra.mxu0 %v1408
        %v1511 = vpop.f32.mrf.mxu0
        %v1512 = vadd.f32 0.0, %v1511
        %v1513 = vpop.f32.mrf.mxu0
        %v1514 = vpop.f32.mrf.mxu0
        %v1515 = vadd.f32 0.0, %v1514
        %v1516 = vpop.f32.mrf.mxu0
        %1517 = vmatprep.mubr.bf16.mxu0 0
        %1518 = vmatmul.mubr.bf16.gmra.mxu0 %v1411
        %v1519 = vpop.f32.mrf.mxu0
        %v1520 = vadd.f32 0.0, %v1519
        %v1521 = vpop.f32.mrf.mxu0
        %v1522 = vpop.f32.mrf.mxu0
        %v1523 = vadd.f32 0.0, %v1522
        %v1524 = vpop.f32.mrf.mxu0
        %1525 = vmatprep.mubr.bf16.mxu0 0
        %1526 = vmatmul.mubr.bf16.gmra.mxu0 %v1414
        %v1527 = vpop.f32.mrf.mxu0
        %v1528 = vadd.f32 0.0, %v1527
        %v1529 = vpop.f32.mrf.mxu0
        %v1530 = vpop.f32.mrf.mxu0
        %v1531 = vadd.f32 0.0, %v1530
        %v1532 = vpop.f32.mrf.mxu0
        %1533 = vmatprep.mubr.bf16.mxu0 0
        %1534 = vmatmul.mubr.bf16.gmra.mxu0 %v1417
        %v1535 = vpop.f32.mrf.mxu0
        %v1536 = vadd.f32 0.0, %v1535
        %v1537 = vpop.f32.mrf.mxu0
        %v1538 = vpop.f32.mrf.mxu0
        %v1539 = vadd.f32 0.0, %v1538
        %v1540 = vpop.f32.mrf.mxu0
        %1541 = vmatprep.mubr.bf16.mxu0 0
        %1542 = vmatmul.mubr.bf16.gmra.mxu0 %v1420
        %v1543 = vpop.f32.mrf.mxu0
        %v1544 = vadd.f32 0.0, %v1543
        %v1545 = vpop.f32.mrf.mxu0
        %v1546 = vpop.f32.mrf.mxu0
        %v1547 = vadd.f32 0.0, %v1546
        %v1548 = vpop.f32.mrf.mxu0
        %1549 = vmatprep.mubr.bf16.mxu0 0
        %1550 = vmatmul.mubr.bf16.gmra.mxu0 %v1423
        %v1551 = vpop.f32.mrf.mxu0
        %v1552 = vadd.f32 0.0, %v1551
        %v1553 = vpop.f32.mrf.mxu0
        %v1554 = vpop.f32.mrf.mxu0
        %v1555 = vadd.f32 0.0, %v1554
        %v1556 = vpop.f32.mrf.mxu0
        %1557 = vmatprep.mubr.bf16.mxu0 0
        %1558 = vmatmul.mubr.bf16.gmra.mxu0 %v1426
        %v1559 = vpop.f32.mrf.mxu0
        %v1560 = vadd.f32 0.0, %v1559
        %v1561 = vpop.f32.mrf.mxu0
        %v1562 = vpop.f32.mrf.mxu0
        %v1563 = vadd.f32 0.0, %v1562
        %v1564 = vpop.f32.mrf.mxu0
        %1565 = vmatprep.mubr.bf16.mxu0 0
        %1566 = vmatmul.mubr.bf16.gmra.mxu0 %v1429
        %v1567 = vpop.f32.mrf.mxu0
        %v1568 = vadd.f32 0.0, %v1567
        %v1569 = vpop.f32.mrf.mxu0
        %v1570 = vpop.f32.mrf.mxu0
        %v1571 = vadd.f32 0.0, %v1570
        %v1572 = vpop.f32.mrf.mxu0
        %1573 = vmatprep.mubr.bf16.mxu0 0
        %1574 = vmatmul.mubr.bf16.gmra.mxu0 %v1432
        %v1575 = vpop.f32.mrf.mxu0
        %v1576 = vadd.f32 0.0, %v1575
        %v1577 = vpop.f32.mrf.mxu0
        %v1578 = vpop.f32.mrf.mxu0
        %v1579 = vadd.f32 0.0, %v1578
        %v1580 = vpop.f32.mrf.mxu0
        %1581 = vmatprep.mubr.bf16.mxu0 0
        %1582 = vmatmul.mubr.bf16.gmra.mxu0 %v1435
        %v1583 = vpop.f32.mrf.mxu0
        %v1584 = vadd.f32 0.0, %v1583
        %v1585 = vpop.f32.mrf.mxu0
        %v1586 = vpop.f32.mrf.mxu0
        %v1587 = vadd.f32 0.0, %v1586
        %v1588 = vpop.f32.mrf.mxu0
        %1589 = vmatprep.mubr.bf16.mxu0 0
        %1590 = vmatmul.mubr.bf16.gmra.mxu0 %v1438
        %v1591 = vpop.f32.mrf.mxu0
        %v1592 = vadd.f32 0.0, %v1591
        %v1593 = vpop.f32.mrf.mxu0
        %v1594 = vpop.f32.mrf.mxu0
        %v1595 = vadd.f32 0.0, %v1594
        %v1596 = vpop.f32.mrf.mxu0
        %1597 = vmatprep.mubr.bf16.mxu0 0
        %1598 = vmatmul.mubr.bf16.gmra.mxu0 %v1441
        %v1599 = vpop.f32.mrf.mxu0
        %v1600 = vadd.f32 0.0, %v1599
        %v1601 = vpop.f32.mrf.mxu0
        %v1602 = vpop.f32.mrf.mxu0
        %v1603 = vadd.f32 0.0, %v1602
        %v1604 = vpop.f32.mrf.mxu0
        %1605 = vmatprep.mubr.bf16.mxu0 0
        %1606 = vmatmul.mubr.bf16.gmra.mxu0 %v1444
        %v1607 = vpop.f32.mrf.mxu0
        %v1608 = vadd.f32 0.0, %v1607
        %v1609 = vpop.f32.mrf.mxu0
        %v1610 = vpop.f32.mrf.mxu0
        %v1611 = vadd.f32 0.0, %v1610
        %v1612 = vpop.f32.mrf.mxu0
        %1613 = vdwg.mxu0
        %v1646 = vunpack.c.l.b16 %v911
        %v1647 = vunpack.c.l.b16 %v912
        %v1648 = vunpack.c.l.b16 %v913
        %v1649 = vunpack.c.l.b16 %v914
        %v1650 = vunpack.c.l.b16 %v915
        %v1651 = vunpack.c.l.b16 %v916
        %v1652 = vunpack.c.l.b16 %v917
        %v1653 = vunpack.c.l.b16 %v918
        %v1654 = vunpack.c.l.b16 %v919
        %v1655 = vunpack.c.l.b16 %v920
        %v1656 = vunpack.c.l.b16 %v921
        %v1657 = vunpack.c.l.b16 %v922
        %v1658 = vunpack.c.l.b16 %v923
        %v1659 = vunpack.c.l.b16 %v924
        %v1660 = vunpack.c.l.b16 %v925
        %v1661 = vunpack.c.l.b16 %v926
        %v1662 = vunpack.c.l.b16 %v927
        %v1663 = vunpack.c.l.b16 %v928
        %v1664 = vunpack.c.l.b16 %v929
        %v1665 = vunpack.c.l.b16 %v930
        %v1666 = vunpack.c.l.b16 %v931
        %v1667 = vunpack.c.l.b16 %v932
        %v1668 = vunpack.c.l.b16 %v933
        %v1669 = vunpack.c.l.b16 %v934
        %v1670 = vunpack.c.l.b16 %v935
        %v1671 = vunpack.c.l.b16 %v936
        %v1672 = vunpack.c.l.b16 %v937
        %v1673 = vunpack.c.l.b16 %v938
        %v1674 = vunpack.c.l.b16 %v939
        %v1675 = vunpack.c.l.b16 %v940
        %v1676 = vunpack.c.l.b16 %v941
        %v1677 = vunpack.c.l.b16 %v942
        %v1678 = vpack.c.b16 %v1647, %v1646
        %v1679 = vpack.c.b16 %v1649, %v1648
        %v1680 = vpack.c.b16 %v1651, %v1650
        %v1681 = vpack.c.b16 %v1653, %v1652
        %v1682 = vpack.c.b16 %v1655, %v1654
        %v1683 = vpack.c.b16 %v1657, %v1656
        %v1684 = vpack.c.b16 %v1659, %v1658
        %v1685 = vpack.c.b16 %v1661, %v1660
        %v1686 = vpack.c.b16 %v1663, %v1662
        %v1687 = vpack.c.b16 %v1665, %v1664
        %v1688 = vpack.c.b16 %v1667, %v1666
        %v1689 = vpack.c.b16 %v1669, %v1668
        %v1690 = vpack.c.b16 %v1671, %v1670
        %v1691 = vpack.c.b16 %v1673, %v1672
        %v1692 = vpack.c.b16 %v1675, %v1674
        %v1693 = vpack.c.b16 %v1677, %v1676
        %v1695 = vsel %vm1397, %v1678, 0
        %v1698 = vsel %vm1397, %v1679, 0
        %v1701 = vsel %vm1397, %v1680, 0
        %v1704 = vsel %vm1397, %v1681, 0
        %v1707 = vsel %vm1397, %v1682, 0
        %v1710 = vsel %vm1397, %v1683, 0
        %v1713 = vsel %vm1397, %v1684, 0
        %v1716 = vsel %vm1397, %v1685, 0
        %v1719 = vsel %vm1397, %v1686, 0
        %v1722 = vsel %vm1397, %v1687, 0
        %v1725 = vsel %vm1397, %v1688, 0
        %v1728 = vsel %vm1397, %v1689, 0
        %v1731 = vsel %vm1397, %v1690, 0
        %v1734 = vsel %vm1397, %v1691, 0
        %v1737 = vsel %vm1397, %v1692, 0
        %v1740 = vsel %vm1397, %v1693, 0
        %v1743 = vand.u32 %v943, %v1449
        %1745 = vmatprep.subr.bf16.mxu0 0
        %1746 = vmatpush1.bf16.msra.mxu0 0
        %1747 = vmatprep.subr.bf16.mxu0 0
        %1748 = vmatpush1.bf16.msra.mxu0 0
        %1749 = vmatprep.subr.bf16.mxu0 0
        %1750 = vmatpush1.bf16.msra.mxu0 0
        %1751 = vmatprep.subr.bf16.mxu0 0
        %1752 = vmatpush1.bf16.msra.mxu0 0
        %1753 = vmatprep.subr.bf16.mxu0 0
        %1754 = vmatpush1.bf16.msra.mxu0 0
        %1755 = vmatprep.subr.bf16.mxu0 0
        %1756 = vmatpush1.bf16.msra.mxu0 0
        %1757 = vmatprep.subr.bf16.mxu0 0
        %1758 = vmatpush1.bf16.msra.mxu0 0
        %1759 = vmatprep.subr.bf16.mxu0 0
        %1760 = vmatpush1.bf16.msra.mxu0 %v1743
        %1761 = vmatprep.subr.bf16.mxu0 0
        %1762 = vmatpush2.bf16.msra.mxu0 0
        %1763 = vmatprep.subr.bf16.mxu0 0
        %1764 = vmatpush2.bf16.msra.mxu0 0
        %1765 = vmatprep.subr.bf16.mxu0 0
        %1766 = vmatpush2.bf16.msra.mxu0 0
        %1767 = vmatprep.subr.bf16.mxu0 0
        %1768 = vmatpush2.bf16.msra.mxu0 0
        %1769 = vmatprep.subr.bf16.mxu0 0
        %1770 = vmatpush2.bf16.msra.mxu0 0
        %1771 = vmatprep.subr.bf16.mxu0 0
        %1772 = vmatpush2.bf16.msra.mxu0 0
        %1773 = vmatprep.subr.bf16.mxu0 0
        %1774 = vmatpush2.bf16.msra.mxu0 0
        %1775 = vmatprep.subr.bf16.mxu0 0
        %1776 = vmatpush2.bf16.msra.mxu0 0
        %1777 = vmatprep.mubr.bf16.mxu0 0
        %1778 = vmatmul.mubr.bf16.gmra.mxu0 %v1695
        %v1779 = vpop.f32.mrf.mxu0
        %v1780 = vadd.f32 %v1488, %v1779
        %v1781 = vpop.f32.mrf.mxu0
        %v1782 = vpop.f32.mrf.mxu0
        %v1783 = vadd.f32 %v1491, %v1782
        %v1784 = vpop.f32.mrf.mxu0
        %1785 = vmatprep.mubr.bf16.mxu0 0
        %1786 = vmatmul.mubr.bf16.gmra.mxu0 %v1698
        %v1787 = vpop.f32.mrf.mxu0
        %v1788 = vadd.f32 %v1496, %v1787
        %v1789 = vpop.f32.mrf.mxu0
        %v1790 = vpop.f32.mrf.mxu0
        %v1791 = vadd.f32 %v1499, %v1790
        %v1792 = vpop.f32.mrf.mxu0
        %1793 = vmatprep.mubr.bf16.mxu0 0
        %1794 = vmatmul.mubr.bf16.gmra.mxu0 %v1701
        %v1795 = vpop.f32.mrf.mxu0
        %v1796 = vadd.f32 %v1504, %v1795
        %v1797 = vpop.f32.mrf.mxu0
        %v1798 = vpop.f32.mrf.mxu0
        %v1799 = vadd.f32 %v1507, %v1798
        %v1800 = vpop.f32.mrf.mxu0
        %1801 = vmatprep.mubr.bf16.mxu0 0
        %1802 = vmatmul.mubr.bf16.gmra.mxu0 %v1704
        %v1803 = vpop.f32.mrf.mxu0
        %v1804 = vadd.f32 %v1512, %v1803
        %v1805 = vpop.f32.mrf.mxu0
        %v1806 = vpop.f32.mrf.mxu0
        %v1807 = vadd.f32 %v1515, %v1806
        %v1808 = vpop.f32.mrf.mxu0
        %1809 = vmatprep.mubr.bf16.mxu0 0
        %1810 = vmatmul.mubr.bf16.gmra.mxu0 %v1707
        %v1811 = vpop.f32.mrf.mxu0
        %v1812 = vadd.f32 %v1520, %v1811
        %v1813 = vpop.f32.mrf.mxu0
        %v1814 = vpop.f32.mrf.mxu0
        %v1815 = vadd.f32 %v1523, %v1814
        %v1816 = vpop.f32.mrf.mxu0
        %1817 = vmatprep.mubr.bf16.mxu0 0
        %1818 = vmatmul.mubr.bf16.gmra.mxu0 %v1710
        %v1819 = vpop.f32.mrf.mxu0
        %v1820 = vadd.f32 %v1528, %v1819
        %v1821 = vpop.f32.mrf.mxu0
        %v1822 = vpop.f32.mrf.mxu0
        %v1823 = vadd.f32 %v1531, %v1822
        %v1824 = vpop.f32.mrf.mxu0
        %1825 = vmatprep.mubr.bf16.mxu0 0
        %1826 = vmatmul.mubr.bf16.gmra.mxu0 %v1713
        %v1827 = vpop.f32.mrf.mxu0
        %v1828 = vadd.f32 %v1536, %v1827
        %v1829 = vpop.f32.mrf.mxu0
        %v1830 = vpop.f32.mrf.mxu0
        %v1831 = vadd.f32 %v1539, %v1830
        %v1832 = vpop.f32.mrf.mxu0
        %1833 = vmatprep.mubr.bf16.mxu0 0
        %1834 = vmatmul.mubr.bf16.gmra.mxu0 %v1716
        %v1835 = vpop.f32.mrf.mxu0
        %v1836 = vadd.f32 %v1544, %v1835
        %v1837 = vpop.f32.mrf.mxu0
        %v1838 = vpop.f32.mrf.mxu0
        %v1839 = vadd.f32 %v1547, %v1838
        %v1840 = vpop.f32.mrf.mxu0
        %1841 = vmatprep.mubr.bf16.mxu0 0
        %1842 = vmatmul.mubr.bf16.gmra.mxu0 %v1719
        %v1843 = vpop.f32.mrf.mxu0
        %v1844 = vadd.f32 %v1552, %v1843
        %v1845 = vpop.f32.mrf.mxu0
        %v1846 = vpop.f32.mrf.mxu0
        %v1847 = vadd.f32 %v1555, %v1846
        %v1848 = vpop.f32.mrf.mxu0
        %1849 = vmatprep.mubr.bf16.mxu0 0
        %1850 = vmatmul.mubr.bf16.gmra.mxu0 %v1722
        %v1851 = vpop.f32.mrf.mxu0
        %v1852 = vadd.f32 %v1560, %v1851
        %v1853 = vpop.f32.mrf.mxu0
        %v1854 = vpop.f32.mrf.mxu0
        %v1855 = vadd.f32 %v1563, %v1854
        %v1856 = vpop.f32.mrf.mxu0
        %1857 = vmatprep.mubr.bf16.mxu0 0
        %1858 = vmatmul.mubr.bf16.gmra.mxu0 %v1725
        %v1859 = vpop.f32.mrf.mxu0
        %v1860 = vadd.f32 %v1568, %v1859
        %v1861 = vpop.f32.mrf.mxu0
        %v1862 = vpop.f32.mrf.mxu0
        %v1863 = vadd.f32 %v1571, %v1862
        %v1864 = vpop.f32.mrf.mxu0
        %1865 = vmatprep.mubr.bf16.mxu0 0
        %1866 = vmatmul.mubr.bf16.gmra.mxu0 %v1728
        %v1867 = vpop.f32.mrf.mxu0
        %v1868 = vadd.f32 %v1576, %v1867
        %v1869 = vpop.f32.mrf.mxu0
        %v1870 = vpop.f32.mrf.mxu0
        %v1871 = vadd.f32 %v1579, %v1870
        %v1872 = vpop.f32.mrf.mxu0
        %1873 = vmatprep.mubr.bf16.mxu0 0
        %1874 = vmatmul.mubr.bf16.gmra.mxu0 %v1731
        %v1875 = vpop.f32.mrf.mxu0
        %v1876 = vadd.f32 %v1584, %v1875
        %v1877 = vpop.f32.mrf.mxu0
        %v1878 = vpop.f32.mrf.mxu0
        %v1879 = vadd.f32 %v1587, %v1878
        %v1880 = vpop.f32.mrf.mxu0
        %1881 = vmatprep.mubr.bf16.mxu0 0
        %1882 = vmatmul.mubr.bf16.gmra.mxu0 %v1734
        %v1883 = vpop.f32.mrf.mxu0
        %v1884 = vadd.f32 %v1592, %v1883
        %v1885 = vpop.f32.mrf.mxu0
        %v1886 = vpop.f32.mrf.mxu0
        %v1887 = vadd.f32 %v1595, %v1886
        %v1888 = vpop.f32.mrf.mxu0
        %1889 = vmatprep.mubr.bf16.mxu0 0
        %1890 = vmatmul.mubr.bf16.gmra.mxu0 %v1737
        %v1891 = vpop.f32.mrf.mxu0
        %v1892 = vadd.f32 %v1600, %v1891
        %v1893 = vpop.f32.mrf.mxu0
        %v1894 = vpop.f32.mrf.mxu0
        %v1895 = vadd.f32 %v1603, %v1894
        %v1896 = vpop.f32.mrf.mxu0
        %1897 = vmatprep.mubr.bf16.mxu0 0
        %1898 = vmatmul.mubr.bf16.gmra.mxu0 %v1740
        %v1899 = vpop.f32.mrf.mxu0
        %v1900 = vadd.f32 %v1608, %v1899
        %v1901 = vpop.f32.mrf.mxu0
        %v1902 = vpop.f32.mrf.mxu0
        %v1903 = vadd.f32 %v1611, %v1902
        %v1904 = vpop.f32.mrf.mxu0
        %1905 = vdwg.mxu0
        %v1906 = vld [vmem:[#allocation2] sm:$0xe]
        %v1907 = vld [vmem:[#allocation2 + $0xc] sm:$0xe]
        %v1908 = vld [vmem:[#allocation2 + $0x18] sm:$0xe]
        %v1909 = vld [vmem:[#allocation2 + $0x24] sm:$0xe]
        %v1910 = vld [vmem:[#allocation2 + $0x30] sm:$0xe]
        %v1911 = vld [vmem:[#allocation2 + $0x3c] sm:$0xe]
        %v1912 = vld [vmem:[#allocation2 + $0x48] sm:$0xe]
        %v1913 = vld [vmem:[#allocation2 + $0x54] sm:$0xe]
        %v1914 = vld [vmem:[#allocation2 + $0x60] sm:$0xe]
        %v1915 = vld [vmem:[#allocation2 + $0x6c] sm:$0xe]
        %v1916 = vld [vmem:[#allocation2 + $0x78] sm:$0xe]
        %v1917 = vld [vmem:[#allocation2 + $0x84] sm:$0xe]
        %v1918 = vld [vmem:[#allocation2 + $0x90] sm:$0xe]
        %v1919 = vld [vmem:[#allocation2 + $0x9c] sm:$0xe]
        %v1920 = vld [vmem:[#allocation2 + $0xa8] sm:$0xe]
        %v1921 = vld [vmem:[#allocation2 + $0xb4] sm:$0xe]
        %vm1954 = vcmask 1042432
        %vm1955 = vcmask 1046532
        %vm1956 = vmor %vm1954, %vm1955
        %v1957 = vrot.slane %v1906, 5
        %v1958 = vrot.slane %v1957, 4
        %v1959 = vrot.slane %v912, 5
        %v1960 = vsel %vm1956, %v1958, %v1959
        %v1961 = vrot.slane %v1959, 4
        %v1962 = vrot.slane %v944, 5
        %v1963 = vsel %vm1956, %v1961, %v1962
        %v1964 = vrot.slane %v1907, 5
        %v1965 = vrot.slane %v1964, 4
        %v1966 = vrot.slane %v914, 5
        %v1967 = vsel %vm1956, %v1965, %v1966
        %v1968 = vrot.slane %v1966, 4
        %v1969 = vrot.slane %v945, 5
        %v1970 = vsel %vm1956, %v1968, %v1969
        %v1971 = vrot.slane %v1908, 5
        %v1972 = vrot.slane %v1971, 4
        %v1973 = vrot.slane %v916, 5
        %v1974 = vsel %vm1956, %v1972, %v1973
        %v1975 = vrot.slane %v1973, 4
        %v1976 = vrot.slane %v946, 5
        %v1977 = vsel %vm1956, %v1975, %v1976
        %v1978 = vrot.slane %v1909, 5
        %v1979 = vrot.slane %v1978, 4
        %v1980 = vrot.slane %v918, 5
        %v1981 = vsel %vm1956, %v1979, %v1980
        %v1982 = vrot.slane %v1980, 4
        %v1983 = vrot.slane %v947, 5
        %v1984 = vsel %vm1956, %v1982, %v1983
        %v1985 = vrot.slane %v1910, 5
        %v1986 = vrot.slane %v1985, 4
        %v1987 = vrot.slane %v920, 5
        %v1988 = vsel %vm1956, %v1986, %v1987
        %v1989 = vrot.slane %v1987, 4
        %v1990 = vrot.slane %v948, 5
        %v1991 = vsel %vm1956, %v1989, %v1990
        %v1992 = vrot.slane %v1911, 5
        %v1993 = vrot.slane %v1992, 4
        %v1994 = vrot.slane %v922, 5
        %v1995 = vsel %vm1956, %v1993, %v1994
        %v1996 = vrot.slane %v1994, 4
        %v1997 = vrot.slane %v949, 5
        %v1998 = vsel %vm1956, %v1996, %v1997
        %v1999 = vrot.slane %v1912, 5
        %v2000 = vrot.slane %v1999, 4
        %v2001 = vrot.slane %v924, 5
        %v2002 = vsel %vm1956, %v2000, %v2001
        %v2003 = vrot.slane %v2001, 4
        %v2004 = vrot.slane %v950, 5
        %v2005 = vsel %vm1956, %v2003, %v2004
        %v2006 = vrot.slane %v1913, 5
        %v2007 = vrot.slane %v2006, 4
        %v2008 = vrot.slane %v926, 5
        %v2009 = vsel %vm1956, %v2007, %v2008
        %v2010 = vrot.slane %v2008, 4
        %v2011 = vrot.slane %v951, 5
        %v2012 = vsel %vm1956, %v2010, %v2011
        %v2013 = vrot.slane %v1914, 5
        %v2014 = vrot.slane %v2013, 4
        %v2015 = vrot.slane %v928, 5
        %v2016 = vsel %vm1956, %v2014, %v2015
        %v2017 = vrot.slane %v2015, 4
        %v2018 = vrot.slane %v952, 5
        %v2019 = vsel %vm1956, %v2017, %v2018
        %v2020 = vrot.slane %v1915, 5
        %v2021 = vrot.slane %v2020, 4
        %v2022 = vrot.slane %v930, 5
        %v2023 = vsel %vm1956, %v2021, %v2022
        %v2024 = vrot.slane %v2022, 4
        %v2025 = vrot.slane %v953, 5
        %v2026 = vsel %vm1956, %v2024, %v2025
        %v2027 = vrot.slane %v1916, 5
        %v2028 = vrot.slane %v2027, 4
        %v2029 = vrot.slane %v932, 5
        %v2030 = vsel %vm1956, %v2028, %v2029
        %v2031 = vrot.slane %v2029, 4
        %v2032 = vrot.slane %v954, 5
        %v2033 = vsel %vm1956, %v2031, %v2032
        %v2034 = vrot.slane %v1917, 5
        %v2035 = vrot.slane %v2034, 4
        %v2036 = vrot.slane %v934, 5
        %v2037 = vsel %vm1956, %v2035, %v2036
        %v2038 = vrot.slane %v2036, 4
        %v2039 = vrot.slane %v955, 5
        %v2040 = vsel %vm1956, %v2038, %v2039
        %v2041 = vrot.slane %v1918, 5
        %v2042 = vrot.slane %v2041, 4
        %v2043 = vrot.slane %v936, 5
        %v2044 = vsel %vm1956, %v2042, %v2043
        %v2045 = vrot.slane %v2043, 4
        %v2046 = vrot.slane %v956, 5
        %v2047 = vsel %vm1956, %v2045, %v2046
        %v2048 = vrot.slane %v1919, 5
        %v2049 = vrot.slane %v2048, 4
        %v2050 = vrot.slane %v938, 5
        %v2051 = vsel %vm1956, %v2049, %v2050
        %v2052 = vrot.slane %v2050, 4
        %v2053 = vrot.slane %v957, 5
        %v2054 = vsel %vm1956, %v2052, %v2053
        %v2055 = vrot.slane %v1920, 5
        %v2056 = vrot.slane %v2055, 4
        %v2057 = vrot.slane %v940, 5
        %v2058 = vsel %vm1956, %v2056, %v2057
        %v2059 = vrot.slane %v2057, 4
        %v2060 = vrot.slane %v958, 5
        %v2061 = vsel %vm1956, %v2059, %v2060
        %v2062 = vrot.slane %v1921, 5
        %v2063 = vrot.slane %v2062, 4
        %v2064 = vrot.slane %v942, 5
        %v2065 = vsel %vm1956, %v2063, %v2064
        %v2066 = vrot.slane %v2064, 4
        %v2067 = vrot.slane %v959, 5
        %v2068 = vsel %vm1956, %v2066, %v2067
        %s2069 = scalar_lea.vmem %s1, 4
        %v2070 = vld [vmem:[%s2069] sm:$0x3]
        %v2071 = vunpack.c.l.b16 %v1960
        %v2072 = vunpack.c.l.b16 %v1963
        %v2073 = vunpack.c.l.b16 %v1967
        %v2074 = vunpack.c.l.b16 %v1970
        %v2075 = vunpack.c.l.b16 %v1974
        %v2076 = vunpack.c.l.b16 %v1977
        %v2077 = vunpack.c.l.b16 %v1981
        %v2078 = vunpack.c.l.b16 %v1984
        %v2079 = vunpack.c.l.b16 %v1988
        %v2080 = vunpack.c.l.b16 %v1991
        %v2081 = vunpack.c.l.b16 %v1995
        %v2082 = vunpack.c.l.b16 %v1998
        %v2083 = vunpack.c.l.b16 %v2002
        %v2084 = vunpack.c.l.b16 %v2005
        %v2085 = vunpack.c.l.b16 %v2009
        %v2086 = vunpack.c.l.b16 %v2012
        %v2087 = vunpack.c.l.b16 %v2016
        %v2088 = vunpack.c.l.b16 %v2019
        %v2089 = vunpack.c.l.b16 %v2023
        %v2090 = vunpack.c.l.b16 %v2026
        %v2091 = vunpack.c.l.b16 %v2030
        %v2092 = vunpack.c.l.b16 %v2033
        %v2093 = vunpack.c.l.b16 %v2037
        %v2094 = vunpack.c.l.b16 %v2040
        %v2095 = vunpack.c.l.b16 %v2044
        %v2096 = vunpack.c.l.b16 %v2047
        %v2097 = vunpack.c.l.b16 %v2051
        %v2098 = vunpack.c.l.b16 %v2054
        %v2099 = vunpack.c.l.b16 %v2058
        %v2100 = vunpack.c.l.b16 %v2061
        %v2101 = vunpack.c.l.b16 %v2065
        %v2102 = vunpack.c.l.b16 %v2068
        %v2103 = vpack.c.b16 %v2072, %v2071
        %v2104 = vpack.c.b16 %v2074, %v2073
        %v2105 = vpack.c.b16 %v2076, %v2075
        %v2106 = vpack.c.b16 %v2078, %v2077
        %v2107 = vpack.c.b16 %v2080, %v2079
        %v2108 = vpack.c.b16 %v2082, %v2081
        %v2109 = vpack.c.b16 %v2084, %v2083
        %v2110 = vpack.c.b16 %v2086, %v2085
        %v2111 = vpack.c.b16 %v2088, %v2087
        %v2112 = vpack.c.b16 %v2090, %v2089
        %v2113 = vpack.c.b16 %v2092, %v2091
        %v2114 = vpack.c.b16 %v2094, %v2093
        %v2115 = vpack.c.b16 %v2096, %v2095
        %v2116 = vpack.c.b16 %v2098, %v2097
        %v2117 = vpack.c.b16 %v2100, %v2099
        %v2118 = vpack.c.b16 %v2102, %v2101
        %v2120 = vsel %vm1397, %v2103, 0
        %v2123 = vsel %vm1397, %v2104, 0
        %v2126 = vsel %vm1397, %v2105, 0
        %v2129 = vsel %vm1397, %v2106, 0
        %v2132 = vsel %vm1397, %v2107, 0
        %v2135 = vsel %vm1397, %v2108, 0
        %v2138 = vsel %vm1397, %v2109, 0
        %v2141 = vsel %vm1397, %v2110, 0
        %v2144 = vsel %vm1397, %v2111, 0
        %v2147 = vsel %vm1397, %v2112, 0
        %v2150 = vsel %vm1397, %v2113, 0
        %v2153 = vsel %vm1397, %v2114, 0
        %v2156 = vsel %vm1397, %v2115, 0
        %v2159 = vsel %vm1397, %v2116, 0
        %v2162 = vsel %vm1397, %v2117, 0
        %v2165 = vsel %vm1397, %v2118, 0
        %v2168 = vand.u32 %v2070, %v1449
        %2170 = vmatprep.subr.bf16.mxu0 0
        %2171 = vmatpush1.bf16.msra.mxu0 0
        %2172 = vmatprep.subr.bf16.mxu0 0
        %2173 = vmatpush1.bf16.msra.mxu0 0
        %2174 = vmatprep.subr.bf16.mxu0 0
        %2175 = vmatpush1.bf16.msra.mxu0 0
        %2176 = vmatprep.subr.bf16.mxu0 0
        %2177 = vmatpush1.bf16.msra.mxu0 0
        %2178 = vmatprep.subr.bf16.mxu0 0
        %2179 = vmatpush1.bf16.msra.mxu0 0
        %2180 = vmatprep.subr.bf16.mxu0 0
        %2181 = vmatpush1.bf16.msra.mxu0 0
        %2182 = vmatprep.subr.bf16.mxu0 0
        %2183 = vmatpush1.bf16.msra.mxu0 0
        %2184 = vmatprep.subr.bf16.mxu0 0
        %2185 = vmatpush1.bf16.msra.mxu0 %v2168
        %2186 = vmatprep.subr.bf16.mxu0 0
        %2187 = vmatpush2.bf16.msra.mxu0 0
        %2188 = vmatprep.subr.bf16.mxu0 0
        %2189 = vmatpush2.bf16.msra.mxu0 0
        %2190 = vmatprep.subr.bf16.mxu0 0
        %2191 = vmatpush2.bf16.msra.mxu0 0
        %2192 = vmatprep.subr.bf16.mxu0 0
        %2193 = vmatpush2.bf16.msra.mxu0 0
        %2194 = vmatprep.subr.bf16.mxu0 0
        %2195 = vmatpush2.bf16.msra.mxu0 0
        %2196 = vmatprep.subr.bf16.mxu0 0
        %2197 = vmatpush2.bf16.msra.mxu0 0
        %2198 = vmatprep.subr.bf16.mxu0 0
        %2199 = vmatpush2.bf16.msra.mxu0 0
        %2200 = vmatprep.subr.bf16.mxu0 0
        %2201 = vmatpush2.bf16.msra.mxu0 0
        %2202 = vmatprep.mubr.bf16.mxu0 0
        %2203 = vmatmul.mubr.bf16.gmra.mxu0 %v2120
        %v2204 = vpop.f32.mrf.mxu0
        %v2205 = vadd.f32 0.0, %v2204
        %v2206 = vpop.f32.mrf.mxu0
        %v2207 = vpop.f32.mrf.mxu0
        %v2208 = vadd.f32 0.0, %v2207
        %v2209 = vpop.f32.mrf.mxu0
        %2210 = vmatprep.mubr.bf16.mxu0 0
        %2211 = vmatmul.mubr.bf16.gmra.mxu0 %v2123
        %v2212 = vpop.f32.mrf.mxu0
        %v2213 = vadd.f32 0.0, %v2212
        %v2214 = vpop.f32.mrf.mxu0
        %v2215 = vpop.f32.mrf.mxu0
        %v2216 = vadd.f32 0.0, %v2215
        %v2217 = vpop.f32.mrf.mxu0
        %2218 = vmatprep.mubr.bf16.mxu0 0
        %2219 = vmatmul.mubr.bf16.gmra.mxu0 %v2126
        %v2220 = vpop.f32.mrf.mxu0
        %v2221 = vadd.f32 0.0, %v2220
        %v2222 = vpop.f32.mrf.mxu0
        %v2223 = vpop.f32.mrf.mxu0
        %v2224 = vadd.f32 0.0, %v2223
        %v2225 = vpop.f32.mrf.mxu0
        %2226 = vmatprep.mubr.bf16.mxu0 0
        %2227 = vmatmul.mubr.bf16.gmra.mxu0 %v2129
        %v2228 = vpop.f32.mrf.mxu0
        %v2229 = vadd.f32 0.0, %v2228
        %v2230 = vpop.f32.mrf.mxu0
        %v2231 = vpop.f32.mrf.mxu0
        %v2232 = vadd.f32 0.0, %v2231
        %v2233 = vpop.f32.mrf.mxu0
        %2234 = vmatprep.mubr.bf16.mxu0 0
        %2235 = vmatmul.mubr.bf16.gmra.mxu0 %v2132
        %v2236 = vpop.f32.mrf.mxu0
        %v2237 = vadd.f32 0.0, %v2236
        %v2238 = vpop.f32.mrf.mxu0
        %v2239 = vpop.f32.mrf.mxu0
        %v2240 = vadd.f32 0.0, %v2239
        %v2241 = vpop.f32.mrf.mxu0
        %2242 = vmatprep.mubr.bf16.mxu0 0
        %2243 = vmatmul.mubr.bf16.gmra.mxu0 %v2135
        %v2244 = vpop.f32.mrf.mxu0
        %v2245 = vadd.f32 0.0, %v2244
        %v2246 = vpop.f32.mrf.mxu0
        %v2247 = vpop.f32.mrf.mxu0
        %v2248 = vadd.f32 0.0, %v2247
        %v2249 = vpop.f32.mrf.mxu0
        %2250 = vmatprep.mubr.bf16.mxu0 0
        %2251 = vmatmul.mubr.bf16.gmra.mxu0 %v2138
        %v2252 = vpop.f32.mrf.mxu0
        %v2253 = vadd.f32 0.0, %v2252
        %v2254 = vpop.f32.mrf.mxu0
        %v2255 = vpop.f32.mrf.mxu0
        %v2256 = vadd.f32 0.0, %v2255
        %v2257 = vpop.f32.mrf.mxu0
        %2258 = vmatprep.mubr.bf16.mxu0 0
        %2259 = vmatmul.mubr.bf16.gmra.mxu0 %v2141
        %v2260 = vpop.f32.mrf.mxu0
        %v2261 = vadd.f32 0.0, %v2260
        %v2262 = vpop.f32.mrf.mxu0
        %v2263 = vpop.f32.mrf.mxu0
        %v2264 = vadd.f32 0.0, %v2263
        %v2265 = vpop.f32.mrf.mxu0
        %2266 = vmatprep.mubr.bf16.mxu0 0
        %2267 = vmatmul.mubr.bf16.gmra.mxu0 %v2144
        %v2268 = vpop.f32.mrf.mxu0
        %v2269 = vadd.f32 0.0, %v2268
        %v2270 = vpop.f32.mrf.mxu0
        %v2271 = vpop.f32.mrf.mxu0
        %v2272 = vadd.f32 0.0, %v2271
        %v2273 = vpop.f32.mrf.mxu0
        %2274 = vmatprep.mubr.bf16.mxu0 0
        %2275 = vmatmul.mubr.bf16.gmra.mxu0 %v2147
        %v2276 = vpop.f32.mrf.mxu0
        %v2277 = vadd.f32 0.0, %v2276
        %v2278 = vpop.f32.mrf.mxu0
        %v2279 = vpop.f32.mrf.mxu0
        %v2280 = vadd.f32 0.0, %v2279
        %v2281 = vpop.f32.mrf.mxu0
        %2282 = vmatprep.mubr.bf16.mxu0 0
        %2283 = vmatmul.mubr.bf16.gmra.mxu0 %v2150
        %v2284 = vpop.f32.mrf.mxu0
        %v2285 = vadd.f32 0.0, %v2284
        %v2286 = vpop.f32.mrf.mxu0
        %v2287 = vpop.f32.mrf.mxu0
        %v2288 = vadd.f32 0.0, %v2287
        %v2289 = vpop.f32.mrf.mxu0
        %2290 = vmatprep.mubr.bf16.mxu0 0
        %2291 = vmatmul.mubr.bf16.gmra.mxu0 %v2153
        %v2292 = vpop.f32.mrf.mxu0
        %v2293 = vadd.f32 0.0, %v2292
        %v2294 = vpop.f32.mrf.mxu0
        %v2295 = vpop.f32.mrf.mxu0
        %v2296 = vadd.f32 0.0, %v2295
        %v2297 = vpop.f32.mrf.mxu0
        %2298 = vmatprep.mubr.bf16.mxu0 0
        %2299 = vmatmul.mubr.bf16.gmra.mxu0 %v2156
        %v2300 = vpop.f32.mrf.mxu0
        %v2301 = vadd.f32 0.0, %v2300
        %v2302 = vpop.f32.mrf.mxu0
        %v2303 = vpop.f32.mrf.mxu0
        %v2304 = vadd.f32 0.0, %v2303
        %v2305 = vpop.f32.mrf.mxu0
        %2306 = vmatprep.mubr.bf16.mxu0 0
        %2307 = vmatmul.mubr.bf16.gmra.mxu0 %v2159
        %v2308 = vpop.f32.mrf.mxu0
        %v2309 = vadd.f32 0.0, %v2308
        %v2310 = vpop.f32.mrf.mxu0
        %v2311 = vpop.f32.mrf.mxu0
        %v2312 = vadd.f32 0.0, %v2311
        %v2313 = vpop.f32.mrf.mxu0
        %2314 = vmatprep.mubr.bf16.mxu0 0
        %2315 = vmatmul.mubr.bf16.gmra.mxu0 %v2162
        %v2316 = vpop.f32.mrf.mxu0
        %v2317 = vadd.f32 0.0, %v2316
        %v2318 = vpop.f32.mrf.mxu0
        %v2319 = vpop.f32.mrf.mxu0
        %v2320 = vadd.f32 0.0, %v2319
        %v2321 = vpop.f32.mrf.mxu0
        %2322 = vmatprep.mubr.bf16.mxu0 0
        %2323 = vmatmul.mubr.bf16.gmra.mxu0 %v2165
        %v2324 = vpop.f32.mrf.mxu0
        %v2325 = vadd.f32 0.0, %v2324
        %v2326 = vpop.f32.mrf.mxu0
        %v2327 = vpop.f32.mrf.mxu0
        %v2328 = vadd.f32 0.0, %v2327
        %v2329 = vpop.f32.mrf.mxu0
        %2330 = vdwg.mxu0
        %v2331 = vadd.f32 %v1780, %v2205
        %v2332 = vadd.f32 %v1783, %v2208
        %v2333 = vadd.f32 %v1788, %v2213
        %v2334 = vadd.f32 %v1791, %v2216
        %v2335 = vadd.f32 %v1796, %v2221
        %v2336 = vadd.f32 %v1799, %v2224
        %v2337 = vadd.f32 %v1804, %v2229
        %v2338 = vadd.f32 %v1807, %v2232
        %v2339 = vadd.f32 %v1812, %v2237
        %v2340 = vadd.f32 %v1815, %v2240
        %v2341 = vadd.f32 %v1820, %v2245
        %v2342 = vadd.f32 %v1823, %v2248
        %v2343 = vadd.f32 %v1828, %v2253
        %v2344 = vadd.f32 %v1831, %v2256
        %v2345 = vadd.f32 %v1836, %v2261
        %v2346 = vadd.f32 %v1839, %v2264
        %v2347 = vadd.f32 %v1844, %v2269
        %v2348 = vadd.f32 %v1847, %v2272
        %v2349 = vadd.f32 %v1852, %v2277
        %v2350 = vadd.f32 %v1855, %v2280
        %v2351 = vadd.f32 %v1860, %v2285
        %v2352 = vadd.f32 %v1863, %v2288
        %v2353 = vadd.f32 %v1868, %v2293
        %v2354 = vadd.f32 %v1871, %v2296
        %v2355 = vadd.f32 %v1876, %v2301
        %v2356 = vadd.f32 %v1879, %v2304
        %v2357 = vadd.f32 %v1884, %v2309
        %v2358 = vadd.f32 %v1887, %v2312
        %v2359 = vadd.f32 %v1892, %v2317
        %v2360 = vadd.f32 %v1895, %v2320
        %v2361 = vadd.f32 %v1900, %v2325
        %v2362 = vadd.f32 %v1903, %v2328
        %v2363 = vld [vmem:[%s796] sm:$0xf]
        %v2364 = vld [vmem:[%s796 + $0x4] sm:$0xf]
        %v2365 = vld [vmem:[%s796 + $0xc] sm:$0xf]
        %v2366 = vld [vmem:[%s796 + $0x10] sm:$0xf]
        %v2367 = vld [vmem:[%s796 + $0x18] sm:$0xf]
        %v2368 = vld [vmem:[%s796 + $0x1c] sm:$0xf]
        %v2369 = vld [vmem:[%s796 + $0x24] sm:$0xf]
        %v2370 = vld [vmem:[%s796 + $0x28] sm:$0xf]
        %v2371 = vld [vmem:[%s796 + $0x30] sm:$0xf]
        %v2372 = vld [vmem:[%s796 + $0x34] sm:$0xf]
        %v2373 = vld [vmem:[%s796 + $0x3c] sm:$0xf]
        %v2374 = vld [vmem:[%s796 + $0x40] sm:$0xf]
        %v2375 = vld [vmem:[%s796 + $0x48] sm:$0xf]
        %v2376 = vld [vmem:[%s796 + $0x4c] sm:$0xf]
        %v2377 = vld [vmem:[%s796 + $0x54] sm:$0xf]
        %v2378 = vld [vmem:[%s796 + $0x58] sm:$0xf]
        %v2379 = vld [vmem:[%s796 + $0x60] sm:$0xf]
        %v2380 = vld [vmem:[%s796 + $0x64] sm:$0xf]
        %v2381 = vld [vmem:[%s796 + $0x6c] sm:$0xf]
        %v2382 = vld [vmem:[%s796 + $0x70] sm:$0xf]
        %v2383 = vld [vmem:[%s796 + $0x78] sm:$0xf]
        %v2384 = vld [vmem:[%s796 + $0x7c] sm:$0xf]
        %v2385 = vld [vmem:[%s796 + $0x84] sm:$0xf]
        %v2386 = vld [vmem:[%s796 + $0x88] sm:$0xf]
        %v2387 = vld [vmem:[%s796 + $0x90] sm:$0xf]
        %v2388 = vld [vmem:[%s796 + $0x94] sm:$0xf]
        %v2389 = vld [vmem:[%s796 + $0x9c] sm:$0xf]
        %v2390 = vld [vmem:[%s796 + $0xa0] sm:$0xf]
        %v2391 = vld [vmem:[%s796 + $0xa8] sm:$0xf]
        %v2392 = vld [vmem:[%s796 + $0xac] sm:$0xf]
        %v2393 = vld [vmem:[%s796 + $0xb4] sm:$0xf]
        %v2394 = vld [vmem:[%s796 + $0xb8] sm:$0xf]
        %s2395 = scalar_lea.vmem %s1, 6
        %v2396 = vld [vmem:[%s2395] sm:$0x3]
        %v2429 = vunpack.c.l.b16 %v2363
        %v2430 = vunpack.c.l.b16 %v2364
        %v2431 = vunpack.c.l.b16 %v2365
        %v2432 = vunpack.c.l.b16 %v2366
        %v2433 = vunpack.c.l.b16 %v2367
        %v2434 = vunpack.c.l.b16 %v2368
        %v2435 = vunpack.c.l.b16 %v2369
        %v2436 = vunpack.c.l.b16 %v2370
        %v2437 = vunpack.c.l.b16 %v2371
        %v2438 = vunpack.c.l.b16 %v2372
        %v2439 = vunpack.c.l.b16 %v2373
        %v2440 = vunpack.c.l.b16 %v2374
        %v2441 = vunpack.c.l.b16 %v2375
        %v2442 = vunpack.c.l.b16 %v2376
        %v2443 = vunpack.c.l.b16 %v2377
        %v2444 = vunpack.c.l.b16 %v2378
        %v2445 = vunpack.c.l.b16 %v2379
        %v2446 = vunpack.c.l.b16 %v2380
        %v2447 = vunpack.c.l.b16 %v2381
        %v2448 = vunpack.c.l.b16 %v2382
        %v2449 = vunpack.c.l.b16 %v2383
        %v2450 = vunpack.c.l.b16 %v2384
        %v2451 = vunpack.c.l.b16 %v2385
        %v2452 = vunpack.c.l.b16 %v2386
        %v2453 = vunpack.c.l.b16 %v2387
        %v2454 = vunpack.c.l.b16 %v2388
        %v2455 = vunpack.c.l.b16 %v2389
        %v2456 = vunpack.c.l.b16 %v2390
        %v2457 = vunpack.c.l.b16 %v2391
        %v2458 = vunpack.c.l.b16 %v2392
        %v2459 = vunpack.c.l.b16 %v2393
        %v2460 = vunpack.c.l.b16 %v2394
        %v2461 = vpack.c.b16 %v2430, %v2429
        %v2462 = vpack.c.b16 %v2432, %v2431
        %v2463 = vpack.c.b16 %v2434, %v2433
        %v2464 = vpack.c.b16 %v2436, %v2435
        %v2465 = vpack.c.b16 %v2438, %v2437
        %v2466 = vpack.c.b16 %v2440, %v2439
        %v2467 = vpack.c.b16 %v2442, %v2441
        %v2468 = vpack.c.b16 %v2444, %v2443
        %v2469 = vpack.c.b16 %v2446, %v2445
        %v2470 = vpack.c.b16 %v2448, %v2447
        %v2471 = vpack.c.b16 %v2450, %v2449
        %v2472 = vpack.c.b16 %v2452, %v2451
        %v2473 = vpack.c.b16 %v2454, %v2453
        %v2474 = vpack.c.b16 %v2456, %v2455
        %v2475 = vpack.c.b16 %v2458, %v2457
        %v2476 = vpack.c.b16 %v2460, %v2459
        %v2478 = vsel %vm1397, %v2461, 0
        %v2481 = vsel %vm1397, %v2462, 0
        %v2484 = vsel %vm1397, %v2463, 0
        %v2487 = vsel %vm1397, %v2464, 0
        %v2490 = vsel %vm1397, %v2465, 0
        %v2493 = vsel %vm1397, %v2466, 0
        %v2496 = vsel %vm1397, %v2467, 0
        %v2499 = vsel %vm1397, %v2468, 0
        %v2502 = vsel %vm1397, %v2469, 0
        %v2505 = vsel %vm1397, %v2470, 0
        %v2508 = vsel %vm1397, %v2471, 0
        %v2511 = vsel %vm1397, %v2472, 0
        %v2514 = vsel %vm1397, %v2473, 0
        %v2517 = vsel %vm1397, %v2474, 0
        %v2520 = vsel %vm1397, %v2475, 0
        %v2523 = vsel %vm1397, %v2476, 0
        %v2526 = vand.u32 %v2396, %v1449
        %2528 = vmatprep.subr.bf16.mxu0 0
        %2529 = vmatpush1.bf16.msra.mxu0 0
        %2530 = vmatprep.subr.bf16.mxu0 0
        %2531 = vmatpush1.bf16.msra.mxu0 0
        %2532 = vmatprep.subr.bf16.mxu0 0
        %2533 = vmatpush1.bf16.msra.mxu0 0
        %2534 = vmatprep.subr.bf16.mxu0 0
        %2535 = vmatpush1.bf16.msra.mxu0 0
        %2536 = vmatprep.subr.bf16.mxu0 0
        %2537 = vmatpush1.bf16.msra.mxu0 0
        %2538 = vmatprep.subr.bf16.mxu0 0
        %2539 = vmatpush1.bf16.msra.mxu0 0
        %2540 = vmatprep.subr.bf16.mxu0 0
        %2541 = vmatpush1.bf16.msra.mxu0 0
        %2542 = vmatprep.subr.bf16.mxu0 0
        %2543 = vmatpush1.bf16.msra.mxu0 %v2526
        %2544 = vmatprep.subr.bf16.mxu0 0
        %2545 = vmatpush2.bf16.msra.mxu0 0
        %2546 = vmatprep.subr.bf16.mxu0 0
        %2547 = vmatpush2.bf16.msra.mxu0 0
        %2548 = vmatprep.subr.bf16.mxu0 0
        %2549 = vmatpush2.bf16.msra.mxu0 0
        %2550 = vmatprep.subr.bf16.mxu0 0
        %2551 = vmatpush2.bf16.msra.mxu0 0
        %2552 = vmatprep.subr.bf16.mxu0 0
        %2553 = vmatpush2.bf16.msra.mxu0 0
        %2554 = vmatprep.subr.bf16.mxu0 0
        %2555 = vmatpush2.bf16.msra.mxu0 0
        %2556 = vmatprep.subr.bf16.mxu0 0
        %2557 = vmatpush2.bf16.msra.mxu0 0
        %2558 = vmatprep.subr.bf16.mxu0 0
        %2559 = vmatpush2.bf16.msra.mxu0 0
        %2560 = vmatprep.mubr.bf16.mxu0 0
        %2561 = vmatmul.mubr.bf16.gmra.mxu0 %v2478
        %v2562 = vpop.f32.mrf.mxu0
        %v2563 = vadd.f32 0.0, %v2562
        %v2564 = vpop.f32.mrf.mxu0
        %v2565 = vpop.f32.mrf.mxu0
        %v2566 = vadd.f32 0.0, %v2565
        %v2567 = vpop.f32.mrf.mxu0
        %2568 = vmatprep.mubr.bf16.mxu0 0
        %2569 = vmatmul.mubr.bf16.gmra.mxu0 %v2481
        %v2570 = vpop.f32.mrf.mxu0
        %v2571 = vadd.f32 0.0, %v2570
        %v2572 = vpop.f32.mrf.mxu0
        %v2573 = vpop.f32.mrf.mxu0
        %v2574 = vadd.f32 0.0, %v2573
        %v2575 = vpop.f32.mrf.mxu0
        %2576 = vmatprep.mubr.bf16.mxu0 0
        %2577 = vmatmul.mubr.bf16.gmra.mxu0 %v2484
        %v2578 = vpop.f32.mrf.mxu0
        %v2579 = vadd.f32 0.0, %v2578
        %v2580 = vpop.f32.mrf.mxu0
        %v2581 = vpop.f32.mrf.mxu0
        %v2582 = vadd.f32 0.0, %v2581
        %v2583 = vpop.f32.mrf.mxu0
        %2584 = vmatprep.mubr.bf16.mxu0 0
        %2585 = vmatmul.mubr.bf16.gmra.mxu0 %v2487
        %v2586 = vpop.f32.mrf.mxu0
        %v2587 = vadd.f32 0.0, %v2586
        %v2588 = vpop.f32.mrf.mxu0
        %v2589 = vpop.f32.mrf.mxu0
        %v2590 = vadd.f32 0.0, %v2589
        %v2591 = vpop.f32.mrf.mxu0
        %2592 = vmatprep.mubr.bf16.mxu0 0
        %2593 = vmatmul.mubr.bf16.gmra.mxu0 %v2490
        %v2594 = vpop.f32.mrf.mxu0
        %v2595 = vadd.f32 0.0, %v2594
        %v2596 = vpop.f32.mrf.mxu0
        %v2597 = vpop.f32.mrf.mxu0
        %v2598 = vadd.f32 0.0, %v2597
        %v2599 = vpop.f32.mrf.mxu0
        %2600 = vmatprep.mubr.bf16.mxu0 0
        %2601 = vmatmul.mubr.bf16.gmra.mxu0 %v2493
        %v2602 = vpop.f32.mrf.mxu0
        %v2603 = vadd.f32 0.0, %v2602
        %v2604 = vpop.f32.mrf.mxu0
        %v2605 = vpop.f32.mrf.mxu0
        %v2606 = vadd.f32 0.0, %v2605
        %v2607 = vpop.f32.mrf.mxu0
        %2608 = vmatprep.mubr.bf16.mxu0 0
        %2609 = vmatmul.mubr.bf16.gmra.mxu0 %v2496
        %v2610 = vpop.f32.mrf.mxu0
        %v2611 = vadd.f32 0.0, %v2610
        %v2612 = vpop.f32.mrf.mxu0
        %v2613 = vpop.f32.mrf.mxu0
        %v2614 = vadd.f32 0.0, %v2613
        %v2615 = vpop.f32.mrf.mxu0
        %2616 = vmatprep.mubr.bf16.mxu0 0
        %2617 = vmatmul.mubr.bf16.gmra.mxu0 %v2499
        %v2618 = vpop.f32.mrf.mxu0
        %v2619 = vadd.f32 0.0, %v2618
        %v2620 = vpop.f32.mrf.mxu0
        %v2621 = vpop.f32.mrf.mxu0
        %v2622 = vadd.f32 0.0, %v2621
        %v2623 = vpop.f32.mrf.mxu0
        %2624 = vmatprep.mubr.bf16.mxu0 0
        %2625 = vmatmul.mubr.bf16.gmra.mxu0 %v2502
        %v2626 = vpop.f32.mrf.mxu0
        %v2627 = vadd.f32 0.0, %v2626
        %v2628 = vpop.f32.mrf.mxu0
        %v2629 = vpop.f32.mrf.mxu0
        %v2630 = vadd.f32 0.0, %v2629
        %v2631 = vpop.f32.mrf.mxu0
        %2632 = vmatprep.mubr.bf16.mxu0 0
        %2633 = vmatmul.mubr.bf16.gmra.mxu0 %v2505
        %v2634 = vpop.f32.mrf.mxu0
        %v2635 = vadd.f32 0.0, %v2634
        %v2636 = vpop.f32.mrf.mxu0
        %v2637 = vpop.f32.mrf.mxu0
        %v2638 = vadd.f32 0.0, %v2637
        %v2639 = vpop.f32.mrf.mxu0
        %2640 = vmatprep.mubr.bf16.mxu0 0
        %2641 = vmatmul.mubr.bf16.gmra.mxu0 %v2508
        %v2642 = vpop.f32.mrf.mxu0
        %v2643 = vadd.f32 0.0, %v2642
        %v2644 = vpop.f32.mrf.mxu0
        %v2645 = vpop.f32.mrf.mxu0
        %v2646 = vadd.f32 0.0, %v2645
        %v2647 = vpop.f32.mrf.mxu0
        %2648 = vmatprep.mubr.bf16.mxu0 0
        %2649 = vmatmul.mubr.bf16.gmra.mxu0 %v2511
        %v2650 = vpop.f32.mrf.mxu0
        %v2651 = vadd.f32 0.0, %v2650
        %v2652 = vpop.f32.mrf.mxu0
        %v2653 = vpop.f32.mrf.mxu0
        %v2654 = vadd.f32 0.0, %v2653
        %v2655 = vpop.f32.mrf.mxu0
        %2656 = vmatprep.mubr.bf16.mxu0 0
        %2657 = vmatmul.mubr.bf16.gmra.mxu0 %v2514
        %v2658 = vpop.f32.mrf.mxu0
        %v2659 = vadd.f32 0.0, %v2658
        %v2660 = vpop.f32.mrf.mxu0
        %v2661 = vpop.f32.mrf.mxu0
        %v2662 = vadd.f32 0.0, %v2661
        %v2663 = vpop.f32.mrf.mxu0
        %2664 = vmatprep.mubr.bf16.mxu0 0
        %2665 = vmatmul.mubr.bf16.gmra.mxu0 %v2517
        %v2666 = vpop.f32.mrf.mxu0
        %v2667 = vadd.f32 0.0, %v2666
        %v2668 = vpop.f32.mrf.mxu0
        %v2669 = vpop.f32.mrf.mxu0
        %v2670 = vadd.f32 0.0, %v2669
        %v2671 = vpop.f32.mrf.mxu0
        %2672 = vmatprep.mubr.bf16.mxu0 0
        %2673 = vmatmul.mubr.bf16.gmra.mxu0 %v2520
        %v2674 = vpop.f32.mrf.mxu0
        %v2675 = vadd.f32 0.0, %v2674
        %v2676 = vpop.f32.mrf.mxu0
        %v2677 = vpop.f32.mrf.mxu0
        %v2678 = vadd.f32 0.0, %v2677
        %v2679 = vpop.f32.mrf.mxu0
        %2680 = vmatprep.mubr.bf16.mxu0 0
        %2681 = vmatmul.mubr.bf16.gmra.mxu0 %v2523
        %v2682 = vpop.f32.mrf.mxu0
        %v2683 = vadd.f32 0.0, %v2682
        %v2684 = vpop.f32.mrf.mxu0
        %v2685 = vpop.f32.mrf.mxu0
        %v2686 = vadd.f32 0.0, %v2685
        %v2687 = vpop.f32.mrf.mxu0
        %2688 = vdwg.mxu0
        %v2689 = vadd.f32 %v2331, %v2563
        %v2690 = vadd.f32 %v2332, %v2566
        %v2691 = vadd.f32 %v2333, %v2571
        %v2692 = vadd.f32 %v2334, %v2574
        %v2693 = vadd.f32 %v2335, %v2579
        %v2694 = vadd.f32 %v2336, %v2582
        %v2695 = vadd.f32 %v2337, %v2587
        %v2696 = vadd.f32 %v2338, %v2590
        %v2697 = vadd.f32 %v2339, %v2595
        %v2698 = vadd.f32 %v2340, %v2598
        %v2699 = vadd.f32 %v2341, %v2603
        %v2700 = vadd.f32 %v2342, %v2606
        %v2701 = vadd.f32 %v2343, %v2611
        %v2702 = vadd.f32 %v2344, %v2614
        %v2703 = vadd.f32 %v2345, %v2619
        %v2704 = vadd.f32 %v2346, %v2622
        %v2705 = vadd.f32 %v2347, %v2627
        %v2706 = vadd.f32 %v2348, %v2630
        %v2707 = vadd.f32 %v2349, %v2635
        %v2708 = vadd.f32 %v2350, %v2638
        %v2709 = vadd.f32 %v2351, %v2643
        %v2710 = vadd.f32 %v2352, %v2646
        %v2711 = vadd.f32 %v2353, %v2651
        %v2712 = vadd.f32 %v2354, %v2654
        %v2713 = vadd.f32 %v2355, %v2659
        %v2714 = vadd.f32 %v2356, %v2662
        %v2715 = vadd.f32 %v2357, %v2667
        %v2716 = vadd.f32 %v2358, %v2670
        %v2717 = vadd.f32 %v2359, %v2675
        %v2718 = vadd.f32 %v2360, %v2678
        %v2719 = vadd.f32 %v2361, %v2683
        %v2720 = vadd.f32 %v2362, %v2686
        %v2721 = vld [vmem:[%s796] sm:$0xf]
        %v2722 = vld [vmem:[%s796 + $0x4] sm:$0xf]
        %v2723 = vld [vmem:[%s796 + $0x8] sm:$0x1]
        %v2724 = vld [vmem:[%s796 + $0xc] sm:$0xf]
        %v2725 = vld [vmem:[%s796 + $0x10] sm:$0xf]
        %v2726 = vld [vmem:[%s796 + $0x14] sm:$0x1]
        %v2727 = vld [vmem:[%s796 + $0x18] sm:$0xf]
        %v2728 = vld [vmem:[%s796 + $0x1c] sm:$0xf]
        %v2729 = vld [vmem:[%s796 + $0x20] sm:$0x1]
        %v2730 = vld [vmem:[%s796 + $0x24] sm:$0xf]
        %v2731 = vld [vmem:[%s796 + $0x28] sm:$0xf]
        %v2732 = vld [vmem:[%s796 + $0x2c] sm:$0x1]
        %v2733 = vld [vmem:[%s796 + $0x30] sm:$0xf]
        %v2734 = vld [vmem:[%s796 + $0x34] sm:$0xf]
        %v2735 = vld [vmem:[%s796 + $0x38] sm:$0x1]
        %v2736 = vld [vmem:[%s796 + $0x3c] sm:$0xf]
        %v2737 = vld [vmem:[%s796 + $0x40] sm:$0xf]
        %v2738 = vld [vmem:[%s796 + $0x44] sm:$0x1]
        %v2739 = vld [vmem:[%s796 + $0x48] sm:$0xf]
        %v2740 = vld [vmem:[%s796 + $0x4c] sm:$0xf]
        %v2741 = vld [vmem:[%s796 + $0x50] sm:$0x1]
        %v2742 = vld [vmem:[%s796 + $0x54] sm:$0xf]
        %v2743 = vld [vmem:[%s796 + $0x58] sm:$0xf]
        %v2744 = vld [vmem:[%s796 + $0x5c] sm:$0x1]
        %v2745 = vld [vmem:[%s796 + $0x60] sm:$0xf]
        %v2746 = vld [vmem:[%s796 + $0x64] sm:$0xf]
        %v2747 = vld [vmem:[%s796 + $0x68] sm:$0x1]
        %v2748 = vld [vmem:[%s796 + $0x6c] sm:$0xf]
        %v2749 = vld [vmem:[%s796 + $0x70] sm:$0xf]
        %v2750 = vld [vmem:[%s796 + $0x74] sm:$0x1]
        %v2751 = vld [vmem:[%s796 + $0x78] sm:$0xf]
        %v2752 = vld [vmem:[%s796 + $0x7c] sm:$0xf]
        %v2753 = vld [vmem:[%s796 + $0x80] sm:$0x1]
        %v2754 = vld [vmem:[%s796 + $0x84] sm:$0xf]
        %v2755 = vld [vmem:[%s796 + $0x88] sm:$0xf]
        %v2756 = vld [vmem:[%s796 + $0x8c] sm:$0x1]
        %v2757 = vld [vmem:[%s796 + $0x90] sm:$0xf]
        %v2758 = vld [vmem:[%s796 + $0x94] sm:$0xf]
        %v2759 = vld [vmem:[%s796 + $0x98] sm:$0x1]
        %v2760 = vld [vmem:[%s796 + $0x9c] sm:$0xf]
        %v2761 = vld [vmem:[%s796 + $0xa0] sm:$0xf]
        %v2762 = vld [vmem:[%s796 + $0xa4] sm:$0x1]
        %v2763 = vld [vmem:[%s796 + $0xa8] sm:$0xf]
        %v2764 = vld [vmem:[%s796 + $0xac] sm:$0xf]
        %v2765 = vld [vmem:[%s796 + $0xb0] sm:$0x1]
        %v2766 = vld [vmem:[%s796 + $0xb4] sm:$0xf]
        %v2767 = vld [vmem:[%s796 + $0xb8] sm:$0xf]
        %v2768 = vld [vmem:[%s796 + $0xbc] sm:$0x1]
        %v2770 = vshrl.u32 %v2721, 16
        %v2772 = vrot.slane %v2770, 4
        %v2773 = vshll.u32 %v2721, 16
        %v2775 = vrot.slane %v2773, 5
        %v2776 = vor.u32 %v2772, %v2775
        %v2777 = vrot.slane %v2776, 4
        %v2779 = vshll.u32 %v2722, 16
        %v2781 = vrot.slane %v2779, 5
        %v2782 = vsel %vm962, %v2777, %v2781
        %v2783 = vshrl.u32 %v2722, 16
        %v2785 = vrot.slane %v2783, 4
        %v2786 = vor.u32 %v2785, %v2781
        %v2787 = vrot.slane %v2786, 4
        %v2789 = vshll.u32 %v2723, 16
        %v2791 = vrot.slane %v2789, 5
        %v2792 = vsel %vm962, %v2787, %v2791
        %v2794 = vshrl.u32 %v2724, 16
        %v2796 = vrot.slane %v2794, 4
        %v2797 = vshll.u32 %v2724, 16
        %v2799 = vrot.slane %v2797, 5
        %v2800 = vor.u32 %v2796, %v2799
        %v2801 = vrot.slane %v2800, 4
        %v2803 = vshll.u32 %v2725, 16
        %v2805 = vrot.slane %v2803, 5
        %v2806 = vsel %vm962, %v2801, %v2805
        %v2807 = vshrl.u32 %v2725, 16
        %v2809 = vrot.slane %v2807, 4
        %v2810 = vor.u32 %v2809, %v2805
        %v2811 = vrot.slane %v2810, 4
        %v2813 = vshll.u32 %v2726, 16
        %v2815 = vrot.slane %v2813, 5
        %v2816 = vsel %vm962, %v2811, %v2815
        %v2818 = vshrl.u32 %v2727, 16
        %v2820 = vrot.slane %v2818, 4
        %v2821 = vshll.u32 %v2727, 16
        %v2823 = vrot.slane %v2821, 5
        %v2824 = vor.u32 %v2820, %v2823
        %v2825 = vrot.slane %v2824, 4
        %v2827 = vshll.u32 %v2728, 16
        %v2829 = vrot.slane %v2827, 5
        %v2830 = vsel %vm962, %v2825, %v2829
        %v2831 = vshrl.u32 %v2728, 16
        %v2833 = vrot.slane %v2831, 4
        %v2834 = vor.u32 %v2833, %v2829
        %v2835 = vrot.slane %v2834, 4
        %v2837 = vshll.u32 %v2729, 16
        %v2839 = vrot.slane %v2837, 5
        %v2840 = vsel %vm962, %v2835, %v2839
        %v2842 = vshrl.u32 %v2730, 16
        %v2844 = vrot.slane %v2842, 4
        %v2845 = vshll.u32 %v2730, 16
        %v2847 = vrot.slane %v2845, 5
        %v2848 = vor.u32 %v2844, %v2847
        %v2849 = vrot.slane %v2848, 4
        %v2851 = vshll.u32 %v2731, 16
        %v2853 = vrot.slane %v2851, 5
        %v2854 = vsel %vm962, %v2849, %v2853
        %v2855 = vshrl.u32 %v2731, 16
        %v2857 = vrot.slane %v2855, 4
        %v2858 = vor.u32 %v2857, %v2853
        %v2859 = vrot.slane %v2858, 4
        %v2861 = vshll.u32 %v2732, 16
        %v2863 = vrot.slane %v2861, 5
        %v2864 = vsel %vm962, %v2859, %v2863
        %v2866 = vshrl.u32 %v2733, 16
        %v2868 = vrot.slane %v2866, 4
        %v2869 = vshll.u32 %v2733, 16
        %v2871 = vrot.slane %v2869, 5
        %v2872 = vor.u32 %v2868, %v2871
        %v2873 = vrot.slane %v2872, 4
        %v2875 = vshll.u32 %v2734, 16
        %v2877 = vrot.slane %v2875, 5
        %v2878 = vsel %vm962, %v2873, %v2877
        %v2879 = vshrl.u32 %v2734, 16
        %v2881 = vrot.slane %v2879, 4
        %v2882 = vor.u32 %v2881, %v2877
        %v2883 = vrot.slane %v2882, 4
        %v2885 = vshll.u32 %v2735, 16
        %v2887 = vrot.slane %v2885, 5
        %v2888 = vsel %vm962, %v2883, %v2887
        %v2890 = vshrl.u32 %v2736, 16
        %v2892 = vrot.slane %v2890, 4
        %v2893 = vshll.u32 %v2736, 16
        %v2895 = vrot.slane %v2893, 5
        %v2896 = vor.u32 %v2892, %v2895
        %v2897 = vrot.slane %v2896, 4
        %v2899 = vshll.u32 %v2737, 16
        %v2901 = vrot.slane %v2899, 5
        %v2902 = vsel %vm962, %v2897, %v2901
        %v2903 = vshrl.u32 %v2737, 16
        %v2905 = vrot.slane %v2903, 4
        %v2906 = vor.u32 %v2905, %v2901
        %v2907 = vrot.slane %v2906, 4
        %v2909 = vshll.u32 %v2738, 16
        %v2911 = vrot.slane %v2909, 5
        %v2912 = vsel %vm962, %v2907, %v2911
        %v2914 = vshrl.u32 %v2739, 16
        %v2916 = vrot.slane %v2914, 4
        %v2917 = vshll.u32 %v2739, 16
        %v2919 = vrot.slane %v2917, 5
        %v2920 = vor.u32 %v2916, %v2919
        %v2921 = vrot.slane %v2920, 4
        %v2923 = vshll.u32 %v2740, 16
        %v2925 = vrot.slane %v2923, 5
        %v2926 = vsel %vm962, %v2921, %v2925
        %v2927 = vshrl.u32 %v2740, 16
        %v2929 = vrot.slane %v2927, 4
        %v2930 = vor.u32 %v2929, %v2925
        %v2931 = vrot.slane %v2930, 4
        %v2933 = vshll.u32 %v2741, 16
        %v2935 = vrot.slane %v2933, 5
        %v2936 = vsel %vm962, %v2931, %v2935
        %v2938 = vshrl.u32 %v2742, 16
        %v2940 = vrot.slane %v2938, 4
        %v2941 = vshll.u32 %v2742, 16
        %v2943 = vrot.slane %v2941, 5
        %v2944 = vor.u32 %v2940, %v2943
        %v2945 = vrot.slane %v2944, 4
        %v2947 = vshll.u32 %v2743, 16
        %v2949 = vrot.slane %v2947, 5
        %v2950 = vsel %vm962, %v2945, %v2949
        %v2951 = vshrl.u32 %v2743, 16
        %v2953 = vrot.slane %v2951, 4
        %v2954 = vor.u32 %v2953, %v2949
        %v2955 = vrot.slane %v2954, 4
        %v2957 = vshll.u32 %v2744, 16
        %v2959 = vrot.slane %v2957, 5
        %v2960 = vsel %vm962, %v2955, %v2959
        %v2962 = vshrl.u32 %v2745, 16
        %v2964 = vrot.slane %v2962, 4
        %v2965 = vshll.u32 %v2745, 16
        %v2967 = vrot.slane %v2965, 5
        %v2968 = vor.u32 %v2964, %v2967
        %v2969 = vrot.slane %v2968, 4
        %v2971 = vshll.u32 %v2746, 16
        %v2973 = vrot.slane %v2971, 5
        %v2974 = vsel %vm962, %v2969, %v2973
        %v2975 = vshrl.u32 %v2746, 16
        %v2977 = vrot.slane %v2975, 4
        %v2978 = vor.u32 %v2977, %v2973
        %v2979 = vrot.slane %v2978, 4
        %v2981 = vshll.u32 %v2747, 16
        %v2983 = vrot.slane %v2981, 5
        %v2984 = vsel %vm962, %v2979, %v2983
        %v2986 = vshrl.u32 %v2748, 16
        %v2988 = vrot.slane %v2986, 4
        %v2989 = vshll.u32 %v2748, 16
        %v2991 = vrot.slane %v2989, 5
        %v2992 = vor.u32 %v2988, %v2991
        %v2993 = vrot.slane %v2992, 4
        %v2995 = vshll.u32 %v2749, 16
        %v2997 = vrot.slane %v2995, 5
        %v2998 = vsel %vm962, %v2993, %v2997
        %v2999 = vshrl.u32 %v2749, 16
        %v3001 = vrot.slane %v2999, 4
        %v3002 = vor.u32 %v3001, %v2997
        %v3003 = vrot.slane %v3002, 4
        %v3005 = vshll.u32 %v2750, 16
        %v3007 = vrot.slane %v3005, 5
        %v3008 = vsel %vm962, %v3003, %v3007
        %v3010 = vshrl.u32 %v2751, 16
        %v3012 = vrot.slane %v3010, 4
        %v3013 = vshll.u32 %v2751, 16
        %v3015 = vrot.slane %v3013, 5
        %v3016 = vor.u32 %v3012, %v3015
        %v3017 = vrot.slane %v3016, 4
        %v3019 = vshll.u32 %v2752, 16
        %v3021 = vrot.slane %v3019, 5
        %v3022 = vsel %vm962, %v3017, %v3021
        %v3023 = vshrl.u32 %v2752, 16
        %v3025 = vrot.slane %v3023, 4
        %v3026 = vor.u32 %v3025, %v3021
        %v3027 = vrot.slane %v3026, 4
        %v3029 = vshll.u32 %v2753, 16
        %v3031 = vrot.slane %v3029, 5
        %v3032 = vsel %vm962, %v3027, %v3031
        %v3034 = vshrl.u32 %v2754, 16
        %v3036 = vrot.slane %v3034, 4
        %v3037 = vshll.u32 %v2754, 16
        %v3039 = vrot.slane %v3037, 5
        %v3040 = vor.u32 %v3036, %v3039
        %v3041 = vrot.slane %v3040, 4
        %v3043 = vshll.u32 %v2755, 16
        %v3045 = vrot.slane %v3043, 5
        %v3046 = vsel %vm962, %v3041, %v3045
        %v3047 = vshrl.u32 %v2755, 16
        %v3049 = vrot.slane %v3047, 4
        %v3050 = vor.u32 %v3049, %v3045
        %v3051 = vrot.slane %v3050, 4
        %v3053 = vshll.u32 %v2756, 16
        %v3055 = vrot.slane %v3053, 5
        %v3056 = vsel %vm962, %v3051, %v3055
        %v3058 = vshrl.u32 %v2757, 16
        %v3060 = vrot.slane %v3058, 4
        %v3061 = vshll.u32 %v2757, 16
        %v3063 = vrot.slane %v3061, 5
        %v3064 = vor.u32 %v3060, %v3063
        %v3065 = vrot.slane %v3064, 4
        %v3067 = vshll.u32 %v2758, 16
        %v3069 = vrot.slane %v3067, 5
        %v3070 = vsel %vm962, %v3065, %v3069
        %v3071 = vshrl.u32 %v2758, 16
        %v3073 = vrot.slane %v3071, 4
        %v3074 = vor.u32 %v3073, %v3069
        %v3075 = vrot.slane %v3074, 4
        %v3077 = vshll.u32 %v2759, 16
        %v3079 = vrot.slane %v3077, 5
        %v3080 = vsel %vm962, %v3075, %v3079
        %v3082 = vshrl.u32 %v2760, 16
        %v3084 = vrot.slane %v3082, 4
        %v3085 = vshll.u32 %v2760, 16
        %v3087 = vrot.slane %v3085, 5
        %v3088 = vor.u32 %v3084, %v3087
        %v3089 = vrot.slane %v3088, 4
        %v3091 = vshll.u32 %v2761, 16
        %v3093 = vrot.slane %v3091, 5
        %v3094 = vsel %vm962, %v3089, %v3093
        %v3095 = vshrl.u32 %v2761, 16
        %v3097 = vrot.slane %v3095, 4
        %v3098 = vor.u32 %v3097, %v3093
        %v3099 = vrot.slane %v3098, 4
        %v3101 = vshll.u32 %v2762, 16
        %v3103 = vrot.slane %v3101, 5
        %v3104 = vsel %vm962, %v3099, %v3103
        %v3106 = vshrl.u32 %v2763, 16
        %v3108 = vrot.slane %v3106, 4
        %v3109 = vshll.u32 %v2763, 16
        %v3111 = vrot.slane %v3109, 5
        %v3112 = vor.u32 %v3108, %v3111
        %v3113 = vrot.slane %v3112, 4
        %v3115 = vshll.u32 %v2764, 16
        %v3117 = vrot.slane %v3115, 5
        %v3118 = vsel %vm962, %v3113, %v3117
        %v3119 = vshrl.u32 %v2764, 16
        %v3121 = vrot.slane %v3119, 4
        %v3122 = vor.u32 %v3121, %v3117
        %v3123 = vrot.slane %v3122, 4
        %v3125 = vshll.u32 %v2765, 16
        %v3127 = vrot.slane %v3125, 5
        %v3128 = vsel %vm962, %v3123, %v3127
        %v3130 = vshrl.u32 %v2766, 16
        %v3132 = vrot.slane %v3130, 4
        %v3133 = vshll.u32 %v2766, 16
        %v3135 = vrot.slane %v3133, 5
        %v3136 = vor.u32 %v3132, %v3135
        %v3137 = vrot.slane %v3136, 4
        %v3139 = vshll.u32 %v2767, 16
        %v3141 = vrot.slane %v3139, 5
        %v3142 = vsel %vm962, %v3137, %v3141
        %v3143 = vshrl.u32 %v2767, 16
        %v3145 = vrot.slane %v3143, 4
        %v3146 = vor.u32 %v3145, %v3141
        %v3147 = vrot.slane %v3146, 4
        %v3149 = vshll.u32 %v2768, 16
        %v3151 = vrot.slane %v3149, 5
        %v3152 = vsel %vm962, %v3147, %v3151
        %s3153 = scalar_lea.vmem %s1, 8
        %v3154 = vld [vmem:[%s3153] sm:$0x3]
        %v3155 = vunpack.c.l.b16 %v2782
        %v3156 = vunpack.c.l.b16 %v2792
        %v3157 = vunpack.c.l.b16 %v2806
        %v3158 = vunpack.c.l.b16 %v2816
        %v3159 = vunpack.c.l.b16 %v2830
        %v3160 = vunpack.c.l.b16 %v2840
        %v3161 = vunpack.c.l.b16 %v2854
        %v3162 = vunpack.c.l.b16 %v2864
        %v3163 = vunpack.c.l.b16 %v2878
        %v3164 = vunpack.c.l.b16 %v2888
        %v3165 = vunpack.c.l.b16 %v2902
        %v3166 = vunpack.c.l.b16 %v2912
        %v3167 = vunpack.c.l.b16 %v2926
        %v3168 = vunpack.c.l.b16 %v2936
        %v3169 = vunpack.c.l.b16 %v2950
        %v3170 = vunpack.c.l.b16 %v2960
        %v3171 = vunpack.c.l.b16 %v2974
        %v3172 = vunpack.c.l.b16 %v2984
        %v3173 = vunpack.c.l.b16 %v2998
        %v3174 = vunpack.c.l.b16 %v3008
        %v3175 = vunpack.c.l.b16 %v3022
        %v3176 = vunpack.c.l.b16 %v3032
        %v3177 = vunpack.c.l.b16 %v3046
        %v3178 = vunpack.c.l.b16 %v3056
        %v3179 = vunpack.c.l.b16 %v3070
        %v3180 = vunpack.c.l.b16 %v3080
        %v3181 = vunpack.c.l.b16 %v3094
        %v3182 = vunpack.c.l.b16 %v3104
        %v3183 = vunpack.c.l.b16 %v3118
        %v3184 = vunpack.c.l.b16 %v3128
        %v3185 = vunpack.c.l.b16 %v3142
        %v3186 = vunpack.c.l.b16 %v3152
        %v3187 = vpack.c.b16 %v3156, %v3155
        %v3188 = vpack.c.b16 %v3158, %v3157
        %v3189 = vpack.c.b16 %v3160, %v3159
        %v3190 = vpack.c.b16 %v3162, %v3161
        %v3191 = vpack.c.b16 %v3164, %v3163
        %v3192 = vpack.c.b16 %v3166, %v3165
        %v3193 = vpack.c.b16 %v3168, %v3167
        %v3194 = vpack.c.b16 %v3170, %v3169
        %v3195 = vpack.c.b16 %v3172, %v3171
        %v3196 = vpack.c.b16 %v3174, %v3173
        %v3197 = vpack.c.b16 %v3176, %v3175
        %v3198 = vpack.c.b16 %v3178, %v3177
        %v3199 = vpack.c.b16 %v3180, %v3179
        %v3200 = vpack.c.b16 %v3182, %v3181
        %v3201 = vpack.c.b16 %v3184, %v3183
        %v3202 = vpack.c.b16 %v3186, %v3185
        %v3204 = vsel %vm1397, %v3187, 0
        %v3207 = vsel %vm1397, %v3188, 0
        %v3210 = vsel %vm1397, %v3189, 0
        %v3213 = vsel %vm1397, %v3190, 0
        %v3216 = vsel %vm1397, %v3191, 0
        %v3219 = vsel %vm1397, %v3192, 0
        %v3222 = vsel %vm1397, %v3193, 0
        %v3225 = vsel %vm1397, %v3194, 0
        %v3228 = vsel %vm1397, %v3195, 0
        %v3231 = vsel %vm1397, %v3196, 0
        %v3234 = vsel %vm1397, %v3197, 0
        %v3237 = vsel %vm1397, %v3198, 0
        %v3240 = vsel %vm1397, %v3199, 0
        %v3243 = vsel %vm1397, %v3200, 0
        %v3246 = vsel %vm1397, %v3201, 0
        %v3249 = vsel %vm1397, %v3202, 0
        %v3252 = vand.u32 %v3154, %v1449
        %3254 = vmatprep.subr.bf16.mxu0 0
        %3255 = vmatpush1.bf16.msra.mxu0 0
        %3256 = vmatprep.subr.bf16.mxu0 0
        %3257 = vmatpush1.bf16.msra.mxu0 0
        %3258 = vmatprep.subr.bf16.mxu0 0
        %3259 = vmatpush1.bf16.msra.mxu0 0
        %3260 = vmatprep.subr.bf16.mxu0 0
        %3261 = vmatpush1.bf16.msra.mxu0 0
        %3262 = vmatprep.subr.bf16.mxu0 0
        %3263 = vmatpush1.bf16.msra.mxu0 0
        %3264 = vmatprep.subr.bf16.mxu0 0
        %3265 = vmatpush1.bf16.msra.mxu0 0
        %3266 = vmatprep.subr.bf16.mxu0 0
        %3267 = vmatpush1.bf16.msra.mxu0 0
        %3268 = vmatprep.subr.bf16.mxu0 0
        %3269 = vmatpush1.bf16.msra.mxu0 %v3252
        %3270 = vmatprep.subr.bf16.mxu0 0
        %3271 = vmatpush2.bf16.msra.mxu0 0
        %3272 = vmatprep.subr.bf16.mxu0 0
        %3273 = vmatpush2.bf16.msra.mxu0 0
        %3274 = vmatprep.subr.bf16.mxu0 0
        %3275 = vmatpush2.bf16.msra.mxu0 0
        %3276 = vmatprep.subr.bf16.mxu0 0
        %3277 = vmatpush2.bf16.msra.mxu0 0
        %3278 = vmatprep.subr.bf16.mxu0 0
        %3279 = vmatpush2.bf16.msra.mxu0 0
        %3280 = vmatprep.subr.bf16.mxu0 0
        %3281 = vmatpush2.bf16.msra.mxu0 0
        %3282 = vmatprep.subr.bf16.mxu0 0
        %3283 = vmatpush2.bf16.msra.mxu0 0
        %3284 = vmatprep.subr.bf16.mxu0 0
        %3285 = vmatpush2.bf16.msra.mxu0 0
        %3286 = vmatprep.mubr.bf16.mxu0 0
        %3287 = vmatmul.mubr.bf16.gmra.mxu0 %v3204
        %v3288 = vpop.f32.mrf.mxu0
        %v3289 = vadd.f32 0.0, %v3288
        %v3290 = vpop.f32.mrf.mxu0
        %v3291 = vpop.f32.mrf.mxu0
        %v3292 = vadd.f32 0.0, %v3291
        %v3293 = vpop.f32.mrf.mxu0
        %3294 = vmatprep.mubr.bf16.mxu0 0
        %3295 = vmatmul.mubr.bf16.gmra.mxu0 %v3207
        %v3296 = vpop.f32.mrf.mxu0
        %v3297 = vadd.f32 0.0, %v3296
        %v3298 = vpop.f32.mrf.mxu0
        %v3299 = vpop.f32.mrf.mxu0
        %v3300 = vadd.f32 0.0, %v3299
        %v3301 = vpop.f32.mrf.mxu0
        %3302 = vmatprep.mubr.bf16.mxu0 0
        %3303 = vmatmul.mubr.bf16.gmra.mxu0 %v3210
        %v3304 = vpop.f32.mrf.mxu0
        %v3305 = vadd.f32 0.0, %v3304
        %v3306 = vpop.f32.mrf.mxu0
        %v3307 = vpop.f32.mrf.mxu0
        %v3308 = vadd.f32 0.0, %v3307
        %v3309 = vpop.f32.mrf.mxu0
        %3310 = vmatprep.mubr.bf16.mxu0 0
        %3311 = vmatmul.mubr.bf16.gmra.mxu0 %v3213
        %v3312 = vpop.f32.mrf.mxu0
        %v3313 = vadd.f32 0.0, %v3312
        %v3314 = vpop.f32.mrf.mxu0
        %v3315 = vpop.f32.mrf.mxu0
        %v3316 = vadd.f32 0.0, %v3315
        %v3317 = vpop.f32.mrf.mxu0
        %3318 = vmatprep.mubr.bf16.mxu0 0
        %3319 = vmatmul.mubr.bf16.gmra.mxu0 %v3216
        %v3320 = vpop.f32.mrf.mxu0
        %v3321 = vadd.f32 0.0, %v3320
        %v3322 = vpop.f32.mrf.mxu0
        %v3323 = vpop.f32.mrf.mxu0
        %v3324 = vadd.f32 0.0, %v3323
        %v3325 = vpop.f32.mrf.mxu0
        %3326 = vmatprep.mubr.bf16.mxu0 0
        %3327 = vmatmul.mubr.bf16.gmra.mxu0 %v3219
        %v3328 = vpop.f32.mrf.mxu0
        %v3329 = vadd.f32 0.0, %v3328
        %v3330 = vpop.f32.mrf.mxu0
        %v3331 = vpop.f32.mrf.mxu0
        %v3332 = vadd.f32 0.0, %v3331
        %v3333 = vpop.f32.mrf.mxu0
        %3334 = vmatprep.mubr.bf16.mxu0 0
        %3335 = vmatmul.mubr.bf16.gmra.mxu0 %v3222
        %v3336 = vpop.f32.mrf.mxu0
        %v3337 = vadd.f32 0.0, %v3336
        %v3338 = vpop.f32.mrf.mxu0
        %v3339 = vpop.f32.mrf.mxu0
        %v3340 = vadd.f32 0.0, %v3339
        %v3341 = vpop.f32.mrf.mxu0
        %3342 = vmatprep.mubr.bf16.mxu0 0
        %3343 = vmatmul.mubr.bf16.gmra.mxu0 %v3225
        %v3344 = vpop.f32.mrf.mxu0
        %v3345 = vadd.f32 0.0, %v3344
        %v3346 = vpop.f32.mrf.mxu0
        %v3347 = vpop.f32.mrf.mxu0
        %v3348 = vadd.f32 0.0, %v3347
        %v3349 = vpop.f32.mrf.mxu0
        %3350 = vmatprep.mubr.bf16.mxu0 0
        %3351 = vmatmul.mubr.bf16.gmra.mxu0 %v3228
        %v3352 = vpop.f32.mrf.mxu0
        %v3353 = vadd.f32 0.0, %v3352
        %v3354 = vpop.f32.mrf.mxu0
        %v3355 = vpop.f32.mrf.mxu0
        %v3356 = vadd.f32 0.0, %v3355
        %v3357 = vpop.f32.mrf.mxu0
        %3358 = vmatprep.mubr.bf16.mxu0 0
        %3359 = vmatmul.mubr.bf16.gmra.mxu0 %v3231
        %v3360 = vpop.f32.mrf.mxu0
        %v3361 = vadd.f32 0.0, %v3360
        %v3362 = vpop.f32.mrf.mxu0
        %v3363 = vpop.f32.mrf.mxu0
        %v3364 = vadd.f32 0.0, %v3363
        %v3365 = vpop.f32.mrf.mxu0
        %3366 = vmatprep.mubr.bf16.mxu0 0
        %3367 = vmatmul.mubr.bf16.gmra.mxu0 %v3234
        %v3368 = vpop.f32.mrf.mxu0
        %v3369 = vadd.f32 0.0, %v3368
        %v3370 = vpop.f32.mrf.mxu0
        %v3371 = vpop.f32.mrf.mxu0
        %v3372 = vadd.f32 0.0, %v3371
        %v3373 = vpop.f32.mrf.mxu0
        %3374 = vmatprep.mubr.bf16.mxu0 0
        %3375 = vmatmul.mubr.bf16.gmra.mxu0 %v3237
        %v3376 = vpop.f32.mrf.mxu0
        %v3377 = vadd.f32 0.0, %v3376
        %v3378 = vpop.f32.mrf.mxu0
        %v3379 = vpop.f32.mrf.mxu0
        %v3380 = vadd.f32 0.0, %v3379
        %v3381 = vpop.f32.mrf.mxu0
        %3382 = vmatprep.mubr.bf16.mxu0 0
        %3383 = vmatmul.mubr.bf16.gmra.mxu0 %v3240
        %v3384 = vpop.f32.mrf.mxu0
        %v3385 = vadd.f32 0.0, %v3384
        %v3386 = vpop.f32.mrf.mxu0
        %v3387 = vpop.f32.mrf.mxu0
        %v3388 = vadd.f32 0.0, %v3387
        %v3389 = vpop.f32.mrf.mxu0
        %3390 = vmatprep.mubr.bf16.mxu0 0
        %3391 = vmatmul.mubr.bf16.gmra.mxu0 %v3243
        %v3392 = vpop.f32.mrf.mxu0
        %v3393 = vadd.f32 0.0, %v3392
        %v3394 = vpop.f32.mrf.mxu0
        %v3395 = vpop.f32.mrf.mxu0
        %v3396 = vadd.f32 0.0, %v3395
        %v3397 = vpop.f32.mrf.mxu0
        %3398 = vmatprep.mubr.bf16.mxu0 0
        %3399 = vmatmul.mubr.bf16.gmra.mxu0 %v3246
        %v3400 = vpop.f32.mrf.mxu0
        %v3401 = vadd.f32 0.0, %v3400
        %v3402 = vpop.f32.mrf.mxu0
        %v3403 = vpop.f32.mrf.mxu0
        %v3404 = vadd.f32 0.0, %v3403
        %v3405 = vpop.f32.mrf.mxu0
        %3406 = vmatprep.mubr.bf16.mxu0 0
        %3407 = vmatmul.mubr.bf16.gmra.mxu0 %v3249
        %v3408 = vpop.f32.mrf.mxu0
        %v3409 = vadd.f32 0.0, %v3408
        %v3410 = vpop.f32.mrf.mxu0
        %v3411 = vpop.f32.mrf.mxu0
        %v3412 = vadd.f32 0.0, %v3411
        %v3413 = vpop.f32.mrf.mxu0
        %3414 = vdwg.mxu0
        %v3415 = vadd.f32 %v2689, %v3289
        %v3416 = vadd.f32 %v2690, %v3292
        %v3417 = vadd.f32 %v2691, %v3297
        %v3418 = vadd.f32 %v2692, %v3300
        %v3419 = vadd.f32 %v2693, %v3305
        %v3420 = vadd.f32 %v2694, %v3308
        %v3421 = vadd.f32 %v2695, %v3313
        %v3422 = vadd.f32 %v2696, %v3316
        %v3423 = vadd.f32 %v2697, %v3321
        %v3424 = vadd.f32 %v2698, %v3324
        %v3425 = vadd.f32 %v2699, %v3329
        %v3426 = vadd.f32 %v2700, %v3332
        %v3427 = vadd.f32 %v2701, %v3337
        %v3428 = vadd.f32 %v2702, %v3340
        %v3429 = vadd.f32 %v2703, %v3345
        %v3430 = vadd.f32 %v2704, %v3348
        %v3431 = vadd.f32 %v2705, %v3353
        %v3432 = vadd.f32 %v2706, %v3356
        %v3433 = vadd.f32 %v2707, %v3361
        %v3434 = vadd.f32 %v2708, %v3364
        %v3435 = vadd.f32 %v2709, %v3369
        %v3436 = vadd.f32 %v2710, %v3372
        %v3437 = vadd.f32 %v2711, %v3377
        %v3438 = vadd.f32 %v2712, %v3380
        %v3439 = vadd.f32 %v2713, %v3385
        %v3440 = vadd.f32 %v2714, %v3388
        %v3441 = vadd.f32 %v2715, %v3393
        %v3442 = vadd.f32 %v2716, %v3396
        %v3443 = vadd.f32 %v2717, %v3401
        %v3444 = vadd.f32 %v2718, %v3404
        %v3445 = vadd.f32 %v2719, %v3409
        %v3446 = vadd.f32 %v2720, %v3412
        %v3447 = vld [vmem:[%s796] sm:$0xe]
        %v3448 = vld [vmem:[%s796 + $0xc] sm:$0xe]
        %v3449 = vld [vmem:[%s796 + $0x18] sm:$0xe]
        %v3450 = vld [vmem:[%s796 + $0x24] sm:$0xe]
        %v3451 = vld [vmem:[%s796 + $0x30] sm:$0xe]
        %v3452 = vld [vmem:[%s796 + $0x3c] sm:$0xe]
        %v3453 = vld [vmem:[%s796 + $0x48] sm:$0xe]
        %v3454 = vld [vmem:[%s796 + $0x54] sm:$0xe]
        %v3455 = vld [vmem:[%s796 + $0x60] sm:$0xe]
        %v3456 = vld [vmem:[%s796 + $0x6c] sm:$0xe]
        %v3457 = vld [vmem:[%s796 + $0x78] sm:$0xe]
        %v3458 = vld [vmem:[%s796 + $0x84] sm:$0xe]
        %v3459 = vld [vmem:[%s796 + $0x90] sm:$0xe]
        %v3460 = vld [vmem:[%s796 + $0x9c] sm:$0xe]
        %v3461 = vld [vmem:[%s796 + $0xa8] sm:$0xe]
        %v3462 = vld [vmem:[%s796 + $0xb4] sm:$0xe]
        %v3511 = vrot.slane %v3447, 5
        %v3512 = vrot.slane %v3511, 4
        %v3513 = vrot.slane %v2722, 5
        %v3514 = vsel %vm1956, %v3512, %v3513
        %v3515 = vrot.slane %v3513, 4
        %v3516 = vrot.slane %v2723, 5
        %v3517 = vsel %vm1956, %v3515, %v3516
        %v3518 = vrot.slane %v3448, 5
        %v3519 = vrot.slane %v3518, 4
        %v3520 = vrot.slane %v2725, 5
        %v3521 = vsel %vm1956, %v3519, %v3520
        %v3522 = vrot.slane %v3520, 4
        %v3523 = vrot.slane %v2726, 5
        %v3524 = vsel %vm1956, %v3522, %v3523
        %v3525 = vrot.slane %v3449, 5
        %v3526 = vrot.slane %v3525, 4
        %v3527 = vrot.slane %v2728, 5
        %v3528 = vsel %vm1956, %v3526, %v3527
        %v3529 = vrot.slane %v3527, 4
        %v3530 = vrot.slane %v2729, 5
        %v3531 = vsel %vm1956, %v3529, %v3530
        %v3532 = vrot.slane %v3450, 5
        %v3533 = vrot.slane %v3532, 4
        %v3534 = vrot.slane %v2731, 5
        %v3535 = vsel %vm1956, %v3533, %v3534
        %v3536 = vrot.slane %v3534, 4
        %v3537 = vrot.slane %v2732, 5
        %v3538 = vsel %vm1956, %v3536, %v3537
        %v3539 = vrot.slane %v3451, 5
        %v3540 = vrot.slane %v3539, 4
        %v3541 = vrot.slane %v2734, 5
        %v3542 = vsel %vm1956, %v3540, %v3541
        %v3543 = vrot.slane %v3541, 4
        %v3544 = vrot.slane %v2735, 5
        %v3545 = vsel %vm1956, %v3543, %v3544
        %v3546 = vrot.slane %v3452, 5
        %v3547 = vrot.slane %v3546, 4
        %v3548 = vrot.slane %v2737, 5
        %v3549 = vsel %vm1956, %v3547, %v3548
        %v3550 = vrot.slane %v3548, 4
        %v3551 = vrot.slane %v2738, 5
        %v3552 = vsel %vm1956, %v3550, %v3551
        %v3553 = vrot.slane %v3453, 5
        %v3554 = vrot.slane %v3553, 4
        %v3555 = vrot.slane %v2740, 5
        %v3556 = vsel %vm1956, %v3554, %v3555
        %v3557 = vrot.slane %v3555, 4
        %v3558 = vrot.slane %v2741, 5
        %v3559 = vsel %vm1956, %v3557, %v3558
        %v3560 = vrot.slane %v3454, 5
        %v3561 = vrot.slane %v3560, 4
        %v3562 = vrot.slane %v2743, 5
        %v3563 = vsel %vm1956, %v3561, %v3562
        %v3564 = vrot.slane %v3562, 4
        %v3565 = vrot.slane %v2744, 5
        %v3566 = vsel %vm1956, %v3564, %v3565
        %v3567 = vrot.slane %v3455, 5
        %v3568 = vrot.slane %v3567, 4
        %v3569 = vrot.slane %v2746, 5
        %v3570 = vsel %vm1956, %v3568, %v3569
        %v3571 = vrot.slane %v3569, 4
        %v3572 = vrot.slane %v2747, 5
        %v3573 = vsel %vm1956, %v3571, %v3572
        %v3574 = vrot.slane %v3456, 5
        %v3575 = vrot.slane %v3574, 4
        %v3576 = vrot.slane %v2749, 5
        %v3577 = vsel %vm1956, %v3575, %v3576
        %v3578 = vrot.slane %v3576, 4
        %v3579 = vrot.slane %v2750, 5
        %v3580 = vsel %vm1956, %v3578, %v3579
        %v3581 = vrot.slane %v3457, 5
        %v3582 = vrot.slane %v3581, 4
        %v3583 = vrot.slane %v2752, 5
        %v3584 = vsel %vm1956, %v3582, %v3583
        %v3585 = vrot.slane %v3583, 4
        %v3586 = vrot.slane %v2753, 5
        %v3587 = vsel %vm1956, %v3585, %v3586
        %v3588 = vrot.slane %v3458, 5
        %v3589 = vrot.slane %v3588, 4
        %v3590 = vrot.slane %v2755, 5
        %v3591 = vsel %vm1956, %v3589, %v3590
        %v3592 = vrot.slane %v3590, 4
        %v3593 = vrot.slane %v2756, 5
        %v3594 = vsel %vm1956, %v3592, %v3593
        %v3595 = vrot.slane %v3459, 5
        %v3596 = vrot.slane %v3595, 4
        %v3597 = vrot.slane %v2758, 5
        %v3598 = vsel %vm1956, %v3596, %v3597
        %v3599 = vrot.slane %v3597, 4
        %v3600 = vrot.slane %v2759, 5
        %v3601 = vsel %vm1956, %v3599, %v3600
        %v3602 = vrot.slane %v3460, 5
        %v3603 = vrot.slane %v3602, 4
        %v3604 = vrot.slane %v2761, 5
        %v3605 = vsel %vm1956, %v3603, %v3604
        %v3606 = vrot.slane %v3604, 4
        %v3607 = vrot.slane %v2762, 5
        %v3608 = vsel %vm1956, %v3606, %v3607
        %v3609 = vrot.slane %v3461, 5
        %v3610 = vrot.slane %v3609, 4
        %v3611 = vrot.slane %v2764, 5
        %v3612 = vsel %vm1956, %v3610, %v3611
        %v3613 = vrot.slane %v3611, 4
        %v3614 = vrot.slane %v2765, 5
        %v3615 = vsel %vm1956, %v3613, %v3614
        %v3616 = vrot.slane %v3462, 5
        %v3617 = vrot.slane %v3616, 4
        %v3618 = vrot.slane %v2767, 5
        %v3619 = vsel %vm1956, %v3617, %v3618
        %v3620 = vrot.slane %v3618, 4
        %v3621 = vrot.slane %v2768, 5
        %v3622 = vsel %vm1956, %v3620, %v3621
        %s3623 = scalar_lea.vmem %s1, 10
        %v3624 = vld [vmem:[%s3623] sm:$0x3]
        %v3625 = vunpack.c.l.b16 %v3514
        %v3626 = vunpack.c.l.b16 %v3517
        %v3627 = vunpack.c.l.b16 %v3521
        %v3628 = vunpack.c.l.b16 %v3524
        %v3629 = vunpack.c.l.b16 %v3528
        %v3630 = vunpack.c.l.b16 %v3531
        %v3631 = vunpack.c.l.b16 %v3535
        %v3632 = vunpack.c.l.b16 %v3538
        %v3633 = vunpack.c.l.b16 %v3542
        %v3634 = vunpack.c.l.b16 %v3545
        %v3635 = vunpack.c.l.b16 %v3549
        %v3636 = vunpack.c.l.b16 %v3552
        %v3637 = vunpack.c.l.b16 %v3556
        %v3638 = vunpack.c.l.b16 %v3559
        %v3639 = vunpack.c.l.b16 %v3563
        %v3640 = vunpack.c.l.b16 %v3566
        %v3641 = vunpack.c.l.b16 %v3570
        %v3642 = vunpack.c.l.b16 %v3573
        %v3643 = vunpack.c.l.b16 %v3577
        %v3644 = vunpack.c.l.b16 %v3580
        %v3645 = vunpack.c.l.b16 %v3584
        %v3646 = vunpack.c.l.b16 %v3587
        %v3647 = vunpack.c.l.b16 %v3591
        %v3648 = vunpack.c.l.b16 %v3594
        %v3649 = vunpack.c.l.b16 %v3598
        %v3650 = vunpack.c.l.b16 %v3601
        %v3651 = vunpack.c.l.b16 %v3605
        %v3652 = vunpack.c.l.b16 %v3608
        %v3653 = vunpack.c.l.b16 %v3612
        %v3654 = vunpack.c.l.b16 %v3615
        %v3655 = vunpack.c.l.b16 %v3619
        %v3656 = vunpack.c.l.b16 %v3622
        %v3657 = vpack.c.b16 %v3626, %v3625
        %v3658 = vpack.c.b16 %v3628, %v3627
        %v3659 = vpack.c.b16 %v3630, %v3629
        %v3660 = vpack.c.b16 %v3632, %v3631
        %v3661 = vpack.c.b16 %v3634, %v3633
        %v3662 = vpack.c.b16 %v3636, %v3635
        %v3663 = vpack.c.b16 %v3638, %v3637
        %v3664 = vpack.c.b16 %v3640, %v3639
        %v3665 = vpack.c.b16 %v3642, %v3641
        %v3666 = vpack.c.b16 %v3644, %v3643
        %v3667 = vpack.c.b16 %v3646, %v3645
        %v3668 = vpack.c.b16 %v3648, %v3647
        %v3669 = vpack.c.b16 %v3650, %v3649
        %v3670 = vpack.c.b16 %v3652, %v3651
        %v3671 = vpack.c.b16 %v3654, %v3653
        %v3672 = vpack.c.b16 %v3656, %v3655
        %v3674 = vsel %vm1397, %v3657, 0
        %v3677 = vsel %vm1397, %v3658, 0
        %v3680 = vsel %vm1397, %v3659, 0
        %v3683 = vsel %vm1397, %v3660, 0
        %v3686 = vsel %vm1397, %v3661, 0
        %v3689 = vsel %vm1397, %v3662, 0
        %v3692 = vsel %vm1397, %v3663, 0
        %v3695 = vsel %vm1397, %v3664, 0
        %v3698 = vsel %vm1397, %v3665, 0
        %v3701 = vsel %vm1397, %v3666, 0
        %v3704 = vsel %vm1397, %v3667, 0
        %v3707 = vsel %vm1397, %v3668, 0
        %v3710 = vsel %vm1397, %v3669, 0
        %v3713 = vsel %vm1397, %v3670, 0
        %v3716 = vsel %vm1397, %v3671, 0
        %v3719 = vsel %vm1397, %v3672, 0
        %v3722 = vand.u32 %v3624, %v1449
        %3724 = vmatprep.subr.bf16.mxu0 0
        %3725 = vmatpush1.bf16.msra.mxu0 0
        %3726 = vmatprep.subr.bf16.mxu0 0
        %3727 = vmatpush1.bf16.msra.mxu0 0
        %3728 = vmatprep.subr.bf16.mxu0 0
        %3729 = vmatpush1.bf16.msra.mxu0 0
        %3730 = vmatprep.subr.bf16.mxu0 0
        %3731 = vmatpush1.bf16.msra.mxu0 0
        %3732 = vmatprep.subr.bf16.mxu0 0
        %3733 = vmatpush1.bf16.msra.mxu0 0
        %3734 = vmatprep.subr.bf16.mxu0 0
        %3735 = vmatpush1.bf16.msra.mxu0 0
        %3736 = vmatprep.subr.bf16.mxu0 0
        %3737 = vmatpush1.bf16.msra.mxu0 0
        %3738 = vmatprep.subr.bf16.mxu0 0
        %3739 = vmatpush1.bf16.msra.mxu0 %v3722
        %3740 = vmatprep.subr.bf16.mxu0 0
        %3741 = vmatpush2.bf16.msra.mxu0 0
        %3742 = vmatprep.subr.bf16.mxu0 0
        %3743 = vmatpush2.bf16.msra.mxu0 0
        %3744 = vmatprep.subr.bf16.mxu0 0
        %3745 = vmatpush2.bf16.msra.mxu0 0
        %3746 = vmatprep.subr.bf16.mxu0 0
        %3747 = vmatpush2.bf16.msra.mxu0 0
        %3748 = vmatprep.subr.bf16.mxu0 0
        %3749 = vmatpush2.bf16.msra.mxu0 0
        %3750 = vmatprep.subr.bf16.mxu0 0
        %3751 = vmatpush2.bf16.msra.mxu0 0
        %3752 = vmatprep.subr.bf16.mxu0 0
        %3753 = vmatpush2.bf16.msra.mxu0 0
        %3754 = vmatprep.subr.bf16.mxu0 0
        %3755 = vmatpush2.bf16.msra.mxu0 0
        %3756 = vmatprep.mubr.bf16.mxu0 0
        %3757 = vmatmul.mubr.bf16.gmra.mxu0 %v3674
        %v3758 = vpop.f32.mrf.mxu0
        %v3759 = vadd.f32 0.0, %v3758
        %v3760 = vpop.f32.mrf.mxu0
        %v3761 = vpop.f32.mrf.mxu0
        %v3762 = vadd.f32 0.0, %v3761
        %v3763 = vpop.f32.mrf.mxu0
        %3764 = vmatprep.mubr.bf16.mxu0 0
        %3765 = vmatmul.mubr.bf16.gmra.mxu0 %v3677
        %v3766 = vpop.f32.mrf.mxu0
        %v3767 = vadd.f32 0.0, %v3766
        %v3768 = vpop.f32.mrf.mxu0
        %v3769 = vpop.f32.mrf.mxu0
        %v3770 = vadd.f32 0.0, %v3769
        %v3771 = vpop.f32.mrf.mxu0
        %3772 = vmatprep.mubr.bf16.mxu0 0
        %3773 = vmatmul.mubr.bf16.gmra.mxu0 %v3680
        %v3774 = vpop.f32.mrf.mxu0
        %v3775 = vadd.f32 0.0, %v3774
        %v3776 = vpop.f32.mrf.mxu0
        %v3777 = vpop.f32.mrf.mxu0
        %v3778 = vadd.f32 0.0, %v3777
        %v3779 = vpop.f32.mrf.mxu0
        %3780 = vmatprep.mubr.bf16.mxu0 0
        %3781 = vmatmul.mubr.bf16.gmra.mxu0 %v3683
        %v3782 = vpop.f32.mrf.mxu0
        %v3783 = vadd.f32 0.0, %v3782
        %v3784 = vpop.f32.mrf.mxu0
        %v3785 = vpop.f32.mrf.mxu0
        %v3786 = vadd.f32 0.0, %v3785
        %v3787 = vpop.f32.mrf.mxu0
        %3788 = vmatprep.mubr.bf16.mxu0 0
        %3789 = vmatmul.mubr.bf16.gmra.mxu0 %v3686
        %v3790 = vpop.f32.mrf.mxu0
        %v3791 = vadd.f32 0.0, %v3790
        %v3792 = vpop.f32.mrf.mxu0
        %v3793 = vpop.f32.mrf.mxu0
        %v3794 = vadd.f32 0.0, %v3793
        %v3795 = vpop.f32.mrf.mxu0
        %3796 = vmatprep.mubr.bf16.mxu0 0
        %3797 = vmatmul.mubr.bf16.gmra.mxu0 %v3689
        %v3798 = vpop.f32.mrf.mxu0
        %v3799 = vadd.f32 0.0, %v3798
        %v3800 = vpop.f32.mrf.mxu0
        %v3801 = vpop.f32.mrf.mxu0
        %v3802 = vadd.f32 0.0, %v3801
        %v3803 = vpop.f32.mrf.mxu0
        %3804 = vmatprep.mubr.bf16.mxu0 0
        %3805 = vmatmul.mubr.bf16.gmra.mxu0 %v3692
        %v3806 = vpop.f32.mrf.mxu0
        %v3807 = vadd.f32 0.0, %v3806
        %v3808 = vpop.f32.mrf.mxu0
        %v3809 = vpop.f32.mrf.mxu0
        %v3810 = vadd.f32 0.0, %v3809
        %v3811 = vpop.f32.mrf.mxu0
        %3812 = vmatprep.mubr.bf16.mxu0 0
        %3813 = vmatmul.mubr.bf16.gmra.mxu0 %v3695
        %v3814 = vpop.f32.mrf.mxu0
        %v3815 = vadd.f32 0.0, %v3814
        %v3816 = vpop.f32.mrf.mxu0
        %v3817 = vpop.f32.mrf.mxu0
        %v3818 = vadd.f32 0.0, %v3817
        %v3819 = vpop.f32.mrf.mxu0
        %3820 = vmatprep.mubr.bf16.mxu0 0
        %3821 = vmatmul.mubr.bf16.gmra.mxu0 %v3698
        %v3822 = vpop.f32.mrf.mxu0
        %v3823 = vadd.f32 0.0, %v3822
        %v3824 = vpop.f32.mrf.mxu0
        %v3825 = vpop.f32.mrf.mxu0
        %v3826 = vadd.f32 0.0, %v3825
        %v3827 = vpop.f32.mrf.mxu0
        %3828 = vmatprep.mubr.bf16.mxu0 0
        %3829 = vmatmul.mubr.bf16.gmra.mxu0 %v3701
        %v3830 = vpop.f32.mrf.mxu0
        %v3831 = vadd.f32 0.0, %v3830
        %v3832 = vpop.f32.mrf.mxu0
        %v3833 = vpop.f32.mrf.mxu0
        %v3834 = vadd.f32 0.0, %v3833
        %v3835 = vpop.f32.mrf.mxu0
        %3836 = vmatprep.mubr.bf16.mxu0 0
        %3837 = vmatmul.mubr.bf16.gmra.mxu0 %v3704
        %v3838 = vpop.f32.mrf.mxu0
        %v3839 = vadd.f32 0.0, %v3838
        %v3840 = vpop.f32.mrf.mxu0
        %v3841 = vpop.f32.mrf.mxu0
        %v3842 = vadd.f32 0.0, %v3841
        %v3843 = vpop.f32.mrf.mxu0
        %3844 = vmatprep.mubr.bf16.mxu0 0
        %3845 = vmatmul.mubr.bf16.gmra.mxu0 %v3707
        %v3846 = vpop.f32.mrf.mxu0
        %v3847 = vadd.f32 0.0, %v3846
        %v3848 = vpop.f32.mrf.mxu0
        %v3849 = vpop.f32.mrf.mxu0
        %v3850 = vadd.f32 0.0, %v3849
        %v3851 = vpop.f32.mrf.mxu0
        %3852 = vmatprep.mubr.bf16.mxu0 0
        %3853 = vmatmul.mubr.bf16.gmra.mxu0 %v3710
        %v3854 = vpop.f32.mrf.mxu0
        %v3855 = vadd.f32 0.0, %v3854
        %v3856 = vpop.f32.mrf.mxu0
        %v3857 = vpop.f32.mrf.mxu0
        %v3858 = vadd.f32 0.0, %v3857
        %v3859 = vpop.f32.mrf.mxu0
        %3860 = vmatprep.mubr.bf16.mxu0 0
        %3861 = vmatmul.mubr.bf16.gmra.mxu0 %v3713
        %v3862 = vpop.f32.mrf.mxu0
        %v3863 = vadd.f32 0.0, %v3862
        %v3864 = vpop.f32.mrf.mxu0
        %v3865 = vpop.f32.mrf.mxu0
        %v3866 = vadd.f32 0.0, %v3865
        %v3867 = vpop.f32.mrf.mxu0
        %3868 = vmatprep.mubr.bf16.mxu0 0
        %3869 = vmatmul.mubr.bf16.gmra.mxu0 %v3716
        %v3870 = vpop.f32.mrf.mxu0
        %v3871 = vadd.f32 0.0, %v3870
        %v3872 = vpop.f32.mrf.mxu0
        %v3873 = vpop.f32.mrf.mxu0
        %v3874 = vadd.f32 0.0, %v3873
        %v3875 = vpop.f32.mrf.mxu0
        %3876 = vmatprep.mubr.bf16.mxu0 0
        %3877 = vmatmul.mubr.bf16.gmra.mxu0 %v3719
        %v3878 = vpop.f32.mrf.mxu0
        %v3879 = vadd.f32 0.0, %v3878
        %v3880 = vpop.f32.mrf.mxu0
        %v3881 = vpop.f32.mrf.mxu0
        %v3882 = vadd.f32 0.0, %v3881
        %v3883 = vpop.f32.mrf.mxu0
        %3884 = vdwg.mxu0
        %v3885 = vadd.f32 %v3415, %v3759
        %v3886 = vadd.f32 %v3416, %v3762
        %v3887 = vadd.f32 %v3417, %v3767
        %v3888 = vadd.f32 %v3418, %v3770
        %v3889 = vadd.f32 %v3419, %v3775
        %v3890 = vadd.f32 %v3420, %v3778
        %v3891 = vadd.f32 %v3421, %v3783
        %v3892 = vadd.f32 %v3422, %v3786
        %v3893 = vadd.f32 %v3423, %v3791
        %v3894 = vadd.f32 %v3424, %v3794
        %v3895 = vadd.f32 %v3425, %v3799
        %v3896 = vadd.f32 %v3426, %v3802
        %v3897 = vadd.f32 %v3427, %v3807
        %v3898 = vadd.f32 %v3428, %v3810
        %v3899 = vadd.f32 %v3429, %v3815
        %v3900 = vadd.f32 %v3430, %v3818
        %v3901 = vadd.f32 %v3431, %v3823
        %v3902 = vadd.f32 %v3432, %v3826
        %v3903 = vadd.f32 %v3433, %v3831
        %v3904 = vadd.f32 %v3434, %v3834
        %v3905 = vadd.f32 %v3435, %v3839
        %v3906 = vadd.f32 %v3436, %v3842
        %v3907 = vadd.f32 %v3437, %v3847
        %v3908 = vadd.f32 %v3438, %v3850
        %v3909 = vadd.f32 %v3439, %v3855
        %v3910 = vadd.f32 %v3440, %v3858
        %v3911 = vadd.f32 %v3441, %v3863
        %v3912 = vadd.f32 %v3442, %v3866
        %v3913 = vadd.f32 %v3443, %v3871
        %v3914 = vadd.f32 %v3444, %v3874
        %v3915 = vadd.f32 %v3445, %v3879
        %v3916 = vadd.f32 %v3446, %v3882
        %s3917 = scalar_lea.vmem [#allocation2], 24
        %v3918 = vld [vmem:[%s3917] sm:$0xf]
        %v3919 = vld [vmem:[%s3917 + $0x4] sm:$0xf]
        %v3920 = vld [vmem:[%s3917 + $0xc] sm:$0xf]
        %v3921 = vld [vmem:[%s3917 + $0x10] sm:$0xf]
        %v3922 = vld [vmem:[%s3917 + $0x18] sm:$0xf]
        %v3923 = vld [vmem:[%s3917 + $0x1c] sm:$0xf]
        %v3924 = vld [vmem:[%s3917 + $0x24] sm:$0xf]
        %v3925 = vld [vmem:[%s3917 + $0x28] sm:$0xf]
        %v3926 = vld [vmem:[%s3917 + $0x30] sm:$0xf]
        %v3927 = vld [vmem:[%s3917 + $0x34] sm:$0xf]
        %v3928 = vld [vmem:[%s3917 + $0x3c] sm:$0xf]
        %v3929 = vld [vmem:[%s3917 + $0x40] sm:$0xf]
        %v3930 = vld [vmem:[%s3917 + $0x48] sm:$0xf]
        %v3931 = vld [vmem:[%s3917 + $0x4c] sm:$0xf]
        %v3932 = vld [vmem:[%s3917 + $0x54] sm:$0xf]
        %v3933 = vld [vmem:[%s3917 + $0x58] sm:$0xf]
        %v3934 = vld [vmem:[%s3917 + $0x60] sm:$0xf]
        %v3935 = vld [vmem:[%s3917 + $0x64] sm:$0xf]
        %v3936 = vld [vmem:[%s3917 + $0x6c] sm:$0xf]
        %v3937 = vld [vmem:[%s3917 + $0x70] sm:$0xf]
        %v3938 = vld [vmem:[%s3917 + $0x78] sm:$0xf]
        %v3939 = vld [vmem:[%s3917 + $0x7c] sm:$0xf]
        %v3940 = vld [vmem:[%s3917 + $0x84] sm:$0xf]
        %v3941 = vld [vmem:[%s3917 + $0x88] sm:$0xf]
        %v3942 = vld [vmem:[%s3917 + $0x90] sm:$0xf]
        %v3943 = vld [vmem:[%s3917 + $0x94] sm:$0xf]
        %v3944 = vld [vmem:[%s3917 + $0x9c] sm:$0xf]
        %v3945 = vld [vmem:[%s3917 + $0xa0] sm:$0xf]
        %v3946 = vld [vmem:[%s3917 + $0xa8] sm:$0xf]
        %v3947 = vld [vmem:[%s3917 + $0xac] sm:$0xf]
        %v3948 = vld [vmem:[%s3917 + $0xb4] sm:$0xf]
        %v3949 = vld [vmem:[%s3917 + $0xb8] sm:$0xf]
        %s3950 = scalar_lea.vmem %s1, 12
        %v3951 = vld [vmem:[%s3950] sm:$0x3]
        %v3984 = vunpack.c.l.b16 %v3918
        %v3985 = vunpack.c.l.b16 %v3919
        %v3986 = vunpack.c.l.b16 %v3920
        %v3987 = vunpack.c.l.b16 %v3921
        %v3988 = vunpack.c.l.b16 %v3922
        %v3989 = vunpack.c.l.b16 %v3923
        %v3990 = vunpack.c.l.b16 %v3924
        %v3991 = vunpack.c.l.b16 %v3925
        %v3992 = vunpack.c.l.b16 %v3926
        %v3993 = vunpack.c.l.b16 %v3927
        %v3994 = vunpack.c.l.b16 %v3928
        %v3995 = vunpack.c.l.b16 %v3929
        %v3996 = vunpack.c.l.b16 %v3930
        %v3997 = vunpack.c.l.b16 %v3931
        %v3998 = vunpack.c.l.b16 %v3932
        %v3999 = vunpack.c.l.b16 %v3933
        %v4000 = vunpack.c.l.b16 %v3934
        %v4001 = vunpack.c.l.b16 %v3935
        %v4002 = vunpack.c.l.b16 %v3936
        %v4003 = vunpack.c.l.b16 %v3937
        %v4004 = vunpack.c.l.b16 %v3938
        %v4005 = vunpack.c.l.b16 %v3939
        %v4006 = vunpack.c.l.b16 %v3940
        %v4007 = vunpack.c.l.b16 %v3941
        %v4008 = vunpack.c.l.b16 %v3942
        %v4009 = vunpack.c.l.b16 %v3943
        %v4010 = vunpack.c.l.b16 %v3944
        %v4011 = vunpack.c.l.b16 %v3945
        %v4012 = vunpack.c.l.b16 %v3946
        %v4013 = vunpack.c.l.b16 %v3947
        %v4014 = vunpack.c.l.b16 %v3948
        %v4015 = vunpack.c.l.b16 %v3949
        %v4016 = vpack.c.b16 %v3985, %v3984
        %v4017 = vpack.c.b16 %v3987, %v3986
        %v4018 = vpack.c.b16 %v3989, %v3988
        %v4019 = vpack.c.b16 %v3991, %v3990
        %v4020 = vpack.c.b16 %v3993, %v3992
        %v4021 = vpack.c.b16 %v3995, %v3994
        %v4022 = vpack.c.b16 %v3997, %v3996
        %v4023 = vpack.c.b16 %v3999, %v3998
        %v4024 = vpack.c.b16 %v4001, %v4000
        %v4025 = vpack.c.b16 %v4003, %v4002
        %v4026 = vpack.c.b16 %v4005, %v4004
        %v4027 = vpack.c.b16 %v4007, %v4006
        %v4028 = vpack.c.b16 %v4009, %v4008
        %v4029 = vpack.c.b16 %v4011, %v4010
        %v4030 = vpack.c.b16 %v4013, %v4012
        %v4031 = vpack.c.b16 %v4015, %v4014
        %v4033 = vsel %vm1397, %v4016, 0
        %v4036 = vsel %vm1397, %v4017, 0
        %v4039 = vsel %vm1397, %v4018, 0
        %v4042 = vsel %vm1397, %v4019, 0
        %v4045 = vsel %vm1397, %v4020, 0
        %v4048 = vsel %vm1397, %v4021, 0
        %v4051 = vsel %vm1397, %v4022, 0
        %v4054 = vsel %vm1397, %v4023, 0
        %v4057 = vsel %vm1397, %v4024, 0
        %v4060 = vsel %vm1397, %v4025, 0
        %v4063 = vsel %vm1397, %v4026, 0
        %v4066 = vsel %vm1397, %v4027, 0
        %v4069 = vsel %vm1397, %v4028, 0
        %v4072 = vsel %vm1397, %v4029, 0
        %v4075 = vsel %vm1397, %v4030, 0
        %v4078 = vsel %vm1397, %v4031, 0
        %v4081 = vand.u32 %v3951, %v1449
        %4083 = vmatprep.subr.bf16.mxu0 0
        %4084 = vmatpush1.bf16.msra.mxu0 0
        %4085 = vmatprep.subr.bf16.mxu0 0
        %4086 = vmatpush1.bf16.msra.mxu0 0
        %4087 = vmatprep.subr.bf16.mxu0 0
        %4088 = vmatpush1.bf16.msra.mxu0 0
        %4089 = vmatprep.subr.bf16.mxu0 0
        %4090 = vmatpush1.bf16.msra.mxu0 0
        %4091 = vmatprep.subr.bf16.mxu0 0
        %4092 = vmatpush1.bf16.msra.mxu0 0
        %4093 = vmatprep.subr.bf16.mxu0 0
        %4094 = vmatpush1.bf16.msra.mxu0 0
        %4095 = vmatprep.subr.bf16.mxu0 0
        %4096 = vmatpush1.bf16.msra.mxu0 0
        %4097 = vmatprep.subr.bf16.mxu0 0
        %4098 = vmatpush1.bf16.msra.mxu0 %v4081
        %4099 = vmatprep.subr.bf16.mxu0 0
        %4100 = vmatpush2.bf16.msra.mxu0 0
        %4101 = vmatprep.subr.bf16.mxu0 0
        %4102 = vmatpush2.bf16.msra.mxu0 0
        %4103 = vmatprep.subr.bf16.mxu0 0
        %4104 = vmatpush2.bf16.msra.mxu0 0
        %4105 = vmatprep.subr.bf16.mxu0 0
        %4106 = vmatpush2.bf16.msra.mxu0 0
        %4107 = vmatprep.subr.bf16.mxu0 0
        %4108 = vmatpush2.bf16.msra.mxu0 0
        %4109 = vmatprep.subr.bf16.mxu0 0
        %4110 = vmatpush2.bf16.msra.mxu0 0
        %4111 = vmatprep.subr.bf16.mxu0 0
        %4112 = vmatpush2.bf16.msra.mxu0 0
        %4113 = vmatprep.subr.bf16.mxu0 0
        %4114 = vmatpush2.bf16.msra.mxu0 0
        %4115 = vmatprep.mubr.bf16.mxu0 0
        %4116 = vmatmul.mubr.bf16.gmra.mxu0 %v4033
        %v4117 = vpop.f32.mrf.mxu0
        %v4118 = vadd.f32 0.0, %v4117
        %v4119 = vpop.f32.mrf.mxu0
        %v4120 = vpop.f32.mrf.mxu0
        %v4121 = vadd.f32 0.0, %v4120
        %v4122 = vpop.f32.mrf.mxu0
        %4123 = vmatprep.mubr.bf16.mxu0 0
        %4124 = vmatmul.mubr.bf16.gmra.mxu0 %v4036
        %v4125 = vpop.f32.mrf.mxu0
        %v4126 = vadd.f32 0.0, %v4125
        %v4127 = vpop.f32.mrf.mxu0
        %v4128 = vpop.f32.mrf.mxu0
        %v4129 = vadd.f32 0.0, %v4128
        %v4130 = vpop.f32.mrf.mxu0
        %4131 = vmatprep.mubr.bf16.mxu0 0
        %4132 = vmatmul.mubr.bf16.gmra.mxu0 %v4039
        %v4133 = vpop.f32.mrf.mxu0
        %v4134 = vadd.f32 0.0, %v4133
        %v4135 = vpop.f32.mrf.mxu0
        %v4136 = vpop.f32.mrf.mxu0
        %v4137 = vadd.f32 0.0, %v4136
        %v4138 = vpop.f32.mrf.mxu0
        %4139 = vmatprep.mubr.bf16.mxu0 0
        %4140 = vmatmul.mubr.bf16.gmra.mxu0 %v4042
        %v4141 = vpop.f32.mrf.mxu0
        %v4142 = vadd.f32 0.0, %v4141
        %v4143 = vpop.f32.mrf.mxu0
        %v4144 = vpop.f32.mrf.mxu0
        %v4145 = vadd.f32 0.0, %v4144
        %v4146 = vpop.f32.mrf.mxu0
        %4147 = vmatprep.mubr.bf16.mxu0 0
        %4148 = vmatmul.mubr.bf16.gmra.mxu0 %v4045
        %v4149 = vpop.f32.mrf.mxu0
        %v4150 = vadd.f32 0.0, %v4149
        %v4151 = vpop.f32.mrf.mxu0
        %v4152 = vpop.f32.mrf.mxu0
        %v4153 = vadd.f32 0.0, %v4152
        %v4154 = vpop.f32.mrf.mxu0
        %4155 = vmatprep.mubr.bf16.mxu0 0
        %4156 = vmatmul.mubr.bf16.gmra.mxu0 %v4048
        %v4157 = vpop.f32.mrf.mxu0
        %v4158 = vadd.f32 0.0, %v4157
        %v4159 = vpop.f32.mrf.mxu0
        %v4160 = vpop.f32.mrf.mxu0
        %v4161 = vadd.f32 0.0, %v4160
        %v4162 = vpop.f32.mrf.mxu0
        %4163 = vmatprep.mubr.bf16.mxu0 0
        %4164 = vmatmul.mubr.bf16.gmra.mxu0 %v4051
        %v4165 = vpop.f32.mrf.mxu0
        %v4166 = vadd.f32 0.0, %v4165
        %v4167 = vpop.f32.mrf.mxu0
        %v4168 = vpop.f32.mrf.mxu0
        %v4169 = vadd.f32 0.0, %v4168
        %v4170 = vpop.f32.mrf.mxu0
        %4171 = vmatprep.mubr.bf16.mxu0 0
        %4172 = vmatmul.mubr.bf16.gmra.mxu0 %v4054
        %v4173 = vpop.f32.mrf.mxu0
        %v4174 = vadd.f32 0.0, %v4173
        %v4175 = vpop.f32.mrf.mxu0
        %v4176 = vpop.f32.mrf.mxu0
        %v4177 = vadd.f32 0.0, %v4176
        %v4178 = vpop.f32.mrf.mxu0
        %4179 = vmatprep.mubr.bf16.mxu0 0
        %4180 = vmatmul.mubr.bf16.gmra.mxu0 %v4057
        %v4181 = vpop.f32.mrf.mxu0
        %v4182 = vadd.f32 0.0, %v4181
        %v4183 = vpop.f32.mrf.mxu0
        %v4184 = vpop.f32.mrf.mxu0
        %v4185 = vadd.f32 0.0, %v4184
        %v4186 = vpop.f32.mrf.mxu0
        %4187 = vmatprep.mubr.bf16.mxu0 0
        %4188 = vmatmul.mubr.bf16.gmra.mxu0 %v4060
        %v4189 = vpop.f32.mrf.mxu0
        %v4190 = vadd.f32 0.0, %v4189
        %v4191 = vpop.f32.mrf.mxu0
        %v4192 = vpop.f32.mrf.mxu0
        %v4193 = vadd.f32 0.0, %v4192
        %v4194 = vpop.f32.mrf.mxu0
        %4195 = vmatprep.mubr.bf16.mxu0 0
        %4196 = vmatmul.mubr.bf16.gmra.mxu0 %v4063
        %v4197 = vpop.f32.mrf.mxu0
        %v4198 = vadd.f32 0.0, %v4197
        %v4199 = vpop.f32.mrf.mxu0
        %v4200 = vpop.f32.mrf.mxu0
        %v4201 = vadd.f32 0.0, %v4200
        %v4202 = vpop.f32.mrf.mxu0
        %4203 = vmatprep.mubr.bf16.mxu0 0
        %4204 = vmatmul.mubr.bf16.gmra.mxu0 %v4066
        %v4205 = vpop.f32.mrf.mxu0
        %v4206 = vadd.f32 0.0, %v4205
        %v4207 = vpop.f32.mrf.mxu0
        %v4208 = vpop.f32.mrf.mxu0
        %v4209 = vadd.f32 0.0, %v4208
        %v4210 = vpop.f32.mrf.mxu0
        %4211 = vmatprep.mubr.bf16.mxu0 0
        %4212 = vmatmul.mubr.bf16.gmra.mxu0 %v4069
        %v4213 = vpop.f32.mrf.mxu0
        %v4214 = vadd.f32 0.0, %v4213
        %v4215 = vpop.f32.mrf.mxu0
        %v4216 = vpop.f32.mrf.mxu0
        %v4217 = vadd.f32 0.0, %v4216
        %v4218 = vpop.f32.mrf.mxu0
        %4219 = vmatprep.mubr.bf16.mxu0 0
        %4220 = vmatmul.mubr.bf16.gmra.mxu0 %v4072
        %v4221 = vpop.f32.mrf.mxu0
        %v4222 = vadd.f32 0.0, %v4221
        %v4223 = vpop.f32.mrf.mxu0
        %v4224 = vpop.f32.mrf.mxu0
        %v4225 = vadd.f32 0.0, %v4224
        %v4226 = vpop.f32.mrf.mxu0
        %4227 = vmatprep.mubr.bf16.mxu0 0
        %4228 = vmatmul.mubr.bf16.gmra.mxu0 %v4075
        %v4229 = vpop.f32.mrf.mxu0
        %v4230 = vadd.f32 0.0, %v4229
        %v4231 = vpop.f32.mrf.mxu0
        %v4232 = vpop.f32.mrf.mxu0
        %v4233 = vadd.f32 0.0, %v4232
        %v4234 = vpop.f32.mrf.mxu0
        %4235 = vmatprep.mubr.bf16.mxu0 0
        %4236 = vmatmul.mubr.bf16.gmra.mxu0 %v4078
        %v4237 = vpop.f32.mrf.mxu0
        %v4238 = vadd.f32 0.0, %v4237
        %v4239 = vpop.f32.mrf.mxu0
        %v4240 = vpop.f32.mrf.mxu0
        %v4241 = vadd.f32 0.0, %v4240
        %v4242 = vpop.f32.mrf.mxu0
        %4243 = vdwg.mxu0
        %v4244 = vadd.f32 %v3885, %v4118
        %v4245 = vadd.f32 %v3886, %v4121
        %v4246 = vadd.f32 %v3887, %v4126
        %v4247 = vadd.f32 %v3888, %v4129
        %v4248 = vadd.f32 %v3889, %v4134
        %v4249 = vadd.f32 %v3890, %v4137
        %v4250 = vadd.f32 %v3891, %v4142
        %v4251 = vadd.f32 %v3892, %v4145
        %v4252 = vadd.f32 %v3893, %v4150
        %v4253 = vadd.f32 %v3894, %v4153
        %v4254 = vadd.f32 %v3895, %v4158
        %v4255 = vadd.f32 %v3896, %v4161
        %v4256 = vadd.f32 %v3897, %v4166
        %v4257 = vadd.f32 %v3898, %v4169
        %v4258 = vadd.f32 %v3899, %v4174
        %v4259 = vadd.f32 %v3900, %v4177
        %v4260 = vadd.f32 %v3901, %v4182
        %v4261 = vadd.f32 %v3902, %v4185
        %v4262 = vadd.f32 %v3903, %v4190
        %v4263 = vadd.f32 %v3904, %v4193
        %v4264 = vadd.f32 %v3905, %v4198
        %v4265 = vadd.f32 %v3906, %v4201
        %v4266 = vadd.f32 %v3907, %v4206
        %v4267 = vadd.f32 %v3908, %v4209
        %v4268 = vadd.f32 %v3909, %v4214
        %v4269 = vadd.f32 %v3910, %v4217
        %v4270 = vadd.f32 %v3911, %v4222
        %v4271 = vadd.f32 %v3912, %v4225
        %v4272 = vadd.f32 %v3913, %v4230
        %v4273 = vadd.f32 %v3914, %v4233
        %v4274 = vadd.f32 %v3915, %v4238
        %v4275 = vadd.f32 %v3916, %v4241
        %v4276 = vld [vmem:[%s3917] sm:$0xf]
        %v4277 = vld [vmem:[%s3917 + $0x4] sm:$0xf]
        %v4278 = vld [vmem:[%s3917 + $0x8] sm:$0x1]
        %v4279 = vld [vmem:[%s3917 + $0xc] sm:$0xf]
        %v4280 = vld [vmem:[%s3917 + $0x10] sm:$0xf]
        %v4281 = vld [vmem:[%s3917 + $0x14] sm:$0x1]
        %v4282 = vld [vmem:[%s3917 + $0x18] sm:$0xf]
        %v4283 = vld [vmem:[%s3917 + $0x1c] sm:$0xf]
        %v4284 = vld [vmem:[%s3917 + $0x20] sm:$0x1]
        %v4285 = vld [vmem:[%s3917 + $0x24] sm:$0xf]
        %v4286 = vld [vmem:[%s3917 + $0x28] sm:$0xf]
        %v4287 = vld [vmem:[%s3917 + $0x2c] sm:$0x1]
        %v4288 = vld [vmem:[%s3917 + $0x30] sm:$0xf]
        %v4289 = vld [vmem:[%s3917 + $0x34] sm:$0xf]
        %v4290 = vld [vmem:[%s3917 + $0x38] sm:$0x1]
        %v4291 = vld [vmem:[%s3917 + $0x3c] sm:$0xf]
        %v4292 = vld [vmem:[%s3917 + $0x40] sm:$0xf]
        %v4293 = vld [vmem:[%s3917 + $0x44] sm:$0x1]
        %v4294 = vld [vmem:[%s3917 + $0x48] sm:$0xf]
        %v4295 = vld [vmem:[%s3917 + $0x4c] sm:$0xf]
        %v4296 = vld [vmem:[%s3917 + $0x50] sm:$0x1]
        %v4297 = vld [vmem:[%s3917 + $0x54] sm:$0xf]
        %v4298 = vld [vmem:[%s3917 + $0x58] sm:$0xf]
        %v4299 = vld [vmem:[%s3917 + $0x5c] sm:$0x1]
        %v4300 = vld [vmem:[%s3917 + $0x60] sm:$0xf]
        %v4301 = vld [vmem:[%s3917 + $0x64] sm:$0xf]
        %v4302 = vld [vmem:[%s3917 + $0x68] sm:$0x1]
        %v4303 = vld [vmem:[%s3917 + $0x6c] sm:$0xf]
        %v4304 = vld [vmem:[%s3917 + $0x70] sm:$0xf]
        %v4305 = vld [vmem:[%s3917 + $0x74] sm:$0x1]
        %v4306 = vld [vmem:[%s3917 + $0x78] sm:$0xf]
        %v4307 = vld [vmem:[%s3917 + $0x7c] sm:$0xf]
        %v4308 = vld [vmem:[%s3917 + $0x80] sm:$0x1]
        %v4309 = vld [vmem:[%s3917 + $0x84] sm:$0xf]
        %v4310 = vld [vmem:[%s3917 + $0x88] sm:$0xf]
        %v4311 = vld [vmem:[%s3917 + $0x8c] sm:$0x1]
        %v4312 = vld [vmem:[%s3917 + $0x90] sm:$0xf]
        %v4313 = vld [vmem:[%s3917 + $0x94] sm:$0xf]
        %v4314 = vld [vmem:[%s3917 + $0x98] sm:$0x1]
        %v4315 = vld [vmem:[%s3917 + $0x9c] sm:$0xf]
        %v4316 = vld [vmem:[%s3917 + $0xa0] sm:$0xf]
        %v4317 = vld [vmem:[%s3917 + $0xa4] sm:$0x1]
        %v4318 = vld [vmem:[%s3917 + $0xa8] sm:$0xf]
        %v4319 = vld [vmem:[%s3917 + $0xac] sm:$0xf]
        %v4320 = vld [vmem:[%s3917 + $0xb0] sm:$0x1]
        %v4321 = vld [vmem:[%s3917 + $0xb4] sm:$0xf]
        %v4322 = vld [vmem:[%s3917 + $0xb8] sm:$0xf]
        %v4323 = vld [vmem:[%s3917 + $0xbc] sm:$0x1]
        %v4325 = vshrl.u32 %v4276, 16
        %v4327 = vrot.slane %v4325, 4
        %v4328 = vshll.u32 %v4276, 16
        %v4330 = vrot.slane %v4328, 5
        %v4331 = vor.u32 %v4327, %v4330
        %v4332 = vrot.slane %v4331, 4
        %v4334 = vshll.u32 %v4277, 16
        %v4336 = vrot.slane %v4334, 5
        %v4337 = vsel %vm962, %v4332, %v4336
        %v4338 = vshrl.u32 %v4277, 16
        %v4340 = vrot.slane %v4338, 4
        %v4341 = vor.u32 %v4340, %v4336
        %v4342 = vrot.slane %v4341, 4
        %v4344 = vshll.u32 %v4278, 16
        %v4346 = vrot.slane %v4344, 5
        %v4347 = vsel %vm962, %v4342, %v4346
        %v4349 = vshrl.u32 %v4279, 16
        %v4351 = vrot.slane %v4349, 4
        %v4352 = vshll.u32 %v4279, 16
        %v4354 = vrot.slane %v4352, 5
        %v4355 = vor.u32 %v4351, %v4354
        %v4356 = vrot.slane %v4355, 4
        %v4358 = vshll.u32 %v4280, 16
        %v4360 = vrot.slane %v4358, 5
        %v4361 = vsel %vm962, %v4356, %v4360
        %v4362 = vshrl.u32 %v4280, 16
        %v4364 = vrot.slane %v4362, 4
        %v4365 = vor.u32 %v4364, %v4360
        %v4366 = vrot.slane %v4365, 4
        %v4368 = vshll.u32 %v4281, 16
        %v4370 = vrot.slane %v4368, 5
        %v4371 = vsel %vm962, %v4366, %v4370
        %v4373 = vshrl.u32 %v4282, 16
        %v4375 = vrot.slane %v4373, 4
        %v4376 = vshll.u32 %v4282, 16
        %v4378 = vrot.slane %v4376, 5
        %v4379 = vor.u32 %v4375, %v4378
        %v4380 = vrot.slane %v4379, 4
        %v4382 = vshll.u32 %v4283, 16
        %v4384 = vrot.slane %v4382, 5
        %v4385 = vsel %vm962, %v4380, %v4384
        %v4386 = vshrl.u32 %v4283, 16
        %v4388 = vrot.slane %v4386, 4
        %v4389 = vor.u32 %v4388, %v4384
        %v4390 = vrot.slane %v4389, 4
        %v4392 = vshll.u32 %v4284, 16
        %v4394 = vrot.slane %v4392, 5
        %v4395 = vsel %vm962, %v4390, %v4394
        %v4397 = vshrl.u32 %v4285, 16
        %v4399 = vrot.slane %v4397, 4
        %v4400 = vshll.u32 %v4285, 16
        %v4402 = vrot.slane %v4400, 5
        %v4403 = vor.u32 %v4399, %v4402
        %v4404 = vrot.slane %v4403, 4
        %v4406 = vshll.u32 %v4286, 16
        %v4408 = vrot.slane %v4406, 5
        %v4409 = vsel %vm962, %v4404, %v4408
        %v4410 = vshrl.u32 %v4286, 16
        %v4412 = vrot.slane %v4410, 4
        %v4413 = vor.u32 %v4412, %v4408
        %v4414 = vrot.slane %v4413, 4
        %v4416 = vshll.u32 %v4287, 16
        %v4418 = vrot.slane %v4416, 5
        %v4419 = vsel %vm962, %v4414, %v4418
        %v4421 = vshrl.u32 %v4288, 16
        %v4423 = vrot.slane %v4421, 4
        %v4424 = vshll.u32 %v4288, 16
        %v4426 = vrot.slane %v4424, 5
        %v4427 = vor.u32 %v4423, %v4426
        %v4428 = vrot.slane %v4427, 4
        %v4430 = vshll.u32 %v4289, 16
        %v4432 = vrot.slane %v4430, 5
        %v4433 = vsel %vm962, %v4428, %v4432
        %v4434 = vshrl.u32 %v4289, 16
        %v4436 = vrot.slane %v4434, 4
        %v4437 = vor.u32 %v4436, %v4432
        %v4438 = vrot.slane %v4437, 4
        %v4440 = vshll.u32 %v4290, 16
        %v4442 = vrot.slane %v4440, 5
        %v4443 = vsel %vm962, %v4438, %v4442
        %v4445 = vshrl.u32 %v4291, 16
        %v4447 = vrot.slane %v4445, 4
        %v4448 = vshll.u32 %v4291, 16
        %v4450 = vrot.slane %v4448, 5
        %v4451 = vor.u32 %v4447, %v4450
        %v4452 = vrot.slane %v4451, 4
        %v4454 = vshll.u32 %v4292, 16
        %v4456 = vrot.slane %v4454, 5
        %v4457 = vsel %vm962, %v4452, %v4456
        %v4458 = vshrl.u32 %v4292, 16
        %v4460 = vrot.slane %v4458, 4
        %v4461 = vor.u32 %v4460, %v4456
        %v4462 = vrot.slane %v4461, 4
        %v4464 = vshll.u32 %v4293, 16
        %v4466 = vrot.slane %v4464, 5
        %v4467 = vsel %vm962, %v4462, %v4466
        %v4469 = vshrl.u32 %v4294, 16
        %v4471 = vrot.slane %v4469, 4
        %v4472 = vshll.u32 %v4294, 16
        %v4474 = vrot.slane %v4472, 5
        %v4475 = vor.u32 %v4471, %v4474
        %v4476 = vrot.slane %v4475, 4
        %v4478 = vshll.u32 %v4295, 16
        %v4480 = vrot.slane %v4478, 5
        %v4481 = vsel %vm962, %v4476, %v4480
        %v4482 = vshrl.u32 %v4295, 16
        %v4484 = vrot.slane %v4482, 4
        %v4485 = vor.u32 %v4484, %v4480
        %v4486 = vrot.slane %v4485, 4
        %v4488 = vshll.u32 %v4296, 16
        %v4490 = vrot.slane %v4488, 5
        %v4491 = vsel %vm962, %v4486, %v4490
        %v4493 = vshrl.u32 %v4297, 16
        %v4495 = vrot.slane %v4493, 4
        %v4496 = vshll.u32 %v4297, 16
        %v4498 = vrot.slane %v4496, 5
        %v4499 = vor.u32 %v4495, %v4498
        %v4500 = vrot.slane %v4499, 4
        %v4502 = vshll.u32 %v4298, 16
        %v4504 = vrot.slane %v4502, 5
        %v4505 = vsel %vm962, %v4500, %v4504
        %v4506 = vshrl.u32 %v4298, 16
        %v4508 = vrot.slane %v4506, 4
        %v4509 = vor.u32 %v4508, %v4504
        %v4510 = vrot.slane %v4509, 4
        %v4512 = vshll.u32 %v4299, 16
        %v4514 = vrot.slane %v4512, 5
        %v4515 = vsel %vm962, %v4510, %v4514
        %v4517 = vshrl.u32 %v4300, 16
        %v4519 = vrot.slane %v4517, 4
        %v4520 = vshll.u32 %v4300, 16
        %v4522 = vrot.slane %v4520, 5
        %v4523 = vor.u32 %v4519, %v4522
        %v4524 = vrot.slane %v4523, 4
        %v4526 = vshll.u32 %v4301, 16
        %v4528 = vrot.slane %v4526, 5
        %v4529 = vsel %vm962, %v4524, %v4528
        %v4530 = vshrl.u32 %v4301, 16
        %v4532 = vrot.slane %v4530, 4
        %v4533 = vor.u32 %v4532, %v4528
        %v4534 = vrot.slane %v4533, 4
        %v4536 = vshll.u32 %v4302, 16
        %v4538 = vrot.slane %v4536, 5
        %v4539 = vsel %vm962, %v4534, %v4538
        %v4541 = vshrl.u32 %v4303, 16
        %v4543 = vrot.slane %v4541, 4
        %v4544 = vshll.u32 %v4303, 16
        %v4546 = vrot.slane %v4544, 5
        %v4547 = vor.u32 %v4543, %v4546
        %v4548 = vrot.slane %v4547, 4
        %v4550 = vshll.u32 %v4304, 16
        %v4552 = vrot.slane %v4550, 5
        %v4553 = vsel %vm962, %v4548, %v4552
        %v4554 = vshrl.u32 %v4304, 16
        %v4556 = vrot.slane %v4554, 4
        %v4557 = vor.u32 %v4556, %v4552
        %v4558 = vrot.slane %v4557, 4
        %v4560 = vshll.u32 %v4305, 16
        %v4562 = vrot.slane %v4560, 5
        %v4563 = vsel %vm962, %v4558, %v4562
        %v4565 = vshrl.u32 %v4306, 16
        %v4567 = vrot.slane %v4565, 4
        %v4568 = vshll.u32 %v4306, 16
        %v4570 = vrot.slane %v4568, 5
        %v4571 = vor.u32 %v4567, %v4570
        %v4572 = vrot.slane %v4571, 4
        %v4574 = vshll.u32 %v4307, 16
        %v4576 = vrot.slane %v4574, 5
        %v4577 = vsel %vm962, %v4572, %v4576
        %v4578 = vshrl.u32 %v4307, 16
        %v4580 = vrot.slane %v4578, 4
        %v4581 = vor.u32 %v4580, %v4576
        %v4582 = vrot.slane %v4581, 4
        %v4584 = vshll.u32 %v4308, 16
        %v4586 = vrot.slane %v4584, 5
        %v4587 = vsel %vm962, %v4582, %v4586
        %v4589 = vshrl.u32 %v4309, 16
        %v4591 = vrot.slane %v4589, 4
        %v4592 = vshll.u32 %v4309, 16
        %v4594 = vrot.slane %v4592, 5
        %v4595 = vor.u32 %v4591, %v4594
        %v4596 = vrot.slane %v4595, 4
        %v4598 = vshll.u32 %v4310, 16
        %v4600 = vrot.slane %v4598, 5
        %v4601 = vsel %vm962, %v4596, %v4600
        %v4602 = vshrl.u32 %v4310, 16
        %v4604 = vrot.slane %v4602, 4
        %v4605 = vor.u32 %v4604, %v4600
        %v4606 = vrot.slane %v4605, 4
        %v4608 = vshll.u32 %v4311, 16
        %v4610 = vrot.slane %v4608, 5
        %v4611 = vsel %vm962, %v4606, %v4610
        %v4613 = vshrl.u32 %v4312, 16
        %v4615 = vrot.slane %v4613, 4
        %v4616 = vshll.u32 %v4312, 16
        %v4618 = vrot.slane %v4616, 5
        %v4619 = vor.u32 %v4615, %v4618
        %v4620 = vrot.slane %v4619, 4
        %v4622 = vshll.u32 %v4313, 16
        %v4624 = vrot.slane %v4622, 5
        %v4625 = vsel %vm962, %v4620, %v4624
        %v4626 = vshrl.u32 %v4313, 16
        %v4628 = vrot.slane %v4626, 4
        %v4629 = vor.u32 %v4628, %v4624
        %v4630 = vrot.slane %v4629, 4
        %v4632 = vshll.u32 %v4314, 16
        %v4634 = vrot.slane %v4632, 5
        %v4635 = vsel %vm962, %v4630, %v4634
        %v4637 = vshrl.u32 %v4315, 16
        %v4639 = vrot.slane %v4637, 4
        %v4640 = vshll.u32 %v4315, 16
        %v4642 = vrot.slane %v4640, 5
        %v4643 = vor.u32 %v4639, %v4642
        %v4644 = vrot.slane %v4643, 4
        %v4646 = vshll.u32 %v4316, 16
        %v4648 = vrot.slane %v4646, 5
        %v4649 = vsel %vm962, %v4644, %v4648
        %v4650 = vshrl.u32 %v4316, 16
        %v4652 = vrot.slane %v4650, 4
        %v4653 = vor.u32 %v4652, %v4648
        %v4654 = vrot.slane %v4653, 4
        %v4656 = vshll.u32 %v4317, 16
        %v4658 = vrot.slane %v4656, 5
        %v4659 = vsel %vm962, %v4654, %v4658
        %v4661 = vshrl.u32 %v4318, 16
        %v4663 = vrot.slane %v4661, 4
        %v4664 = vshll.u32 %v4318, 16
        %v4666 = vrot.slane %v4664, 5
        %v4667 = vor.u32 %v4663, %v4666
        %v4668 = vrot.slane %v4667, 4
        %v4670 = vshll.u32 %v4319, 16
        %v4672 = vrot.slane %v4670, 5
        %v4673 = vsel %vm962, %v4668, %v4672
        %v4674 = vshrl.u32 %v4319, 16
        %v4676 = vrot.slane %v4674, 4
        %v4677 = vor.u32 %v4676, %v4672
        %v4678 = vrot.slane %v4677, 4
        %v4680 = vshll.u32 %v4320, 16
        %v4682 = vrot.slane %v4680, 5
        %v4683 = vsel %vm962, %v4678, %v4682
        %v4685 = vshrl.u32 %v4321, 16
        %v4687 = vrot.slane %v4685, 4
        %v4688 = vshll.u32 %v4321, 16
        %v4690 = vrot.slane %v4688, 5
        %v4691 = vor.u32 %v4687, %v4690
        %v4692 = vrot.slane %v4691, 4
        %v4694 = vshll.u32 %v4322, 16
        %v4696 = vrot.slane %v4694, 5
        %v4697 = vsel %vm962, %v4692, %v4696
        %v4698 = vshrl.u32 %v4322, 16
        %v4700 = vrot.slane %v4698, 4
        %v4701 = vor.u32 %v4700, %v4696
        %v4702 = vrot.slane %v4701, 4
        %v4704 = vshll.u32 %v4323, 16
        %v4706 = vrot.slane %v4704, 5
        %v4707 = vsel %vm962, %v4702, %v4706
        %s4708 = scalar_lea.vmem %s1, 14
        %v4709 = vld [vmem:[%s4708] sm:$0x3]
        %v4710 = vunpack.c.l.b16 %v4337
        %v4711 = vunpack.c.l.b16 %v4347
        %v4712 = vunpack.c.l.b16 %v4361
        %v4713 = vunpack.c.l.b16 %v4371
        %v4714 = vunpack.c.l.b16 %v4385
        %v4715 = vunpack.c.l.b16 %v4395
        %v4716 = vunpack.c.l.b16 %v4409
        %v4717 = vunpack.c.l.b16 %v4419
        %v4718 = vunpack.c.l.b16 %v4433
        %v4719 = vunpack.c.l.b16 %v4443
        %v4720 = vunpack.c.l.b16 %v4457
        %v4721 = vunpack.c.l.b16 %v4467
        %v4722 = vunpack.c.l.b16 %v4481
        %v4723 = vunpack.c.l.b16 %v4491
        %v4724 = vunpack.c.l.b16 %v4505
        %v4725 = vunpack.c.l.b16 %v4515
        %v4726 = vunpack.c.l.b16 %v4529
        %v4727 = vunpack.c.l.b16 %v4539
        %v4728 = vunpack.c.l.b16 %v4553
        %v4729 = vunpack.c.l.b16 %v4563
        %v4730 = vunpack.c.l.b16 %v4577
        %v4731 = vunpack.c.l.b16 %v4587
        %v4732 = vunpack.c.l.b16 %v4601
        %v4733 = vunpack.c.l.b16 %v4611
        %v4734 = vunpack.c.l.b16 %v4625
        %v4735 = vunpack.c.l.b16 %v4635
        %v4736 = vunpack.c.l.b16 %v4649
        %v4737 = vunpack.c.l.b16 %v4659
        %v4738 = vunpack.c.l.b16 %v4673
        %v4739 = vunpack.c.l.b16 %v4683
        %v4740 = vunpack.c.l.b16 %v4697
        %v4741 = vunpack.c.l.b16 %v4707
        %v4742 = vpack.c.b16 %v4711, %v4710
        %v4743 = vpack.c.b16 %v4713, %v4712
        %v4744 = vpack.c.b16 %v4715, %v4714
        %v4745 = vpack.c.b16 %v4717, %v4716
        %v4746 = vpack.c.b16 %v4719, %v4718
        %v4747 = vpack.c.b16 %v4721, %v4720
        %v4748 = vpack.c.b16 %v4723, %v4722
        %v4749 = vpack.c.b16 %v4725, %v4724
        %v4750 = vpack.c.b16 %v4727, %v4726
        %v4751 = vpack.c.b16 %v4729, %v4728
        %v4752 = vpack.c.b16 %v4731, %v4730
        %v4753 = vpack.c.b16 %v4733, %v4732
        %v4754 = vpack.c.b16 %v4735, %v4734
        %v4755 = vpack.c.b16 %v4737, %v4736
        %v4756 = vpack.c.b16 %v4739, %v4738
        %v4757 = vpack.c.b16 %v4741, %v4740
        %v4759 = vsel %vm1397, %v4742, 0
        %v4762 = vsel %vm1397, %v4743, 0
        %v4765 = vsel %vm1397, %v4744, 0
        %v4768 = vsel %vm1397, %v4745, 0
        %v4771 = vsel %vm1397, %v4746, 0
        %v4774 = vsel %vm1397, %v4747, 0
        %v4777 = vsel %vm1397, %v4748, 0
        %v4780 = vsel %vm1397, %v4749, 0
        %v4783 = vsel %vm1397, %v4750, 0
        %v4786 = vsel %vm1397, %v4751, 0
        %v4789 = vsel %vm1397, %v4752, 0
        %v4792 = vsel %vm1397, %v4753, 0
        %v4795 = vsel %vm1397, %v4754, 0
        %v4798 = vsel %vm1397, %v4755, 0
        %v4801 = vsel %vm1397, %v4756, 0
        %v4804 = vsel %vm1397, %v4757, 0
        %v4807 = vand.u32 %v4709, %v1449
        %4809 = vmatprep.subr.bf16.mxu0 0
        %4810 = vmatpush1.bf16.msra.mxu0 0
        %4811 = vmatprep.subr.bf16.mxu0 0
        %4812 = vmatpush1.bf16.msra.mxu0 0
        %4813 = vmatprep.subr.bf16.mxu0 0
        %4814 = vmatpush1.bf16.msra.mxu0 0
        %4815 = vmatprep.subr.bf16.mxu0 0
        %4816 = vmatpush1.bf16.msra.mxu0 0
        %4817 = vmatprep.subr.bf16.mxu0 0
        %4818 = vmatpush1.bf16.msra.mxu0 0
        %4819 = vmatprep.subr.bf16.mxu0 0
        %4820 = vmatpush1.bf16.msra.mxu0 0
        %4821 = vmatprep.subr.bf16.mxu0 0
        %4822 = vmatpush1.bf16.msra.mxu0 0
        %4823 = vmatprep.subr.bf16.mxu0 0
        %4824 = vmatpush1.bf16.msra.mxu0 %v4807
        %4825 = vmatprep.subr.bf16.mxu0 0
        %4826 = vmatpush2.bf16.msra.mxu0 0
        %4827 = vmatprep.subr.bf16.mxu0 0
        %4828 = vmatpush2.bf16.msra.mxu0 0
        %4829 = vmatprep.subr.bf16.mxu0 0
        %4830 = vmatpush2.bf16.msra.mxu0 0
        %4831 = vmatprep.subr.bf16.mxu0 0
        %4832 = vmatpush2.bf16.msra.mxu0 0
        %4833 = vmatprep.subr.bf16.mxu0 0
        %4834 = vmatpush2.bf16.msra.mxu0 0
        %4835 = vmatprep.subr.bf16.mxu0 0
        %4836 = vmatpush2.bf16.msra.mxu0 0
        %4837 = vmatprep.subr.bf16.mxu0 0
        %4838 = vmatpush2.bf16.msra.mxu0 0
        %4839 = vmatprep.subr.bf16.mxu0 0
        %4840 = vmatpush2.bf16.msra.mxu0 0
        %4841 = vmatprep.mubr.bf16.mxu0 0
        %4842 = vmatmul.mubr.bf16.gmra.mxu0 %v4759
        %v4843 = vpop.f32.mrf.mxu0
        %v4844 = vadd.f32 0.0, %v4843
        %v4845 = vpop.f32.mrf.mxu0
        %v4846 = vpop.f32.mrf.mxu0
        %v4847 = vadd.f32 0.0, %v4846
        %v4848 = vpop.f32.mrf.mxu0
        %4849 = vmatprep.mubr.bf16.mxu0 0
        %4850 = vmatmul.mubr.bf16.gmra.mxu0 %v4762
        %v4851 = vpop.f32.mrf.mxu0
        %v4852 = vadd.f32 0.0, %v4851
        %v4853 = vpop.f32.mrf.mxu0
        %v4854 = vpop.f32.mrf.mxu0
        %v4855 = vadd.f32 0.0, %v4854
        %v4856 = vpop.f32.mrf.mxu0
        %4857 = vmatprep.mubr.bf16.mxu0 0
        %4858 = vmatmul.mubr.bf16.gmra.mxu0 %v4765
        %v4859 = vpop.f32.mrf.mxu0
        %v4860 = vadd.f32 0.0, %v4859
        %v4861 = vpop.f32.mrf.mxu0
        %v4862 = vpop.f32.mrf.mxu0
        %v4863 = vadd.f32 0.0, %v4862
        %v4864 = vpop.f32.mrf.mxu0
        %4865 = vmatprep.mubr.bf16.mxu0 0
        %4866 = vmatmul.mubr.bf16.gmra.mxu0 %v4768
        %v4867 = vpop.f32.mrf.mxu0
        %v4868 = vadd.f32 0.0, %v4867
        %v4869 = vpop.f32.mrf.mxu0
        %v4870 = vpop.f32.mrf.mxu0
        %v4871 = vadd.f32 0.0, %v4870
        %v4872 = vpop.f32.mrf.mxu0
        %4873 = vmatprep.mubr.bf16.mxu0 0
        %4874 = vmatmul.mubr.bf16.gmra.mxu0 %v4771
        %v4875 = vpop.f32.mrf.mxu0
        %v4876 = vadd.f32 0.0, %v4875
        %v4877 = vpop.f32.mrf.mxu0
        %v4878 = vpop.f32.mrf.mxu0
        %v4879 = vadd.f32 0.0, %v4878
        %v4880 = vpop.f32.mrf.mxu0
        %4881 = vmatprep.mubr.bf16.mxu0 0
        %4882 = vmatmul.mubr.bf16.gmra.mxu0 %v4774
        %v4883 = vpop.f32.mrf.mxu0
        %v4884 = vadd.f32 0.0, %v4883
        %v4885 = vpop.f32.mrf.mxu0
        %v4886 = vpop.f32.mrf.mxu0
        %v4887 = vadd.f32 0.0, %v4886
        %v4888 = vpop.f32.mrf.mxu0
        %4889 = vmatprep.mubr.bf16.mxu0 0
        %4890 = vmatmul.mubr.bf16.gmra.mxu0 %v4777
        %v4891 = vpop.f32.mrf.mxu0
        %v4892 = vadd.f32 0.0, %v4891
        %v4893 = vpop.f32.mrf.mxu0
        %v4894 = vpop.f32.mrf.mxu0
        %v4895 = vadd.f32 0.0, %v4894
        %v4896 = vpop.f32.mrf.mxu0
        %4897 = vmatprep.mubr.bf16.mxu0 0
        %4898 = vmatmul.mubr.bf16.gmra.mxu0 %v4780
        %v4899 = vpop.f32.mrf.mxu0
        %v4900 = vadd.f32 0.0, %v4899
        %v4901 = vpop.f32.mrf.mxu0
        %v4902 = vpop.f32.mrf.mxu0
        %v4903 = vadd.f32 0.0, %v4902
        %v4904 = vpop.f32.mrf.mxu0
        %4905 = vmatprep.mubr.bf16.mxu0 0
        %4906 = vmatmul.mubr.bf16.gmra.mxu0 %v4783
        %v4907 = vpop.f32.mrf.mxu0
        %v4908 = vadd.f32 0.0, %v4907
        %v4909 = vpop.f32.mrf.mxu0
        %v4910 = vpop.f32.mrf.mxu0
        %v4911 = vadd.f32 0.0, %v4910
        %v4912 = vpop.f32.mrf.mxu0
        %4913 = vmatprep.mubr.bf16.mxu0 0
        %4914 = vmatmul.mubr.bf16.gmra.mxu0 %v4786
        %v4915 = vpop.f32.mrf.mxu0
        %v4916 = vadd.f32 0.0, %v4915
        %v4917 = vpop.f32.mrf.mxu0
        %v4918 = vpop.f32.mrf.mxu0
        %v4919 = vadd.f32 0.0, %v4918
        %v4920 = vpop.f32.mrf.mxu0
        %4921 = vmatprep.mubr.bf16.mxu0 0
        %4922 = vmatmul.mubr.bf16.gmra.mxu0 %v4789
        %v4923 = vpop.f32.mrf.mxu0
        %v4924 = vadd.f32 0.0, %v4923
        %v4925 = vpop.f32.mrf.mxu0
        %v4926 = vpop.f32.mrf.mxu0
        %v4927 = vadd.f32 0.0, %v4926
        %v4928 = vpop.f32.mrf.mxu0
        %4929 = vmatprep.mubr.bf16.mxu0 0
        %4930 = vmatmul.mubr.bf16.gmra.mxu0 %v4792
        %v4931 = vpop.f32.mrf.mxu0
        %v4932 = vadd.f32 0.0, %v4931
        %v4933 = vpop.f32.mrf.mxu0
        %v4934 = vpop.f32.mrf.mxu0
        %v4935 = vadd.f32 0.0, %v4934
        %v4936 = vpop.f32.mrf.mxu0
        %4937 = vmatprep.mubr.bf16.mxu0 0
        %4938 = vmatmul.mubr.bf16.gmra.mxu0 %v4795
        %v4939 = vpop.f32.mrf.mxu0
        %v4940 = vadd.f32 0.0, %v4939
        %v4941 = vpop.f32.mrf.mxu0
        %v4942 = vpop.f32.mrf.mxu0
        %v4943 = vadd.f32 0.0, %v4942
        %v4944 = vpop.f32.mrf.mxu0
        %4945 = vmatprep.mubr.bf16.mxu0 0
        %4946 = vmatmul.mubr.bf16.gmra.mxu0 %v4798
        %v4947 = vpop.f32.mrf.mxu0
        %v4948 = vadd.f32 0.0, %v4947
        %v4949 = vpop.f32.mrf.mxu0
        %v4950 = vpop.f32.mrf.mxu0
        %v4951 = vadd.f32 0.0, %v4950
        %v4952 = vpop.f32.mrf.mxu0
        %4953 = vmatprep.mubr.bf16.mxu0 0
        %4954 = vmatmul.mubr.bf16.gmra.mxu0 %v4801
        %v4955 = vpop.f32.mrf.mxu0
        %v4956 = vadd.f32 0.0, %v4955
        %v4957 = vpop.f32.mrf.mxu0
        %v4958 = vpop.f32.mrf.mxu0
        %v4959 = vadd.f32 0.0, %v4958
        %v4960 = vpop.f32.mrf.mxu0
        %4961 = vmatprep.mubr.bf16.mxu0 0
        %4962 = vmatmul.mubr.bf16.gmra.mxu0 %v4804
        %v4963 = vpop.f32.mrf.mxu0
        %v4964 = vadd.f32 0.0, %v4963
        %v4965 = vpop.f32.mrf.mxu0
        %v4966 = vpop.f32.mrf.mxu0
        %v4967 = vadd.f32 0.0, %v4966
        %v4968 = vpop.f32.mrf.mxu0
        %4969 = vdwg.mxu0
        %v4970 = vadd.f32 %v4244, %v4844
        %v4971 = vadd.f32 %v4245, %v4847
        %v4972 = vadd.f32 %v4246, %v4852
        %v4973 = vadd.f32 %v4247, %v4855
        %v4974 = vadd.f32 %v4248, %v4860
        %v4975 = vadd.f32 %v4249, %v4863
        %v4976 = vadd.f32 %v4250, %v4868
        %v4977 = vadd.f32 %v4251, %v4871
        %v4978 = vadd.f32 %v4252, %v4876
        %v4979 = vadd.f32 %v4253, %v4879
        %v4980 = vadd.f32 %v4254, %v4884
        %v4981 = vadd.f32 %v4255, %v4887
        %v4982 = vadd.f32 %v4256, %v4892
        %v4983 = vadd.f32 %v4257, %v4895
        %v4984 = vadd.f32 %v4258, %v4900
        %v4985 = vadd.f32 %v4259, %v4903
        %v4986 = vadd.f32 %v4260, %v4908
        %v4987 = vadd.f32 %v4261, %v4911
        %v4988 = vadd.f32 %v4262, %v4916
        %v4989 = vadd.f32 %v4263, %v4919
        %v4990 = vadd.f32 %v4264, %v4924
        %v4991 = vadd.f32 %v4265, %v4927
        %v4992 = vadd.f32 %v4266, %v4932
        %v4993 = vadd.f32 %v4267, %v4935
        %v4994 = vadd.f32 %v4268, %v4940
        %v4995 = vadd.f32 %v4269, %v4943
        %v4996 = vadd.f32 %v4270, %v4948
        %v4997 = vadd.f32 %v4271, %v4951
        %v4998 = vadd.f32 %v4272, %v4956
        %v4999 = vadd.f32 %v4273, %v4959
        %v5000 = vadd.f32 %v4274, %v4964
        %v5001 = vadd.f32 %v4275, %v4967
        %v5002 = vld [vmem:[%s3917] sm:$0xe]
        %v5003 = vld [vmem:[%s3917 + $0xc] sm:$0xe]
        %v5004 = vld [vmem:[%s3917 + $0x18] sm:$0xe]
        %v5005 = vld [vmem:[%s3917 + $0x24] sm:$0xe]
        %v5006 = vld [vmem:[%s3917 + $0x30] sm:$0xe]
        %v5007 = vld [vmem:[%s3917 + $0x3c] sm:$0xe]
        %v5008 = vld [vmem:[%s3917 + $0x48] sm:$0xe]
        %v5009 = vld [vmem:[%s3917 + $0x54] sm:$0xe]
        %v5010 = vld [vmem:[%s3917 + $0x60] sm:$0xe]
        %v5011 = vld [vmem:[%s3917 + $0x6c] sm:$0xe]
        %v5012 = vld [vmem:[%s3917 + $0x78] sm:$0xe]
        %v5013 = vld [vmem:[%s3917 + $0x84] sm:$0xe]
        %v5014 = vld [vmem:[%s3917 + $0x90] sm:$0xe]
        %v5015 = vld [vmem:[%s3917 + $0x9c] sm:$0xe]
        %v5016 = vld [vmem:[%s3917 + $0xa8] sm:$0xe]
        %v5017 = vld [vmem:[%s3917 + $0xb4] sm:$0xe]
        %v5066 = vrot.slane %v5002, 5
        %v5067 = vrot.slane %v5066, 4
        %v5068 = vrot.slane %v4277, 5
        %v5069 = vsel %vm1956, %v5067, %v5068
        %v5070 = vrot.slane %v5068, 4
        %v5071 = vrot.slane %v4278, 5
        %v5072 = vsel %vm1956, %v5070, %v5071
        %v5073 = vrot.slane %v5003, 5
        %v5074 = vrot.slane %v5073, 4
        %v5075 = vrot.slane %v4280, 5
        %v5076 = vsel %vm1956, %v5074, %v5075
        %v5077 = vrot.slane %v5075, 4
        %v5078 = vrot.slane %v4281, 5
        %v5079 = vsel %vm1956, %v5077, %v5078
        %v5080 = vrot.slane %v5004, 5
        %v5081 = vrot.slane %v5080, 4
        %v5082 = vrot.slane %v4283, 5
        %v5083 = vsel %vm1956, %v5081, %v5082
        %v5084 = vrot.slane %v5082, 4
        %v5085 = vrot.slane %v4284, 5
        %v5086 = vsel %vm1956, %v5084, %v5085
        %v5087 = vrot.slane %v5005, 5
        %v5088 = vrot.slane %v5087, 4
        %v5089 = vrot.slane %v4286, 5
        %v5090 = vsel %vm1956, %v5088, %v5089
        %v5091 = vrot.slane %v5089, 4
        %v5092 = vrot.slane %v4287, 5
        %v5093 = vsel %vm1956, %v5091, %v5092
        %v5094 = vrot.slane %v5006, 5
        %v5095 = vrot.slane %v5094, 4
        %v5096 = vrot.slane %v4289, 5
        %v5097 = vsel %vm1956, %v5095, %v5096
        %v5098 = vrot.slane %v5096, 4
        %v5099 = vrot.slane %v4290, 5
        %v5100 = vsel %vm1956, %v5098, %v5099
        %v5101 = vrot.slane %v5007, 5
        %v5102 = vrot.slane %v5101, 4
        %v5103 = vrot.slane %v4292, 5
        %v5104 = vsel %vm1956, %v5102, %v5103
        %v5105 = vrot.slane %v5103, 4
        %v5106 = vrot.slane %v4293, 5
        %v5107 = vsel %vm1956, %v5105, %v5106
        %v5108 = vrot.slane %v5008, 5
        %v5109 = vrot.slane %v5108, 4
        %v5110 = vrot.slane %v4295, 5
        %v5111 = vsel %vm1956, %v5109, %v5110
        %v5112 = vrot.slane %v5110, 4
        %v5113 = vrot.slane %v4296, 5
        %v5114 = vsel %vm1956, %v5112, %v5113
        %v5115 = vrot.slane %v5009, 5
        %v5116 = vrot.slane %v5115, 4
        %v5117 = vrot.slane %v4298, 5
        %v5118 = vsel %vm1956, %v5116, %v5117
        %v5119 = vrot.slane %v5117, 4
        %v5120 = vrot.slane %v4299, 5
        %v5121 = vsel %vm1956, %v5119, %v5120
        %v5122 = vrot.slane %v5010, 5
        %v5123 = vrot.slane %v5122, 4
        %v5124 = vrot.slane %v4301, 5
        %v5125 = vsel %vm1956, %v5123, %v5124
        %v5126 = vrot.slane %v5124, 4
        %v5127 = vrot.slane %v4302, 5
        %v5128 = vsel %vm1956, %v5126, %v5127
        %v5129 = vrot.slane %v5011, 5
        %v5130 = vrot.slane %v5129, 4
        %v5131 = vrot.slane %v4304, 5
        %v5132 = vsel %vm1956, %v5130, %v5131
        %v5133 = vrot.slane %v5131, 4
        %v5134 = vrot.slane %v4305, 5
        %v5135 = vsel %vm1956, %v5133, %v5134
        %v5136 = vrot.slane %v5012, 5
        %v5137 = vrot.slane %v5136, 4
        %v5138 = vrot.slane %v4307, 5
        %v5139 = vsel %vm1956, %v5137, %v5138
        %v5140 = vrot.slane %v5138, 4
        %v5141 = vrot.slane %v4308, 5
        %v5142 = vsel %vm1956, %v5140, %v5141
        %v5143 = vrot.slane %v5013, 5
        %v5144 = vrot.slane %v5143, 4
        %v5145 = vrot.slane %v4310, 5
        %v5146 = vsel %vm1956, %v5144, %v5145
        %v5147 = vrot.slane %v5145, 4
        %v5148 = vrot.slane %v4311, 5
        %v5149 = vsel %vm1956, %v5147, %v5148
        %v5150 = vrot.slane %v5014, 5
        %v5151 = vrot.slane %v5150, 4
        %v5152 = vrot.slane %v4313, 5
        %v5153 = vsel %vm1956, %v5151, %v5152
        %v5154 = vrot.slane %v5152, 4
        %v5155 = vrot.slane %v4314, 5
        %v5156 = vsel %vm1956, %v5154, %v5155
        %v5157 = vrot.slane %v5015, 5
        %v5158 = vrot.slane %v5157, 4
        %v5159 = vrot.slane %v4316, 5
        %v5160 = vsel %vm1956, %v5158, %v5159
        %v5161 = vrot.slane %v5159, 4
        %v5162 = vrot.slane %v4317, 5
        %v5163 = vsel %vm1956, %v5161, %v5162
        %v5164 = vrot.slane %v5016, 5
        %v5165 = vrot.slane %v5164, 4
        %v5166 = vrot.slane %v4319, 5
        %v5167 = vsel %vm1956, %v5165, %v5166
        %v5168 = vrot.slane %v5166, 4
        %v5169 = vrot.slane %v4320, 5
        %v5170 = vsel %vm1956, %v5168, %v5169
        %v5171 = vrot.slane %v5017, 5
        %v5172 = vrot.slane %v5171, 4
        %v5173 = vrot.slane %v4322, 5
        %v5174 = vsel %vm1956, %v5172, %v5173
        %v5175 = vrot.slane %v5173, 4
        %v5176 = vrot.slane %v4323, 5
        %v5177 = vsel %vm1956, %v5175, %v5176
        %s5178 = scalar_lea.vmem %s1, 16
        %v5179 = vld [vmem:[%s5178] sm:$0x3]
        %v5180 = vunpack.c.l.b16 %v5069
        %v5181 = vunpack.c.l.b16 %v5072
        %v5182 = vunpack.c.l.b16 %v5076
        %v5183 = vunpack.c.l.b16 %v5079
        %v5184 = vunpack.c.l.b16 %v5083
        %v5185 = vunpack.c.l.b16 %v5086
        %v5186 = vunpack.c.l.b16 %v5090
        %v5187 = vunpack.c.l.b16 %v5093
        %v5188 = vunpack.c.l.b16 %v5097
        %v5189 = vunpack.c.l.b16 %v5100
        %v5190 = vunpack.c.l.b16 %v5104
        %v5191 = vunpack.c.l.b16 %v5107
        %v5192 = vunpack.c.l.b16 %v5111
        %v5193 = vunpack.c.l.b16 %v5114
        %v5194 = vunpack.c.l.b16 %v5118
        %v5195 = vunpack.c.l.b16 %v5121
        %v5196 = vunpack.c.l.b16 %v5125
        %v5197 = vunpack.c.l.b16 %v5128
        %v5198 = vunpack.c.l.b16 %v5132
        %v5199 = vunpack.c.l.b16 %v5135
        %v5200 = vunpack.c.l.b16 %v5139
        %v5201 = vunpack.c.l.b16 %v5142
        %v5202 = vunpack.c.l.b16 %v5146
        %v5203 = vunpack.c.l.b16 %v5149
        %v5204 = vunpack.c.l.b16 %v5153
        %v5205 = vunpack.c.l.b16 %v5156
        %v5206 = vunpack.c.l.b16 %v5160
        %v5207 = vunpack.c.l.b16 %v5163
        %v5208 = vunpack.c.l.b16 %v5167
        %v5209 = vunpack.c.l.b16 %v5170
        %v5210 = vunpack.c.l.b16 %v5174
        %v5211 = vunpack.c.l.b16 %v5177
        %v5212 = vpack.c.b16 %v5181, %v5180
        %v5213 = vpack.c.b16 %v5183, %v5182
        %v5214 = vpack.c.b16 %v5185, %v5184
        %v5215 = vpack.c.b16 %v5187, %v5186
        %v5216 = vpack.c.b16 %v5189, %v5188
        %v5217 = vpack.c.b16 %v5191, %v5190
        %v5218 = vpack.c.b16 %v5193, %v5192
        %v5219 = vpack.c.b16 %v5195, %v5194
        %v5220 = vpack.c.b16 %v5197, %v5196
        %v5221 = vpack.c.b16 %v5199, %v5198
        %v5222 = vpack.c.b16 %v5201, %v5200
        %v5223 = vpack.c.b16 %v5203, %v5202
        %v5224 = vpack.c.b16 %v5205, %v5204
        %v5225 = vpack.c.b16 %v5207, %v5206
        %v5226 = vpack.c.b16 %v5209, %v5208
        %v5227 = vpack.c.b16 %v5211, %v5210
        %v5229 = vsel %vm1397, %v5212, 0
        %v5232 = vsel %vm1397, %v5213, 0
        %v5235 = vsel %vm1397, %v5214, 0
        %v5238 = vsel %vm1397, %v5215, 0
        %v5241 = vsel %vm1397, %v5216, 0
        %v5244 = vsel %vm1397, %v5217, 0
        %v5247 = vsel %vm1397, %v5218, 0
        %v5250 = vsel %vm1397, %v5219, 0
        %v5253 = vsel %vm1397, %v5220, 0
        %v5256 = vsel %vm1397, %v5221, 0
        %v5259 = vsel %vm1397, %v5222, 0
        %v5262 = vsel %vm1397, %v5223, 0
        %v5265 = vsel %vm1397, %v5224, 0
        %v5268 = vsel %vm1397, %v5225, 0
        %v5271 = vsel %vm1397, %v5226, 0
        %v5274 = vsel %vm1397, %v5227, 0
        %v5277 = vand.u32 %v5179, %v1449
        %5279 = vmatprep.subr.bf16.mxu0 0
        %5280 = vmatpush1.bf16.msra.mxu0 0
        %5281 = vmatprep.subr.bf16.mxu0 0
        %5282 = vmatpush1.bf16.msra.mxu0 0
        %5283 = vmatprep.subr.bf16.mxu0 0
        %5284 = vmatpush1.bf16.msra.mxu0 0
        %5285 = vmatprep.subr.bf16.mxu0 0
        %5286 = vmatpush1.bf16.msra.mxu0 0
        %5287 = vmatprep.subr.bf16.mxu0 0
        %5288 = vmatpush1.bf16.msra.mxu0 0
        %5289 = vmatprep.subr.bf16.mxu0 0
        %5290 = vmatpush1.bf16.msra.mxu0 0
        %5291 = vmatprep.subr.bf16.mxu0 0
        %5292 = vmatpush1.bf16.msra.mxu0 0
        %5293 = vmatprep.subr.bf16.mxu0 0
        %5294 = vmatpush1.bf16.msra.mxu0 %v5277
        %5295 = vmatprep.subr.bf16.mxu0 0
        %5296 = vmatpush2.bf16.msra.mxu0 0
        %5297 = vmatprep.subr.bf16.mxu0 0
        %5298 = vmatpush2.bf16.msra.mxu0 0
        %5299 = vmatprep.subr.bf16.mxu0 0
        %5300 = vmatpush2.bf16.msra.mxu0 0
        %5301 = vmatprep.subr.bf16.mxu0 0
        %5302 = vmatpush2.bf16.msra.mxu0 0
        %5303 = vmatprep.subr.bf16.mxu0 0
        %5304 = vmatpush2.bf16.msra.mxu0 0
        %5305 = vmatprep.subr.bf16.mxu0 0
        %5306 = vmatpush2.bf16.msra.mxu0 0
        %5307 = vmatprep.subr.bf16.mxu0 0
        %5308 = vmatpush2.bf16.msra.mxu0 0
        %5309 = vmatprep.subr.bf16.mxu0 0
        %5310 = vmatpush2.bf16.msra.mxu0 0
        %5311 = vmatprep.mubr.bf16.mxu0 0
        %5312 = vmatmul.mubr.bf16.gmra.mxu0 %v5229
        %v5313 = vpop.f32.mrf.mxu0
        %v5314 = vadd.f32 0.0, %v5313
        %v5315 = vpop.f32.mrf.mxu0
        %v5316 = vpop.f32.mrf.mxu0
        %v5317 = vadd.f32 0.0, %v5316
        %v5318 = vpop.f32.mrf.mxu0
        %5319 = vmatprep.mubr.bf16.mxu0 0
        %5320 = vmatmul.mubr.bf16.gmra.mxu0 %v5232
        %v5321 = vpop.f32.mrf.mxu0
        %v5322 = vadd.f32 0.0, %v5321
        %v5323 = vpop.f32.mrf.mxu0
        %v5324 = vpop.f32.mrf.mxu0
        %v5325 = vadd.f32 0.0, %v5324
        %v5326 = vpop.f32.mrf.mxu0
        %5327 = vmatprep.mubr.bf16.mxu0 0
        %5328 = vmatmul.mubr.bf16.gmra.mxu0 %v5235
        %v5329 = vpop.f32.mrf.mxu0
        %v5330 = vadd.f32 0.0, %v5329
        %v5331 = vpop.f32.mrf.mxu0
        %v5332 = vpop.f32.mrf.mxu0
        %v5333 = vadd.f32 0.0, %v5332
        %v5334 = vpop.f32.mrf.mxu0
        %5335 = vmatprep.mubr.bf16.mxu0 0
        %5336 = vmatmul.mubr.bf16.gmra.mxu0 %v5238
        %v5337 = vpop.f32.mrf.mxu0
        %v5338 = vadd.f32 0.0, %v5337
        %v5339 = vpop.f32.mrf.mxu0
        %v5340 = vpop.f32.mrf.mxu0
        %v5341 = vadd.f32 0.0, %v5340
        %v5342 = vpop.f32.mrf.mxu0
        %5343 = vmatprep.mubr.bf16.mxu0 0
        %5344 = vmatmul.mubr.bf16.gmra.mxu0 %v5241
        %v5345 = vpop.f32.mrf.mxu0
        %v5346 = vadd.f32 0.0, %v5345
        %v5347 = vpop.f32.mrf.mxu0
        %v5348 = vpop.f32.mrf.mxu0
        %v5349 = vadd.f32 0.0, %v5348
        %v5350 = vpop.f32.mrf.mxu0
        %5351 = vmatprep.mubr.bf16.mxu0 0
        %5352 = vmatmul.mubr.bf16.gmra.mxu0 %v5244
        %v5353 = vpop.f32.mrf.mxu0
        %v5354 = vadd.f32 0.0, %v5353
        %v5355 = vpop.f32.mrf.mxu0
        %v5356 = vpop.f32.mrf.mxu0
        %v5357 = vadd.f32 0.0, %v5356
        %v5358 = vpop.f32.mrf.mxu0
        %5359 = vmatprep.mubr.bf16.mxu0 0
        %5360 = vmatmul.mubr.bf16.gmra.mxu0 %v5247
        %v5361 = vpop.f32.mrf.mxu0
        %v5362 = vadd.f32 0.0, %v5361
        %v5363 = vpop.f32.mrf.mxu0
        %v5364 = vpop.f32.mrf.mxu0
        %v5365 = vadd.f32 0.0, %v5364
        %v5366 = vpop.f32.mrf.mxu0
        %5367 = vmatprep.mubr.bf16.mxu0 0
        %5368 = vmatmul.mubr.bf16.gmra.mxu0 %v5250
        %v5369 = vpop.f32.mrf.mxu0
        %v5370 = vadd.f32 0.0, %v5369
        %v5371 = vpop.f32.mrf.mxu0
        %v5372 = vpop.f32.mrf.mxu0
        %v5373 = vadd.f32 0.0, %v5372
        %v5374 = vpop.f32.mrf.mxu0
        %5375 = vmatprep.mubr.bf16.mxu0 0
        %5376 = vmatmul.mubr.bf16.gmra.mxu0 %v5253
        %v5377 = vpop.f32.mrf.mxu0
        %v5378 = vadd.f32 0.0, %v5377
        %v5379 = vpop.f32.mrf.mxu0
        %v5380 = vpop.f32.mrf.mxu0
        %v5381 = vadd.f32 0.0, %v5380
        %v5382 = vpop.f32.mrf.mxu0
        %5383 = vmatprep.mubr.bf16.mxu0 0
        %5384 = vmatmul.mubr.bf16.gmra.mxu0 %v5256
        %v5385 = vpop.f32.mrf.mxu0
        %v5386 = vadd.f32 0.0, %v5385
        %v5387 = vpop.f32.mrf.mxu0
        %v5388 = vpop.f32.mrf.mxu0
        %v5389 = vadd.f32 0.0, %v5388
        %v5390 = vpop.f32.mrf.mxu0
        %5391 = vmatprep.mubr.bf16.mxu0 0
        %5392 = vmatmul.mubr.bf16.gmra.mxu0 %v5259
        %v5393 = vpop.f32.mrf.mxu0
        %v5394 = vadd.f32 0.0, %v5393
        %v5395 = vpop.f32.mrf.mxu0
        %v5396 = vpop.f32.mrf.mxu0
        %v5397 = vadd.f32 0.0, %v5396
        %v5398 = vpop.f32.mrf.mxu0
        %5399 = vmatprep.mubr.bf16.mxu0 0
        %5400 = vmatmul.mubr.bf16.gmra.mxu0 %v5262
        %v5401 = vpop.f32.mrf.mxu0
        %v5402 = vadd.f32 0.0, %v5401
        %v5403 = vpop.f32.mrf.mxu0
        %v5404 = vpop.f32.mrf.mxu0
        %v5405 = vadd.f32 0.0, %v5404
        %v5406 = vpop.f32.mrf.mxu0
        %5407 = vmatprep.mubr.bf16.mxu0 0
        %5408 = vmatmul.mubr.bf16.gmra.mxu0 %v5265
        %v5409 = vpop.f32.mrf.mxu0
        %v5410 = vadd.f32 0.0, %v5409
        %v5411 = vpop.f32.mrf.mxu0
        %v5412 = vpop.f32.mrf.mxu0
        %v5413 = vadd.f32 0.0, %v5412
        %v5414 = vpop.f32.mrf.mxu0
        %5415 = vmatprep.mubr.bf16.mxu0 0
        %5416 = vmatmul.mubr.bf16.gmra.mxu0 %v5268
        %v5417 = vpop.f32.mrf.mxu0
        %v5418 = vadd.f32 0.0, %v5417
        %v5419 = vpop.f32.mrf.mxu0
        %v5420 = vpop.f32.mrf.mxu0
        %v5421 = vadd.f32 0.0, %v5420
        %v5422 = vpop.f32.mrf.mxu0
        %5423 = vmatprep.mubr.bf16.mxu0 0
        %5424 = vmatmul.mubr.bf16.gmra.mxu0 %v5271
        %v5425 = vpop.f32.mrf.mxu0
        %v5426 = vadd.f32 0.0, %v5425
        %v5427 = vpop.f32.mrf.mxu0
        %v5428 = vpop.f32.mrf.mxu0
        %v5429 = vadd.f32 0.0, %v5428
        %v5430 = vpop.f32.mrf.mxu0
        %5431 = vmatprep.mubr.bf16.mxu0 0
        %5432 = vmatmul.mubr.bf16.gmra.mxu0 %v5274
        %v5433 = vpop.f32.mrf.mxu0
        %v5434 = vadd.f32 0.0, %v5433
        %v5435 = vpop.f32.mrf.mxu0
        %v5436 = vpop.f32.mrf.mxu0
        %v5437 = vadd.f32 0.0, %v5436
        %v5438 = vpop.f32.mrf.mxu0
        %5439 = vdwg.mxu0
        %v5440 = vadd.f32 %v4970, %v5314
        %v5441 = vadd.f32 %v4971, %v5317
        %v5442 = vadd.f32 %v4972, %v5322
        %v5443 = vadd.f32 %v4973, %v5325
        %v5444 = vadd.f32 %v4974, %v5330
        %v5445 = vadd.f32 %v4975, %v5333
        %v5446 = vadd.f32 %v4976, %v5338
        %v5447 = vadd.f32 %v4977, %v5341
        %v5448 = vadd.f32 %v4978, %v5346
        %v5449 = vadd.f32 %v4979, %v5349
        %v5450 = vadd.f32 %v4980, %v5354
        %v5451 = vadd.f32 %v4981, %v5357
        %v5452 = vadd.f32 %v4982, %v5362
        %v5453 = vadd.f32 %v4983, %v5365
        %v5454 = vadd.f32 %v4984, %v5370
        %v5455 = vadd.f32 %v4985, %v5373
        %v5456 = vadd.f32 %v4986, %v5378
        %v5457 = vadd.f32 %v4987, %v5381
        %v5458 = vadd.f32 %v4988, %v5386
        %v5459 = vadd.f32 %v4989, %v5389
        %v5460 = vadd.f32 %v4990, %v5394
        %v5461 = vadd.f32 %v4991, %v5397
        %v5462 = vadd.f32 %v4992, %v5402
        %v5463 = vadd.f32 %v4993, %v5405
        %v5464 = vadd.f32 %v4994, %v5410
        %v5465 = vadd.f32 %v4995, %v5413
        %v5466 = vadd.f32 %v4996, %v5418
        %v5467 = vadd.f32 %v4997, %v5421
        %v5468 = vadd.f32 %v4998, %v5426
        %v5469 = vadd.f32 %v4999, %v5429
        %v5470 = vadd.f32 %v5000, %v5434
        %v5471 = vadd.f32 %v5001, %v5437
        %v5472 = vld [vmem:[%s2] sm:$0x1]
        %v5473 = vld [vmem:[%s2 + $0x1] sm:$0x1]
        %v5474 = vld [vmem:[%s2 + $0x2] sm:$0x1]
        %v5475 = vlaneseq
        %v5476 = vshrl.u32 %v5475, 7
        %v5477 = vsub.s32 0, %v5476
        %v5478 = vrot.slane %v5472, %v5477
        %v5479 = vadd.f32 %v5440, %v5478
        %v5480 = vadd.f32 %v5441, %v5478
        %v5481 = vadd.f32 %v5442, %v5478
        %v5482 = vadd.f32 %v5443, %v5478
        %v5483 = vadd.f32 %v5444, %v5478
        %v5484 = vadd.f32 %v5445, %v5478
        %v5485 = vadd.f32 %v5446, %v5478
        %v5486 = vadd.f32 %v5447, %v5478
        %v5487 = vadd.f32 %v5448, %v5478
        %v5488 = vadd.f32 %v5449, %v5478
        %v5489 = vadd.f32 %v5450, %v5478
        %v5490 = vadd.f32 %v5451, %v5478
        %v5491 = vadd.f32 %v5452, %v5478
        %v5492 = vadd.f32 %v5453, %v5478
        %v5493 = vadd.f32 %v5454, %v5478
        %v5494 = vadd.f32 %v5455, %v5478
        %v5495 = vadd.f32 %v5456, %v5478
        %v5496 = vadd.f32 %v5457, %v5478
        %v5497 = vadd.f32 %v5458, %v5478
        %v5498 = vadd.f32 %v5459, %v5478
        %v5499 = vadd.f32 %v5460, %v5478
        %v5500 = vadd.f32 %v5461, %v5478
        %v5501 = vadd.f32 %v5462, %v5478
        %v5502 = vadd.f32 %v5463, %v5478
        %v5503 = vadd.f32 %v5464, %v5478
        %v5504 = vadd.f32 %v5465, %v5478
        %v5505 = vadd.f32 %v5466, %v5478
        %v5506 = vadd.f32 %v5467, %v5478
        %v5507 = vadd.f32 %v5468, %v5478
        %v5508 = vadd.f32 %v5469, %v5478
        %v5509 = vadd.f32 %v5470, %v5478
        %v5510 = vadd.f32 %v5471, %v5478
        %vm5511 = vcmask 195584
        %v5512 = vsel %vm5511, %v5479, 0.0
        %5513 = vadd.xlane.f32.xlu0 %v5512
        %v5514 = vpop.xlane.xlu0 %5513
        %v5515 = vsel %vm5511, %v5480, 0.0
        %5516 = vadd.xlane.f32.xlu0 %v5515
        %v5517 = vpop.xlane.xlu0 %5516
        %v5518 = vsel %vm5511, %v5481, 0.0
        %5519 = vadd.xlane.f32.xlu0 %v5518
        %v5520 = vpop.xlane.xlu0 %5519
        %v5521 = vsel %vm5511, %v5482, 0.0
        %5522 = vadd.xlane.f32.xlu0 %v5521
        %v5523 = vpop.xlane.xlu0 %5522
        %v5524 = vsel %vm5511, %v5483, 0.0
        %5525 = vadd.xlane.f32.xlu0 %v5524
        %v5526 = vpop.xlane.xlu0 %5525
        %v5527 = vsel %vm5511, %v5484, 0.0
        %5528 = vadd.xlane.f32.xlu0 %v5527
        %v5529 = vpop.xlane.xlu0 %5528
        %v5530 = vsel %vm5511, %v5485, 0.0
        %5531 = vadd.xlane.f32.xlu0 %v5530
        %v5532 = vpop.xlane.xlu0 %5531
        %v5533 = vsel %vm5511, %v5486, 0.0
        %5534 = vadd.xlane.f32.xlu0 %v5533
        %v5535 = vpop.xlane.xlu0 %5534
        %v5536 = vsel %vm5511, %v5487, 0.0
        %5537 = vadd.xlane.f32.xlu0 %v5536
        %v5538 = vpop.xlane.xlu0 %5537
        %v5539 = vsel %vm5511, %v5488, 0.0
        %5540 = vadd.xlane.f32.xlu0 %v5539
        %v5541 = vpop.xlane.xlu0 %5540
        %v5542 = vsel %vm5511, %v5489, 0.0
        %5543 = vadd.xlane.f32.xlu0 %v5542
        %v5544 = vpop.xlane.xlu0 %5543
        %v5545 = vsel %vm5511, %v5490, 0.0
        %5546 = vadd.xlane.f32.xlu0 %v5545
        %v5547 = vpop.xlane.xlu0 %5546
        %v5548 = vsel %vm5511, %v5491, 0.0
        %5549 = vadd.xlane.f32.xlu0 %v5548
        %v5550 = vpop.xlane.xlu0 %5549
        %v5551 = vsel %vm5511, %v5492, 0.0
        %5552 = vadd.xlane.f32.xlu0 %v5551
        %v5553 = vpop.xlane.xlu0 %5552
        %v5554 = vsel %vm5511, %v5493, 0.0
        %5555 = vadd.xlane.f32.xlu0 %v5554
        %v5556 = vpop.xlane.xlu0 %5555
        %v5557 = vsel %vm5511, %v5494, 0.0
        %5558 = vadd.xlane.f32.xlu0 %v5557
        %v5559 = vpop.xlane.xlu0 %5558
        %v5560 = vsel %vm5511, %v5495, 0.0
        %5561 = vadd.xlane.f32.xlu0 %v5560
        %v5562 = vpop.xlane.xlu0 %5561
        %v5563 = vsel %vm5511, %v5496, 0.0
        %5564 = vadd.xlane.f32.xlu0 %v5563
        %v5565 = vpop.xlane.xlu0 %5564
        %v5566 = vsel %vm5511, %v5497, 0.0
        %5567 = vadd.xlane.f32.xlu0 %v5566
        %v5568 = vpop.xlane.xlu0 %5567
        %v5569 = vsel %vm5511, %v5498, 0.0
        %5570 = vadd.xlane.f32.xlu0 %v5569
        %v5571 = vpop.xlane.xlu0 %5570
        %v5572 = vsel %vm5511, %v5499, 0.0
        %5573 = vadd.xlane.f32.xlu0 %v5572
        %v5574 = vpop.xlane.xlu0 %5573
        %v5575 = vsel %vm5511, %v5500, 0.0
        %5576 = vadd.xlane.f32.xlu0 %v5575
        %v5577 = vpop.xlane.xlu0 %5576
        %v5578 = vsel %vm5511, %v5501, 0.0
        %5579 = vadd.xlane.f32.xlu0 %v5578
        %v5580 = vpop.xlane.xlu0 %5579
        %v5581 = vsel %vm5511, %v5502, 0.0
        %5582 = vadd.xlane.f32.xlu0 %v5581
        %v5583 = vpop.xlane.xlu0 %5582
        %v5584 = vsel %vm5511, %v5503, 0.0
        %5585 = vadd.xlane.f32.xlu0 %v5584
        %v5586 = vpop.xlane.xlu0 %5585
        %v5587 = vsel %vm5511, %v5504, 0.0
        %5588 = vadd.xlane.f32.xlu0 %v5587
        %v5589 = vpop.xlane.xlu0 %5588
        %v5590 = vsel %vm5511, %v5505, 0.0
        %5591 = vadd.xlane.f32.xlu0 %v5590
        %v5592 = vpop.xlane.xlu0 %5591
        %v5593 = vsel %vm5511, %v5506, 0.0
        %5594 = vadd.xlane.f32.xlu0 %v5593
        %v5595 = vpop.xlane.xlu0 %5594
        %v5596 = vsel %vm5511, %v5507, 0.0
        %5597 = vadd.xlane.f32.xlu0 %v5596
        %v5598 = vpop.xlane.xlu0 %5597
        %v5599 = vsel %vm5511, %v5508, 0.0
        %5600 = vadd.xlane.f32.xlu0 %v5599
        %v5601 = vpop.xlane.xlu0 %5600
        %v5602 = vsel %vm5511, %v5509, 0.0
        %5603 = vadd.xlane.f32.xlu0 %v5602
        %v5604 = vpop.xlane.xlu0 %5603
        %v5605 = vsel %vm5511, %v5510, 0.0
        %5606 = vadd.xlane.f32.xlu0 %v5605
        %v5607 = vpop.xlane.xlu0 %5606
        %v5608 = vmul.f32 %v5479, %v5479
        %v5609 = vmul.f32 %v5480, %v5480
        %v5610 = vmul.f32 %v5481, %v5481
        %v5611 = vmul.f32 %v5482, %v5482
        %v5612 = vmul.f32 %v5483, %v5483
        %v5613 = vmul.f32 %v5484, %v5484
        %v5614 = vmul.f32 %v5485, %v5485
        %v5615 = vmul.f32 %v5486, %v5486
        %v5616 = vmul.f32 %v5487, %v5487
        %v5617 = vmul.f32 %v5488, %v5488
        %v5618 = vmul.f32 %v5489, %v5489
        %v5619 = vmul.f32 %v5490, %v5490
        %v5620 = vmul.f32 %v5491, %v5491
        %v5621 = vmul.f32 %v5492, %v5492
        %v5622 = vmul.f32 %v5493, %v5493
        %v5623 = vmul.f32 %v5494, %v5494
        %v5624 = vmul.f32 %v5495, %v5495
        %v5625 = vmul.f32 %v5496, %v5496
        %v5626 = vmul.f32 %v5497, %v5497
        %v5627 = vmul.f32 %v5498, %v5498
        %v5628 = vmul.f32 %v5499, %v5499
        %v5629 = vmul.f32 %v5500, %v5500
        %v5630 = vmul.f32 %v5501, %v5501
        %v5631 = vmul.f32 %v5502, %v5502
        %v5632 = vmul.f32 %v5503, %v5503
        %v5633 = vmul.f32 %v5504, %v5504
        %v5634 = vmul.f32 %v5505, %v5505
        %v5635 = vmul.f32 %v5506, %v5506
        %v5636 = vmul.f32 %v5507, %v5507
        %v5637 = vmul.f32 %v5508, %v5508
        %v5638 = vmul.f32 %v5509, %v5509
        %v5639 = vmul.f32 %v5510, %v5510
        %v5640 = vsel %vm5511, %v5608, 0.0
        %5641 = vadd.xlane.f32.xlu0 %v5640
        %v5642 = vpop.xlane.xlu0 %5641
        %v5643 = vsel %vm5511, %v5609, 0.0
        %5644 = vadd.xlane.f32.xlu0 %v5643
        %v5645 = vpop.xlane.xlu0 %5644
        %v5646 = vsel %vm5511, %v5610, 0.0
        %5647 = vadd.xlane.f32.xlu0 %v5646
        %v5648 = vpop.xlane.xlu0 %5647
        %v5649 = vsel %vm5511, %v5611, 0.0
        %5650 = vadd.xlane.f32.xlu0 %v5649
        %v5651 = vpop.xlane.xlu0 %5650
        %v5652 = vsel %vm5511, %v5612, 0.0
        %5653 = vadd.xlane.f32.xlu0 %v5652
        %v5654 = vpop.xlane.xlu0 %5653
        %v5655 = vsel %vm5511, %v5613, 0.0
        %5656 = vadd.xlane.f32.xlu0 %v5655
        %v5657 = vpop.xlane.xlu0 %5656
        %v5658 = vsel %vm5511, %v5614, 0.0
        %5659 = vadd.xlane.f32.xlu0 %v5658
        %v5660 = vpop.xlane.xlu0 %5659
        %v5661 = vsel %vm5511, %v5615, 0.0
        %5662 = vadd.xlane.f32.xlu0 %v5661
        %v5663 = vpop.xlane.xlu0 %5662
        %v5664 = vsel %vm5511, %v5616, 0.0
        %5665 = vadd.xlane.f32.xlu0 %v5664
        %v5666 = vpop.xlane.xlu0 %5665
        %v5667 = vsel %vm5511, %v5617, 0.0
        %5668 = vadd.xlane.f32.xlu0 %v5667
        %v5669 = vpop.xlane.xlu0 %5668
        %v5670 = vsel %vm5511, %v5618, 0.0
        %5671 = vadd.xlane.f32.xlu0 %v5670
        %v5672 = vpop.xlane.xlu0 %5671
        %v5673 = vsel %vm5511, %v5619, 0.0
        %5674 = vadd.xlane.f32.xlu0 %v5673
        %v5675 = vpop.xlane.xlu0 %5674
        %v5676 = vsel %vm5511, %v5620, 0.0
        %5677 = vadd.xlane.f32.xlu0 %v5676
        %v5678 = vpop.xlane.xlu0 %5677
        %v5679 = vsel %vm5511, %v5621, 0.0
        %5680 = vadd.xlane.f32.xlu0 %v5679
        %v5681 = vpop.xlane.xlu0 %5680
        %v5682 = vsel %vm5511, %v5622, 0.0
        %5683 = vadd.xlane.f32.xlu0 %v5682
        %v5684 = vpop.xlane.xlu0 %5683
        %v5685 = vsel %vm5511, %v5623, 0.0
        %5686 = vadd.xlane.f32.xlu0 %v5685
        %v5687 = vpop.xlane.xlu0 %5686
        %v5688 = vsel %vm5511, %v5624, 0.0
        %5689 = vadd.xlane.f32.xlu0 %v5688
        %v5690 = vpop.xlane.xlu0 %5689
        %v5691 = vsel %vm5511, %v5625, 0.0
        %5692 = vadd.xlane.f32.xlu0 %v5691
        %v5693 = vpop.xlane.xlu0 %5692
        %v5694 = vsel %vm5511, %v5626, 0.0
        %5695 = vadd.xlane.f32.xlu0 %v5694
        %v5696 = vpop.xlane.xlu0 %5695
        %v5697 = vsel %vm5511, %v5627, 0.0
        %5698 = vadd.xlane.f32.xlu0 %v5697
        %v5699 = vpop.xlane.xlu0 %5698
        %v5700 = vsel %vm5511, %v5628, 0.0
        %5701 = vadd.xlane.f32.xlu0 %v5700
        %v5702 = vpop.xlane.xlu0 %5701
        %v5703 = vsel %vm5511, %v5629, 0.0
        %5704 = vadd.xlane.f32.xlu0 %v5703
        %v5705 = vpop.xlane.xlu0 %5704
        %v5706 = vsel %vm5511, %v5630, 0.0
        %5707 = vadd.xlane.f32.xlu0 %v5706
        %v5708 = vpop.xlane.xlu0 %5707
        %v5709 = vsel %vm5511, %v5631, 0.0
        %5710 = vadd.xlane.f32.xlu0 %v5709
        %v5711 = vpop.xlane.xlu0 %5710
        %v5712 = vsel %vm5511, %v5632, 0.0
        %5713 = vadd.xlane.f32.xlu0 %v5712
        %v5714 = vpop.xlane.xlu0 %5713
        %v5715 = vsel %vm5511, %v5633, 0.0
        %5716 = vadd.xlane.f32.xlu0 %v5715
        %v5717 = vpop.xlane.xlu0 %5716
        %v5718 = vsel %vm5511, %v5634, 0.0
        %5719 = vadd.xlane.f32.xlu0 %v5718
        %v5720 = vpop.xlane.xlu0 %5719
        %v5721 = vsel %vm5511, %v5635, 0.0
        %5722 = vadd.xlane.f32.xlu0 %v5721
        %v5723 = vpop.xlane.xlu0 %5722
        %v5724 = vsel %vm5511, %v5636, 0.0
        %5725 = vadd.xlane.f32.xlu0 %v5724
        %v5726 = vpop.xlane.xlu0 %5725
        %v5727 = vsel %vm5511, %v5637, 0.0
        %5728 = vadd.xlane.f32.xlu0 %v5727
        %v5729 = vpop.xlane.xlu0 %5728
        %v5730 = vsel %vm5511, %v5638, 0.0
        %5731 = vadd.xlane.f32.xlu0 %v5730
        %v5732 = vpop.xlane.xlu0 %5731
        %v5733 = vsel %vm5511, %v5639, 0.0
        %5734 = vadd.xlane.f32.xlu0 %v5733
        %v5735 = vpop.xlane.xlu0 %5734
        %v5736 = vmul.f32 %v5514, 0.041666668
        %v5737 = vmul.f32 %v5517, 0.041666668
        %v5738 = vmul.f32 %v5520, 0.041666668
        %v5739 = vmul.f32 %v5523, 0.041666668
        %v5740 = vmul.f32 %v5526, 0.041666668
        %v5741 = vmul.f32 %v5529, 0.041666668
        %v5742 = vmul.f32 %v5532, 0.041666668
        %v5743 = vmul.f32 %v5535, 0.041666668
        %v5744 = vmul.f32 %v5538, 0.041666668
        %v5745 = vmul.f32 %v5541, 0.041666668
        %v5746 = vmul.f32 %v5544, 0.041666668
        %v5747 = vmul.f32 %v5547, 0.041666668
        %v5748 = vmul.f32 %v5550, 0.041666668
        %v5749 = vmul.f32 %v5553, 0.041666668
        %v5750 = vmul.f32 %v5556, 0.041666668
        %v5751 = vmul.f32 %v5559, 0.041666668
        %v5752 = vmul.f32 %v5562, 0.041666668
        %v5753 = vmul.f32 %v5565, 0.041666668
        %v5754 = vmul.f32 %v5568, 0.041666668
        %v5755 = vmul.f32 %v5571, 0.041666668
        %v5756 = vmul.f32 %v5574, 0.041666668
        %v5757 = vmul.f32 %v5577, 0.041666668
        %v5758 = vmul.f32 %v5580, 0.041666668
        %v5759 = vmul.f32 %v5583, 0.041666668
        %v5760 = vmul.f32 %v5586, 0.041666668
        %v5761 = vmul.f32 %v5589, 0.041666668
        %v5762 = vmul.f32 %v5592, 0.041666668
        %v5763 = vmul.f32 %v5595, 0.041666668
        %v5764 = vmul.f32 %v5598, 0.041666668
        %v5765 = vmul.f32 %v5601, 0.041666668
        %v5766 = vmul.f32 %v5604, 0.041666668
        %v5767 = vmul.f32 %v5607, 0.041666668
        %v5768 = vmul.f32 %v5642, 0.041666668
        %v5769 = vmul.f32 %v5645, 0.041666668
        %v5770 = vmul.f32 %v5648, 0.041666668
        %v5771 = vmul.f32 %v5651, 0.041666668
        %v5772 = vmul.f32 %v5654, 0.041666668
        %v5773 = vmul.f32 %v5657, 0.041666668
        %v5774 = vmul.f32 %v5660, 0.041666668
        %v5775 = vmul.f32 %v5663, 0.041666668
        %v5776 = vmul.f32 %v5666, 0.041666668
        %v5777 = vmul.f32 %v5669, 0.041666668
        %v5778 = vmul.f32 %v5672, 0.041666668
        %v5779 = vmul.f32 %v5675, 0.041666668
        %v5780 = vmul.f32 %v5678, 0.041666668
        %v5781 = vmul.f32 %v5681, 0.041666668
        %v5782 = vmul.f32 %v5684, 0.041666668
        %v5783 = vmul.f32 %v5687, 0.041666668
        %v5784 = vmul.f32 %v5690, 0.041666668
        %v5785 = vmul.f32 %v5693, 0.041666668
        %v5786 = vmul.f32 %v5696, 0.041666668
        %v5787 = vmul.f32 %v5699, 0.041666668
        %v5788 = vmul.f32 %v5702, 0.041666668
        %v5789 = vmul.f32 %v5705, 0.041666668
        %v5790 = vmul.f32 %v5708, 0.041666668
        %v5791 = vmul.f32 %v5711, 0.041666668
        %v5792 = vmul.f32 %v5714, 0.041666668
        %v5793 = vmul.f32 %v5717, 0.041666668
        %v5794 = vmul.f32 %v5720, 0.041666668
        %v5795 = vmul.f32 %v5723, 0.041666668
        %v5796 = vmul.f32 %v5726, 0.041666668
        %v5797 = vmul.f32 %v5729, 0.041666668
        %v5798 = vmul.f32 %v5732, 0.041666668
        %v5799 = vmul.f32 %v5735, 0.041666668
        %v5800 = vmul.f32 %v5736, %v5736
        %v5801 = vmul.f32 %v5737, %v5737
        %v5802 = vmul.f32 %v5738, %v5738
        %v5803 = vmul.f32 %v5739, %v5739
        %v5804 = vmul.f32 %v5740, %v5740
        %v5805 = vmul.f32 %v5741, %v5741
        %v5806 = vmul.f32 %v5742, %v5742
        %v5807 = vmul.f32 %v5743, %v5743
        %v5808 = vmul.f32 %v5744, %v5744
        %v5809 = vmul.f32 %v5745, %v5745
        %v5810 = vmul.f32 %v5746, %v5746
        %v5811 = vmul.f32 %v5747, %v5747
        %v5812 = vmul.f32 %v5748, %v5748
        %v5813 = vmul.f32 %v5749, %v5749
        %v5814 = vmul.f32 %v5750, %v5750
        %v5815 = vmul.f32 %v5751, %v5751
        %v5816 = vmul.f32 %v5752, %v5752
        %v5817 = vmul.f32 %v5753, %v5753
        %v5818 = vmul.f32 %v5754, %v5754
        %v5819 = vmul.f32 %v5755, %v5755
        %v5820 = vmul.f32 %v5756, %v5756
        %v5821 = vmul.f32 %v5757, %v5757
        %v5822 = vmul.f32 %v5758, %v5758
        %v5823 = vmul.f32 %v5759, %v5759
        %v5824 = vmul.f32 %v5760, %v5760
        %v5825 = vmul.f32 %v5761, %v5761
        %v5826 = vmul.f32 %v5762, %v5762
        %v5827 = vmul.f32 %v5763, %v5763
        %v5828 = vmul.f32 %v5764, %v5764
        %v5829 = vmul.f32 %v5765, %v5765
        %v5830 = vmul.f32 %v5766, %v5766
        %v5831 = vmul.f32 %v5767, %v5767
        %v5832 = vsub.f32 %v5768, %v5800
        %v5833 = vsub.f32 %v5769, %v5801
        %v5834 = vsub.f32 %v5770, %v5802
        %v5835 = vsub.f32 %v5771, %v5803
        %v5836 = vsub.f32 %v5772, %v5804
        %v5837 = vsub.f32 %v5773, %v5805
        %v5838 = vsub.f32 %v5774, %v5806
        %v5839 = vsub.f32 %v5775, %v5807
        %v5840 = vsub.f32 %v5776, %v5808
        %v5841 = vsub.f32 %v5777, %v5809
        %v5842 = vsub.f32 %v5778, %v5810
        %v5843 = vsub.f32 %v5779, %v5811
        %v5844 = vsub.f32 %v5780, %v5812
        %v5845 = vsub.f32 %v5781, %v5813
        %v5846 = vsub.f32 %v5782, %v5814
        %v5847 = vsub.f32 %v5783, %v5815
        %v5848 = vsub.f32 %v5784, %v5816
        %v5849 = vsub.f32 %v5785, %v5817
        %v5850 = vsub.f32 %v5786, %v5818
        %v5851 = vsub.f32 %v5787, %v5819
        %v5852 = vsub.f32 %v5788, %v5820
        %v5853 = vsub.f32 %v5789, %v5821
        %v5854 = vsub.f32 %v5790, %v5822
        %v5855 = vsub.f32 %v5791, %v5823
        %v5856 = vsub.f32 %v5792, %v5824
        %v5857 = vsub.f32 %v5793, %v5825
        %v5858 = vsub.f32 %v5794, %v5826
        %v5859 = vsub.f32 %v5795, %v5827
        %v5860 = vsub.f32 %v5796, %v5828
        %v5861 = vsub.f32 %v5797, %v5829
        %v5862 = vsub.f32 %v5798, %v5830
        %v5863 = vsub.f32 %v5799, %v5831
        %v5864 = vsub.f32 %v5479, %v5736
        %v5865 = vsub.f32 %v5480, %v5737
        %v5866 = vsub.f32 %v5481, %v5738
        %v5867 = vsub.f32 %v5482, %v5739
        %v5868 = vsub.f32 %v5483, %v5740
        %v5869 = vsub.f32 %v5484, %v5741
        %v5870 = vsub.f32 %v5485, %v5742
        %v5871 = vsub.f32 %v5486, %v5743
        %v5872 = vsub.f32 %v5487, %v5744
        %v5873 = vsub.f32 %v5488, %v5745
        %v5874 = vsub.f32 %v5489, %v5746
        %v5875 = vsub.f32 %v5490, %v5747
        %v5876 = vsub.f32 %v5491, %v5748
        %v5877 = vsub.f32 %v5492, %v5749
        %v5878 = vsub.f32 %v5493, %v5750
        %v5879 = vsub.f32 %v5494, %v5751
        %v5880 = vsub.f32 %v5495, %v5752
        %v5881 = vsub.f32 %v5496, %v5753
        %v5882 = vsub.f32 %v5497, %v5754
        %v5883 = vsub.f32 %v5498, %v5755
        %v5884 = vsub.f32 %v5499, %v5756
        %v5885 = vsub.f32 %v5500, %v5757
        %v5886 = vsub.f32 %v5501, %v5758
        %v5887 = vsub.f32 %v5502, %v5759
        %v5888 = vsub.f32 %v5503, %v5760
        %v5889 = vsub.f32 %v5504, %v5761
        %v5890 = vsub.f32 %v5505, %v5762
        %v5891 = vsub.f32 %v5506, %v5763
        %v5892 = vsub.f32 %v5507, %v5764
        %v5893 = vsub.f32 %v5508, %v5765
        %v5894 = vsub.f32 %v5509, %v5766
        %v5895 = vsub.f32 %v5510, %v5767
        %v5896 = vadd.f32 %v5832, 1e-06
        %v5897 = vadd.f32 %v5833, 1e-06
        %v5898 = vadd.f32 %v5834, 1e-06
        %v5899 = vadd.f32 %v5835, 1e-06
        %v5900 = vadd.f32 %v5836, 1e-06
        %v5901 = vadd.f32 %v5837, 1e-06
        %v5902 = vadd.f32 %v5838, 1e-06
        %v5903 = vadd.f32 %v5839, 1e-06
        %v5904 = vadd.f32 %v5840, 1e-06
        %v5905 = vadd.f32 %v5841, 1e-06
        %v5906 = vadd.f32 %v5842, 1e-06
        %v5907 = vadd.f32 %v5843, 1e-06
        %v5908 = vadd.f32 %v5844, 1e-06
        %v5909 = vadd.f32 %v5845, 1e-06
        %v5910 = vadd.f32 %v5846, 1e-06
        %v5911 = vadd.f32 %v5847, 1e-06
        %v5912 = vadd.f32 %v5848, 1e-06
        %v5913 = vadd.f32 %v5849, 1e-06
        %v5914 = vadd.f32 %v5850, 1e-06
        %v5915 = vadd.f32 %v5851, 1e-06
        %v5916 = vadd.f32 %v5852, 1e-06
        %v5917 = vadd.f32 %v5853, 1e-06
        %v5918 = vadd.f32 %v5854, 1e-06
        %v5919 = vadd.f32 %v5855, 1e-06
        %v5920 = vadd.f32 %v5856, 1e-06
        %v5921 = vadd.f32 %v5857, 1e-06
        %v5922 = vadd.f32 %v5858, 1e-06
        %v5923 = vadd.f32 %v5859, 1e-06
        %v5924 = vadd.f32 %v5860, 1e-06
        %v5925 = vadd.f32 %v5861, 1e-06
        %v5926 = vadd.f32 %v5862, 1e-06
        %v5927 = vadd.f32 %v5863, 1e-06
        %v5928 = vrsqrt.pop %v5896
        %v5929 = vrsqrt.pop %v5897
        %v5930 = vrsqrt.pop %v5898
        %v5931 = vrsqrt.pop %v5899
        %v5932 = vrsqrt.pop %v5900
        %v5933 = vrsqrt.pop %v5901
        %v5934 = vrsqrt.pop %v5902
        %v5935 = vrsqrt.pop %v5903
        %v5936 = vrsqrt.pop %v5904
        %v5937 = vrsqrt.pop %v5905
        %v5938 = vrsqrt.pop %v5906
        %v5939 = vrsqrt.pop %v5907
        %v5940 = vrsqrt.pop %v5908
        %v5941 = vrsqrt.pop %v5909
        %v5942 = vrsqrt.pop %v5910
        %v5943 = vrsqrt.pop %v5911
        %v5944 = vrsqrt.pop %v5912
        %v5945 = vrsqrt.pop %v5913
        %v5946 = vrsqrt.pop %v5914
        %v5947 = vrsqrt.pop %v5915
        %v5948 = vrsqrt.pop %v5916
        %v5949 = vrsqrt.pop %v5917
        %v5950 = vrsqrt.pop %v5918
        %v5951 = vrsqrt.pop %v5919
        %v5952 = vrsqrt.pop %v5920
        %v5953 = vrsqrt.pop %v5921
        %v5954 = vrsqrt.pop %v5922
        %v5955 = vrsqrt.pop %v5923
        %v5956 = vrsqrt.pop %v5924
        %v5957 = vrsqrt.pop %v5925
        %v5958 = vrsqrt.pop %v5926
        %v5959 = vrsqrt.pop %v5927
        %v5960 = vmul.f32 %v5864, %v5928
        %v5961 = vmul.f32 %v5865, %v5929
        %v5962 = vmul.f32 %v5866, %v5930
        %v5963 = vmul.f32 %v5867, %v5931
        %v5964 = vmul.f32 %v5868, %v5932
        %v5965 = vmul.f32 %v5869, %v5933
        %v5966 = vmul.f32 %v5870, %v5934
        %v5967 = vmul.f32 %v5871, %v5935
        %v5968 = vmul.f32 %v5872, %v5936
        %v5969 = vmul.f32 %v5873, %v5937
        %v5970 = vmul.f32 %v5874, %v5938
        %v5971 = vmul.f32 %v5875, %v5939
        %v5972 = vmul.f32 %v5876, %v5940
        %v5973 = vmul.f32 %v5877, %v5941
        %v5974 = vmul.f32 %v5878, %v5942
        %v5975 = vmul.f32 %v5879, %v5943
        %v5976 = vmul.f32 %v5880, %v5944
        %v5977 = vmul.f32 %v5881, %v5945
        %v5978 = vmul.f32 %v5882, %v5946
        %v5979 = vmul.f32 %v5883, %v5947
        %v5980 = vmul.f32 %v5884, %v5948
        %v5981 = vmul.f32 %v5885, %v5949
        %v5982 = vmul.f32 %v5886, %v5950
        %v5983 = vmul.f32 %v5887, %v5951
        %v5984 = vmul.f32 %v5888, %v5952
        %v5985 = vmul.f32 %v5889, %v5953
        %v5986 = vmul.f32 %v5890, %v5954
        %v5987 = vmul.f32 %v5891, %v5955
        %v5988 = vmul.f32 %v5892, %v5956
        %v5989 = vmul.f32 %v5893, %v5957
        %v5990 = vmul.f32 %v5894, %v5958
        %v5991 = vmul.f32 %v5895, %v5959
        %v5992 = vlaneseq
        %v5993 = vshrl.u32 %v5992, 7
        %v5994 = vsub.s32 0, %v5993
        %v5995 = vrot.slane %v5473, %v5994
        %v5996 = vmul.f32 %v5960, %v5995
        %v5997 = vmul.f32 %v5961, %v5995
        %v5998 = vmul.f32 %v5962, %v5995
        %v5999 = vmul.f32 %v5963, %v5995
        %v6000 = vmul.f32 %v5964, %v5995
        %v6001 = vmul.f32 %v5965, %v5995
        %v6002 = vmul.f32 %v5966, %v5995
        %v6003 = vmul.f32 %v5967, %v5995
        %v6004 = vmul.f32 %v5968, %v5995
        %v6005 = vmul.f32 %v5969, %v5995
        %v6006 = vmul.f32 %v5970, %v5995
        %v6007 = vmul.f32 %v5971, %v5995
        %v6008 = vmul.f32 %v5972, %v5995
        %v6009 = vmul.f32 %v5973, %v5995
        %v6010 = vmul.f32 %v5974, %v5995
        %v6011 = vmul.f32 %v5975, %v5995
        %v6012 = vmul.f32 %v5976, %v5995
        %v6013 = vmul.f32 %v5977, %v5995
        %v6014 = vmul.f32 %v5978, %v5995
        %v6015 = vmul.f32 %v5979, %v5995
        %v6016 = vmul.f32 %v5980, %v5995
        %v6017 = vmul.f32 %v5981, %v5995
        %v6018 = vmul.f32 %v5982, %v5995
        %v6019 = vmul.f32 %v5983, %v5995
        %v6020 = vmul.f32 %v5984, %v5995
        %v6021 = vmul.f32 %v5985, %v5995
        %v6022 = vmul.f32 %v5986, %v5995
        %v6023 = vmul.f32 %v5987, %v5995
        %v6024 = vmul.f32 %v5988, %v5995
        %v6025 = vmul.f32 %v5989, %v5995
        %v6026 = vmul.f32 %v5990, %v5995
        %v6027 = vmul.f32 %v5991, %v5995
        %v6028 = vlaneseq
        %v6029 = vshrl.u32 %v6028, 7
        %v6030 = vsub.s32 0, %v6029
        %v6031 = vrot.slane %v5474, %v6030
        %v6032 = vadd.f32 %v5996, %v6031
        %v6033 = vadd.f32 %v5997, %v6031
        %v6034 = vadd.f32 %v5998, %v6031
        %v6035 = vadd.f32 %v5999, %v6031
        %v6036 = vadd.f32 %v6000, %v6031
        %v6037 = vadd.f32 %v6001, %v6031
        %v6038 = vadd.f32 %v6002, %v6031
        %v6039 = vadd.f32 %v6003, %v6031
        %v6040 = vadd.f32 %v6004, %v6031
        %v6041 = vadd.f32 %v6005, %v6031
        %v6042 = vadd.f32 %v6006, %v6031
        %v6043 = vadd.f32 %v6007, %v6031
        %v6044 = vadd.f32 %v6008, %v6031
        %v6045 = vadd.f32 %v6009, %v6031
        %v6046 = vadd.f32 %v6010, %v6031
        %v6047 = vadd.f32 %v6011, %v6031
        %v6048 = vadd.f32 %v6012, %v6031
        %v6049 = vadd.f32 %v6013, %v6031
        %v6050 = vadd.f32 %v6014, %v6031
        %v6051 = vadd.f32 %v6015, %v6031
        %v6052 = vadd.f32 %v6016, %v6031
        %v6053 = vadd.f32 %v6017, %v6031
        %v6054 = vadd.f32 %v6018, %v6031
        %v6055 = vadd.f32 %v6019, %v6031
        %v6056 = vadd.f32 %v6020, %v6031
        %v6057 = vadd.f32 %v6021, %v6031
        %v6058 = vadd.f32 %v6022, %v6031
        %v6059 = vadd.f32 %v6023, %v6031
        %v6060 = vadd.f32 %v6024, %v6031
        %v6061 = vadd.f32 %v6025, %v6031
        %v6062 = vadd.f32 %v6026, %v6031
        %v6063 = vadd.f32 %v6027, %v6031
        %v6064 = vmul.f32 %v6032, %v6032
        %v6065 = vmul.f32 %v6033, %v6033
        %v6066 = vmul.f32 %v6034, %v6034
        %v6067 = vmul.f32 %v6035, %v6035
        %v6068 = vmul.f32 %v6036, %v6036
        %v6069 = vmul.f32 %v6037, %v6037
        %v6070 = vmul.f32 %v6038, %v6038
        %v6071 = vmul.f32 %v6039, %v6039
        %v6072 = vmul.f32 %v6040, %v6040
        %v6073 = vmul.f32 %v6041, %v6041
        %v6074 = vmul.f32 %v6042, %v6042
        %v6075 = vmul.f32 %v6043, %v6043
        %v6076 = vmul.f32 %v6044, %v6044
        %v6077 = vmul.f32 %v6045, %v6045
        %v6078 = vmul.f32 %v6046, %v6046
        %v6079 = vmul.f32 %v6047, %v6047
        %v6080 = vmul.f32 %v6048, %v6048
        %v6081 = vmul.f32 %v6049, %v6049
        %v6082 = vmul.f32 %v6050, %v6050
        %v6083 = vmul.f32 %v6051, %v6051
        %v6084 = vmul.f32 %v6052, %v6052
        %v6085 = vmul.f32 %v6053, %v6053
        %v6086 = vmul.f32 %v6054, %v6054
        %v6087 = vmul.f32 %v6055, %v6055
        %v6088 = vmul.f32 %v6056, %v6056
        %v6089 = vmul.f32 %v6057, %v6057
        %v6090 = vmul.f32 %v6058, %v6058
        %v6091 = vmul.f32 %v6059, %v6059
        %v6092 = vmul.f32 %v6060, %v6060
        %v6093 = vmul.f32 %v6061, %v6061
        %v6094 = vmul.f32 %v6062, %v6062
        %v6095 = vmul.f32 %v6063, %v6063
        %v6096 = vmul.f32 %v6032, %v6064
        %v6097 = vmul.f32 %v6033, %v6065
        %v6098 = vmul.f32 %v6034, %v6066
        %v6099 = vmul.f32 %v6035, %v6067
        %v6100 = vmul.f32 %v6036, %v6068
        %v6101 = vmul.f32 %v6037, %v6069
        %v6102 = vmul.f32 %v6038, %v6070
        %v6103 = vmul.f32 %v6039, %v6071
        %v6104 = vmul.f32 %v6040, %v6072
        %v6105 = vmul.f32 %v6041, %v6073
        %v6106 = vmul.f32 %v6042, %v6074
        %v6107 = vmul.f32 %v6043, %v6075
        %v6108 = vmul.f32 %v6044, %v6076
        %v6109 = vmul.f32 %v6045, %v6077
        %v6110 = vmul.f32 %v6046, %v6078
        %v6111 = vmul.f32 %v6047, %v6079
        %v6112 = vmul.f32 %v6048, %v6080
        %v6113 = vmul.f32 %v6049, %v6081
        %v6114 = vmul.f32 %v6050, %v6082
        %v6115 = vmul.f32 %v6051, %v6083
        %v6116 = vmul.f32 %v6052, %v6084
        %v6117 = vmul.f32 %v6053, %v6085
        %v6118 = vmul.f32 %v6054, %v6086
        %v6119 = vmul.f32 %v6055, %v6087
        %v6120 = vmul.f32 %v6056, %v6088
        %v6121 = vmul.f32 %v6057, %v6089
        %v6122 = vmul.f32 %v6058, %v6090
        %v6123 = vmul.f32 %v6059, %v6091
        %v6124 = vmul.f32 %v6060, %v6092
        %v6125 = vmul.f32 %v6061, %v6093
        %v6126 = vmul.f32 %v6062, %v6094
        %v6127 = vmul.f32 %v6063, %v6095
        %v6128 = vmul.f32 %v6096, 0.044715
        %v6129 = vmul.f32 %v6097, 0.044715
        %v6130 = vmul.f32 %v6098, 0.044715
        %v6131 = vmul.f32 %v6099, 0.044715
        %v6132 = vmul.f32 %v6100, 0.044715
        %v6133 = vmul.f32 %v6101, 0.044715
        %v6134 = vmul.f32 %v6102, 0.044715
        %v6135 = vmul.f32 %v6103, 0.044715
        %v6136 = vmul.f32 %v6104, 0.044715
        %v6137 = vmul.f32 %v6105, 0.044715
        %v6138 = vmul.f32 %v6106, 0.044715
        %v6139 = vmul.f32 %v6107, 0.044715
        %v6140 = vmul.f32 %v6108, 0.044715
        %v6141 = vmul.f32 %v6109, 0.044715
        %v6142 = vmul.f32 %v6110, 0.044715
        %v6143 = vmul.f32 %v6111, 0.044715
        %v6144 = vmul.f32 %v6112, 0.044715
        %v6145 = vmul.f32 %v6113, 0.044715
        %v6146 = vmul.f32 %v6114, 0.044715
        %v6147 = vmul.f32 %v6115, 0.044715
        %v6148 = vmul.f32 %v6116, 0.044715
        %v6149 = vmul.f32 %v6117, 0.044715
        %v6150 = vmul.f32 %v6118, 0.044715
        %v6151 = vmul.f32 %v6119, 0.044715
        %v6152 = vmul.f32 %v6120, 0.044715
        %v6153 = vmul.f32 %v6121, 0.044715
        %v6154 = vmul.f32 %v6122, 0.044715
        %v6155 = vmul.f32 %v6123, 0.044715
        %v6156 = vmul.f32 %v6124, 0.044715
        %v6157 = vmul.f32 %v6125, 0.044715
        %v6158 = vmul.f32 %v6126, 0.044715
        %v6159 = vmul.f32 %v6127, 0.044715
        %v6160 = vadd.f32 %v6032, %v6128
        %v6161 = vadd.f32 %v6033, %v6129
        %v6162 = vadd.f32 %v6034, %v6130
        %v6163 = vadd.f32 %v6035, %v6131
        %v6164 = vadd.f32 %v6036, %v6132
        %v6165 = vadd.f32 %v6037, %v6133
        %v6166 = vadd.f32 %v6038, %v6134
        %v6167 = vadd.f32 %v6039, %v6135
        %v6168 = vadd.f32 %v6040, %v6136
        %v6169 = vadd.f32 %v6041, %v6137
        %v6170 = vadd.f32 %v6042, %v6138
        %v6171 = vadd.f32 %v6043, %v6139
        %v6172 = vadd.f32 %v6044, %v6140
        %v6173 = vadd.f32 %v6045, %v6141
        %v6174 = vadd.f32 %v6046, %v6142
        %v6175 = vadd.f32 %v6047, %v6143
        %v6176 = vadd.f32 %v6048, %v6144
        %v6177 = vadd.f32 %v6049, %v6145
        %v6178 = vadd.f32 %v6050, %v6146
        %v6179 = vadd.f32 %v6051, %v6147
        %v6180 = vadd.f32 %v6052, %v6148
        %v6181 = vadd.f32 %v6053, %v6149
        %v6182 = vadd.f32 %v6054, %v6150
        %v6183 = vadd.f32 %v6055, %v6151
        %v6184 = vadd.f32 %v6056, %v6152
        %v6185 = vadd.f32 %v6057, %v6153
        %v6186 = vadd.f32 %v6058, %v6154
        %v6187 = vadd.f32 %v6059, %v6155
        %v6188 = vadd.f32 %v6060, %v6156
        %v6189 = vadd.f32 %v6061, %v6157
        %v6190 = vadd.f32 %v6062, %v6158
        %v6191 = vadd.f32 %v6063, %v6159
        %v6192 = vmul.f32 %v6160, 0.7978846
        %v6193 = vmul.f32 %v6161, 0.7978846
        %v6194 = vmul.f32 %v6162, 0.7978846
        %v6195 = vmul.f32 %v6163, 0.7978846
        %v6196 = vmul.f32 %v6164, 0.7978846
        %v6197 = vmul.f32 %v6165, 0.7978846
        %v6198 = vmul.f32 %v6166, 0.7978846
        %v6199 = vmul.f32 %v6167, 0.7978846
        %v6200 = vmul.f32 %v6168, 0.7978846
        %v6201 = vmul.f32 %v6169, 0.7978846
        %v6202 = vmul.f32 %v6170, 0.7978846
        %v6203 = vmul.f32 %v6171, 0.7978846
        %v6204 = vmul.f32 %v6172, 0.7978846
        %v6205 = vmul.f32 %v6173, 0.7978846
        %v6206 = vmul.f32 %v6174, 0.7978846
        %v6207 = vmul.f32 %v6175, 0.7978846
        %v6208 = vmul.f32 %v6176, 0.7978846
        %v6209 = vmul.f32 %v6177, 0.7978846
        %v6210 = vmul.f32 %v6178, 0.7978846
        %v6211 = vmul.f32 %v6179, 0.7978846
        %v6212 = vmul.f32 %v6180, 0.7978846
        %v6213 = vmul.f32 %v6181, 0.7978846
        %v6214 = vmul.f32 %v6182, 0.7978846
        %v6215 = vmul.f32 %v6183, 0.7978846
        %v6216 = vmul.f32 %v6184, 0.7978846
        %v6217 = vmul.f32 %v6185, 0.7978846
        %v6218 = vmul.f32 %v6186, 0.7978846
        %v6219 = vmul.f32 %v6187, 0.7978846
        %v6220 = vmul.f32 %v6188, 0.7978846
        %v6221 = vmul.f32 %v6189, 0.7978846
        %v6222 = vmul.f32 %v6190, 0.7978846
        %v6223 = vmul.f32 %v6191, 0.7978846
        %v6224 = vtanh.pop %v6192
        %v6225 = vtanh.pop %v6193
        %v6226 = vtanh.pop %v6194
        %v6227 = vtanh.pop %v6195
        %v6228 = vtanh.pop %v6196
        %v6229 = vtanh.pop %v6197
        %v6230 = vtanh.pop %v6198
        %v6231 = vtanh.pop %v6199
        %v6232 = vtanh.pop %v6200
        %v6233 = vtanh.pop %v6201
        %v6234 = vtanh.pop %v6202
        %v6235 = vtanh.pop %v6203
        %v6236 = vtanh.pop %v6204
        %v6237 = vtanh.pop %v6205
        %v6238 = vtanh.pop %v6206
        %v6239 = vtanh.pop %v6207
        %v6240 = vtanh.pop %v6208
        %v6241 = vtanh.pop %v6209
        %v6242 = vtanh.pop %v6210
        %v6243 = vtanh.pop %v6211
        %v6244 = vtanh.pop %v6212
        %v6245 = vtanh.pop %v6213
        %v6246 = vtanh.pop %v6214
        %v6247 = vtanh.pop %v6215
        %v6248 = vtanh.pop %v6216
        %v6249 = vtanh.pop %v6217
        %v6250 = vtanh.pop %v6218
        %v6251 = vtanh.pop %v6219
        %v6252 = vtanh.pop %v6220
        %v6253 = vtanh.pop %v6221
        %v6254 = vtanh.pop %v6222
        %v6255 = vtanh.pop %v6223
        %v6256 = vadd.f32 %v6224, 1.0
        %v6257 = vadd.f32 %v6225, 1.0
        %v6258 = vadd.f32 %v6226, 1.0
        %v6259 = vadd.f32 %v6227, 1.0
        %v6260 = vadd.f32 %v6228, 1.0
        %v6261 = vadd.f32 %v6229, 1.0
        %v6262 = vadd.f32 %v6230, 1.0
        %v6263 = vadd.f32 %v6231, 1.0
        %v6264 = vadd.f32 %v6232, 1.0
        %v6265 = vadd.f32 %v6233, 1.0
        %v6266 = vadd.f32 %v6234, 1.0
        %v6267 = vadd.f32 %v6235, 1.0
        %v6268 = vadd.f32 %v6236, 1.0
        %v6269 = vadd.f32 %v6237, 1.0
        %v6270 = vadd.f32 %v6238, 1.0
        %v6271 = vadd.f32 %v6239, 1.0
        %v6272 = vadd.f32 %v6240, 1.0
        %v6273 = vadd.f32 %v6241, 1.0
        %v6274 = vadd.f32 %v6242, 1.0
        %v6275 = vadd.f32 %v6243, 1.0
        %v6276 = vadd.f32 %v6244, 1.0
        %v6277 = vadd.f32 %v6245, 1.0
        %v6278 = vadd.f32 %v6246, 1.0
        %v6279 = vadd.f32 %v6247, 1.0
        %v6280 = vadd.f32 %v6248, 1.0
        %v6281 = vadd.f32 %v6249, 1.0
        %v6282 = vadd.f32 %v6250, 1.0
        %v6283 = vadd.f32 %v6251, 1.0
        %v6284 = vadd.f32 %v6252, 1.0
        %v6285 = vadd.f32 %v6253, 1.0
        %v6286 = vadd.f32 %v6254, 1.0
        %v6287 = vadd.f32 %v6255, 1.0
        %v6288 = vmul.f32 %v6256, 0.5
        %v6289 = vmul.f32 %v6257, 0.5
        %v6290 = vmul.f32 %v6258, 0.5
        %v6291 = vmul.f32 %v6259, 0.5
        %v6292 = vmul.f32 %v6260, 0.5
        %v6293 = vmul.f32 %v6261, 0.5
        %v6294 = vmul.f32 %v6262, 0.5
        %v6295 = vmul.f32 %v6263, 0.5
        %v6296 = vmul.f32 %v6264, 0.5
        %v6297 = vmul.f32 %v6265, 0.5
        %v6298 = vmul.f32 %v6266, 0.5
        %v6299 = vmul.f32 %v6267, 0.5
        %v6300 = vmul.f32 %v6268, 0.5
        %v6301 = vmul.f32 %v6269, 0.5
        %v6302 = vmul.f32 %v6270, 0.5
        %v6303 = vmul.f32 %v6271, 0.5
        %v6304 = vmul.f32 %v6272, 0.5
        %v6305 = vmul.f32 %v6273, 0.5
        %v6306 = vmul.f32 %v6274, 0.5
        %v6307 = vmul.f32 %v6275, 0.5
        %v6308 = vmul.f32 %v6276, 0.5
        %v6309 = vmul.f32 %v6277, 0.5
        %v6310 = vmul.f32 %v6278, 0.5
        %v6311 = vmul.f32 %v6279, 0.5
        %v6312 = vmul.f32 %v6280, 0.5
        %v6313 = vmul.f32 %v6281, 0.5
        %v6314 = vmul.f32 %v6282, 0.5
        %v6315 = vmul.f32 %v6283, 0.5
        %v6316 = vmul.f32 %v6284, 0.5
        %v6317 = vmul.f32 %v6285, 0.5
        %v6318 = vmul.f32 %v6286, 0.5
        %v6319 = vmul.f32 %v6287, 0.5
        %v6320 = vmul.f32 %v6032, %v6288
        %v6321 = vmul.f32 %v6033, %v6289
        %v6322 = vmul.f32 %v6034, %v6290
        %v6323 = vmul.f32 %v6035, %v6291
        %v6324 = vmul.f32 %v6036, %v6292
        %v6325 = vmul.f32 %v6037, %v6293
        %v6326 = vmul.f32 %v6038, %v6294
        %v6327 = vmul.f32 %v6039, %v6295
        %v6328 = vmul.f32 %v6040, %v6296
        %v6329 = vmul.f32 %v6041, %v6297
        %v6330 = vmul.f32 %v6042, %v6298
        %v6331 = vmul.f32 %v6043, %v6299
        %v6332 = vmul.f32 %v6044, %v6300
        %v6333 = vmul.f32 %v6045, %v6301
        %v6334 = vmul.f32 %v6046, %v6302
        %v6335 = vmul.f32 %v6047, %v6303
        %v6336 = vmul.f32 %v6048, %v6304
        %v6337 = vmul.f32 %v6049, %v6305
        %v6338 = vmul.f32 %v6050, %v6306
        %v6339 = vmul.f32 %v6051, %v6307
        %v6340 = vmul.f32 %v6052, %v6308
        %v6341 = vmul.f32 %v6053, %v6309
        %v6342 = vmul.f32 %v6054, %v6310
        %v6343 = vmul.f32 %v6055, %v6311
        %v6344 = vmul.f32 %v6056, %v6312
        %v6345 = vmul.f32 %v6057, %v6313
        %v6346 = vmul.f32 %v6058, %v6314
        %v6347 = vmul.f32 %v6059, %v6315
        %v6348 = vmul.f32 %v6060, %v6316
        %v6349 = vmul.f32 %v6061, %v6317
        %v6350 = vmul.f32 %v6062, %v6318
        %v6351 = vmul.f32 %v6063, %v6319
        %vm6352 = vcmask 191488
        %6353 = vst.msk [vmem:[#allocation3] sm:$0xf] %vm6352, 0
        %6354 = vst.msk [vmem:[#allocation3 + $0x4] sm:$0xf] %vm6352, 0
        %vm6355 = vcmask 188416
        %6356 = vst.msk [vmem:[#allocation3 + $0x8] sm:$0x1] %vm6355, 0
        %s6357 = scalar_lea.vmem [#allocation3], 204
        %6358 = vst.msk [vmem:[%s6357] sm:$0xf] %vm6352, 0
        %6359 = vst.msk [vmem:[%s6357 + $0x4] sm:$0xf] %vm6352, 0
        %6360 = vst.msk [vmem:[%s6357 + $0x8] sm:$0x1] %vm6355, 0
        %vm6361 = vcmask 188416
        %vm6362 = vmand %vm6361, %vm234
        %v6363 = vld [vmem:[#allocation3] sm:$0x1]
        %v6364 = vsel %vm6362, 0, %v6363
        %6365 = vst [vmem:[#allocation3] sm:$0x1] %v6364
        %v6366 = vld [vmem:[#allocation3 + $0xc] sm:$0x1]
        %v6367 = vsel %vm6362, 0, %v6366
        %6368 = vst [vmem:[#allocation3 + $0xc] sm:$0x1] %v6367
        %v6369 = vld [vmem:[#allocation3 + $0x18] sm:$0x1]
        %v6370 = vsel %vm6362, 0, %v6369
        %6371 = vst [vmem:[#allocation3 + $0x18] sm:$0x1] %v6370
        %v6372 = vld [vmem:[#allocation3 + $0x24] sm:$0x1]
        %v6373 = vsel %vm6362, 0, %v6372
        %6374 = vst [vmem:[#allocation3 + $0x24] sm:$0x1] %v6373
        %v6375 = vld [vmem:[#allocation3 + $0x30] sm:$0x1]
        %v6376 = vsel %vm6362, 0, %v6375
        %6377 = vst [vmem:[#allocation3 + $0x30] sm:$0x1] %v6376
        %v6378 = vld [vmem:[#allocation3 + $0x3c] sm:$0x1]
        %v6379 = vsel %vm6362, 0, %v6378
        %6380 = vst [vmem:[#allocation3 + $0x3c] sm:$0x1] %v6379
        %v6381 = vld [vmem:[#allocation3 + $0x48] sm:$0x1]
        %v6382 = vsel %vm6362, 0, %v6381
        %6383 = vst [vmem:[#allocation3 + $0x48] sm:$0x1] %v6382
        %v6384 = vld [vmem:[#allocation3 + $0x54] sm:$0x1]
        %v6385 = vsel %vm6362, 0, %v6384
        %6386 = vst [vmem:[#allocation3 + $0x54] sm:$0x1] %v6385
        %v6387 = vld [vmem:[#allocation3 + $0x60] sm:$0x1]
        %v6388 = vsel %vm6362, 0, %v6387
        %6389 = vst [vmem:[#allocation3 + $0x60] sm:$0x1] %v6388
        %v6390 = vld [vmem:[#allocation3 + $0x6c] sm:$0x1]
        %v6391 = vsel %vm6362, 0, %v6390
        %6392 = vst [vmem:[#allocation3 + $0x6c] sm:$0x1] %v6391
        %v6393 = vld [vmem:[#allocation3 + $0x78] sm:$0x1]
        %v6394 = vsel %vm6362, 0, %v6393
        %6395 = vst [vmem:[#allocation3 + $0x78] sm:$0x1] %v6394
        %v6396 = vld [vmem:[#allocation3 + $0x84] sm:$0x1]
        %v6397 = vsel %vm6362, 0, %v6396
        %6398 = vst [vmem:[#allocation3 + $0x84] sm:$0x1] %v6397
        %v6399 = vld [vmem:[#allocation3 + $0x90] sm:$0x1]
        %v6400 = vsel %vm6362, 0, %v6399
        %6401 = vst [vmem:[#allocation3 + $0x90] sm:$0x1] %v6400
        %v6402 = vld [vmem:[#allocation3 + $0x9c] sm:$0x1]
        %v6403 = vsel %vm6362, 0, %v6402
        %6404 = vst [vmem:[#allocation3 + $0x9c] sm:$0x1] %v6403
        %v6405 = vld [vmem:[#allocation3 + $0xa8] sm:$0x1]
        %v6406 = vsel %vm6362, 0, %v6405
        %6407 = vst [vmem:[#allocation3 + $0xa8] sm:$0x1] %v6406
        %v6408 = vld [vmem:[#allocation3 + $0xb4] sm:$0x1]
        %v6409 = vsel %vm6362, 0, %v6408
        %6410 = vst [vmem:[#allocation3 + $0xb4] sm:$0x1] %v6409
        %v6411 = vld [vmem:[#allocation3 + $0xc0] sm:$0x1]
        %v6412 = vsel %vm6362, 0, %v6411
        %6413 = vst [vmem:[#allocation3 + $0xc0] sm:$0x1] %v6412
        %v6414 = vld [vmem:[#allocation3 + $0xcc] sm:$0x1]
        %v6415 = vsel %vm6362, 0, %v6414
        %6416 = vst [vmem:[#allocation3 + $0xcc] sm:$0x1] %v6415
        %vm6417 = vmand %vm6361, %vm290
        %v6418 = vld [vmem:[#allocation3 + $0x8] sm:$0x1]
        %v6419 = vsel %vm6417, 0, %v6418
        %6420 = vst [vmem:[#allocation3 + $0x8] sm:$0x1] %v6419
        %v6421 = vld [vmem:[#allocation3 + $0x14] sm:$0x1]
        %v6422 = vsel %vm6417, 0, %v6421
        %6423 = vst [vmem:[#allocation3 + $0x14] sm:$0x1] %v6422
        %v6424 = vld [vmem:[#allocation3 + $0x20] sm:$0x1]
        %v6425 = vsel %vm6417, 0, %v6424
        %6426 = vst [vmem:[#allocation3 + $0x20] sm:$0x1] %v6425
        %v6427 = vld [vmem:[#allocation3 + $0x2c] sm:$0x1]
        %v6428 = vsel %vm6417, 0, %v6427
        %6429 = vst [vmem:[#allocation3 + $0x2c] sm:$0x1] %v6428
        %v6430 = vld [vmem:[#allocation3 + $0x38] sm:$0x1]
        %v6431 = vsel %vm6417, 0, %v6430
        %6432 = vst [vmem:[#allocation3 + $0x38] sm:$0x1] %v6431
        %v6433 = vld [vmem:[#allocation3 + $0x44] sm:$0x1]
        %v6434 = vsel %vm6417, 0, %v6433
        %6435 = vst [vmem:[#allocation3 + $0x44] sm:$0x1] %v6434
        %v6436 = vld [vmem:[#allocation3 + $0x50] sm:$0x1]
        %v6437 = vsel %vm6417, 0, %v6436
        %6438 = vst [vmem:[#allocation3 + $0x50] sm:$0x1] %v6437
        %v6439 = vld [vmem:[#allocation3 + $0x5c] sm:$0x1]
        %v6440 = vsel %vm6417, 0, %v6439
        %6441 = vst [vmem:[#allocation3 + $0x5c] sm:$0x1] %v6440
        %v6442 = vld [vmem:[#allocation3 + $0x68] sm:$0x1]
        %v6443 = vsel %vm6417, 0, %v6442
        %6444 = vst [vmem:[#allocation3 + $0x68] sm:$0x1] %v6443
        %v6445 = vld [vmem:[#allocation3 + $0x74] sm:$0x1]
        %v6446 = vsel %vm6417, 0, %v6445
        %6447 = vst [vmem:[#allocation3 + $0x74] sm:$0x1] %v6446
        %v6448 = vld [vmem:[#allocation3 + $0x80] sm:$0x1]
        %v6449 = vsel %vm6417, 0, %v6448
        %6450 = vst [vmem:[#allocation3 + $0x80] sm:$0x1] %v6449
        %v6451 = vld [vmem:[#allocation3 + $0x8c] sm:$0x1]
        %v6452 = vsel %vm6417, 0, %v6451
        %6453 = vst [vmem:[#allocation3 + $0x8c] sm:$0x1] %v6452
        %v6454 = vld [vmem:[#allocation3 + $0x98] sm:$0x1]
        %v6455 = vsel %vm6417, 0, %v6454
        %6456 = vst [vmem:[#allocation3 + $0x98] sm:$0x1] %v6455
        %v6457 = vld [vmem:[#allocation3 + $0xa4] sm:$0x1]
        %v6458 = vsel %vm6417, 0, %v6457
        %6459 = vst [vmem:[#allocation3 + $0xa4] sm:$0x1] %v6458
        %v6460 = vld [vmem:[#allocation3 + $0xb0] sm:$0x1]
        %v6461 = vsel %vm6417, 0, %v6460
        %6462 = vst [vmem:[#allocation3 + $0xb0] sm:$0x1] %v6461
        %v6463 = vld [vmem:[#allocation3 + $0xbc] sm:$0x1]
        %v6464 = vsel %vm6417, 0, %v6463
        %6465 = vst [vmem:[#allocation3 + $0xbc] sm:$0x1] %v6464
        %v6466 = vld [vmem:[#allocation3 + $0xc8] sm:$0x1]
        %v6467 = vsel %vm6417, 0, %v6466
        %6468 = vst [vmem:[#allocation3 + $0xc8] sm:$0x1] %v6467
        %v6469 = vld [vmem:[#allocation3 + $0xd4] sm:$0x1]
        %v6470 = vsel %vm6417, 0, %v6469
        %6471 = vst [vmem:[#allocation3 + $0xd4] sm:$0x1] %v6470
        %v6472 = vpack.c.bf16 %v6321, %v6320
        %v6473 = vpack.c.bf16 %v6323, %v6322
        %v6474 = vpack.c.bf16 %v6325, %v6324
        %v6475 = vpack.c.bf16 %v6327, %v6326
        %v6476 = vpack.c.bf16 %v6329, %v6328
        %v6477 = vpack.c.bf16 %v6331, %v6330
        %v6478 = vpack.c.bf16 %v6333, %v6332
        %v6479 = vpack.c.bf16 %v6335, %v6334
        %v6480 = vpack.c.bf16 %v6337, %v6336
        %v6481 = vpack.c.bf16 %v6339, %v6338
        %v6482 = vpack.c.bf16 %v6341, %v6340
        %v6483 = vpack.c.bf16 %v6343, %v6342
        %v6484 = vpack.c.bf16 %v6345, %v6344
        %v6485 = vpack.c.bf16 %v6347, %v6346
        %v6486 = vpack.c.bf16 %v6349, %v6348
        %v6487 = vpack.c.bf16 %v6351, %v6350
        %v6504 = vunpack.c.l.b16 %v6472
        %v6505 = vunpack.c.h.b16 %v6472
        %v6506 = vunpack.c.l.b16 %v6473
        %v6507 = vunpack.c.h.b16 %v6473
        %v6508 = vunpack.c.l.b16 %v6474
        %v6509 = vunpack.c.h.b16 %v6474
        %v6510 = vunpack.c.l.b16 %v6475
        %v6511 = vunpack.c.h.b16 %v6475
        %v6512 = vunpack.c.l.b16 %v6476
        %v6513 = vunpack.c.h.b16 %v6476
        %v6514 = vunpack.c.l.b16 %v6477
        %v6515 = vunpack.c.h.b16 %v6477
        %v6516 = vunpack.c.l.b16 %v6478
        %v6517 = vunpack.c.h.b16 %v6478
        %v6518 = vunpack.c.l.b16 %v6479
        %v6519 = vunpack.c.h.b16 %v6479
        %v6520 = vunpack.c.l.b16 %v6480
        %v6521 = vunpack.c.h.b16 %v6480
        %v6522 = vunpack.c.l.b16 %v6481
        %v6523 = vunpack.c.h.b16 %v6481
        %v6524 = vunpack.c.l.b16 %v6482
        %v6525 = vunpack.c.h.b16 %v6482
        %v6526 = vunpack.c.l.b16 %v6483
        %v6527 = vunpack.c.h.b16 %v6483
        %v6528 = vunpack.c.l.b16 %v6484
        %v6529 = vunpack.c.h.b16 %v6484
        %v6530 = vunpack.c.l.b16 %v6485
        %v6531 = vunpack.c.h.b16 %v6485
        %v6532 = vunpack.c.l.b16 %v6486
        %v6533 = vunpack.c.h.b16 %v6486
        %v6534 = vunpack.c.l.b16 %v6487
        %v6535 = vunpack.c.h.b16 %v6487
        %v6536 = vpack.c.b16 %v6504, %v6504
        %v6537 = vpack.c.b16 %v6505, %v6505
        %v6538 = vpack.c.b16 %v6506, %v6506
        %v6539 = vpack.c.b16 %v6507, %v6507
        %v6540 = vpack.c.b16 %v6508, %v6508
        %v6541 = vpack.c.b16 %v6509, %v6509
        %v6542 = vpack.c.b16 %v6510, %v6510
        %v6543 = vpack.c.b16 %v6511, %v6511
        %v6544 = vpack.c.b16 %v6512, %v6512
        %v6545 = vpack.c.b16 %v6513, %v6513
        %v6546 = vpack.c.b16 %v6514, %v6514
        %v6547 = vpack.c.b16 %v6515, %v6515
        %v6548 = vpack.c.b16 %v6516, %v6516
        %v6549 = vpack.c.b16 %v6517, %v6517
        %v6550 = vpack.c.b16 %v6518, %v6518
        %v6551 = vpack.c.b16 %v6519, %v6519
        %v6552 = vpack.c.b16 %v6520, %v6520
        %v6553 = vpack.c.b16 %v6521, %v6521
        %v6554 = vpack.c.b16 %v6522, %v6522
        %v6555 = vpack.c.b16 %v6523, %v6523
        %v6556 = vpack.c.b16 %v6524, %v6524
        %v6557 = vpack.c.b16 %v6525, %v6525
        %v6558 = vpack.c.b16 %v6526, %v6526
        %v6559 = vpack.c.b16 %v6527, %v6527
        %v6560 = vpack.c.b16 %v6528, %v6528
        %v6561 = vpack.c.b16 %v6529, %v6529
        %v6562 = vpack.c.b16 %v6530, %v6530
        %v6563 = vpack.c.b16 %v6531, %v6531
        %v6564 = vpack.c.b16 %v6532, %v6532
        %v6565 = vpack.c.b16 %v6533, %v6533
        %v6566 = vpack.c.b16 %v6534, %v6534
        %v6567 = vpack.c.b16 %v6535, %v6535
        %v6569 = vshrl.u32 %v6536, 16
        %v6571 = vrot.slane %v6569, 7
        %v6572 = vshll.u32 %v6536, 16
        %v6574 = vor.u32 %v6571, %v6572
        %v6575 = vrot.slane %v6571, 4
        %v6577 = vshrl.u32 %v6537, 16
        %v6579 = vrot.slane %v6577, 7
        %v6580 = vshll.u32 %v6537, 16
        %v6582 = vor.u32 %v6579, %v6580
        %v6583 = vsel %vm475, %v6575, %v6582
        %v6584 = vrot.slane %v6579, 4
        %v6586 = vshrl.u32 %v6538, 16
        %v6588 = vrot.slane %v6586, 7
        %v6589 = vshll.u32 %v6538, 16
        %v6591 = vor.u32 %v6588, %v6589
        %v6592 = vrot.slane %v6588, 4
        %v6594 = vshrl.u32 %v6539, 16
        %v6596 = vrot.slane %v6594, 7
        %v6597 = vshll.u32 %v6539, 16
        %v6599 = vor.u32 %v6596, %v6597
        %v6600 = vsel %vm475, %v6592, %v6599
        %v6601 = vrot.slane %v6596, 4
        %v6603 = vshrl.u32 %v6540, 16
        %v6605 = vrot.slane %v6603, 7
        %v6606 = vshll.u32 %v6540, 16
        %v6608 = vor.u32 %v6605, %v6606
        %v6609 = vrot.slane %v6605, 4
        %v6611 = vshrl.u32 %v6541, 16
        %v6613 = vrot.slane %v6611, 7
        %v6614 = vshll.u32 %v6541, 16
        %v6616 = vor.u32 %v6613, %v6614
        %v6617 = vsel %vm475, %v6609, %v6616
        %v6618 = vrot.slane %v6613, 4
        %v6620 = vshrl.u32 %v6542, 16
        %v6622 = vrot.slane %v6620, 7
        %v6623 = vshll.u32 %v6542, 16
        %v6625 = vor.u32 %v6622, %v6623
        %v6626 = vrot.slane %v6622, 4
        %v6628 = vshrl.u32 %v6543, 16
        %v6630 = vrot.slane %v6628, 7
        %v6631 = vshll.u32 %v6543, 16
        %v6633 = vor.u32 %v6630, %v6631
        %v6634 = vsel %vm475, %v6626, %v6633
        %v6635 = vrot.slane %v6630, 4
        %v6637 = vshrl.u32 %v6544, 16
        %v6639 = vrot.slane %v6637, 7
        %v6640 = vshll.u32 %v6544, 16
        %v6642 = vor.u32 %v6639, %v6640
        %v6643 = vrot.slane %v6639, 4
        %v6645 = vshrl.u32 %v6545, 16
        %v6647 = vrot.slane %v6645, 7
        %v6648 = vshll.u32 %v6545, 16
        %v6650 = vor.u32 %v6647, %v6648
        %v6651 = vsel %vm475, %v6643, %v6650
        %v6652 = vrot.slane %v6647, 4
        %v6654 = vshrl.u32 %v6546, 16
        %v6656 = vrot.slane %v6654, 7
        %v6657 = vshll.u32 %v6546, 16
        %v6659 = vor.u32 %v6656, %v6657
        %v6660 = vrot.slane %v6656, 4
        %v6662 = vshrl.u32 %v6547, 16
        %v6664 = vrot.slane %v6662, 7
        %v6665 = vshll.u32 %v6547, 16
        %v6667 = vor.u32 %v6664, %v6665
        %v6668 = vsel %vm475, %v6660, %v6667
        %v6669 = vrot.slane %v6664, 4
        %v6671 = vshrl.u32 %v6548, 16
        %v6673 = vrot.slane %v6671, 7
        %v6674 = vshll.u32 %v6548, 16
        %v6676 = vor.u32 %v6673, %v6674
        %v6677 = vrot.slane %v6673, 4
        %v6679 = vshrl.u32 %v6549, 16
        %v6681 = vrot.slane %v6679, 7
        %v6682 = vshll.u32 %v6549, 16
        %v6684 = vor.u32 %v6681, %v6682
        %v6685 = vsel %vm475, %v6677, %v6684
        %v6686 = vrot.slane %v6681, 4
        %v6688 = vshrl.u32 %v6550, 16
        %v6690 = vrot.slane %v6688, 7
        %v6691 = vshll.u32 %v6550, 16
        %v6693 = vor.u32 %v6690, %v6691
        %v6694 = vrot.slane %v6690, 4
        %v6696 = vshrl.u32 %v6551, 16
        %v6698 = vrot.slane %v6696, 7
        %v6699 = vshll.u32 %v6551, 16
        %v6701 = vor.u32 %v6698, %v6699
        %v6702 = vsel %vm475, %v6694, %v6701
        %v6703 = vrot.slane %v6698, 4
        %v6705 = vshrl.u32 %v6552, 16
        %v6707 = vrot.slane %v6705, 7
        %v6708 = vshll.u32 %v6552, 16
        %v6710 = vor.u32 %v6707, %v6708
        %v6711 = vrot.slane %v6707, 4
        %v6713 = vshrl.u32 %v6553, 16
        %v6715 = vrot.slane %v6713, 7
        %v6716 = vshll.u32 %v6553, 16
        %v6718 = vor.u32 %v6715, %v6716
        %v6719 = vsel %vm475, %v6711, %v6718
        %v6720 = vrot.slane %v6715, 4
        %v6722 = vshrl.u32 %v6554, 16
        %v6724 = vrot.slane %v6722, 7
        %v6725 = vshll.u32 %v6554, 16
        %v6727 = vor.u32 %v6724, %v6725
        %v6728 = vrot.slane %v6724, 4
        %v6730 = vshrl.u32 %v6555, 16
        %v6732 = vrot.slane %v6730, 7
        %v6733 = vshll.u32 %v6555, 16
        %v6735 = vor.u32 %v6732, %v6733
        %v6736 = vsel %vm475, %v6728, %v6735
        %v6737 = vrot.slane %v6732, 4
        %v6739 = vshrl.u32 %v6556, 16
        %v6741 = vrot.slane %v6739, 7
        %v6742 = vshll.u32 %v6556, 16
        %v6744 = vor.u32 %v6741, %v6742
        %v6745 = vrot.slane %v6741, 4
        %v6747 = vshrl.u32 %v6557, 16
        %v6749 = vrot.slane %v6747, 7
        %v6750 = vshll.u32 %v6557, 16
        %v6752 = vor.u32 %v6749, %v6750
        %v6753 = vsel %vm475, %v6745, %v6752
        %v6754 = vrot.slane %v6749, 4
        %v6756 = vshrl.u32 %v6558, 16
        %v6758 = vrot.slane %v6756, 7
        %v6759 = vshll.u32 %v6558, 16
        %v6761 = vor.u32 %v6758, %v6759
        %v6762 = vrot.slane %v6758, 4
        %v6764 = vshrl.u32 %v6559, 16
        %v6766 = vrot.slane %v6764, 7
        %v6767 = vshll.u32 %v6559, 16
        %v6769 = vor.u32 %v6766, %v6767
        %v6770 = vsel %vm475, %v6762, %v6769
        %v6771 = vrot.slane %v6766, 4
        %v6773 = vshrl.u32 %v6560, 16
        %v6775 = vrot.slane %v6773, 7
        %v6776 = vshll.u32 %v6560, 16
        %v6778 = vor.u32 %v6775, %v6776
        %v6779 = vrot.slane %v6775, 4
        %v6781 = vshrl.u32 %v6561, 16
        %v6783 = vrot.slane %v6781, 7
        %v6784 = vshll.u32 %v6561, 16
        %v6786 = vor.u32 %v6783, %v6784
        %v6787 = vsel %vm475, %v6779, %v6786
        %v6788 = vrot.slane %v6783, 4
        %v6790 = vshrl.u32 %v6562, 16
        %v6792 = vrot.slane %v6790, 7
        %v6793 = vshll.u32 %v6562, 16
        %v6795 = vor.u32 %v6792, %v6793
        %v6796 = vrot.slane %v6792, 4
        %v6798 = vshrl.u32 %v6563, 16
        %v6800 = vrot.slane %v6798, 7
        %v6801 = vshll.u32 %v6563, 16
        %v6803 = vor.u32 %v6800, %v6801
        %v6804 = vsel %vm475, %v6796, %v6803
        %v6805 = vrot.slane %v6800, 4
        %v6807 = vshrl.u32 %v6564, 16
        %v6809 = vrot.slane %v6807, 7
        %v6810 = vshll.u32 %v6564, 16
        %v6812 = vor.u32 %v6809, %v6810
        %v6813 = vrot.slane %v6809, 4
        %v6815 = vshrl.u32 %v6565, 16
        %v6817 = vrot.slane %v6815, 7
        %v6818 = vshll.u32 %v6565, 16
        %v6820 = vor.u32 %v6817, %v6818
        %v6821 = vsel %vm475, %v6813, %v6820
        %v6822 = vrot.slane %v6817, 4
        %v6824 = vshrl.u32 %v6566, 16
        %v6826 = vrot.slane %v6824, 7
        %v6827 = vshll.u32 %v6566, 16
        %v6829 = vor.u32 %v6826, %v6827
        %v6830 = vrot.slane %v6826, 4
        %v6832 = vshrl.u32 %v6567, 16
        %v6834 = vrot.slane %v6832, 7
        %v6835 = vshll.u32 %v6567, 16
        %v6837 = vor.u32 %v6834, %v6835
        %v6838 = vsel %vm475, %v6830, %v6837
        %v6839 = vrot.slane %v6834, 4
        %s6888 = scalar_lea.vmem [#allocation3], 12
        %vm6889 = vcmask 191488
        %vm6890 = vmand %vm6889, %vm290
        %v6891 = vld [vmem:[%s6888] sm:$0xf]
        %v6892 = vsel %vm6890, %v6574, %v6891
        %6893 = vst [vmem:[%s6888] sm:$0xf] %v6892
        %6894 = vst.msk [vmem:[%s6888 + $0x4] sm:$0xf] %vm6352, %v6583
        %v6895 = vld [vmem:[%s6888 + $0x8] sm:$0x1]
        %v6896 = vsel %vm6362, %v6584, %v6895
        %6897 = vst [vmem:[%s6888 + $0x8] sm:$0x1] %v6896
        %v6898 = vld [vmem:[%s6888 + $0xc] sm:$0xf]
        %v6899 = vsel %vm6890, %v6591, %v6898
        %6900 = vst [vmem:[%s6888 + $0xc] sm:$0xf] %v6899
        %6901 = vst.msk [vmem:[%s6888 + $0x10] sm:$0xf] %vm6352, %v6600
        %v6902 = vld [vmem:[%s6888 + $0x14] sm:$0x1]
        %v6903 = vsel %vm6362, %v6601, %v6902
        %6904 = vst [vmem:[%s6888 + $0x14] sm:$0x1] %v6903
        %v6905 = vld [vmem:[%s6888 + $0x18] sm:$0xf]
        %v6906 = vsel %vm6890, %v6608, %v6905
        %6907 = vst [vmem:[%s6888 + $0x18] sm:$0xf] %v6906
        %6908 = vst.msk [vmem:[%s6888 + $0x1c] sm:$0xf] %vm6352, %v6617
        %v6909 = vld [vmem:[%s6888 + $0x20] sm:$0x1]
        %v6910 = vsel %vm6362, %v6618, %v6909
        %6911 = vst [vmem:[%s6888 + $0x20] sm:$0x1] %v6910
        %v6912 = vld [vmem:[%s6888 + $0x24] sm:$0xf]
        %v6913 = vsel %vm6890, %v6625, %v6912
        %6914 = vst [vmem:[%s6888 + $0x24] sm:$0xf] %v6913
        %6915 = vst.msk [vmem:[%s6888 + $0x28] sm:$0xf] %vm6352, %v6634
        %v6916 = vld [vmem:[%s6888 + $0x2c] sm:$0x1]
        %v6917 = vsel %vm6362, %v6635, %v6916
        %6918 = vst [vmem:[%s6888 + $0x2c] sm:$0x1] %v6917
        %v6919 = vld [vmem:[%s6888 + $0x30] sm:$0xf]
        %v6920 = vsel %vm6890, %v6642, %v6919
        %6921 = vst [vmem:[%s6888 + $0x30] sm:$0xf] %v6920
        %6922 = vst.msk [vmem:[%s6888 + $0x34] sm:$0xf] %vm6352, %v6651
        %v6923 = vld [vmem:[%s6888 + $0x38] sm:$0x1]
        %v6924 = vsel %vm6362, %v6652, %v6923
        %6925 = vst [vmem:[%s6888 + $0x38] sm:$0x1] %v6924
        %v6926 = vld [vmem:[%s6888 + $0x3c] sm:$0xf]
        %v6927 = vsel %vm6890, %v6659, %v6926
        %6928 = vst [vmem:[%s6888 + $0x3c] sm:$0xf] %v6927
        %6929 = vst.msk [vmem:[%s6888 + $0x40] sm:$0xf] %vm6352, %v6668
        %v6930 = vld [vmem:[%s6888 + $0x44] sm:$0x1]
        %v6931 = vsel %vm6362, %v6669, %v6930
        %6932 = vst [vmem:[%s6888 + $0x44] sm:$0x1] %v6931
        %v6933 = vld [vmem:[%s6888 + $0x48] sm:$0xf]
        %v6934 = vsel %vm6890, %v6676, %v6933
        %6935 = vst [vmem:[%s6888 + $0x48] sm:$0xf] %v6934
        %6936 = vst.msk [vmem:[%s6888 + $0x4c] sm:$0xf] %vm6352, %v6685
        %v6937 = vld [vmem:[%s6888 + $0x50] sm:$0x1]
        %v6938 = vsel %vm6362, %v6686, %v6937
        %6939 = vst [vmem:[%s6888 + $0x50] sm:$0x1] %v6938
        %v6940 = vld [vmem:[%s6888 + $0x54] sm:$0xf]
        %v6941 = vsel %vm6890, %v6693, %v6940
        %6942 = vst [vmem:[%s6888 + $0x54] sm:$0xf] %v6941
        %6943 = vst.msk [vmem:[%s6888 + $0x58] sm:$0xf] %vm6352, %v6702
        %v6944 = vld [vmem:[%s6888 + $0x5c] sm:$0x1]
        %v6945 = vsel %vm6362, %v6703, %v6944
        %6946 = vst [vmem:[%s6888 + $0x5c] sm:$0x1] %v6945
        %v6947 = vld [vmem:[%s6888 + $0x60] sm:$0xf]
        %v6948 = vsel %vm6890, %v6710, %v6947
        %6949 = vst [vmem:[%s6888 + $0x60] sm:$0xf] %v6948
        %6950 = vst.msk [vmem:[%s6888 + $0x64] sm:$0xf] %vm6352, %v6719
        %v6951 = vld [vmem:[%s6888 + $0x68] sm:$0x1]
        %v6952 = vsel %vm6362, %v6720, %v6951
        %6953 = vst [vmem:[%s6888 + $0x68] sm:$0x1] %v6952
        %v6954 = vld [vmem:[%s6888 + $0x6c] sm:$0xf]
        %v6955 = vsel %vm6890, %v6727, %v6954
        %6956 = vst [vmem:[%s6888 + $0x6c] sm:$0xf] %v6955
        %6957 = vst.msk [vmem:[%s6888 + $0x70] sm:$0xf] %vm6352, %v6736
        %v6958 = vld [vmem:[%s6888 + $0x74] sm:$0x1]
        %v6959 = vsel %vm6362, %v6737, %v6958
        %6960 = vst [vmem:[%s6888 + $0x74] sm:$0x1] %v6959
        %v6961 = vld [vmem:[%s6888 + $0x78] sm:$0xf]
        %v6962 = vsel %vm6890, %v6744, %v6961
        %6963 = vst [vmem:[%s6888 + $0x78] sm:$0xf] %v6962
        %6964 = vst.msk [vmem:[%s6888 + $0x7c] sm:$0xf] %vm6352, %v6753
        %v6965 = vld [vmem:[%s6888 + $0x80] sm:$0x1]
        %v6966 = vsel %vm6362, %v6754, %v6965
        %6967 = vst [vmem:[%s6888 + $0x80] sm:$0x1] %v6966
        %v6968 = vld [vmem:[%s6888 + $0x84] sm:$0xf]
        %v6969 = vsel %vm6890, %v6761, %v6968
        %6970 = vst [vmem:[%s6888 + $0x84] sm:$0xf] %v6969
        %6971 = vst.msk [vmem:[%s6888 + $0x88] sm:$0xf] %vm6352, %v6770
        %v6972 = vld [vmem:[%s6888 + $0x8c] sm:$0x1]
        %v6973 = vsel %vm6362, %v6771, %v6972
        %6974 = vst [vmem:[%s6888 + $0x8c] sm:$0x1] %v6973
        %v6975 = vld [vmem:[%s6888 + $0x90] sm:$0xf]
        %v6976 = vsel %vm6890, %v6778, %v6975
        %6977 = vst [vmem:[%s6888 + $0x90] sm:$0xf] %v6976
        %6978 = vst.msk [vmem:[%s6888 + $0x94] sm:$0xf] %vm6352, %v6787
        %v6979 = vld [vmem:[%s6888 + $0x98] sm:$0x1]
        %v6980 = vsel %vm6362, %v6788, %v6979
        %6981 = vst [vmem:[%s6888 + $0x98] sm:$0x1] %v6980
        %v6982 = vld [vmem:[%s6888 + $0x9c] sm:$0xf]
        %v6983 = vsel %vm6890, %v6795, %v6982
        %6984 = vst [vmem:[%s6888 + $0x9c] sm:$0xf] %v6983
        %6985 = vst.msk [vmem:[%s6888 + $0xa0] sm:$0xf] %vm6352, %v6804
        %v6986 = vld [vmem:[%s6888 + $0xa4] sm:$0x1]
        %v6987 = vsel %vm6362, %v6805, %v6986
        %6988 = vst [vmem:[%s6888 + $0xa4] sm:$0x1] %v6987
        %v6989 = vld [vmem:[%s6888 + $0xa8] sm:$0xf]
        %v6990 = vsel %vm6890, %v6812, %v6989
        %6991 = vst [vmem:[%s6888 + $0xa8] sm:$0xf] %v6990
        %6992 = vst.msk [vmem:[%s6888 + $0xac] sm:$0xf] %vm6352, %v6821
        %v6993 = vld [vmem:[%s6888 + $0xb0] sm:$0x1]
        %v6994 = vsel %vm6362, %v6822, %v6993
        %6995 = vst [vmem:[%s6888 + $0xb0] sm:$0x1] %v6994
        %v6996 = vld [vmem:[%s6888 + $0xb4] sm:$0xf]
        %v6997 = vsel %vm6890, %v6829, %v6996
        %6998 = vst [vmem:[%s6888 + $0xb4] sm:$0xf] %v6997
        %6999 = vst.msk [vmem:[%s6888 + $0xb8] sm:$0xf] %vm6352, %v6838
        %v7000 = vld [vmem:[%s6888 + $0xbc] sm:$0x1]
        %v7001 = vsel %vm6362, %v6839, %v7000
        %7002 = vst [vmem:[%s6888 + $0xbc] sm:$0x1] %v7001
        %v7003 = vld [vmem:[#allocation3] sm:$0xf]
        %v7004 = vld [vmem:[#allocation3 + $0x4] sm:$0xf]
        %v7005 = vld [vmem:[#allocation3 + $0xc] sm:$0xf]
        %v7006 = vld [vmem:[#allocation3 + $0x10] sm:$0xf]
        %v7007 = vld [vmem:[#allocation3 + $0x18] sm:$0xf]
        %v7008 = vld [vmem:[#allocation3 + $0x1c] sm:$0xf]
        %v7009 = vld [vmem:[#allocation3 + $0x24] sm:$0xf]
        %v7010 = vld [vmem:[#allocation3 + $0x28] sm:$0xf]
        %v7011 = vld [vmem:[#allocation3 + $0x30] sm:$0xf]
        %v7012 = vld [vmem:[#allocation3 + $0x34] sm:$0xf]
        %v7013 = vld [vmem:[#allocation3 + $0x3c] sm:$0xf]
        %v7014 = vld [vmem:[#allocation3 + $0x40] sm:$0xf]
        %v7015 = vld [vmem:[#allocation3 + $0x48] sm:$0xf]
        %v7016 = vld [vmem:[#allocation3 + $0x4c] sm:$0xf]
        %v7017 = vld [vmem:[#allocation3 + $0x54] sm:$0xf]
        %v7018 = vld [vmem:[#allocation3 + $0x58] sm:$0xf]
        %v7019 = vld [vmem:[#allocation3 + $0x60] sm:$0xf]
        %v7020 = vld [vmem:[#allocation3 + $0x64] sm:$0xf]
        %v7021 = vld [vmem:[#allocation3 + $0x6c] sm:$0xf]
        %v7022 = vld [vmem:[#allocation3 + $0x70] sm:$0xf]
        %v7023 = vld [vmem:[#allocation3 + $0x78] sm:$0xf]
        %v7024 = vld [vmem:[#allocation3 + $0x7c] sm:$0xf]
        %v7025 = vld [vmem:[#allocation3 + $0x84] sm:$0xf]
        %v7026 = vld [vmem:[#allocation3 + $0x88] sm:$0xf]
        %v7027 = vld [vmem:[#allocation3 + $0x90] sm:$0xf]
        %v7028 = vld [vmem:[#allocation3 + $0x94] sm:$0xf]
        %v7029 = vld [vmem:[#allocation3 + $0x9c] sm:$0xf]
        %v7030 = vld [vmem:[#allocation3 + $0xa0] sm:$0xf]
        %v7031 = vld [vmem:[#allocation3 + $0xa8] sm:$0xf]
        %v7032 = vld [vmem:[#allocation3 + $0xac] sm:$0xf]
        %v7033 = vld [vmem:[#allocation3 + $0xb4] sm:$0xf]
        %v7034 = vld [vmem:[#allocation3 + $0xb8] sm:$0xf]
        %v7035 = vld [vmem:[%s3] sm:$0xf]
        %v7036 = vld [vmem:[%s3 + $0x4] sm:$0xf]
        %v7037 = vld [vmem:[%s3 + $0x8] sm:$0xf]
        %v7038 = vld [vmem:[#allocation3 + $0x8] sm:$0x1]
        %v7039 = vld [vmem:[#allocation3 + $0x14] sm:$0x1]
        %v7040 = vld [vmem:[#allocation3 + $0x20] sm:$0x1]
        %v7041 = vld [vmem:[#allocation3 + $0x2c] sm:$0x1]
        %v7042 = vld [vmem:[#allocation3 + $0x38] sm:$0x1]
        %v7043 = vld [vmem:[#allocation3 + $0x44] sm:$0x1]
        %v7044 = vld [vmem:[#allocation3 + $0x50] sm:$0x1]
        %v7045 = vld [vmem:[#allocation3 + $0x5c] sm:$0x1]
        %v7046 = vld [vmem:[#allocation3 + $0x68] sm:$0x1]
        %v7047 = vld [vmem:[#allocation3 + $0x74] sm:$0x1]
        %v7048 = vld [vmem:[#allocation3 + $0x80] sm:$0x1]
        %v7049 = vld [vmem:[#allocation3 + $0x8c] sm:$0x1]
        %v7050 = vld [vmem:[#allocation3 + $0x98] sm:$0x1]
        %v7051 = vld [vmem:[#allocation3 + $0xa4] sm:$0x1]
        %v7052 = vld [vmem:[#allocation3 + $0xb0] sm:$0x1]
        %v7053 = vld [vmem:[#allocation3 + $0xbc] sm:$0x1]
        %v7055 = vshrl.u32 %v7003, 16
        %v7057 = vrot.slane %v7055, 4
        %v7058 = vshll.u32 %v7003, 16
        %v7060 = vrot.slane %v7058, 5
        %v7061 = vor.u32 %v7057, %v7060
        %v7062 = vrot.slane %v7061, 4
        %v7064 = vshll.u32 %v7004, 16
        %v7066 = vrot.slane %v7064, 5
        %v7067 = vsel %vm962, %v7062, %v7066
        %v7068 = vshrl.u32 %v7004, 16
        %v7070 = vrot.slane %v7068, 4
        %v7071 = vor.u32 %v7070, %v7066
        %v7072 = vrot.slane %v7071, 4
        %v7074 = vshll.u32 %v7038, 16
        %v7076 = vrot.slane %v7074, 5
        %v7077 = vsel %vm962, %v7072, %v7076
        %v7079 = vshrl.u32 %v7005, 16
        %v7081 = vrot.slane %v7079, 4
        %v7082 = vshll.u32 %v7005, 16
        %v7084 = vrot.slane %v7082, 5
        %v7085 = vor.u32 %v7081, %v7084
        %v7086 = vrot.slane %v7085, 4
        %v7088 = vshll.u32 %v7006, 16
        %v7090 = vrot.slane %v7088, 5
        %v7091 = vsel %vm962, %v7086, %v7090
        %v7092 = vshrl.u32 %v7006, 16
        %v7094 = vrot.slane %v7092, 4
        %v7095 = vor.u32 %v7094, %v7090
        %v7096 = vrot.slane %v7095, 4
        %v7098 = vshll.u32 %v7039, 16
        %v7100 = vrot.slane %v7098, 5
        %v7101 = vsel %vm962, %v7096, %v7100
        %v7103 = vshrl.u32 %v7007, 16
        %v7105 = vrot.slane %v7103, 4
        %v7106 = vshll.u32 %v7007, 16
        %v7108 = vrot.slane %v7106, 5
        %v7109 = vor.u32 %v7105, %v7108
        %v7110 = vrot.slane %v7109, 4
        %v7112 = vshll.u32 %v7008, 16
        %v7114 = vrot.slane %v7112, 5
        %v7115 = vsel %vm962, %v7110, %v7114
        %v7116 = vshrl.u32 %v7008, 16
        %v7118 = vrot.slane %v7116, 4
        %v7119 = vor.u32 %v7118, %v7114
        %v7120 = vrot.slane %v7119, 4
        %v7122 = vshll.u32 %v7040, 16
        %v7124 = vrot.slane %v7122, 5
        %v7125 = vsel %vm962, %v7120, %v7124
        %v7127 = vshrl.u32 %v7009, 16
        %v7129 = vrot.slane %v7127, 4
        %v7130 = vshll.u32 %v7009, 16
        %v7132 = vrot.slane %v7130, 5
        %v7133 = vor.u32 %v7129, %v7132
        %v7134 = vrot.slane %v7133, 4
        %v7136 = vshll.u32 %v7010, 16
        %v7138 = vrot.slane %v7136, 5
        %v7139 = vsel %vm962, %v7134, %v7138
        %v7140 = vshrl.u32 %v7010, 16
        %v7142 = vrot.slane %v7140, 4
        %v7143 = vor.u32 %v7142, %v7138
        %v7144 = vrot.slane %v7143, 4
        %v7146 = vshll.u32 %v7041, 16
        %v7148 = vrot.slane %v7146, 5
        %v7149 = vsel %vm962, %v7144, %v7148
        %v7151 = vshrl.u32 %v7011, 16
        %v7153 = vrot.slane %v7151, 4
        %v7154 = vshll.u32 %v7011, 16
        %v7156 = vrot.slane %v7154, 5
        %v7157 = vor.u32 %v7153, %v7156
        %v7158 = vrot.slane %v7157, 4
        %v7160 = vshll.u32 %v7012, 16
        %v7162 = vrot.slane %v7160, 5
        %v7163 = vsel %vm962, %v7158, %v7162
        %v7164 = vshrl.u32 %v7012, 16
        %v7166 = vrot.slane %v7164, 4
        %v7167 = vor.u32 %v7166, %v7162
        %v7168 = vrot.slane %v7167, 4
        %v7170 = vshll.u32 %v7042, 16
        %v7172 = vrot.slane %v7170, 5
        %v7173 = vsel %vm962, %v7168, %v7172
        %v7175 = vshrl.u32 %v7013, 16
        %v7177 = vrot.slane %v7175, 4
        %v7178 = vshll.u32 %v7013, 16
        %v7180 = vrot.slane %v7178, 5
        %v7181 = vor.u32 %v7177, %v7180
        %v7182 = vrot.slane %v7181, 4
        %v7184 = vshll.u32 %v7014, 16
        %v7186 = vrot.slane %v7184, 5
        %v7187 = vsel %vm962, %v7182, %v7186
        %v7188 = vshrl.u32 %v7014, 16
        %v7190 = vrot.slane %v7188, 4
        %v7191 = vor.u32 %v7190, %v7186
        %v7192 = vrot.slane %v7191, 4
        %v7194 = vshll.u32 %v7043, 16
        %v7196 = vrot.slane %v7194, 5
        %v7197 = vsel %vm962, %v7192, %v7196
        %v7199 = vshrl.u32 %v7015, 16
        %v7201 = vrot.slane %v7199, 4
        %v7202 = vshll.u32 %v7015, 16
        %v7204 = vrot.slane %v7202, 5
        %v7205 = vor.u32 %v7201, %v7204
        %v7206 = vrot.slane %v7205, 4
        %v7208 = vshll.u32 %v7016, 16
        %v7210 = vrot.slane %v7208, 5
        %v7211 = vsel %vm962, %v7206, %v7210
        %v7212 = vshrl.u32 %v7016, 16
        %v7214 = vrot.slane %v7212, 4
        %v7215 = vor.u32 %v7214, %v7210
        %v7216 = vrot.slane %v7215, 4
        %v7218 = vshll.u32 %v7044, 16
        %v7220 = vrot.slane %v7218, 5
        %v7221 = vsel %vm962, %v7216, %v7220
        %v7223 = vshrl.u32 %v7017, 16
        %v7225 = vrot.slane %v7223, 4
        %v7226 = vshll.u32 %v7017, 16
        %v7228 = vrot.slane %v7226, 5
        %v7229 = vor.u32 %v7225, %v7228
        %v7230 = vrot.slane %v7229, 4
        %v7232 = vshll.u32 %v7018, 16
        %v7234 = vrot.slane %v7232, 5
        %v7235 = vsel %vm962, %v7230, %v7234
        %v7236 = vshrl.u32 %v7018, 16
        %v7238 = vrot.slane %v7236, 4
        %v7239 = vor.u32 %v7238, %v7234
        %v7240 = vrot.slane %v7239, 4
        %v7242 = vshll.u32 %v7045, 16
        %v7244 = vrot.slane %v7242, 5
        %v7245 = vsel %vm962, %v7240, %v7244
        %v7247 = vshrl.u32 %v7019, 16
        %v7249 = vrot.slane %v7247, 4
        %v7250 = vshll.u32 %v7019, 16
        %v7252 = vrot.slane %v7250, 5
        %v7253 = vor.u32 %v7249, %v7252
        %v7254 = vrot.slane %v7253, 4
        %v7256 = vshll.u32 %v7020, 16
        %v7258 = vrot.slane %v7256, 5
        %v7259 = vsel %vm962, %v7254, %v7258
        %v7260 = vshrl.u32 %v7020, 16
        %v7262 = vrot.slane %v7260, 4
        %v7263 = vor.u32 %v7262, %v7258
        %v7264 = vrot.slane %v7263, 4
        %v7266 = vshll.u32 %v7046, 16
        %v7268 = vrot.slane %v7266, 5
        %v7269 = vsel %vm962, %v7264, %v7268
        %v7271 = vshrl.u32 %v7021, 16
        %v7273 = vrot.slane %v7271, 4
        %v7274 = vshll.u32 %v7021, 16
        %v7276 = vrot.slane %v7274, 5
        %v7277 = vor.u32 %v7273, %v7276
        %v7278 = vrot.slane %v7277, 4
        %v7280 = vshll.u32 %v7022, 16
        %v7282 = vrot.slane %v7280, 5
        %v7283 = vsel %vm962, %v7278, %v7282
        %v7284 = vshrl.u32 %v7022, 16
        %v7286 = vrot.slane %v7284, 4
        %v7287 = vor.u32 %v7286, %v7282
        %v7288 = vrot.slane %v7287, 4
        %v7290 = vshll.u32 %v7047, 16
        %v7292 = vrot.slane %v7290, 5
        %v7293 = vsel %vm962, %v7288, %v7292
        %v7295 = vshrl.u32 %v7023, 16
        %v7297 = vrot.slane %v7295, 4
        %v7298 = vshll.u32 %v7023, 16
        %v7300 = vrot.slane %v7298, 5
        %v7301 = vor.u32 %v7297, %v7300
        %v7302 = vrot.slane %v7301, 4
        %v7304 = vshll.u32 %v7024, 16
        %v7306 = vrot.slane %v7304, 5
        %v7307 = vsel %vm962, %v7302, %v7306
        %v7308 = vshrl.u32 %v7024, 16
        %v7310 = vrot.slane %v7308, 4
        %v7311 = vor.u32 %v7310, %v7306
        %v7312 = vrot.slane %v7311, 4
        %v7314 = vshll.u32 %v7048, 16
        %v7316 = vrot.slane %v7314, 5
        %v7317 = vsel %vm962, %v7312, %v7316
        %v7319 = vshrl.u32 %v7025, 16
        %v7321 = vrot.slane %v7319, 4
        %v7322 = vshll.u32 %v7025, 16
        %v7324 = vrot.slane %v7322, 5
        %v7325 = vor.u32 %v7321, %v7324
        %v7326 = vrot.slane %v7325, 4
        %v7328 = vshll.u32 %v7026, 16
        %v7330 = vrot.slane %v7328, 5
        %v7331 = vsel %vm962, %v7326, %v7330
        %v7332 = vshrl.u32 %v7026, 16
        %v7334 = vrot.slane %v7332, 4
        %v7335 = vor.u32 %v7334, %v7330
        %v7336 = vrot.slane %v7335, 4
        %v7338 = vshll.u32 %v7049, 16
        %v7340 = vrot.slane %v7338, 5
        %v7341 = vsel %vm962, %v7336, %v7340
        %v7343 = vshrl.u32 %v7027, 16
        %v7345 = vrot.slane %v7343, 4
        %v7346 = vshll.u32 %v7027, 16
        %v7348 = vrot.slane %v7346, 5
        %v7349 = vor.u32 %v7345, %v7348
        %v7350 = vrot.slane %v7349, 4
        %v7352 = vshll.u32 %v7028, 16
        %v7354 = vrot.slane %v7352, 5
        %v7355 = vsel %vm962, %v7350, %v7354
        %v7356 = vshrl.u32 %v7028, 16
        %v7358 = vrot.slane %v7356, 4
        %v7359 = vor.u32 %v7358, %v7354
        %v7360 = vrot.slane %v7359, 4
        %v7362 = vshll.u32 %v7050, 16
        %v7364 = vrot.slane %v7362, 5
        %v7365 = vsel %vm962, %v7360, %v7364
        %v7367 = vshrl.u32 %v7029, 16
        %v7369 = vrot.slane %v7367, 4
        %v7370 = vshll.u32 %v7029, 16
        %v7372 = vrot.slane %v7370, 5
        %v7373 = vor.u32 %v7369, %v7372
        %v7374 = vrot.slane %v7373, 4
        %v7376 = vshll.u32 %v7030, 16
        %v7378 = vrot.slane %v7376, 5
        %v7379 = vsel %vm962, %v7374, %v7378
        %v7380 = vshrl.u32 %v7030, 16
        %v7382 = vrot.slane %v7380, 4
        %v7383 = vor.u32 %v7382, %v7378
        %v7384 = vrot.slane %v7383, 4
        %v7386 = vshll.u32 %v7051, 16
        %v7388 = vrot.slane %v7386, 5
        %v7389 = vsel %vm962, %v7384, %v7388
        %v7391 = vshrl.u32 %v7031, 16
        %v7393 = vrot.slane %v7391, 4
        %v7394 = vshll.u32 %v7031, 16
        %v7396 = vrot.slane %v7394, 5
        %v7397 = vor.u32 %v7393, %v7396
        %v7398 = vrot.slane %v7397, 4
        %v7400 = vshll.u32 %v7032, 16
        %v7402 = vrot.slane %v7400, 5
        %v7403 = vsel %vm962, %v7398, %v7402
        %v7404 = vshrl.u32 %v7032, 16
        %v7406 = vrot.slane %v7404, 4
        %v7407 = vor.u32 %v7406, %v7402
        %v7408 = vrot.slane %v7407, 4
        %v7410 = vshll.u32 %v7052, 16
        %v7412 = vrot.slane %v7410, 5
        %v7413 = vsel %vm962, %v7408, %v7412
        %v7415 = vshrl.u32 %v7033, 16
        %v7417 = vrot.slane %v7415, 4
        %v7418 = vshll.u32 %v7033, 16
        %v7420 = vrot.slane %v7418, 5
        %v7421 = vor.u32 %v7417, %v7420
        %v7422 = vrot.slane %v7421, 4
        %v7424 = vshll.u32 %v7034, 16
        %v7426 = vrot.slane %v7424, 5
        %v7427 = vsel %vm962, %v7422, %v7426
        %v7428 = vshrl.u32 %v7034, 16
        %v7430 = vrot.slane %v7428, 4
        %v7431 = vor.u32 %v7430, %v7426
        %v7432 = vrot.slane %v7431, 4
        %v7434 = vshll.u32 %v7053, 16
        %v7436 = vrot.slane %v7434, 5
        %v7437 = vsel %vm962, %v7432, %v7436
        %s7438 = scalar_lea.vmem %s3, 12
        %v7439 = vld [vmem:[%s7438] sm:$0xf]
        %v7440 = vld [vmem:[%s7438 + $0x4] sm:$0xf]
        %v7441 = vld [vmem:[%s7438 + $0x8] sm:$0xf]
        %v7442 = vunpack.c.l.b16 %v7067
        %v7443 = vunpack.c.l.b16 %v7077
        %v7444 = vunpack.c.l.b16 %v7091
        %v7445 = vunpack.c.l.b16 %v7101
        %v7446 = vunpack.c.l.b16 %v7115
        %v7447 = vunpack.c.l.b16 %v7125
        %v7448 = vunpack.c.l.b16 %v7139
        %v7449 = vunpack.c.l.b16 %v7149
        %v7450 = vunpack.c.l.b16 %v7163
        %v7451 = vunpack.c.l.b16 %v7173
        %v7452 = vunpack.c.l.b16 %v7187
        %v7453 = vunpack.c.l.b16 %v7197
        %v7454 = vunpack.c.l.b16 %v7211
        %v7455 = vunpack.c.l.b16 %v7221
        %v7456 = vunpack.c.l.b16 %v7235
        %v7457 = vunpack.c.l.b16 %v7245
        %v7458 = vunpack.c.l.b16 %v7259
        %v7459 = vunpack.c.l.b16 %v7269
        %v7460 = vunpack.c.l.b16 %v7283
        %v7461 = vunpack.c.l.b16 %v7293
        %v7462 = vunpack.c.l.b16 %v7307
        %v7463 = vunpack.c.l.b16 %v7317
        %v7464 = vunpack.c.l.b16 %v7331
        %v7465 = vunpack.c.l.b16 %v7341
        %v7466 = vunpack.c.l.b16 %v7355
        %v7467 = vunpack.c.l.b16 %v7365
        %v7468 = vunpack.c.l.b16 %v7379
        %v7469 = vunpack.c.l.b16 %v7389
        %v7470 = vunpack.c.l.b16 %v7403
        %v7471 = vunpack.c.l.b16 %v7413
        %v7472 = vunpack.c.l.b16 %v7427
        %v7473 = vunpack.c.l.b16 %v7437
        %v7474 = vpack.c.b16 %v7443, %v7442
        %v7475 = vpack.c.b16 %v7445, %v7444
        %v7476 = vpack.c.b16 %v7447, %v7446
        %v7477 = vpack.c.b16 %v7449, %v7448
        %v7478 = vpack.c.b16 %v7451, %v7450
        %v7479 = vpack.c.b16 %v7453, %v7452
        %v7480 = vpack.c.b16 %v7455, %v7454
        %v7481 = vpack.c.b16 %v7457, %v7456
        %v7482 = vpack.c.b16 %v7459, %v7458
        %v7483 = vpack.c.b16 %v7461, %v7460
        %v7484 = vpack.c.b16 %v7463, %v7462
        %v7485 = vpack.c.b16 %v7465, %v7464
        %v7486 = vpack.c.b16 %v7467, %v7466
        %v7487 = vpack.c.b16 %v7469, %v7468
        %v7488 = vpack.c.b16 %v7471, %v7470
        %v7489 = vpack.c.b16 %v7473, %v7472
        %v7493 = vunpack.c.l.b16 %v7439
        %v7494 = vunpack.c.l.b16 %v7440
        %v7495 = vunpack.c.l.b16 %v7441
        %v7496 = vpack.c.b16 %v7494, %v7493
        %v7497 = vpack.c.b16 %v7495, %v7495
        %v7500 = vsel %vm5511, %v7474, 0
        %v7503 = vsel %vm5511, %v7475, 0
        %v7506 = vsel %vm5511, %v7476, 0
        %v7509 = vsel %vm5511, %v7477, 0
        %v7512 = vsel %vm5511, %v7478, 0
        %v7515 = vsel %vm5511, %v7479, 0
        %v7518 = vsel %vm5511, %v7480, 0
        %v7521 = vsel %vm5511, %v7481, 0
        %v7524 = vsel %vm5511, %v7482, 0
        %v7527 = vsel %vm5511, %v7483, 0
        %v7530 = vsel %vm5511, %v7484, 0
        %v7533 = vsel %vm5511, %v7485, 0
        %v7536 = vsel %vm5511, %v7486, 0
        %v7539 = vsel %vm5511, %v7487, 0
        %v7542 = vsel %vm5511, %v7488, 0
        %v7545 = vsel %vm5511, %v7489, 0
        %vm7547 = vcmask 1043456
        %v7549 = vsel %vm7547, %v7497, 0
        %7551 = vmatprep.subr.bf16.mxu0 0
        %7552 = vmatpush1.bf16.msra.mxu0 0
        %7553 = vmatprep.subr.bf16.mxu0 0
        %7554 = vmatpush1.bf16.msra.mxu0 0
        %7555 = vmatprep.subr.bf16.mxu0 0
        %7556 = vmatpush1.bf16.msra.mxu0 0
        %7557 = vmatprep.subr.bf16.mxu0 0
        %7558 = vmatpush1.bf16.msra.mxu0 0
        %7559 = vmatprep.subr.bf16.mxu0 0
        %7560 = vmatpush1.bf16.msra.mxu0 0
        %7561 = vmatprep.subr.bf16.mxu0 0
        %7562 = vmatpush1.bf16.msra.mxu0 0
        %7563 = vmatprep.subr.bf16.mxu0 0
        %7564 = vmatpush1.bf16.msra.mxu0 %v7549
        %7565 = vmatprep.subr.bf16.mxu0 0
        %7566 = vmatpush1.bf16.msra.mxu0 %v7496
        %7567 = vmatprep.subr.bf16.mxu0 0
        %7568 = vmatpush2.bf16.msra.mxu0 0
        %7569 = vmatprep.subr.bf16.mxu0 0
        %7570 = vmatpush2.bf16.msra.mxu0 0
        %7571 = vmatprep.subr.bf16.mxu0 0
        %7572 = vmatpush2.bf16.msra.mxu0 0
        %7573 = vmatprep.subr.bf16.mxu0 0
        %7574 = vmatpush2.bf16.msra.mxu0 0
        %7575 = vmatprep.subr.bf16.mxu0 0
        %7576 = vmatpush2.bf16.msra.mxu0 0
        %7577 = vmatprep.subr.bf16.mxu0 0
        %7578 = vmatpush2.bf16.msra.mxu0 0
        %7579 = vmatprep.subr.bf16.mxu0 0
        %7580 = vmatpush2.bf16.msra.mxu0 0
        %7581 = vmatprep.subr.bf16.mxu0 0
        %7582 = vmatpush2.bf16.msra.mxu0 0
        %7583 = vmatprep.mubr.bf16.mxu0 0
        %7584 = vmatmul.mubr.bf16.gmra.mxu0 %v7500
        %v7585 = vpop.f32.mrf.mxu0
        %v7586 = vadd.f32 0.0, %v7585
        %v7587 = vpop.f32.mrf.mxu0
        %v7588 = vpop.f32.mrf.mxu0
        %v7589 = vadd.f32 0.0, %v7588
        %v7590 = vpop.f32.mrf.mxu0
        %7591 = vmatprep.mubr.bf16.mxu0 0
        %7592 = vmatmul.mubr.bf16.gmra.mxu0 %v7503
        %v7593 = vpop.f32.mrf.mxu0
        %v7594 = vadd.f32 0.0, %v7593
        %v7595 = vpop.f32.mrf.mxu0
        %v7596 = vpop.f32.mrf.mxu0
        %v7597 = vadd.f32 0.0, %v7596
        %v7598 = vpop.f32.mrf.mxu0
        %7599 = vmatprep.mubr.bf16.mxu0 0
        %7600 = vmatmul.mubr.bf16.gmra.mxu0 %v7506
        %v7601 = vpop.f32.mrf.mxu0
        %v7602 = vadd.f32 0.0, %v7601
        %v7603 = vpop.f32.mrf.mxu0
        %v7604 = vpop.f32.mrf.mxu0
        %v7605 = vadd.f32 0.0, %v7604
        %v7606 = vpop.f32.mrf.mxu0
        %7607 = vmatprep.mubr.bf16.mxu0 0
        %7608 = vmatmul.mubr.bf16.gmra.mxu0 %v7509
        %v7609 = vpop.f32.mrf.mxu0
        %v7610 = vadd.f32 0.0, %v7609
        %v7611 = vpop.f32.mrf.mxu0
        %v7612 = vpop.f32.mrf.mxu0
        %v7613 = vadd.f32 0.0, %v7612
        %v7614 = vpop.f32.mrf.mxu0
        %7615 = vmatprep.mubr.bf16.mxu0 0
        %7616 = vmatmul.mubr.bf16.gmra.mxu0 %v7512
        %v7617 = vpop.f32.mrf.mxu0
        %v7618 = vadd.f32 0.0, %v7617
        %v7619 = vpop.f32.mrf.mxu0
        %v7620 = vpop.f32.mrf.mxu0
        %v7621 = vadd.f32 0.0, %v7620
        %v7622 = vpop.f32.mrf.mxu0
        %7623 = vmatprep.mubr.bf16.mxu0 0
        %7624 = vmatmul.mubr.bf16.gmra.mxu0 %v7515
        %v7625 = vpop.f32.mrf.mxu0
        %v7626 = vadd.f32 0.0, %v7625
        %v7627 = vpop.f32.mrf.mxu0
        %v7628 = vpop.f32.mrf.mxu0
        %v7629 = vadd.f32 0.0, %v7628
        %v7630 = vpop.f32.mrf.mxu0
        %7631 = vmatprep.mubr.bf16.mxu0 0
        %7632 = vmatmul.mubr.bf16.gmra.mxu0 %v7518
        %v7633 = vpop.f32.mrf.mxu0
        %v7634 = vadd.f32 0.0, %v7633
        %v7635 = vpop.f32.mrf.mxu0
        %v7636 = vpop.f32.mrf.mxu0
        %v7637 = vadd.f32 0.0, %v7636
        %v7638 = vpop.f32.mrf.mxu0
        %7639 = vmatprep.mubr.bf16.mxu0 0
        %7640 = vmatmul.mubr.bf16.gmra.mxu0 %v7521
        %v7641 = vpop.f32.mrf.mxu0
        %v7642 = vadd.f32 0.0, %v7641
        %v7643 = vpop.f32.mrf.mxu0
        %v7644 = vpop.f32.mrf.mxu0
        %v7645 = vadd.f32 0.0, %v7644
        %v7646 = vpop.f32.mrf.mxu0
        %7647 = vmatprep.mubr.bf16.mxu0 0
        %7648 = vmatmul.mubr.bf16.gmra.mxu0 %v7524
        %v7649 = vpop.f32.mrf.mxu0
        %v7650 = vadd.f32 0.0, %v7649
        %v7651 = vpop.f32.mrf.mxu0
        %v7652 = vpop.f32.mrf.mxu0
        %v7653 = vadd.f32 0.0, %v7652
        %v7654 = vpop.f32.mrf.mxu0
        %7655 = vmatprep.mubr.bf16.mxu0 0
        %7656 = vmatmul.mubr.bf16.gmra.mxu0 %v7527
        %v7657 = vpop.f32.mrf.mxu0
        %v7658 = vadd.f32 0.0, %v7657
        %v7659 = vpop.f32.mrf.mxu0
        %v7660 = vpop.f32.mrf.mxu0
        %v7661 = vadd.f32 0.0, %v7660
        %v7662 = vpop.f32.mrf.mxu0
        %7663 = vmatprep.mubr.bf16.mxu0 0
        %7664 = vmatmul.mubr.bf16.gmra.mxu0 %v7530
        %v7665 = vpop.f32.mrf.mxu0
        %v7666 = vadd.f32 0.0, %v7665
        %v7667 = vpop.f32.mrf.mxu0
        %v7668 = vpop.f32.mrf.mxu0
        %v7669 = vadd.f32 0.0, %v7668
        %v7670 = vpop.f32.mrf.mxu0
        %7671 = vmatprep.mubr.bf16.mxu0 0
        %7672 = vmatmul.mubr.bf16.gmra.mxu0 %v7533
        %v7673 = vpop.f32.mrf.mxu0
        %v7674 = vadd.f32 0.0, %v7673
        %v7675 = vpop.f32.mrf.mxu0
        %v7676 = vpop.f32.mrf.mxu0
        %v7677 = vadd.f32 0.0, %v7676
        %v7678 = vpop.f32.mrf.mxu0
        %7679 = vmatprep.mubr.bf16.mxu0 0
        %7680 = vmatmul.mubr.bf16.gmra.mxu0 %v7536
        %v7681 = vpop.f32.mrf.mxu0
        %v7682 = vadd.f32 0.0, %v7681
        %v7683 = vpop.f32.mrf.mxu0
        %v7684 = vpop.f32.mrf.mxu0
        %v7685 = vadd.f32 0.0, %v7684
        %v7686 = vpop.f32.mrf.mxu0
        %7687 = vmatprep.mubr.bf16.mxu0 0
        %7688 = vmatmul.mubr.bf16.gmra.mxu0 %v7539
        %v7689 = vpop.f32.mrf.mxu0
        %v7690 = vadd.f32 0.0, %v7689
        %v7691 = vpop.f32.mrf.mxu0
        %v7692 = vpop.f32.mrf.mxu0
        %v7693 = vadd.f32 0.0, %v7692
        %v7694 = vpop.f32.mrf.mxu0
        %7695 = vmatprep.mubr.bf16.mxu0 0
        %7696 = vmatmul.mubr.bf16.gmra.mxu0 %v7542
        %v7697 = vpop.f32.mrf.mxu0
        %v7698 = vadd.f32 0.0, %v7697
        %v7699 = vpop.f32.mrf.mxu0
        %v7700 = vpop.f32.mrf.mxu0
        %v7701 = vadd.f32 0.0, %v7700
        %v7702 = vpop.f32.mrf.mxu0
        %7703 = vmatprep.mubr.bf16.mxu0 0
        %7704 = vmatmul.mubr.bf16.gmra.mxu0 %v7545
        %v7705 = vpop.f32.mrf.mxu0
        %v7706 = vadd.f32 0.0, %v7705
        %v7707 = vpop.f32.mrf.mxu0
        %v7708 = vpop.f32.mrf.mxu0
        %v7709 = vadd.f32 0.0, %v7708
        %v7710 = vpop.f32.mrf.mxu0
        %7711 = vdwg.mxu0
        %v7744 = vunpack.c.l.b16 %v7003
        %v7745 = vunpack.c.l.b16 %v7004
        %v7746 = vunpack.c.l.b16 %v7005
        %v7747 = vunpack.c.l.b16 %v7006
        %v7748 = vunpack.c.l.b16 %v7007
        %v7749 = vunpack.c.l.b16 %v7008
        %v7750 = vunpack.c.l.b16 %v7009
        %v7751 = vunpack.c.l.b16 %v7010
        %v7752 = vunpack.c.l.b16 %v7011
        %v7753 = vunpack.c.l.b16 %v7012
        %v7754 = vunpack.c.l.b16 %v7013
        %v7755 = vunpack.c.l.b16 %v7014
        %v7756 = vunpack.c.l.b16 %v7015
        %v7757 = vunpack.c.l.b16 %v7016
        %v7758 = vunpack.c.l.b16 %v7017
        %v7759 = vunpack.c.l.b16 %v7018
        %v7760 = vunpack.c.l.b16 %v7019
        %v7761 = vunpack.c.l.b16 %v7020
        %v7762 = vunpack.c.l.b16 %v7021
        %v7763 = vunpack.c.l.b16 %v7022
        %v7764 = vunpack.c.l.b16 %v7023
        %v7765 = vunpack.c.l.b16 %v7024
        %v7766 = vunpack.c.l.b16 %v7025
        %v7767 = vunpack.c.l.b16 %v7026
        %v7768 = vunpack.c.l.b16 %v7027
        %v7769 = vunpack.c.l.b16 %v7028
        %v7770 = vunpack.c.l.b16 %v7029
        %v7771 = vunpack.c.l.b16 %v7030
        %v7772 = vunpack.c.l.b16 %v7031
        %v7773 = vunpack.c.l.b16 %v7032
        %v7774 = vunpack.c.l.b16 %v7033
        %v7775 = vunpack.c.l.b16 %v7034
        %v7776 = vpack.c.b16 %v7745, %v7744
        %v7777 = vpack.c.b16 %v7747, %v7746
        %v7778 = vpack.c.b16 %v7749, %v7748
        %v7779 = vpack.c.b16 %v7751, %v7750
        %v7780 = vpack.c.b16 %v7753, %v7752
        %v7781 = vpack.c.b16 %v7755, %v7754
        %v7782 = vpack.c.b16 %v7757, %v7756
        %v7783 = vpack.c.b16 %v7759, %v7758
        %v7784 = vpack.c.b16 %v7761, %v7760
        %v7785 = vpack.c.b16 %v7763, %v7762
        %v7786 = vpack.c.b16 %v7765, %v7764
        %v7787 = vpack.c.b16 %v7767, %v7766
        %v7788 = vpack.c.b16 %v7769, %v7768
        %v7789 = vpack.c.b16 %v7771, %v7770
        %v7790 = vpack.c.b16 %v7773, %v7772
        %v7791 = vpack.c.b16 %v7775, %v7774
        %v7795 = vunpack.c.l.b16 %v7035
        %v7796 = vunpack.c.l.b16 %v7036
        %v7797 = vunpack.c.l.b16 %v7037
        %v7798 = vpack.c.b16 %v7796, %v7795
        %v7799 = vpack.c.b16 %v7797, %v7797
        %v7802 = vsel %vm5511, %v7776, 0
        %v7805 = vsel %vm5511, %v7777, 0
        %v7808 = vsel %vm5511, %v7778, 0
        %v7811 = vsel %vm5511, %v7779, 0
        %v7814 = vsel %vm5511, %v7780, 0
        %v7817 = vsel %vm5511, %v7781, 0
        %v7820 = vsel %vm5511, %v7782, 0
        %v7823 = vsel %vm5511, %v7783, 0
        %v7826 = vsel %vm5511, %v7784, 0
        %v7829 = vsel %vm5511, %v7785, 0
        %v7832 = vsel %vm5511, %v7786, 0
        %v7835 = vsel %vm5511, %v7787, 0
        %v7838 = vsel %vm5511, %v7788, 0
        %v7841 = vsel %vm5511, %v7789, 0
        %v7844 = vsel %vm5511, %v7790, 0
        %v7847 = vsel %vm5511, %v7791, 0
        %v7850 = vsel %vm7547, %v7799, 0
        %7852 = vmatprep.subr.bf16.mxu0 0
        %7853 = vmatpush1.bf16.msra.mxu0 0
        %7854 = vmatprep.subr.bf16.mxu0 0
        %7855 = vmatpush1.bf16.msra.mxu0 0
        %7856 = vmatprep.subr.bf16.mxu0 0
        %7857 = vmatpush1.bf16.msra.mxu0 0
        %7858 = vmatprep.subr.bf16.mxu0 0
        %7859 = vmatpush1.bf16.msra.mxu0 0
        %7860 = vmatprep.subr.bf16.mxu0 0
        %7861 = vmatpush1.bf16.msra.mxu0 0
        %7862 = vmatprep.subr.bf16.mxu0 0
        %7863 = vmatpush1.bf16.msra.mxu0 0
        %7864 = vmatprep.subr.bf16.mxu0 0
        %7865 = vmatpush1.bf16.msra.mxu0 %v7850
        %7866 = vmatprep.subr.bf16.mxu0 0
        %7867 = vmatpush1.bf16.msra.mxu0 %v7798
        %7868 = vmatprep.subr.bf16.mxu0 0
        %7869 = vmatpush2.bf16.msra.mxu0 0
        %7870 = vmatprep.subr.bf16.mxu0 0
        %7871 = vmatpush2.bf16.msra.mxu0 0
        %7872 = vmatprep.subr.bf16.mxu0 0
        %7873 = vmatpush2.bf16.msra.mxu0 0
        %7874 = vmatprep.subr.bf16.mxu0 0
        %7875 = vmatpush2.bf16.msra.mxu0 0
        %7876 = vmatprep.subr.bf16.mxu0 0
        %7877 = vmatpush2.bf16.msra.mxu0 0
        %7878 = vmatprep.subr.bf16.mxu0 0
        %7879 = vmatpush2.bf16.msra.mxu0 0
        %7880 = vmatprep.subr.bf16.mxu0 0
        %7881 = vmatpush2.bf16.msra.mxu0 0
        %7882 = vmatprep.subr.bf16.mxu0 0
        %7883 = vmatpush2.bf16.msra.mxu0 0
        %7884 = vmatprep.mubr.bf16.mxu0 0
        %7885 = vmatmul.mubr.bf16.gmra.mxu0 %v7802
        %v7886 = vpop.f32.mrf.mxu0
        %v7887 = vadd.f32 %v7586, %v7886
        %v7888 = vpop.f32.mrf.mxu0
        %v7889 = vpop.f32.mrf.mxu0
        %v7890 = vadd.f32 %v7589, %v7889
        %v7891 = vpop.f32.mrf.mxu0
        %7892 = vmatprep.mubr.bf16.mxu0 0
        %7893 = vmatmul.mubr.bf16.gmra.mxu0 %v7805
        %v7894 = vpop.f32.mrf.mxu0
        %v7895 = vadd.f32 %v7594, %v7894
        %v7896 = vpop.f32.mrf.mxu0
        %v7897 = vpop.f32.mrf.mxu0
        %v7898 = vadd.f32 %v7597, %v7897
        %v7899 = vpop.f32.mrf.mxu0
        %7900 = vmatprep.mubr.bf16.mxu0 0
        %7901 = vmatmul.mubr.bf16.gmra.mxu0 %v7808
        %v7902 = vpop.f32.mrf.mxu0
        %v7903 = vadd.f32 %v7602, %v7902
        %v7904 = vpop.f32.mrf.mxu0
        %v7905 = vpop.f32.mrf.mxu0
        %v7906 = vadd.f32 %v7605, %v7905
        %v7907 = vpop.f32.mrf.mxu0
        %7908 = vmatprep.mubr.bf16.mxu0 0
        %7909 = vmatmul.mubr.bf16.gmra.mxu0 %v7811
        %v7910 = vpop.f32.mrf.mxu0
        %v7911 = vadd.f32 %v7610, %v7910
        %v7912 = vpop.f32.mrf.mxu0
        %v7913 = vpop.f32.mrf.mxu0
        %v7914 = vadd.f32 %v7613, %v7913
        %v7915 = vpop.f32.mrf.mxu0
        %7916 = vmatprep.mubr.bf16.mxu0 0
        %7917 = vmatmul.mubr.bf16.gmra.mxu0 %v7814
        %v7918 = vpop.f32.mrf.mxu0
        %v7919 = vadd.f32 %v7618, %v7918
        %v7920 = vpop.f32.mrf.mxu0
        %v7921 = vpop.f32.mrf.mxu0
        %v7922 = vadd.f32 %v7621, %v7921
        %v7923 = vpop.f32.mrf.mxu0
        %7924 = vmatprep.mubr.bf16.mxu0 0
        %7925 = vmatmul.mubr.bf16.gmra.mxu0 %v7817
        %v7926 = vpop.f32.mrf.mxu0
        %v7927 = vadd.f32 %v7626, %v7926
        %v7928 = vpop.f32.mrf.mxu0
        %v7929 = vpop.f32.mrf.mxu0
        %v7930 = vadd.f32 %v7629, %v7929
        %v7931 = vpop.f32.mrf.mxu0
        %7932 = vmatprep.mubr.bf16.mxu0 0
        %7933 = vmatmul.mubr.bf16.gmra.mxu0 %v7820
        %v7934 = vpop.f32.mrf.mxu0
        %v7935 = vadd.f32 %v7634, %v7934
        %v7936 = vpop.f32.mrf.mxu0
        %v7937 = vpop.f32.mrf.mxu0
        %v7938 = vadd.f32 %v7637, %v7937
        %v7939 = vpop.f32.mrf.mxu0
        %7940 = vmatprep.mubr.bf16.mxu0 0
        %7941 = vmatmul.mubr.bf16.gmra.mxu0 %v7823
        %v7942 = vpop.f32.mrf.mxu0
        %v7943 = vadd.f32 %v7642, %v7942
        %v7944 = vpop.f32.mrf.mxu0
        %v7945 = vpop.f32.mrf.mxu0
        %v7946 = vadd.f32 %v7645, %v7945
        %v7947 = vpop.f32.mrf.mxu0
        %7948 = vmatprep.mubr.bf16.mxu0 0
        %7949 = vmatmul.mubr.bf16.gmra.mxu0 %v7826
        %v7950 = vpop.f32.mrf.mxu0
        %v7951 = vadd.f32 %v7650, %v7950
        %v7952 = vpop.f32.mrf.mxu0
        %v7953 = vpop.f32.mrf.mxu0
        %v7954 = vadd.f32 %v7653, %v7953
        %v7955 = vpop.f32.mrf.mxu0
        %7956 = vmatprep.mubr.bf16.mxu0 0
        %7957 = vmatmul.mubr.bf16.gmra.mxu0 %v7829
        %v7958 = vpop.f32.mrf.mxu0
        %v7959 = vadd.f32 %v7658, %v7958
        %v7960 = vpop.f32.mrf.mxu0
        %v7961 = vpop.f32.mrf.mxu0
        %v7962 = vadd.f32 %v7661, %v7961
        %v7963 = vpop.f32.mrf.mxu0
        %7964 = vmatprep.mubr.bf16.mxu0 0
        %7965 = vmatmul.mubr.bf16.gmra.mxu0 %v7832
        %v7966 = vpop.f32.mrf.mxu0
        %v7967 = vadd.f32 %v7666, %v7966
        %v7968 = vpop.f32.mrf.mxu0
        %v7969 = vpop.f32.mrf.mxu0
        %v7970 = vadd.f32 %v7669, %v7969
        %v7971 = vpop.f32.mrf.mxu0
        %7972 = vmatprep.mubr.bf16.mxu0 0
        %7973 = vmatmul.mubr.bf16.gmra.mxu0 %v7835
        %v7974 = vpop.f32.mrf.mxu0
        %v7975 = vadd.f32 %v7674, %v7974
        %v7976 = vpop.f32.mrf.mxu0
        %v7977 = vpop.f32.mrf.mxu0
        %v7978 = vadd.f32 %v7677, %v7977
        %v7979 = vpop.f32.mrf.mxu0
        %7980 = vmatprep.mubr.bf16.mxu0 0
        %7981 = vmatmul.mubr.bf16.gmra.mxu0 %v7838
        %v7982 = vpop.f32.mrf.mxu0
        %v7983 = vadd.f32 %v7682, %v7982
        %v7984 = vpop.f32.mrf.mxu0
        %v7985 = vpop.f32.mrf.mxu0
        %v7986 = vadd.f32 %v7685, %v7985
        %v7987 = vpop.f32.mrf.mxu0
        %7988 = vmatprep.mubr.bf16.mxu0 0
        %7989 = vmatmul.mubr.bf16.gmra.mxu0 %v7841
        %v7990 = vpop.f32.mrf.mxu0
        %v7991 = vadd.f32 %v7690, %v7990
        %v7992 = vpop.f32.mrf.mxu0
        %v7993 = vpop.f32.mrf.mxu0
        %v7994 = vadd.f32 %v7693, %v7993
        %v7995 = vpop.f32.mrf.mxu0
        %7996 = vmatprep.mubr.bf16.mxu0 0
        %7997 = vmatmul.mubr.bf16.gmra.mxu0 %v7844
        %v7998 = vpop.f32.mrf.mxu0
        %v7999 = vadd.f32 %v7698, %v7998
        %v8000 = vpop.f32.mrf.mxu0
        %v8001 = vpop.f32.mrf.mxu0
        %v8002 = vadd.f32 %v7701, %v8001
        %v8003 = vpop.f32.mrf.mxu0
        %8004 = vmatprep.mubr.bf16.mxu0 0
        %8005 = vmatmul.mubr.bf16.gmra.mxu0 %v7847
        %v8006 = vpop.f32.mrf.mxu0
        %v8007 = vadd.f32 %v7706, %v8006
        %v8008 = vpop.f32.mrf.mxu0
        %v8009 = vpop.f32.mrf.mxu0
        %v8010 = vadd.f32 %v7709, %v8009
        %v8011 = vpop.f32.mrf.mxu0
        %8012 = vdwg.mxu0
        %v8013 = vld [vmem:[#allocation3] sm:$0xe]
        %v8014 = vld [vmem:[#allocation3 + $0xc] sm:$0xe]
        %v8015 = vld [vmem:[#allocation3 + $0x18] sm:$0xe]
        %v8016 = vld [vmem:[#allocation3 + $0x24] sm:$0xe]
        %v8017 = vld [vmem:[#allocation3 + $0x30] sm:$0xe]
        %v8018 = vld [vmem:[#allocation3 + $0x3c] sm:$0xe]
        %v8019 = vld [vmem:[#allocation3 + $0x48] sm:$0xe]
        %v8020 = vld [vmem:[#allocation3 + $0x54] sm:$0xe]
        %v8021 = vld [vmem:[#allocation3 + $0x60] sm:$0xe]
        %v8022 = vld [vmem:[#allocation3 + $0x6c] sm:$0xe]
        %v8023 = vld [vmem:[#allocation3 + $0x78] sm:$0xe]
        %v8024 = vld [vmem:[#allocation3 + $0x84] sm:$0xe]
        %v8025 = vld [vmem:[#allocation3 + $0x90] sm:$0xe]
        %v8026 = vld [vmem:[#allocation3 + $0x9c] sm:$0xe]
        %v8027 = vld [vmem:[#allocation3 + $0xa8] sm:$0xe]
        %v8028 = vld [vmem:[#allocation3 + $0xb4] sm:$0xe]
        %v8061 = vrot.slane %v8013, 5
        %v8062 = vrot.slane %v8061, 4
        %v8063 = vrot.slane %v7004, 5
        %v8064 = vsel %vm1956, %v8062, %v8063
        %v8065 = vrot.slane %v8063, 4
        %v8066 = vrot.slane %v7038, 5
        %v8067 = vsel %vm1956, %v8065, %v8066
        %v8068 = vrot.slane %v8014, 5
        %v8069 = vrot.slane %v8068, 4
        %v8070 = vrot.slane %v7006, 5
        %v8071 = vsel %vm1956, %v8069, %v8070
        %v8072 = vrot.slane %v8070, 4
        %v8073 = vrot.slane %v7039, 5
        %v8074 = vsel %vm1956, %v8072, %v8073
        %v8075 = vrot.slane %v8015, 5
        %v8076 = vrot.slane %v8075, 4
        %v8077 = vrot.slane %v7008, 5
        %v8078 = vsel %vm1956, %v8076, %v8077
        %v8079 = vrot.slane %v8077, 4
        %v8080 = vrot.slane %v7040, 5
        %v8081 = vsel %vm1956, %v8079, %v8080
        %v8082 = vrot.slane %v8016, 5
        %v8083 = vrot.slane %v8082, 4
        %v8084 = vrot.slane %v7010, 5
        %v8085 = vsel %vm1956, %v8083, %v8084
        %v8086 = vrot.slane %v8084, 4
        %v8087 = vrot.slane %v7041, 5
        %v8088 = vsel %vm1956, %v8086, %v8087
        %v8089 = vrot.slane %v8017, 5
        %v8090 = vrot.slane %v8089, 4
        %v8091 = vrot.slane %v7012, 5
        %v8092 = vsel %vm1956, %v8090, %v8091
        %v8093 = vrot.slane %v8091, 4
        %v8094 = vrot.slane %v7042, 5
        %v8095 = vsel %vm1956, %v8093, %v8094
        %v8096 = vrot.slane %v8018, 5
        %v8097 = vrot.slane %v8096, 4
        %v8098 = vrot.slane %v7014, 5
        %v8099 = vsel %vm1956, %v8097, %v8098
        %v8100 = vrot.slane %v8098, 4
        %v8101 = vrot.slane %v7043, 5
        %v8102 = vsel %vm1956, %v8100, %v8101
        %v8103 = vrot.slane %v8019, 5
        %v8104 = vrot.slane %v8103, 4
        %v8105 = vrot.slane %v7016, 5
        %v8106 = vsel %vm1956, %v8104, %v8105
        %v8107 = vrot.slane %v8105, 4
        %v8108 = vrot.slane %v7044, 5
        %v8109 = vsel %vm1956, %v8107, %v8108
        %v8110 = vrot.slane %v8020, 5
        %v8111 = vrot.slane %v8110, 4
        %v8112 = vrot.slane %v7018, 5
        %v8113 = vsel %vm1956, %v8111, %v8112
        %v8114 = vrot.slane %v8112, 4
        %v8115 = vrot.slane %v7045, 5
        %v8116 = vsel %vm1956, %v8114, %v8115
        %v8117 = vrot.slane %v8021, 5
        %v8118 = vrot.slane %v8117, 4
        %v8119 = vrot.slane %v7020, 5
        %v8120 = vsel %vm1956, %v8118, %v8119
        %v8121 = vrot.slane %v8119, 4
        %v8122 = vrot.slane %v7046, 5
        %v8123 = vsel %vm1956, %v8121, %v8122
        %v8124 = vrot.slane %v8022, 5
        %v8125 = vrot.slane %v8124, 4
        %v8126 = vrot.slane %v7022, 5
        %v8127 = vsel %vm1956, %v8125, %v8126
        %v8128 = vrot.slane %v8126, 4
        %v8129 = vrot.slane %v7047, 5
        %v8130 = vsel %vm1956, %v8128, %v8129
        %v8131 = vrot.slane %v8023, 5
        %v8132 = vrot.slane %v8131, 4
        %v8133 = vrot.slane %v7024, 5
        %v8134 = vsel %vm1956, %v8132, %v8133
        %v8135 = vrot.slane %v8133, 4
        %v8136 = vrot.slane %v7048, 5
        %v8137 = vsel %vm1956, %v8135, %v8136
        %v8138 = vrot.slane %v8024, 5
        %v8139 = vrot.slane %v8138, 4
        %v8140 = vrot.slane %v7026, 5
        %v8141 = vsel %vm1956, %v8139, %v8140
        %v8142 = vrot.slane %v8140, 4
        %v8143 = vrot.slane %v7049, 5
        %v8144 = vsel %vm1956, %v8142, %v8143
        %v8145 = vrot.slane %v8025, 5
        %v8146 = vrot.slane %v8145, 4
        %v8147 = vrot.slane %v7028, 5
        %v8148 = vsel %vm1956, %v8146, %v8147
        %v8149 = vrot.slane %v8147, 4
        %v8150 = vrot.slane %v7050, 5
        %v8151 = vsel %vm1956, %v8149, %v8150
        %v8152 = vrot.slane %v8026, 5
        %v8153 = vrot.slane %v8152, 4
        %v8154 = vrot.slane %v7030, 5
        %v8155 = vsel %vm1956, %v8153, %v8154
        %v8156 = vrot.slane %v8154, 4
        %v8157 = vrot.slane %v7051, 5
        %v8158 = vsel %vm1956, %v8156, %v8157
        %v8159 = vrot.slane %v8027, 5
        %v8160 = vrot.slane %v8159, 4
        %v8161 = vrot.slane %v7032, 5
        %v8162 = vsel %vm1956, %v8160, %v8161
        %v8163 = vrot.slane %v8161, 4
        %v8164 = vrot.slane %v7052, 5
        %v8165 = vsel %vm1956, %v8163, %v8164
        %v8166 = vrot.slane %v8028, 5
        %v8167 = vrot.slane %v8166, 4
        %v8168 = vrot.slane %v7034, 5
        %v8169 = vsel %vm1956, %v8167, %v8168
        %v8170 = vrot.slane %v8168, 4
        %v8171 = vrot.slane %v7053, 5
        %v8172 = vsel %vm1956, %v8170, %v8171
        %s8173 = scalar_lea.vmem %s3, 24
        %v8174 = vld [vmem:[%s8173] sm:$0xf]
        %v8175 = vld [vmem:[%s8173 + $0x4] sm:$0xf]
        %v8176 = vld [vmem:[%s8173 + $0x8] sm:$0xf]
        %v8177 = vunpack.c.l.b16 %v8064
        %v8178 = vunpack.c.l.b16 %v8067
        %v8179 = vunpack.c.l.b16 %v8071
        %v8180 = vunpack.c.l.b16 %v8074
        %v8181 = vunpack.c.l.b16 %v8078
        %v8182 = vunpack.c.l.b16 %v8081
        %v8183 = vunpack.c.l.b16 %v8085
        %v8184 = vunpack.c.l.b16 %v8088
        %v8185 = vunpack.c.l.b16 %v8092
        %v8186 = vunpack.c.l.b16 %v8095
        %v8187 = vunpack.c.l.b16 %v8099
        %v8188 = vunpack.c.l.b16 %v8102
        %v8189 = vunpack.c.l.b16 %v8106
        %v8190 = vunpack.c.l.b16 %v8109
        %v8191 = vunpack.c.l.b16 %v8113
        %v8192 = vunpack.c.l.b16 %v8116
        %v8193 = vunpack.c.l.b16 %v8120
        %v8194 = vunpack.c.l.b16 %v8123
        %v8195 = vunpack.c.l.b16 %v8127
        %v8196 = vunpack.c.l.b16 %v8130
        %v8197 = vunpack.c.l.b16 %v8134
        %v8198 = vunpack.c.l.b16 %v8137
        %v8199 = vunpack.c.l.b16 %v8141
        %v8200 = vunpack.c.l.b16 %v8144
        %v8201 = vunpack.c.l.b16 %v8148
        %v8202 = vunpack.c.l.b16 %v8151
        %v8203 = vunpack.c.l.b16 %v8155
        %v8204 = vunpack.c.l.b16 %v8158
        %v8205 = vunpack.c.l.b16 %v8162
        %v8206 = vunpack.c.l.b16 %v8165
        %v8207 = vunpack.c.l.b16 %v8169
        %v8208 = vunpack.c.l.b16 %v8172
        %v8209 = vpack.c.b16 %v8178, %v8177
        %v8210 = vpack.c.b16 %v8180, %v8179
        %v8211 = vpack.c.b16 %v8182, %v8181
        %v8212 = vpack.c.b16 %v8184, %v8183
        %v8213 = vpack.c.b16 %v8186, %v8185
        %v8214 = vpack.c.b16 %v8188, %v8187
        %v8215 = vpack.c.b16 %v8190, %v8189
        %v8216 = vpack.c.b16 %v8192, %v8191
        %v8217 = vpack.c.b16 %v8194, %v8193
        %v8218 = vpack.c.b16 %v8196, %v8195
        %v8219 = vpack.c.b16 %v8198, %v8197
        %v8220 = vpack.c.b16 %v8200, %v8199
        %v8221 = vpack.c.b16 %v8202, %v8201
        %v8222 = vpack.c.b16 %v8204, %v8203
        %v8223 = vpack.c.b16 %v8206, %v8205
        %v8224 = vpack.c.b16 %v8208, %v8207
        %v8228 = vunpack.c.l.b16 %v8174
        %v8229 = vunpack.c.l.b16 %v8175
        %v8230 = vunpack.c.l.b16 %v8176
        %v8231 = vpack.c.b16 %v8229, %v8228
        %v8232 = vpack.c.b16 %v8230, %v8230
        %v8235 = vsel %vm5511, %v8209, 0
        %v8238 = vsel %vm5511, %v8210, 0
        %v8241 = vsel %vm5511, %v8211, 0
        %v8244 = vsel %vm5511, %v8212, 0
        %v8247 = vsel %vm5511, %v8213, 0
        %v8250 = vsel %vm5511, %v8214, 0
        %v8253 = vsel %vm5511, %v8215, 0
        %v8256 = vsel %vm5511, %v8216, 0
        %v8259 = vsel %vm5511, %v8217, 0
        %v8262 = vsel %vm5511, %v8218, 0
        %v8265 = vsel %vm5511, %v8219, 0
        %v8268 = vsel %vm5511, %v8220, 0
        %v8271 = vsel %vm5511, %v8221, 0
        %v8274 = vsel %vm5511, %v8222, 0
        %v8277 = vsel %vm5511, %v8223, 0
        %v8280 = vsel %vm5511, %v8224, 0
        %v8283 = vsel %vm7547, %v8232, 0
        %8285 = vmatprep.subr.bf16.mxu0 0
        %8286 = vmatpush1.bf16.msra.mxu0 0
        %8287 = vmatprep.subr.bf16.mxu0 0
        %8288 = vmatpush1.bf16.msra.mxu0 0
        %8289 = vmatprep.subr.bf16.mxu0 0
        %8290 = vmatpush1.bf16.msra.mxu0 0
        %8291 = vmatprep.subr.bf16.mxu0 0
        %8292 = vmatpush1.bf16.msra.mxu0 0
        %8293 = vmatprep.subr.bf16.mxu0 0
        %8294 = vmatpush1.bf16.msra.mxu0 0
        %8295 = vmatprep.subr.bf16.mxu0 0
        %8296 = vmatpush1.bf16.msra.mxu0 0
        %8297 = vmatprep.subr.bf16.mxu0 0
        %8298 = vmatpush1.bf16.msra.mxu0 %v8283
        %8299 = vmatprep.subr.bf16.mxu0 0
        %8300 = vmatpush1.bf16.msra.mxu0 %v8231
        %8301 = vmatprep.subr.bf16.mxu0 0
        %8302 = vmatpush2.bf16.msra.mxu0 0
        %8303 = vmatprep.subr.bf16.mxu0 0
        %8304 = vmatpush2.bf16.msra.mxu0 0
        %8305 = vmatprep.subr.bf16.mxu0 0
        %8306 = vmatpush2.bf16.msra.mxu0 0
        %8307 = vmatprep.subr.bf16.mxu0 0
        %8308 = vmatpush2.bf16.msra.mxu0 0
        %8309 = vmatprep.subr.bf16.mxu0 0
        %8310 = vmatpush2.bf16.msra.mxu0 0
        %8311 = vmatprep.subr.bf16.mxu0 0
        %8312 = vmatpush2.bf16.msra.mxu0 0
        %8313 = vmatprep.subr.bf16.mxu0 0
        %8314 = vmatpush2.bf16.msra.mxu0 0
        %8315 = vmatprep.subr.bf16.mxu0 0
        %8316 = vmatpush2.bf16.msra.mxu0 0
        %8317 = vmatprep.mubr.bf16.mxu0 0
        %8318 = vmatmul.mubr.bf16.gmra.mxu0 %v8235
        %v8319 = vpop.f32.mrf.mxu0
        %v8320 = vadd.f32 0.0, %v8319
        %v8321 = vpop.f32.mrf.mxu0
        %v8322 = vpop.f32.mrf.mxu0
        %v8323 = vadd.f32 0.0, %v8322
        %v8324 = vpop.f32.mrf.mxu0
        %8325 = vmatprep.mubr.bf16.mxu0 0
        %8326 = vmatmul.mubr.bf16.gmra.mxu0 %v8238
        %v8327 = vpop.f32.mrf.mxu0
        %v8328 = vadd.f32 0.0, %v8327
        %v8329 = vpop.f32.mrf.mxu0
        %v8330 = vpop.f32.mrf.mxu0
        %v8331 = vadd.f32 0.0, %v8330
        %v8332 = vpop.f32.mrf.mxu0
        %8333 = vmatprep.mubr.bf16.mxu0 0
        %8334 = vmatmul.mubr.bf16.gmra.mxu0 %v8241
        %v8335 = vpop.f32.mrf.mxu0
        %v8336 = vadd.f32 0.0, %v8335
        %v8337 = vpop.f32.mrf.mxu0
        %v8338 = vpop.f32.mrf.mxu0
        %v8339 = vadd.f32 0.0, %v8338
        %v8340 = vpop.f32.mrf.mxu0
        %8341 = vmatprep.mubr.bf16.mxu0 0
        %8342 = vmatmul.mubr.bf16.gmra.mxu0 %v8244
        %v8343 = vpop.f32.mrf.mxu0
        %v8344 = vadd.f32 0.0, %v8343
        %v8345 = vpop.f32.mrf.mxu0
        %v8346 = vpop.f32.mrf.mxu0
        %v8347 = vadd.f32 0.0, %v8346
        %v8348 = vpop.f32.mrf.mxu0
        %8349 = vmatprep.mubr.bf16.mxu0 0
        %8350 = vmatmul.mubr.bf16.gmra.mxu0 %v8247
        %v8351 = vpop.f32.mrf.mxu0
        %v8352 = vadd.f32 0.0, %v8351
        %v8353 = vpop.f32.mrf.mxu0
        %v8354 = vpop.f32.mrf.mxu0
        %v8355 = vadd.f32 0.0, %v8354
        %v8356 = vpop.f32.mrf.mxu0
        %8357 = vmatprep.mubr.bf16.mxu0 0
        %8358 = vmatmul.mubr.bf16.gmra.mxu0 %v8250
        %v8359 = vpop.f32.mrf.mxu0
        %v8360 = vadd.f32 0.0, %v8359
        %v8361 = vpop.f32.mrf.mxu0
        %v8362 = vpop.f32.mrf.mxu0
        %v8363 = vadd.f32 0.0, %v8362
        %v8364 = vpop.f32.mrf.mxu0
        %8365 = vmatprep.mubr.bf16.mxu0 0
        %8366 = vmatmul.mubr.bf16.gmra.mxu0 %v8253
        %v8367 = vpop.f32.mrf.mxu0
        %v8368 = vadd.f32 0.0, %v8367
        %v8369 = vpop.f32.mrf.mxu0
        %v8370 = vpop.f32.mrf.mxu0
        %v8371 = vadd.f32 0.0, %v8370
        %v8372 = vpop.f32.mrf.mxu0
        %8373 = vmatprep.mubr.bf16.mxu0 0
        %8374 = vmatmul.mubr.bf16.gmra.mxu0 %v8256
        %v8375 = vpop.f32.mrf.mxu0
        %v8376 = vadd.f32 0.0, %v8375
        %v8377 = vpop.f32.mrf.mxu0
        %v8378 = vpop.f32.mrf.mxu0
        %v8379 = vadd.f32 0.0, %v8378
        %v8380 = vpop.f32.mrf.mxu0
        %8381 = vmatprep.mubr.bf16.mxu0 0
        %8382 = vmatmul.mubr.bf16.gmra.mxu0 %v8259
        %v8383 = vpop.f32.mrf.mxu0
        %v8384 = vadd.f32 0.0, %v8383
        %v8385 = vpop.f32.mrf.mxu0
        %v8386 = vpop.f32.mrf.mxu0
        %v8387 = vadd.f32 0.0, %v8386
        %v8388 = vpop.f32.mrf.mxu0
        %8389 = vmatprep.mubr.bf16.mxu0 0
        %8390 = vmatmul.mubr.bf16.gmra.mxu0 %v8262
        %v8391 = vpop.f32.mrf.mxu0
        %v8392 = vadd.f32 0.0, %v8391
        %v8393 = vpop.f32.mrf.mxu0
        %v8394 = vpop.f32.mrf.mxu0
        %v8395 = vadd.f32 0.0, %v8394
        %v8396 = vpop.f32.mrf.mxu0
        %8397 = vmatprep.mubr.bf16.mxu0 0
        %8398 = vmatmul.mubr.bf16.gmra.mxu0 %v8265
        %v8399 = vpop.f32.mrf.mxu0
        %v8400 = vadd.f32 0.0, %v8399
        %v8401 = vpop.f32.mrf.mxu0
        %v8402 = vpop.f32.mrf.mxu0
        %v8403 = vadd.f32 0.0, %v8402
        %v8404 = vpop.f32.mrf.mxu0
        %8405 = vmatprep.mubr.bf16.mxu0 0
        %8406 = vmatmul.mubr.bf16.gmra.mxu0 %v8268
        %v8407 = vpop.f32.mrf.mxu0
        %v8408 = vadd.f32 0.0, %v8407
        %v8409 = vpop.f32.mrf.mxu0
        %v8410 = vpop.f32.mrf.mxu0
        %v8411 = vadd.f32 0.0, %v8410
        %v8412 = vpop.f32.mrf.mxu0
        %8413 = vmatprep.mubr.bf16.mxu0 0
        %8414 = vmatmul.mubr.bf16.gmra.mxu0 %v8271
        %v8415 = vpop.f32.mrf.mxu0
        %v8416 = vadd.f32 0.0, %v8415
        %v8417 = vpop.f32.mrf.mxu0
        %v8418 = vpop.f32.mrf.mxu0
        %v8419 = vadd.f32 0.0, %v8418
        %v8420 = vpop.f32.mrf.mxu0
        %8421 = vmatprep.mubr.bf16.mxu0 0
        %8422 = vmatmul.mubr.bf16.gmra.mxu0 %v8274
        %v8423 = vpop.f32.mrf.mxu0
        %v8424 = vadd.f32 0.0, %v8423
        %v8425 = vpop.f32.mrf.mxu0
        %v8426 = vpop.f32.mrf.mxu0
        %v8427 = vadd.f32 0.0, %v8426
        %v8428 = vpop.f32.mrf.mxu0
        %8429 = vmatprep.mubr.bf16.mxu0 0
        %8430 = vmatmul.mubr.bf16.gmra.mxu0 %v8277
        %v8431 = vpop.f32.mrf.mxu0
        %v8432 = vadd.f32 0.0, %v8431
        %v8433 = vpop.f32.mrf.mxu0
        %v8434 = vpop.f32.mrf.mxu0
        %v8435 = vadd.f32 0.0, %v8434
        %v8436 = vpop.f32.mrf.mxu0
        %8437 = vmatprep.mubr.bf16.mxu0 0
        %8438 = vmatmul.mubr.bf16.gmra.mxu0 %v8280
        %v8439 = vpop.f32.mrf.mxu0
        %v8440 = vadd.f32 0.0, %v8439
        %v8441 = vpop.f32.mrf.mxu0
        %v8442 = vpop.f32.mrf.mxu0
        %v8443 = vadd.f32 0.0, %v8442
        %v8444 = vpop.f32.mrf.mxu0
        %8445 = vdwg.mxu0
        %v8446 = vadd.f32 %v7887, %v8320
        %v8447 = vadd.f32 %v7890, %v8323
        %v8448 = vadd.f32 %v7895, %v8328
        %v8449 = vadd.f32 %v7898, %v8331
        %v8450 = vadd.f32 %v7903, %v8336
        %v8451 = vadd.f32 %v7906, %v8339
        %v8452 = vadd.f32 %v7911, %v8344
        %v8453 = vadd.f32 %v7914, %v8347
        %v8454 = vadd.f32 %v7919, %v8352
        %v8455 = vadd.f32 %v7922, %v8355
        %v8456 = vadd.f32 %v7927, %v8360
        %v8457 = vadd.f32 %v7930, %v8363
        %v8458 = vadd.f32 %v7935, %v8368
        %v8459 = vadd.f32 %v7938, %v8371
        %v8460 = vadd.f32 %v7943, %v8376
        %v8461 = vadd.f32 %v7946, %v8379
        %v8462 = vadd.f32 %v7951, %v8384
        %v8463 = vadd.f32 %v7954, %v8387
        %v8464 = vadd.f32 %v7959, %v8392
        %v8465 = vadd.f32 %v7962, %v8395
        %v8466 = vadd.f32 %v7967, %v8400
        %v8467 = vadd.f32 %v7970, %v8403
        %v8468 = vadd.f32 %v7975, %v8408
        %v8469 = vadd.f32 %v7978, %v8411
        %v8470 = vadd.f32 %v7983, %v8416
        %v8471 = vadd.f32 %v7986, %v8419
        %v8472 = vadd.f32 %v7991, %v8424
        %v8473 = vadd.f32 %v7994, %v8427
        %v8474 = vadd.f32 %v7999, %v8432
        %v8475 = vadd.f32 %v8002, %v8435
        %v8476 = vadd.f32 %v8007, %v8440
        %v8477 = vadd.f32 %v8010, %v8443
        %v8478 = vld [vmem:[%s6888] sm:$0xf]
        %v8479 = vld [vmem:[%s6888 + $0x4] sm:$0xf]
        %v8480 = vld [vmem:[%s6888 + $0xc] sm:$0xf]
        %v8481 = vld [vmem:[%s6888 + $0x10] sm:$0xf]
        %v8482 = vld [vmem:[%s6888 + $0x18] sm:$0xf]
        %v8483 = vld [vmem:[%s6888 + $0x1c] sm:$0xf]
        %v8484 = vld [vmem:[%s6888 + $0x24] sm:$0xf]
        %v8485 = vld [vmem:[%s6888 + $0x28] sm:$0xf]
        %v8486 = vld [vmem:[%s6888 + $0x30] sm:$0xf]
        %v8487 = vld [vmem:[%s6888 + $0x34] sm:$0xf]
        %v8488 = vld [vmem:[%s6888 + $0x3c] sm:$0xf]
        %v8489 = vld [vmem:[%s6888 + $0x40] sm:$0xf]
        %v8490 = vld [vmem:[%s6888 + $0x48] sm:$0xf]
        %v8491 = vld [vmem:[%s6888 + $0x4c] sm:$0xf]
        %v8492 = vld [vmem:[%s6888 + $0x54] sm:$0xf]
        %v8493 = vld [vmem:[%s6888 + $0x58] sm:$0xf]
        %v8494 = vld [vmem:[%s6888 + $0x60] sm:$0xf]
        %v8495 = vld [vmem:[%s6888 + $0x64] sm:$0xf]
        %v8496 = vld [vmem:[%s6888 + $0x6c] sm:$0xf]
        %v8497 = vld [vmem:[%s6888 + $0x70] sm:$0xf]
        %v8498 = vld [vmem:[%s6888 + $0x78] sm:$0xf]
        %v8499 = vld [vmem:[%s6888 + $0x7c] sm:$0xf]
        %v8500 = vld [vmem:[%s6888 + $0x84] sm:$0xf]
        %v8501 = vld [vmem:[%s6888 + $0x88] sm:$0xf]
        %v8502 = vld [vmem:[%s6888 + $0x90] sm:$0xf]
        %v8503 = vld [vmem:[%s6888 + $0x94] sm:$0xf]
        %v8504 = vld [vmem:[%s6888 + $0x9c] sm:$0xf]
        %v8505 = vld [vmem:[%s6888 + $0xa0] sm:$0xf]
        %v8506 = vld [vmem:[%s6888 + $0xa8] sm:$0xf]
        %v8507 = vld [vmem:[%s6888 + $0xac] sm:$0xf]
        %v8508 = vld [vmem:[%s6888 + $0xb4] sm:$0xf]
        %v8509 = vld [vmem:[%s6888 + $0xb8] sm:$0xf]
        %s8510 = scalar_lea.vmem %s3, 36
        %v8511 = vld [vmem:[%s8510] sm:$0xf]
        %v8512 = vld [vmem:[%s8510 + $0x4] sm:$0xf]
        %v8513 = vld [vmem:[%s8510 + $0x8] sm:$0xf]
        %v8546 = vunpack.c.l.b16 %v8478
        %v8547 = vunpack.c.l.b16 %v8479
        %v8548 = vunpack.c.l.b16 %v8480
        %v8549 = vunpack.c.l.b16 %v8481
        %v8550 = vunpack.c.l.b16 %v8482
        %v8551 = vunpack.c.l.b16 %v8483
        %v8552 = vunpack.c.l.b16 %v8484
        %v8553 = vunpack.c.l.b16 %v8485
        %v8554 = vunpack.c.l.b16 %v8486
        %v8555 = vunpack.c.l.b16 %v8487
        %v8556 = vunpack.c.l.b16 %v8488
        %v8557 = vunpack.c.l.b16 %v8489
        %v8558 = vunpack.c.l.b16 %v8490
        %v8559 = vunpack.c.l.b16 %v8491
        %v8560 = vunpack.c.l.b16 %v8492
        %v8561 = vunpack.c.l.b16 %v8493
        %v8562 = vunpack.c.l.b16 %v8494
        %v8563 = vunpack.c.l.b16 %v8495
        %v8564 = vunpack.c.l.b16 %v8496
        %v8565 = vunpack.c.l.b16 %v8497
        %v8566 = vunpack.c.l.b16 %v8498
        %v8567 = vunpack.c.l.b16 %v8499
        %v8568 = vunpack.c.l.b16 %v8500
        %v8569 = vunpack.c.l.b16 %v8501
        %v8570 = vunpack.c.l.b16 %v8502
        %v8571 = vunpack.c.l.b16 %v8503
        %v8572 = vunpack.c.l.b16 %v8504
        %v8573 = vunpack.c.l.b16 %v8505
        %v8574 = vunpack.c.l.b16 %v8506
        %v8575 = vunpack.c.l.b16 %v8507
        %v8576 = vunpack.c.l.b16 %v8508
        %v8577 = vunpack.c.l.b16 %v8509
        %v8578 = vpack.c.b16 %v8547, %v8546
        %v8579 = vpack.c.b16 %v8549, %v8548
        %v8580 = vpack.c.b16 %v8551, %v8550
        %v8581 = vpack.c.b16 %v8553, %v8552
        %v8582 = vpack.c.b16 %v8555, %v8554
        %v8583 = vpack.c.b16 %v8557, %v8556
        %v8584 = vpack.c.b16 %v8559, %v8558
        %v8585 = vpack.c.b16 %v8561, %v8560
        %v8586 = vpack.c.b16 %v8563, %v8562
        %v8587 = vpack.c.b16 %v8565, %v8564
        %v8588 = vpack.c.b16 %v8567, %v8566
        %v8589 = vpack.c.b16 %v8569, %v8568
        %v8590 = vpack.c.b16 %v8571, %v8570
        %v8591 = vpack.c.b16 %v8573, %v8572
        %v8592 = vpack.c.b16 %v8575, %v8574
        %v8593 = vpack.c.b16 %v8577, %v8576
        %v8597 = vunpack.c.l.b16 %v8511
        %v8598 = vunpack.c.l.b16 %v8512
        %v8599 = vunpack.c.l.b16 %v8513
        %v8600 = vpack.c.b16 %v8598, %v8597
        %v8601 = vpack.c.b16 %v8599, %v8599
        %v8604 = vsel %vm5511, %v8578, 0
        %v8607 = vsel %vm5511, %v8579, 0
        %v8610 = vsel %vm5511, %v8580, 0
        %v8613 = vsel %vm5511, %v8581, 0
        %v8616 = vsel %vm5511, %v8582, 0
        %v8619 = vsel %vm5511, %v8583, 0
        %v8622 = vsel %vm5511, %v8584, 0
        %v8625 = vsel %vm5511, %v8585, 0
        %v8628 = vsel %vm5511, %v8586, 0
        %v8631 = vsel %vm5511, %v8587, 0
        %v8634 = vsel %vm5511, %v8588, 0
        %v8637 = vsel %vm5511, %v8589, 0
        %v8640 = vsel %vm5511, %v8590, 0
        %v8643 = vsel %vm5511, %v8591, 0
        %v8646 = vsel %vm5511, %v8592, 0
        %v8649 = vsel %vm5511, %v8593, 0
        %v8652 = vsel %vm7547, %v8601, 0
        %8654 = vmatprep.subr.bf16.mxu0 0
        %8655 = vmatpush1.bf16.msra.mxu0 0
        %8656 = vmatprep.subr.bf16.mxu0 0
        %8657 = vmatpush1.bf16.msra.mxu0 0
        %8658 = vmatprep.subr.bf16.mxu0 0
        %8659 = vmatpush1.bf16.msra.mxu0 0
        %8660 = vmatprep.subr.bf16.mxu0 0
        %8661 = vmatpush1.bf16.msra.mxu0 0
        %8662 = vmatprep.subr.bf16.mxu0 0
        %8663 = vmatpush1.bf16.msra.mxu0 0
        %8664 = vmatprep.subr.bf16.mxu0 0
        %8665 = vmatpush1.bf16.msra.mxu0 0
        %8666 = vmatprep.subr.bf16.mxu0 0
        %8667 = vmatpush1.bf16.msra.mxu0 %v8652
        %8668 = vmatprep.subr.bf16.mxu0 0
        %8669 = vmatpush1.bf16.msra.mxu0 %v8600
        %8670 = vmatprep.subr.bf16.mxu0 0
        %8671 = vmatpush2.bf16.msra.mxu0 0
        %8672 = vmatprep.subr.bf16.mxu0 0
        %8673 = vmatpush2.bf16.msra.mxu0 0
        %8674 = vmatprep.subr.bf16.mxu0 0
        %8675 = vmatpush2.bf16.msra.mxu0 0
        %8676 = vmatprep.subr.bf16.mxu0 0
        %8677 = vmatpush2.bf16.msra.mxu0 0
        %8678 = vmatprep.subr.bf16.mxu0 0
        %8679 = vmatpush2.bf16.msra.mxu0 0
        %8680 = vmatprep.subr.bf16.mxu0 0
        %8681 = vmatpush2.bf16.msra.mxu0 0
        %8682 = vmatprep.subr.bf16.mxu0 0
        %8683 = vmatpush2.bf16.msra.mxu0 0
        %8684 = vmatprep.subr.bf16.mxu0 0
        %8685 = vmatpush2.bf16.msra.mxu0 0
        %8686 = vmatprep.mubr.bf16.mxu0 0
        %8687 = vmatmul.mubr.bf16.gmra.mxu0 %v8604
        %v8688 = vpop.f32.mrf.mxu0
        %v8689 = vadd.f32 0.0, %v8688
        %v8690 = vpop.f32.mrf.mxu0
        %v8691 = vpop.f32.mrf.mxu0
        %v8692 = vadd.f32 0.0, %v8691
        %v8693 = vpop.f32.mrf.mxu0
        %8694 = vmatprep.mubr.bf16.mxu0 0
        %8695 = vmatmul.mubr.bf16.gmra.mxu0 %v8607
        %v8696 = vpop.f32.mrf.mxu0
        %v8697 = vadd.f32 0.0, %v8696
        %v8698 = vpop.f32.mrf.mxu0
        %v8699 = vpop.f32.mrf.mxu0
        %v8700 = vadd.f32 0.0, %v8699
        %v8701 = vpop.f32.mrf.mxu0
        %8702 = vmatprep.mubr.bf16.mxu0 0
        %8703 = vmatmul.mubr.bf16.gmra.mxu0 %v8610
        %v8704 = vpop.f32.mrf.mxu0
        %v8705 = vadd.f32 0.0, %v8704
        %v8706 = vpop.f32.mrf.mxu0
        %v8707 = vpop.f32.mrf.mxu0
        %v8708 = vadd.f32 0.0, %v8707
        %v8709 = vpop.f32.mrf.mxu0
        %8710 = vmatprep.mubr.bf16.mxu0 0
        %8711 = vmatmul.mubr.bf16.gmra.mxu0 %v8613
        %v8712 = vpop.f32.mrf.mxu0
        %v8713 = vadd.f32 0.0, %v8712
        %v8714 = vpop.f32.mrf.mxu0
        %v8715 = vpop.f32.mrf.mxu0
        %v8716 = vadd.f32 0.0, %v8715
        %v8717 = vpop.f32.mrf.mxu0
        %8718 = vmatprep.mubr.bf16.mxu0 0
        %8719 = vmatmul.mubr.bf16.gmra.mxu0 %v8616
        %v8720 = vpop.f32.mrf.mxu0
        %v8721 = vadd.f32 0.0, %v8720
        %v8722 = vpop.f32.mrf.mxu0
        %v8723 = vpop.f32.mrf.mxu0
        %v8724 = vadd.f32 0.0, %v8723
        %v8725 = vpop.f32.mrf.mxu0
        %8726 = vmatprep.mubr.bf16.mxu0 0
        %8727 = vmatmul.mubr.bf16.gmra.mxu0 %v8619
        %v8728 = vpop.f32.mrf.mxu0
        %v8729 = vadd.f32 0.0, %v8728
        %v8730 = vpop.f32.mrf.mxu0
        %v8731 = vpop.f32.mrf.mxu0
        %v8732 = vadd.f32 0.0, %v8731
        %v8733 = vpop.f32.mrf.mxu0
        %8734 = vmatprep.mubr.bf16.mxu0 0
        %8735 = vmatmul.mubr.bf16.gmra.mxu0 %v8622
        %v8736 = vpop.f32.mrf.mxu0
        %v8737 = vadd.f32 0.0, %v8736
        %v8738 = vpop.f32.mrf.mxu0
        %v8739 = vpop.f32.mrf.mxu0
        %v8740 = vadd.f32 0.0, %v8739
        %v8741 = vpop.f32.mrf.mxu0
        %8742 = vmatprep.mubr.bf16.mxu0 0
        %8743 = vmatmul.mubr.bf16.gmra.mxu0 %v8625
        %v8744 = vpop.f32.mrf.mxu0
        %v8745 = vadd.f32 0.0, %v8744
        %v8746 = vpop.f32.mrf.mxu0
        %v8747 = vpop.f32.mrf.mxu0
        %v8748 = vadd.f32 0.0, %v8747
        %v8749 = vpop.f32.mrf.mxu0
        %8750 = vmatprep.mubr.bf16.mxu0 0
        %8751 = vmatmul.mubr.bf16.gmra.mxu0 %v8628
        %v8752 = vpop.f32.mrf.mxu0
        %v8753 = vadd.f32 0.0, %v8752
        %v8754 = vpop.f32.mrf.mxu0
        %v8755 = vpop.f32.mrf.mxu0
        %v8756 = vadd.f32 0.0, %v8755
        %v8757 = vpop.f32.mrf.mxu0
        %8758 = vmatprep.mubr.bf16.mxu0 0
        %8759 = vmatmul.mubr.bf16.gmra.mxu0 %v8631
        %v8760 = vpop.f32.mrf.mxu0
        %v8761 = vadd.f32 0.0, %v8760
        %v8762 = vpop.f32.mrf.mxu0
        %v8763 = vpop.f32.mrf.mxu0
        %v8764 = vadd.f32 0.0, %v8763
        %v8765 = vpop.f32.mrf.mxu0
        %8766 = vmatprep.mubr.bf16.mxu0 0
        %8767 = vmatmul.mubr.bf16.gmra.mxu0 %v8634
        %v8768 = vpop.f32.mrf.mxu0
        %v8769 = vadd.f32 0.0, %v8768
        %v8770 = vpop.f32.mrf.mxu0
        %v8771 = vpop.f32.mrf.mxu0
        %v8772 = vadd.f32 0.0, %v8771
        %v8773 = vpop.f32.mrf.mxu0
        %8774 = vmatprep.mubr.bf16.mxu0 0
        %8775 = vmatmul.mubr.bf16.gmra.mxu0 %v8637
        %v8776 = vpop.f32.mrf.mxu0
        %v8777 = vadd.f32 0.0, %v8776
        %v8778 = vpop.f32.mrf.mxu0
        %v8779 = vpop.f32.mrf.mxu0
        %v8780 = vadd.f32 0.0, %v8779
        %v8781 = vpop.f32.mrf.mxu0
        %8782 = vmatprep.mubr.bf16.mxu0 0
        %8783 = vmatmul.mubr.bf16.gmra.mxu0 %v8640
        %v8784 = vpop.f32.mrf.mxu0
        %v8785 = vadd.f32 0.0, %v8784
        %v8786 = vpop.f32.mrf.mxu0
        %v8787 = vpop.f32.mrf.mxu0
        %v8788 = vadd.f32 0.0, %v8787
        %v8789 = vpop.f32.mrf.mxu0
        %8790 = vmatprep.mubr.bf16.mxu0 0
        %8791 = vmatmul.mubr.bf16.gmra.mxu0 %v8643
        %v8792 = vpop.f32.mrf.mxu0
        %v8793 = vadd.f32 0.0, %v8792
        %v8794 = vpop.f32.mrf.mxu0
        %v8795 = vpop.f32.mrf.mxu0
        %v8796 = vadd.f32 0.0, %v8795
        %v8797 = vpop.f32.mrf.mxu0
        %8798 = vmatprep.mubr.bf16.mxu0 0
        %8799 = vmatmul.mubr.bf16.gmra.mxu0 %v8646
        %v8800 = vpop.f32.mrf.mxu0
        %v8801 = vadd.f32 0.0, %v8800
        %v8802 = vpop.f32.mrf.mxu0
        %v8803 = vpop.f32.mrf.mxu0
        %v8804 = vadd.f32 0.0, %v8803
        %v8805 = vpop.f32.mrf.mxu0
        %8806 = vmatprep.mubr.bf16.mxu0 0
        %8807 = vmatmul.mubr.bf16.gmra.mxu0 %v8649
        %v8808 = vpop.f32.mrf.mxu0
        %v8809 = vadd.f32 0.0, %v8808
        %v8810 = vpop.f32.mrf.mxu0
        %v8811 = vpop.f32.mrf.mxu0
        %v8812 = vadd.f32 0.0, %v8811
        %v8813 = vpop.f32.mrf.mxu0
        %8814 = vdwg.mxu0
        %v8815 = vadd.f32 %v8446, %v8689
        %v8816 = vadd.f32 %v8447, %v8692
        %v8817 = vadd.f32 %v8448, %v8697
        %v8818 = vadd.f32 %v8449, %v8700
        %v8819 = vadd.f32 %v8450, %v8705
        %v8820 = vadd.f32 %v8451, %v8708
        %v8821 = vadd.f32 %v8452, %v8713
        %v8822 = vadd.f32 %v8453, %v8716
        %v8823 = vadd.f32 %v8454, %v8721
        %v8824 = vadd.f32 %v8455, %v8724
        %v8825 = vadd.f32 %v8456, %v8729
        %v8826 = vadd.f32 %v8457, %v8732
        %v8827 = vadd.f32 %v8458, %v8737
        %v8828 = vadd.f32 %v8459, %v8740
        %v8829 = vadd.f32 %v8460, %v8745
        %v8830 = vadd.f32 %v8461, %v8748
        %v8831 = vadd.f32 %v8462, %v8753
        %v8832 = vadd.f32 %v8463, %v8756
        %v8833 = vadd.f32 %v8464, %v8761
        %v8834 = vadd.f32 %v8465, %v8764
        %v8835 = vadd.f32 %v8466, %v8769
        %v8836 = vadd.f32 %v8467, %v8772
        %v8837 = vadd.f32 %v8468, %v8777
        %v8838 = vadd.f32 %v8469, %v8780
        %v8839 = vadd.f32 %v8470, %v8785
        %v8840 = vadd.f32 %v8471, %v8788
        %v8841 = vadd.f32 %v8472, %v8793
        %v8842 = vadd.f32 %v8473, %v8796
        %v8843 = vadd.f32 %v8474, %v8801
        %v8844 = vadd.f32 %v8475, %v8804
        %v8845 = vadd.f32 %v8476, %v8809
        %v8846 = vadd.f32 %v8477, %v8812
        %v8847 = vld [vmem:[%s6888] sm:$0xf]
        %v8848 = vld [vmem:[%s6888 + $0x4] sm:$0xf]
        %v8849 = vld [vmem:[%s6888 + $0x8] sm:$0x1]
        %v8850 = vld [vmem:[%s6888 + $0xc] sm:$0xf]
        %v8851 = vld [vmem:[%s6888 + $0x10] sm:$0xf]
        %v8852 = vld [vmem:[%s6888 + $0x14] sm:$0x1]
        %v8853 = vld [vmem:[%s6888 + $0x18] sm:$0xf]
        %v8854 = vld [vmem:[%s6888 + $0x1c] sm:$0xf]
        %v8855 = vld [vmem:[%s6888 + $0x20] sm:$0x1]
        %v8856 = vld [vmem:[%s6888 + $0x24] sm:$0xf]
        %v8857 = vld [vmem:[%s6888 + $0x28] sm:$0xf]
        %v8858 = vld [vmem:[%s6888 + $0x2c] sm:$0x1]
        %v8859 = vld [vmem:[%s6888 + $0x30] sm:$0xf]
        %v8860 = vld [vmem:[%s6888 + $0x34] sm:$0xf]
        %v8861 = vld [vmem:[%s6888 + $0x38] sm:$0x1]
        %v8862 = vld [vmem:[%s6888 + $0x3c] sm:$0xf]
        %v8863 = vld [vmem:[%s6888 + $0x40] sm:$0xf]
        %v8864 = vld [vmem:[%s6888 + $0x44] sm:$0x1]
        %v8865 = vld [vmem:[%s6888 + $0x48] sm:$0xf]
        %v8866 = vld [vmem:[%s6888 + $0x4c] sm:$0xf]
        %v8867 = vld [vmem:[%s6888 + $0x50] sm:$0x1]
        %v8868 = vld [vmem:[%s6888 + $0x54] sm:$0xf]
        %v8869 = vld [vmem:[%s6888 + $0x58] sm:$0xf]
        %v8870 = vld [vmem:[%s6888 + $0x5c] sm:$0x1]
        %v8871 = vld [vmem:[%s6888 + $0x60] sm:$0xf]
        %v8872 = vld [vmem:[%s6888 + $0x64] sm:$0xf]
        %v8873 = vld [vmem:[%s6888 + $0x68] sm:$0x1]
        %v8874 = vld [vmem:[%s6888 + $0x6c] sm:$0xf]
        %v8875 = vld [vmem:[%s6888 + $0x70] sm:$0xf]
        %v8876 = vld [vmem:[%s6888 + $0x74] sm:$0x1]
        %v8877 = vld [vmem:[%s6888 + $0x78] sm:$0xf]
        %v8878 = vld [vmem:[%s6888 + $0x7c] sm:$0xf]
        %v8879 = vld [vmem:[%s6888 + $0x80] sm:$0x1]
        %v8880 = vld [vmem:[%s6888 + $0x84] sm:$0xf]
        %v8881 = vld [vmem:[%s6888 + $0x88] sm:$0xf]
        %v8882 = vld [vmem:[%s6888 + $0x8c] sm:$0x1]
        %v8883 = vld [vmem:[%s6888 + $0x90] sm:$0xf]
        %v8884 = vld [vmem:[%s6888 + $0x94] sm:$0xf]
        %v8885 = vld [vmem:[%s6888 + $0x98] sm:$0x1]
        %v8886 = vld [vmem:[%s6888 + $0x9c] sm:$0xf]
        %v8887 = vld [vmem:[%s6888 + $0xa0] sm:$0xf]
        %v8888 = vld [vmem:[%s6888 + $0xa4] sm:$0x1]
        %v8889 = vld [vmem:[%s6888 + $0xa8] sm:$0xf]
        %v8890 = vld [vmem:[%s6888 + $0xac] sm:$0xf]
        %v8891 = vld [vmem:[%s6888 + $0xb0] sm:$0x1]
        %v8892 = vld [vmem:[%s6888 + $0xb4] sm:$0xf]
        %v8893 = vld [vmem:[%s6888 + $0xb8] sm:$0xf]
        %v8894 = vld [vmem:[%s6888 + $0xbc] sm:$0x1]
        %v8896 = vshrl.u32 %v8847, 16
        %v8898 = vrot.slane %v8896, 4
        %v8899 = vshll.u32 %v8847, 16
        %v8901 = vrot.slane %v8899, 5
        %v8902 = vor.u32 %v8898, %v8901
        %v8903 = vrot.slane %v8902, 4
        %v8905 = vshll.u32 %v8848, 16
        %v8907 = vrot.slane %v8905, 5
        %v8908 = vsel %vm962, %v8903, %v8907
        %v8909 = vshrl.u32 %v8848, 16
        %v8911 = vrot.slane %v8909, 4
        %v8912 = vor.u32 %v8911, %v8907
        %v8913 = vrot.slane %v8912, 4
        %v8915 = vshll.u32 %v8849, 16
        %v8917 = vrot.slane %v8915, 5
        %v8918 = vsel %vm962, %v8913, %v8917
        %v8920 = vshrl.u32 %v8850, 16
        %v8922 = vrot.slane %v8920, 4
        %v8923 = vshll.u32 %v8850, 16
        %v8925 = vrot.slane %v8923, 5
        %v8926 = vor.u32 %v8922, %v8925
        %v8927 = vrot.slane %v8926, 4
        %v8929 = vshll.u32 %v8851, 16
        %v8931 = vrot.slane %v8929, 5
        %v8932 = vsel %vm962, %v8927, %v8931
        %v8933 = vshrl.u32 %v8851, 16
        %v8935 = vrot.slane %v8933, 4
        %v8936 = vor.u32 %v8935, %v8931
        %v8937 = vrot.slane %v8936, 4
        %v8939 = vshll.u32 %v8852, 16
        %v8941 = vrot.slane %v8939, 5
        %v8942 = vsel %vm962, %v8937, %v8941
        %v8944 = vshrl.u32 %v8853, 16
        %v8946 = vrot.slane %v8944, 4
        %v8947 = vshll.u32 %v8853, 16
        %v8949 = vrot.slane %v8947, 5
        %v8950 = vor.u32 %v8946, %v8949
        %v8951 = vrot.slane %v8950, 4
        %v8953 = vshll.u32 %v8854, 16
        %v8955 = vrot.slane %v8953, 5
        %v8956 = vsel %vm962, %v8951, %v8955
        %v8957 = vshrl.u32 %v8854, 16
        %v8959 = vrot.slane %v8957, 4
        %v8960 = vor.u32 %v8959, %v8955
        %v8961 = vrot.slane %v8960, 4
        %v8963 = vshll.u32 %v8855, 16
        %v8965 = vrot.slane %v8963, 5
        %v8966 = vsel %vm962, %v8961, %v8965
        %v8968 = vshrl.u32 %v8856, 16
        %v8970 = vrot.slane %v8968, 4
        %v8971 = vshll.u32 %v8856, 16
        %v8973 = vrot.slane %v8971, 5
        %v8974 = vor.u32 %v8970, %v8973
        %v8975 = vrot.slane %v8974, 4
        %v8977 = vshll.u32 %v8857, 16
        %v8979 = vrot.slane %v8977, 5
        %v8980 = vsel %vm962, %v8975, %v8979
        %v8981 = vshrl.u32 %v8857, 16
        %v8983 = vrot.slane %v8981, 4
        %v8984 = vor.u32 %v8983, %v8979
        %v8985 = vrot.slane %v8984, 4
        %v8987 = vshll.u32 %v8858, 16
        %v8989 = vrot.slane %v8987, 5
        %v8990 = vsel %vm962, %v8985, %v8989
        %v8992 = vshrl.u32 %v8859, 16
        %v8994 = vrot.slane %v8992, 4
        %v8995 = vshll.u32 %v8859, 16
        %v8997 = vrot.slane %v8995, 5
        %v8998 = vor.u32 %v8994, %v8997
        %v8999 = vrot.slane %v8998, 4
        %v9001 = vshll.u32 %v8860, 16
        %v9003 = vrot.slane %v9001, 5
        %v9004 = vsel %vm962, %v8999, %v9003
        %v9005 = vshrl.u32 %v8860, 16
        %v9007 = vrot.slane %v9005, 4
        %v9008 = vor.u32 %v9007, %v9003
        %v9009 = vrot.slane %v9008, 4
        %v9011 = vshll.u32 %v8861, 16
        %v9013 = vrot.slane %v9011, 5
        %v9014 = vsel %vm962, %v9009, %v9013
        %v9016 = vshrl.u32 %v8862, 16
        %v9018 = vrot.slane %v9016, 4
        %v9019 = vshll.u32 %v8862, 16
        %v9021 = vrot.slane %v9019, 5
        %v9022 = vor.u32 %v9018, %v9021
        %v9023 = vrot.slane %v9022, 4
        %v9025 = vshll.u32 %v8863, 16
        %v9027 = vrot.slane %v9025, 5
        %v9028 = vsel %vm962, %v9023, %v9027
        %v9029 = vshrl.u32 %v8863, 16
        %v9031 = vrot.slane %v9029, 4
        %v9032 = vor.u32 %v9031, %v9027
        %v9033 = vrot.slane %v9032, 4
        %v9035 = vshll.u32 %v8864, 16
        %v9037 = vrot.slane %v9035, 5
        %v9038 = vsel %vm962, %v9033, %v9037
        %v9040 = vshrl.u32 %v8865, 16
        %v9042 = vrot.slane %v9040, 4
        %v9043 = vshll.u32 %v8865, 16
        %v9045 = vrot.slane %v9043, 5
        %v9046 = vor.u32 %v9042, %v9045
        %v9047 = vrot.slane %v9046, 4
        %v9049 = vshll.u32 %v8866, 16
        %v9051 = vrot.slane %v9049, 5
        %v9052 = vsel %vm962, %v9047, %v9051
        %v9053 = vshrl.u32 %v8866, 16
        %v9055 = vrot.slane %v9053, 4
        %v9056 = vor.u32 %v9055, %v9051
        %v9057 = vrot.slane %v9056, 4
        %v9059 = vshll.u32 %v8867, 16
        %v9061 = vrot.slane %v9059, 5
        %v9062 = vsel %vm962, %v9057, %v9061
        %v9064 = vshrl.u32 %v8868, 16
        %v9066 = vrot.slane %v9064, 4
        %v9067 = vshll.u32 %v8868, 16
        %v9069 = vrot.slane %v9067, 5
        %v9070 = vor.u32 %v9066, %v9069
        %v9071 = vrot.slane %v9070, 4
        %v9073 = vshll.u32 %v8869, 16
        %v9075 = vrot.slane %v9073, 5
        %v9076 = vsel %vm962, %v9071, %v9075
        %v9077 = vshrl.u32 %v8869, 16
        %v9079 = vrot.slane %v9077, 4
        %v9080 = vor.u32 %v9079, %v9075
        %v9081 = vrot.slane %v9080, 4
        %v9083 = vshll.u32 %v8870, 16
        %v9085 = vrot.slane %v9083, 5
        %v9086 = vsel %vm962, %v9081, %v9085
        %v9088 = vshrl.u32 %v8871, 16
        %v9090 = vrot.slane %v9088, 4
        %v9091 = vshll.u32 %v8871, 16
        %v9093 = vrot.slane %v9091, 5
        %v9094 = vor.u32 %v9090, %v9093
        %v9095 = vrot.slane %v9094, 4
        %v9097 = vshll.u32 %v8872, 16
        %v9099 = vrot.slane %v9097, 5
        %v9100 = vsel %vm962, %v9095, %v9099
        %v9101 = vshrl.u32 %v8872, 16
        %v9103 = vrot.slane %v9101, 4
        %v9104 = vor.u32 %v9103, %v9099
        %v9105 = vrot.slane %v9104, 4
        %v9107 = vshll.u32 %v8873, 16
        %v9109 = vrot.slane %v9107, 5
        %v9110 = vsel %vm962, %v9105, %v9109
        %v9112 = vshrl.u32 %v8874, 16
        %v9114 = vrot.slane %v9112, 4
        %v9115 = vshll.u32 %v8874, 16
        %v9117 = vrot.slane %v9115, 5
        %v9118 = vor.u32 %v9114, %v9117
        %v9119 = vrot.slane %v9118, 4
        %v9121 = vshll.u32 %v8875, 16
        %v9123 = vrot.slane %v9121, 5
        %v9124 = vsel %vm962, %v9119, %v9123
        %v9125 = vshrl.u32 %v8875, 16
        %v9127 = vrot.slane %v9125, 4
        %v9128 = vor.u32 %v9127, %v9123
        %v9129 = vrot.slane %v9128, 4
        %v9131 = vshll.u32 %v8876, 16
        %v9133 = vrot.slane %v9131, 5
        %v9134 = vsel %vm962, %v9129, %v9133
        %v9136 = vshrl.u32 %v8877, 16
        %v9138 = vrot.slane %v9136, 4
        %v9139 = vshll.u32 %v8877, 16
        %v9141 = vrot.slane %v9139, 5
        %v9142 = vor.u32 %v9138, %v9141
        %v9143 = vrot.slane %v9142, 4
        %v9145 = vshll.u32 %v8878, 16
        %v9147 = vrot.slane %v9145, 5
        %v9148 = vsel %vm962, %v9143, %v9147
        %v9149 = vshrl.u32 %v8878, 16
        %v9151 = vrot.slane %v9149, 4
        %v9152 = vor.u32 %v9151, %v9147
        %v9153 = vrot.slane %v9152, 4
        %v9155 = vshll.u32 %v8879, 16
        %v9157 = vrot.slane %v9155, 5
        %v9158 = vsel %vm962, %v9153, %v9157
        %v9160 = vshrl.u32 %v8880, 16
        %v9162 = vrot.slane %v9160, 4
        %v9163 = vshll.u32 %v8880, 16
        %v9165 = vrot.slane %v9163, 5
        %v9166 = vor.u32 %v9162, %v9165
        %v9167 = vrot.slane %v9166, 4
        %v9169 = vshll.u32 %v8881, 16
        %v9171 = vrot.slane %v9169, 5
        %v9172 = vsel %vm962, %v9167, %v9171
        %v9173 = vshrl.u32 %v8881, 16
        %v9175 = vrot.slane %v9173, 4
        %v9176 = vor.u32 %v9175, %v9171
        %v9177 = vrot.slane %v9176, 4
        %v9179 = vshll.u32 %v8882, 16
        %v9181 = vrot.slane %v9179, 5
        %v9182 = vsel %vm962, %v9177, %v9181
        %v9184 = vshrl.u32 %v8883, 16
        %v9186 = vrot.slane %v9184, 4
        %v9187 = vshll.u32 %v8883, 16
        %v9189 = vrot.slane %v9187, 5
        %v9190 = vor.u32 %v9186, %v9189
        %v9191 = vrot.slane %v9190, 4
        %v9193 = vshll.u32 %v8884, 16
        %v9195 = vrot.slane %v9193, 5
        %v9196 = vsel %vm962, %v9191, %v9195
        %v9197 = vshrl.u32 %v8884, 16
        %v9199 = vrot.slane %v9197, 4
        %v9200 = vor.u32 %v9199, %v9195
        %v9201 = vrot.slane %v9200, 4
        %v9203 = vshll.u32 %v8885, 16
        %v9205 = vrot.slane %v9203, 5
        %v9206 = vsel %vm962, %v9201, %v9205
        %v9208 = vshrl.u32 %v8886, 16
        %v9210 = vrot.slane %v9208, 4
        %v9211 = vshll.u32 %v8886, 16
        %v9213 = vrot.slane %v9211, 5
        %v9214 = vor.u32 %v9210, %v9213
        %v9215 = vrot.slane %v9214, 4
        %v9217 = vshll.u32 %v8887, 16
        %v9219 = vrot.slane %v9217, 5
        %v9220 = vsel %vm962, %v9215, %v9219
        %v9221 = vshrl.u32 %v8887, 16
        %v9223 = vrot.slane %v9221, 4
        %v9224 = vor.u32 %v9223, %v9219
        %v9225 = vrot.slane %v9224, 4
        %v9227 = vshll.u32 %v8888, 16
        %v9229 = vrot.slane %v9227, 5
        %v9230 = vsel %vm962, %v9225, %v9229
        %v9232 = vshrl.u32 %v8889, 16
        %v9234 = vrot.slane %v9232, 4
        %v9235 = vshll.u32 %v8889, 16
        %v9237 = vrot.slane %v9235, 5
        %v9238 = vor.u32 %v9234, %v9237
        %v9239 = vrot.slane %v9238, 4
        %v9241 = vshll.u32 %v8890, 16
        %v9243 = vrot.slane %v9241, 5
        %v9244 = vsel %vm962, %v9239, %v9243
        %v9245 = vshrl.u32 %v8890, 16
        %v9247 = vrot.slane %v9245, 4
        %v9248 = vor.u32 %v9247, %v9243
        %v9249 = vrot.slane %v9248, 4
        %v9251 = vshll.u32 %v8891, 16
        %v9253 = vrot.slane %v9251, 5
        %v9254 = vsel %vm962, %v9249, %v9253
        %v9256 = vshrl.u32 %v8892, 16
        %v9258 = vrot.slane %v9256, 4
        %v9259 = vshll.u32 %v8892, 16
        %v9261 = vrot.slane %v9259, 5
        %v9262 = vor.u32 %v9258, %v9261
        %v9263 = vrot.slane %v9262, 4
        %v9265 = vshll.u32 %v8893, 16
        %v9267 = vrot.slane %v9265, 5
        %v9268 = vsel %vm962, %v9263, %v9267
        %v9269 = vshrl.u32 %v8893, 16
        %v9271 = vrot.slane %v9269, 4
        %v9272 = vor.u32 %v9271, %v9267
        %v9273 = vrot.slane %v9272, 4
        %v9275 = vshll.u32 %v8894, 16
        %v9277 = vrot.slane %v9275, 5
        %v9278 = vsel %vm962, %v9273, %v9277
        %s9279 = scalar_lea.vmem %s3, 48
        %v9280 = vld [vmem:[%s9279] sm:$0xf]
        %v9281 = vld [vmem:[%s9279 + $0x4] sm:$0xf]
        %v9282 = vld [vmem:[%s9279 + $0x8] sm:$0xf]
        %v9283 = vunpack.c.l.b16 %v8908
        %v9284 = vunpack.c.l.b16 %v8918
        %v9285 = vunpack.c.l.b16 %v8932
        %v9286 = vunpack.c.l.b16 %v8942
        %v9287 = vunpack.c.l.b16 %v8956
        %v9288 = vunpack.c.l.b16 %v8966
        %v9289 = vunpack.c.l.b16 %v8980
        %v9290 = vunpack.c.l.b16 %v8990
        %v9291 = vunpack.c.l.b16 %v9004
        %v9292 = vunpack.c.l.b16 %v9014
        %v9293 = vunpack.c.l.b16 %v9028
        %v9294 = vunpack.c.l.b16 %v9038
        %v9295 = vunpack.c.l.b16 %v9052
        %v9296 = vunpack.c.l.b16 %v9062
        %v9297 = vunpack.c.l.b16 %v9076
        %v9298 = vunpack.c.l.b16 %v9086
        %v9299 = vunpack.c.l.b16 %v9100
        %v9300 = vunpack.c.l.b16 %v9110
        %v9301 = vunpack.c.l.b16 %v9124
        %v9302 = vunpack.c.l.b16 %v9134
        %v9303 = vunpack.c.l.b16 %v9148
        %v9304 = vunpack.c.l.b16 %v9158
        %v9305 = vunpack.c.l.b16 %v9172
        %v9306 = vunpack.c.l.b16 %v9182
        %v9307 = vunpack.c.l.b16 %v9196
        %v9308 = vunpack.c.l.b16 %v9206
        %v9309 = vunpack.c.l.b16 %v9220
        %v9310 = vunpack.c.l.b16 %v9230
        %v9311 = vunpack.c.l.b16 %v9244
        %v9312 = vunpack.c.l.b16 %v9254
        %v9313 = vunpack.c.l.b16 %v9268
        %v9314 = vunpack.c.l.b16 %v9278
        %v9315 = vpack.c.b16 %v9284, %v9283
        %v9316 = vpack.c.b16 %v9286, %v9285
        %v9317 = vpack.c.b16 %v9288, %v9287
        %v9318 = vpack.c.b16 %v9290, %v9289
        %v9319 = vpack.c.b16 %v9292, %v9291
        %v9320 = vpack.c.b16 %v9294, %v9293
        %v9321 = vpack.c.b16 %v9296, %v9295
        %v9322 = vpack.c.b16 %v9298, %v9297
        %v9323 = vpack.c.b16 %v9300, %v9299
        %v9324 = vpack.c.b16 %v9302, %v9301
        %v9325 = vpack.c.b16 %v9304, %v9303
        %v9326 = vpack.c.b16 %v9306, %v9305
        %v9327 = vpack.c.b16 %v9308, %v9307
        %v9328 = vpack.c.b16 %v9310, %v9309
        %v9329 = vpack.c.b16 %v9312, %v9311
        %v9330 = vpack.c.b16 %v9314, %v9313
        %v9334 = vunpack.c.l.b16 %v9280
        %v9335 = vunpack.c.l.b16 %v9281
        %v9336 = vunpack.c.l.b16 %v9282
        %v9337 = vpack.c.b16 %v9335, %v9334
        %v9338 = vpack.c.b16 %v9336, %v9336
        %v9341 = vsel %vm5511, %v9315, 0
        %v9344 = vsel %vm5511, %v9316, 0
        %v9347 = vsel %vm5511, %v9317, 0
        %v9350 = vsel %vm5511, %v9318, 0
        %v9353 = vsel %vm5511, %v9319, 0
        %v9356 = vsel %vm5511, %v9320, 0
        %v9359 = vsel %vm5511, %v9321, 0
        %v9362 = vsel %vm5511, %v9322, 0
        %v9365 = vsel %vm5511, %v9323, 0
        %v9368 = vsel %vm5511, %v9324, 0
        %v9371 = vsel %vm5511, %v9325, 0
        %v9374 = vsel %vm5511, %v9326, 0
        %v9377 = vsel %vm5511, %v9327, 0
        %v9380 = vsel %vm5511, %v9328, 0
        %v9383 = vsel %vm5511, %v9329, 0
        %v9386 = vsel %vm5511, %v9330, 0
        %v9389 = vsel %vm7547, %v9338, 0
        %9391 = vmatprep.subr.bf16.mxu0 0
        %9392 = vmatpush1.bf16.msra.mxu0 0
        %9393 = vmatprep.subr.bf16.mxu0 0
        %9394 = vmatpush1.bf16.msra.mxu0 0
        %9395 = vmatprep.subr.bf16.mxu0 0
        %9396 = vmatpush1.bf16.msra.mxu0 0
        %9397 = vmatprep.subr.bf16.mxu0 0
        %9398 = vmatpush1.bf16.msra.mxu0 0
        %9399 = vmatprep.subr.bf16.mxu0 0
        %9400 = vmatpush1.bf16.msra.mxu0 0
        %9401 = vmatprep.subr.bf16.mxu0 0
        %9402 = vmatpush1.bf16.msra.mxu0 0
        %9403 = vmatprep.subr.bf16.mxu0 0
        %9404 = vmatpush1.bf16.msra.mxu0 %v9389
        %9405 = vmatprep.subr.bf16.mxu0 0
        %9406 = vmatpush1.bf16.msra.mxu0 %v9337
        %9407 = vmatprep.subr.bf16.mxu0 0
        %9408 = vmatpush2.bf16.msra.mxu0 0
        %9409 = vmatprep.subr.bf16.mxu0 0
        %9410 = vmatpush2.bf16.msra.mxu0 0
        %9411 = vmatprep.subr.bf16.mxu0 0
        %9412 = vmatpush2.bf16.msra.mxu0 0
        %9413 = vmatprep.subr.bf16.mxu0 0
        %9414 = vmatpush2.bf16.msra.mxu0 0
        %9415 = vmatprep.subr.bf16.mxu0 0
        %9416 = vmatpush2.bf16.msra.mxu0 0
        %9417 = vmatprep.subr.bf16.mxu0 0
        %9418 = vmatpush2.bf16.msra.mxu0 0
        %9419 = vmatprep.subr.bf16.mxu0 0
        %9420 = vmatpush2.bf16.msra.mxu0 0
        %9421 = vmatprep.subr.bf16.mxu0 0
        %9422 = vmatpush2.bf16.msra.mxu0 0
        %9423 = vmatprep.mubr.bf16.mxu0 0
        %9424 = vmatmul.mubr.bf16.gmra.mxu0 %v9341
        %v9425 = vpop.f32.mrf.mxu0
        %v9426 = vadd.f32 0.0, %v9425
        %v9427 = vpop.f32.mrf.mxu0
        %v9428 = vpop.f32.mrf.mxu0
        %v9429 = vadd.f32 0.0, %v9428
        %v9430 = vpop.f32.mrf.mxu0
        %9431 = vmatprep.mubr.bf16.mxu0 0
        %9432 = vmatmul.mubr.bf16.gmra.mxu0 %v9344
        %v9433 = vpop.f32.mrf.mxu0
        %v9434 = vadd.f32 0.0, %v9433
        %v9435 = vpop.f32.mrf.mxu0
        %v9436 = vpop.f32.mrf.mxu0
        %v9437 = vadd.f32 0.0, %v9436
        %v9438 = vpop.f32.mrf.mxu0
        %9439 = vmatprep.mubr.bf16.mxu0 0
        %9440 = vmatmul.mubr.bf16.gmra.mxu0 %v9347
        %v9441 = vpop.f32.mrf.mxu0
        %v9442 = vadd.f32 0.0, %v9441
        %v9443 = vpop.f32.mrf.mxu0
        %v9444 = vpop.f32.mrf.mxu0
        %v9445 = vadd.f32 0.0, %v9444
        %v9446 = vpop.f32.mrf.mxu0
        %9447 = vmatprep.mubr.bf16.mxu0 0
        %9448 = vmatmul.mubr.bf16.gmra.mxu0 %v9350
        %v9449 = vpop.f32.mrf.mxu0
        %v9450 = vadd.f32 0.0, %v9449
        %v9451 = vpop.f32.mrf.mxu0
        %v9452 = vpop.f32.mrf.mxu0
        %v9453 = vadd.f32 0.0, %v9452
        %v9454 = vpop.f32.mrf.mxu0
        %9455 = vmatprep.mubr.bf16.mxu0 0
        %9456 = vmatmul.mubr.bf16.gmra.mxu0 %v9353
        %v9457 = vpop.f32.mrf.mxu0
        %v9458 = vadd.f32 0.0, %v9457
        %v9459 = vpop.f32.mrf.mxu0
        %v9460 = vpop.f32.mrf.mxu0
        %v9461 = vadd.f32 0.0, %v9460
        %v9462 = vpop.f32.mrf.mxu0
        %9463 = vmatprep.mubr.bf16.mxu0 0
        %9464 = vmatmul.mubr.bf16.gmra.mxu0 %v9356
        %v9465 = vpop.f32.mrf.mxu0
        %v9466 = vadd.f32 0.0, %v9465
        %v9467 = vpop.f32.mrf.mxu0
        %v9468 = vpop.f32.mrf.mxu0
        %v9469 = vadd.f32 0.0, %v9468
        %v9470 = vpop.f32.mrf.mxu0
        %9471 = vmatprep.mubr.bf16.mxu0 0
        %9472 = vmatmul.mubr.bf16.gmra.mxu0 %v9359
        %v9473 = vpop.f32.mrf.mxu0
        %v9474 = vadd.f32 0.0, %v9473
        %v9475 = vpop.f32.mrf.mxu0
        %v9476 = vpop.f32.mrf.mxu0
        %v9477 = vadd.f32 0.0, %v9476
        %v9478 = vpop.f32.mrf.mxu0
        %9479 = vmatprep.mubr.bf16.mxu0 0
        %9480 = vmatmul.mubr.bf16.gmra.mxu0 %v9362
        %v9481 = vpop.f32.mrf.mxu0
        %v9482 = vadd.f32 0.0, %v9481
        %v9483 = vpop.f32.mrf.mxu0
        %v9484 = vpop.f32.mrf.mxu0
        %v9485 = vadd.f32 0.0, %v9484
        %v9486 = vpop.f32.mrf.mxu0
        %9487 = vmatprep.mubr.bf16.mxu0 0
        %9488 = vmatmul.mubr.bf16.gmra.mxu0 %v9365
        %v9489 = vpop.f32.mrf.mxu0
        %v9490 = vadd.f32 0.0, %v9489
        %v9491 = vpop.f32.mrf.mxu0
        %v9492 = vpop.f32.mrf.mxu0
        %v9493 = vadd.f32 0.0, %v9492
        %v9494 = vpop.f32.mrf.mxu0
        %9495 = vmatprep.mubr.bf16.mxu0 0
        %9496 = vmatmul.mubr.bf16.gmra.mxu0 %v9368
        %v9497 = vpop.f32.mrf.mxu0
        %v9498 = vadd.f32 0.0, %v9497
        %v9499 = vpop.f32.mrf.mxu0
        %v9500 = vpop.f32.mrf.mxu0
        %v9501 = vadd.f32 0.0, %v9500
        %v9502 = vpop.f32.mrf.mxu0
        %9503 = vmatprep.mubr.bf16.mxu0 0
        %9504 = vmatmul.mubr.bf16.gmra.mxu0 %v9371
        %v9505 = vpop.f32.mrf.mxu0
        %v9506 = vadd.f32 0.0, %v9505
        %v9507 = vpop.f32.mrf.mxu0
        %v9508 = vpop.f32.mrf.mxu0
        %v9509 = vadd.f32 0.0, %v9508
        %v9510 = vpop.f32.mrf.mxu0
        %9511 = vmatprep.mubr.bf16.mxu0 0
        %9512 = vmatmul.mubr.bf16.gmra.mxu0 %v9374
        %v9513 = vpop.f32.mrf.mxu0
        %v9514 = vadd.f32 0.0, %v9513
        %v9515 = vpop.f32.mrf.mxu0
        %v9516 = vpop.f32.mrf.mxu0
        %v9517 = vadd.f32 0.0, %v9516
        %v9518 = vpop.f32.mrf.mxu0
        %9519 = vmatprep.mubr.bf16.mxu0 0
        %9520 = vmatmul.mubr.bf16.gmra.mxu0 %v9377
        %v9521 = vpop.f32.mrf.mxu0
        %v9522 = vadd.f32 0.0, %v9521
        %v9523 = vpop.f32.mrf.mxu0
        %v9524 = vpop.f32.mrf.mxu0
        %v9525 = vadd.f32 0.0, %v9524
        %v9526 = vpop.f32.mrf.mxu0
        %9527 = vmatprep.mubr.bf16.mxu0 0
        %9528 = vmatmul.mubr.bf16.gmra.mxu0 %v9380
        %v9529 = vpop.f32.mrf.mxu0
        %v9530 = vadd.f32 0.0, %v9529
        %v9531 = vpop.f32.mrf.mxu0
        %v9532 = vpop.f32.mrf.mxu0
        %v9533 = vadd.f32 0.0, %v9532
        %v9534 = vpop.f32.mrf.mxu0
        %9535 = vmatprep.mubr.bf16.mxu0 0
        %9536 = vmatmul.mubr.bf16.gmra.mxu0 %v9383
        %v9537 = vpop.f32.mrf.mxu0
        %v9538 = vadd.f32 0.0, %v9537
        %v9539 = vpop.f32.mrf.mxu0
        %v9540 = vpop.f32.mrf.mxu0
        %v9541 = vadd.f32 0.0, %v9540
        %v9542 = vpop.f32.mrf.mxu0
        %9543 = vmatprep.mubr.bf16.mxu0 0
        %9544 = vmatmul.mubr.bf16.gmra.mxu0 %v9386
        %v9545 = vpop.f32.mrf.mxu0
        %v9546 = vadd.f32 0.0, %v9545
        %v9547 = vpop.f32.mrf.mxu0
        %v9548 = vpop.f32.mrf.mxu0
        %v9549 = vadd.f32 0.0, %v9548
        %v9550 = vpop.f32.mrf.mxu0
        %9551 = vdwg.mxu0
        %v9552 = vadd.f32 %v8815, %v9426
        %v9553 = vadd.f32 %v8816, %v9429
        %v9554 = vadd.f32 %v8817, %v9434
        %v9555 = vadd.f32 %v8818, %v9437
        %v9556 = vadd.f32 %v8819, %v9442
        %v9557 = vadd.f32 %v8820, %v9445
        %v9558 = vadd.f32 %v8821, %v9450
        %v9559 = vadd.f32 %v8822, %v9453
        %v9560 = vadd.f32 %v8823, %v9458
        %v9561 = vadd.f32 %v8824, %v9461
        %v9562 = vadd.f32 %v8825, %v9466
        %v9563 = vadd.f32 %v8826, %v9469
        %v9564 = vadd.f32 %v8827, %v9474
        %v9565 = vadd.f32 %v8828, %v9477
        %v9566 = vadd.f32 %v8829, %v9482
        %v9567 = vadd.f32 %v8830, %v9485
        %v9568 = vadd.f32 %v8831, %v9490
        %v9569 = vadd.f32 %v8832, %v9493
        %v9570 = vadd.f32 %v8833, %v9498
        %v9571 = vadd.f32 %v8834, %v9501
        %v9572 = vadd.f32 %v8835, %v9506
        %v9573 = vadd.f32 %v8836, %v9509
        %v9574 = vadd.f32 %v8837, %v9514
        %v9575 = vadd.f32 %v8838, %v9517
        %v9576 = vadd.f32 %v8839, %v9522
        %v9577 = vadd.f32 %v8840, %v9525
        %v9578 = vadd.f32 %v8841, %v9530
        %v9579 = vadd.f32 %v8842, %v9533
        %v9580 = vadd.f32 %v8843, %v9538
        %v9581 = vadd.f32 %v8844, %v9541
        %v9582 = vadd.f32 %v8845, %v9546
        %v9583 = vadd.f32 %v8846, %v9549
        %v9584 = vld [vmem:[%s6888] sm:$0xe]
        %v9585 = vld [vmem:[%s6888 + $0xc] sm:$0xe]
        %v9586 = vld [vmem:[%s6888 + $0x18] sm:$0xe]
        %v9587 = vld [vmem:[%s6888 + $0x24] sm:$0xe]
        %v9588 = vld [vmem:[%s6888 + $0x30] sm:$0xe]
        %v9589 = vld [vmem:[%s6888 + $0x3c] sm:$0xe]
        %v9590 = vld [vmem:[%s6888 + $0x48] sm:$0xe]
        %v9591 = vld [vmem:[%s6888 + $0x54] sm:$0xe]
        %v9592 = vld [vmem:[%s6888 + $0x60] sm:$0xe]
        %v9593 = vld [vmem:[%s6888 + $0x6c] sm:$0xe]
        %v9594 = vld [vmem:[%s6888 + $0x78] sm:$0xe]
        %v9595 = vld [vmem:[%s6888 + $0x84] sm:$0xe]
        %v9596 = vld [vmem:[%s6888 + $0x90] sm:$0xe]
        %v9597 = vld [vmem:[%s6888 + $0x9c] sm:$0xe]
        %v9598 = vld [vmem:[%s6888 + $0xa8] sm:$0xe]
        %v9599 = vld [vmem:[%s6888 + $0xb4] sm:$0xe]
        %v9648 = vrot.slane %v9584, 5
        %v9649 = vrot.slane %v9648, 4
        %v9650 = vrot.slane %v8848, 5
        %v9651 = vsel %vm1956, %v9649, %v9650
        %v9652 = vrot.slane %v9650, 4
        %v9653 = vrot.slane %v8849, 5
        %v9654 = vsel %vm1956, %v9652, %v9653
        %v9655 = vrot.slane %v9585, 5
        %v9656 = vrot.slane %v9655, 4
        %v9657 = vrot.slane %v8851, 5
        %v9658 = vsel %vm1956, %v9656, %v9657
        %v9659 = vrot.slane %v9657, 4
        %v9660 = vrot.slane %v8852, 5
        %v9661 = vsel %vm1956, %v9659, %v9660
        %v9662 = vrot.slane %v9586, 5
        %v9663 = vrot.slane %v9662, 4
        %v9664 = vrot.slane %v8854, 5
        %v9665 = vsel %vm1956, %v9663, %v9664
        %v9666 = vrot.slane %v9664, 4
        %v9667 = vrot.slane %v8855, 5
        %v9668 = vsel %vm1956, %v9666, %v9667
        %v9669 = vrot.slane %v9587, 5
        %v9670 = vrot.slane %v9669, 4
        %v9671 = vrot.slane %v8857, 5
        %v9672 = vsel %vm1956, %v9670, %v9671
        %v9673 = vrot.slane %v9671, 4
        %v9674 = vrot.slane %v8858, 5
        %v9675 = vsel %vm1956, %v9673, %v9674
        %v9676 = vrot.slane %v9588, 5
        %v9677 = vrot.slane %v9676, 4
        %v9678 = vrot.slane %v8860, 5
        %v9679 = vsel %vm1956, %v9677, %v9678
        %v9680 = vrot.slane %v9678, 4
        %v9681 = vrot.slane %v8861, 5
        %v9682 = vsel %vm1956, %v9680, %v9681
        %v9683 = vrot.slane %v9589, 5
        %v9684 = vrot.slane %v9683, 4
        %v9685 = vrot.slane %v8863, 5
        %v9686 = vsel %vm1956, %v9684, %v9685
        %v9687 = vrot.slane %v9685, 4
        %v9688 = vrot.slane %v8864, 5
        %v9689 = vsel %vm1956, %v9687, %v9688
        %v9690 = vrot.slane %v9590, 5
        %v9691 = vrot.slane %v9690, 4
        %v9692 = vrot.slane %v8866, 5
        %v9693 = vsel %vm1956, %v9691, %v9692
        %v9694 = vrot.slane %v9692, 4
        %v9695 = vrot.slane %v8867, 5
        %v9696 = vsel %vm1956, %v9694, %v9695
        %v9697 = vrot.slane %v9591, 5
        %v9698 = vrot.slane %v9697, 4
        %v9699 = vrot.slane %v8869, 5
        %v9700 = vsel %vm1956, %v9698, %v9699
        %v9701 = vrot.slane %v9699, 4
        %v9702 = vrot.slane %v8870, 5
        %v9703 = vsel %vm1956, %v9701, %v9702
        %v9704 = vrot.slane %v9592, 5
        %v9705 = vrot.slane %v9704, 4
        %v9706 = vrot.slane %v8872, 5
        %v9707 = vsel %vm1956, %v9705, %v9706
        %v9708 = vrot.slane %v9706, 4
        %v9709 = vrot.slane %v8873, 5
        %v9710 = vsel %vm1956, %v9708, %v9709
        %v9711 = vrot.slane %v9593, 5
        %v9712 = vrot.slane %v9711, 4
        %v9713 = vrot.slane %v8875, 5
        %v9714 = vsel %vm1956, %v9712, %v9713
        %v9715 = vrot.slane %v9713, 4
        %v9716 = vrot.slane %v8876, 5
        %v9717 = vsel %vm1956, %v9715, %v9716
        %v9718 = vrot.slane %v9594, 5
        %v9719 = vrot.slane %v9718, 4
        %v9720 = vrot.slane %v8878, 5
        %v9721 = vsel %vm1956, %v9719, %v9720
        %v9722 = vrot.slane %v9720, 4
        %v9723 = vrot.slane %v8879, 5
        %v9724 = vsel %vm1956, %v9722, %v9723
        %v9725 = vrot.slane %v9595, 5
        %v9726 = vrot.slane %v9725, 4
        %v9727 = vrot.slane %v8881, 5
        %v9728 = vsel %vm1956, %v9726, %v9727
        %v9729 = vrot.slane %v9727, 4
        %v9730 = vrot.slane %v8882, 5
        %v9731 = vsel %vm1956, %v9729, %v9730
        %v9732 = vrot.slane %v9596, 5
        %v9733 = vrot.slane %v9732, 4
        %v9734 = vrot.slane %v8884, 5
        %v9735 = vsel %vm1956, %v9733, %v9734
        %v9736 = vrot.slane %v9734, 4
        %v9737 = vrot.slane %v8885, 5
        %v9738 = vsel %vm1956, %v9736, %v9737
        %v9739 = vrot.slane %v9597, 5
        %v9740 = vrot.slane %v9739, 4
        %v9741 = vrot.slane %v8887, 5
        %v9742 = vsel %vm1956, %v9740, %v9741
        %v9743 = vrot.slane %v9741, 4
        %v9744 = vrot.slane %v8888, 5
        %v9745 = vsel %vm1956, %v9743, %v9744
        %v9746 = vrot.slane %v9598, 5
        %v9747 = vrot.slane %v9746, 4
        %v9748 = vrot.slane %v8890, 5
        %v9749 = vsel %vm1956, %v9747, %v9748
        %v9750 = vrot.slane %v9748, 4
        %v9751 = vrot.slane %v8891, 5
        %v9752 = vsel %vm1956, %v9750, %v9751
        %v9753 = vrot.slane %v9599, 5
        %v9754 = vrot.slane %v9753, 4
        %v9755 = vrot.slane %v8893, 5
        %v9756 = vsel %vm1956, %v9754, %v9755
        %v9757 = vrot.slane %v9755, 4
        %v9758 = vrot.slane %v8894, 5
        %v9759 = vsel %vm1956, %v9757, %v9758
        %s9760 = scalar_lea.vmem %s3, 60
        %v9761 = vld [vmem:[%s9760] sm:$0xf]
        %v9762 = vld [vmem:[%s9760 + $0x4] sm:$0xf]
        %v9763 = vld [vmem:[%s9760 + $0x8] sm:$0xf]
        %v9764 = vunpack.c.l.b16 %v9651
        %v9765 = vunpack.c.l.b16 %v9654
        %v9766 = vunpack.c.l.b16 %v9658
        %v9767 = vunpack.c.l.b16 %v9661
        %v9768 = vunpack.c.l.b16 %v9665
        %v9769 = vunpack.c.l.b16 %v9668
        %v9770 = vunpack.c.l.b16 %v9672
        %v9771 = vunpack.c.l.b16 %v9675
        %v9772 = vunpack.c.l.b16 %v9679
        %v9773 = vunpack.c.l.b16 %v9682
        %v9774 = vunpack.c.l.b16 %v9686
        %v9775 = vunpack.c.l.b16 %v9689
        %v9776 = vunpack.c.l.b16 %v9693
        %v9777 = vunpack.c.l.b16 %v9696
        %v9778 = vunpack.c.l.b16 %v9700
        %v9779 = vunpack.c.l.b16 %v9703
        %v9780 = vunpack.c.l.b16 %v9707
        %v9781 = vunpack.c.l.b16 %v9710
        %v9782 = vunpack.c.l.b16 %v9714
        %v9783 = vunpack.c.l.b16 %v9717
        %v9784 = vunpack.c.l.b16 %v9721
        %v9785 = vunpack.c.l.b16 %v9724
        %v9786 = vunpack.c.l.b16 %v9728
        %v9787 = vunpack.c.l.b16 %v9731
        %v9788 = vunpack.c.l.b16 %v9735
        %v9789 = vunpack.c.l.b16 %v9738
        %v9790 = vunpack.c.l.b16 %v9742
        %v9791 = vunpack.c.l.b16 %v9745
        %v9792 = vunpack.c.l.b16 %v9749
        %v9793 = vunpack.c.l.b16 %v9752
        %v9794 = vunpack.c.l.b16 %v9756
        %v9795 = vunpack.c.l.b16 %v9759
        %v9796 = vpack.c.b16 %v9765, %v9764
        %v9797 = vpack.c.b16 %v9767, %v9766
        %v9798 = vpack.c.b16 %v9769, %v9768
        %v9799 = vpack.c.b16 %v9771, %v9770
        %v9800 = vpack.c.b16 %v9773, %v9772
        %v9801 = vpack.c.b16 %v9775, %v9774
        %v9802 = vpack.c.b16 %v9777, %v9776
        %v9803 = vpack.c.b16 %v9779, %v9778
        %v9804 = vpack.c.b16 %v9781, %v9780
        %v9805 = vpack.c.b16 %v9783, %v9782
        %v9806 = vpack.c.b16 %v9785, %v9784
        %v9807 = vpack.c.b16 %v9787, %v9786
        %v9808 = vpack.c.b16 %v9789, %v9788
        %v9809 = vpack.c.b16 %v9791, %v9790
        %v9810 = vpack.c.b16 %v9793, %v9792
        %v9811 = vpack.c.b16 %v9795, %v9794
        %v9815 = vunpack.c.l.b16 %v9761
        %v9816 = vunpack.c.l.b16 %v9762
        %v9817 = vunpack.c.l.b16 %v9763
        %v9818 = vpack.c.b16 %v9816, %v9815
        %v9819 = vpack.c.b16 %v9817, %v9817
        %v9822 = vsel %vm5511, %v9796, 0
        %v9825 = vsel %vm5511, %v9797, 0
        %v9828 = vsel %vm5511, %v9798, 0
        %v9831 = vsel %vm5511, %v9799, 0
        %v9834 = vsel %vm5511, %v9800, 0
        %v9837 = vsel %vm5511, %v9801, 0
        %v9840 = vsel %vm5511, %v9802, 0
        %v9843 = vsel %vm5511, %v9803, 0
        %v9846 = vsel %vm5511, %v9804, 0
        %v9849 = vsel %vm5511, %v9805, 0
        %v9852 = vsel %vm5511, %v9806, 0
        %v9855 = vsel %vm5511, %v9807, 0
        %v9858 = vsel %vm5511, %v9808, 0
        %v9861 = vsel %vm5511, %v9809, 0
        %v9864 = vsel %vm5511, %v9810, 0
        %v9867 = vsel %vm5511, %v9811, 0
        %v9870 = vsel %vm7547, %v9819, 0
        %9872 = vmatprep.subr.bf16.mxu0 0
        %9873 = vmatpush1.bf16.msra.mxu0 0
        %9874 = vmatprep.subr.bf16.mxu0 0
        %9875 = vmatpush1.bf16.msra.mxu0 0
        %9876 = vmatprep.subr.bf16.mxu0 0
        %9877 = vmatpush1.bf16.msra.mxu0 0
        %9878 = vmatprep.subr.bf16.mxu0 0
        %9879 = vmatpush1.bf16.msra.mxu0 0
        %9880 = vmatprep.subr.bf16.mxu0 0
        %9881 = vmatpush1.bf16.msra.mxu0 0
        %9882 = vmatprep.subr.bf16.mxu0 0
        %9883 = vmatpush1.bf16.msra.mxu0 0
        %9884 = vmatprep.subr.bf16.mxu0 0
        %9885 = vmatpush1.bf16.msra.mxu0 %v9870
        %9886 = vmatprep.subr.bf16.mxu0 0
        %9887 = vmatpush1.bf16.msra.mxu0 %v9818
        %9888 = vmatprep.subr.bf16.mxu0 0
        %9889 = vmatpush2.bf16.msra.mxu0 0
        %9890 = vmatprep.subr.bf16.mxu0 0
        %9891 = vmatpush2.bf16.msra.mxu0 0
        %9892 = vmatprep.subr.bf16.mxu0 0
        %9893 = vmatpush2.bf16.msra.mxu0 0
        %9894 = vmatprep.subr.bf16.mxu0 0
        %9895 = vmatpush2.bf16.msra.mxu0 0
        %9896 = vmatprep.subr.bf16.mxu0 0
        %9897 = vmatpush2.bf16.msra.mxu0 0
        %9898 = vmatprep.subr.bf16.mxu0 0
        %9899 = vmatpush2.bf16.msra.mxu0 0
        %9900 = vmatprep.subr.bf16.mxu0 0
        %9901 = vmatpush2.bf16.msra.mxu0 0
        %9902 = vmatprep.subr.bf16.mxu0 0
        %9903 = vmatpush2.bf16.msra.mxu0 0
        %9904 = vmatprep.mubr.bf16.mxu0 0
        %9905 = vmatmul.mubr.bf16.gmra.mxu0 %v9822
        %v9906 = vpop.f32.mrf.mxu0
        %v9907 = vadd.f32 0.0, %v9906
        %v9908 = vpop.f32.mrf.mxu0
        %v9909 = vpop.f32.mrf.mxu0
        %v9910 = vadd.f32 0.0, %v9909
        %v9911 = vpop.f32.mrf.mxu0
        %9912 = vmatprep.mubr.bf16.mxu0 0
        %9913 = vmatmul.mubr.bf16.gmra.mxu0 %v9825
        %v9914 = vpop.f32.mrf.mxu0
        %v9915 = vadd.f32 0.0, %v9914
        %v9916 = vpop.f32.mrf.mxu0
        %v9917 = vpop.f32.mrf.mxu0
        %v9918 = vadd.f32 0.0, %v9917
        %v9919 = vpop.f32.mrf.mxu0
        %9920 = vmatprep.mubr.bf16.mxu0 0
        %9921 = vmatmul.mubr.bf16.gmra.mxu0 %v9828
        %v9922 = vpop.f32.mrf.mxu0
        %v9923 = vadd.f32 0.0, %v9922
        %v9924 = vpop.f32.mrf.mxu0
        %v9925 = vpop.f32.mrf.mxu0
        %v9926 = vadd.f32 0.0, %v9925
        %v9927 = vpop.f32.mrf.mxu0
        %9928 = vmatprep.mubr.bf16.mxu0 0
        %9929 = vmatmul.mubr.bf16.gmra.mxu0 %v9831
        %v9930 = vpop.f32.mrf.mxu0
        %v9931 = vadd.f32 0.0, %v9930
        %v9932 = vpop.f32.mrf.mxu0
        %v9933 = vpop.f32.mrf.mxu0
        %v9934 = vadd.f32 0.0, %v9933
        %v9935 = vpop.f32.mrf.mxu0
        %9936 = vmatprep.mubr.bf16.mxu0 0
        %9937 = vmatmul.mubr.bf16.gmra.mxu0 %v9834
        %v9938 = vpop.f32.mrf.mxu0
        %v9939 = vadd.f32 0.0, %v9938
        %v9940 = vpop.f32.mrf.mxu0
        %v9941 = vpop.f32.mrf.mxu0
        %v9942 = vadd.f32 0.0, %v9941
        %v9943 = vpop.f32.mrf.mxu0
        %9944 = vmatprep.mubr.bf16.mxu0 0
        %9945 = vmatmul.mubr.bf16.gmra.mxu0 %v9837
        %v9946 = vpop.f32.mrf.mxu0
        %v9947 = vadd.f32 0.0, %v9946
        %v9948 = vpop.f32.mrf.mxu0
        %v9949 = vpop.f32.mrf.mxu0
        %v9950 = vadd.f32 0.0, %v9949
        %v9951 = vpop.f32.mrf.mxu0
        %9952 = vmatprep.mubr.bf16.mxu0 0
        %9953 = vmatmul.mubr.bf16.gmra.mxu0 %v9840
        %v9954 = vpop.f32.mrf.mxu0
        %v9955 = vadd.f32 0.0, %v9954
        %v9956 = vpop.f32.mrf.mxu0
        %v9957 = vpop.f32.mrf.mxu0
        %v9958 = vadd.f32 0.0, %v9957
        %v9959 = vpop.f32.mrf.mxu0
        %9960 = vmatprep.mubr.bf16.mxu0 0
        %9961 = vmatmul.mubr.bf16.gmra.mxu0 %v9843
        %v9962 = vpop.f32.mrf.mxu0
        %v9963 = vadd.f32 0.0, %v9962
        %v9964 = vpop.f32.mrf.mxu0
        %v9965 = vpop.f32.mrf.mxu0
        %v9966 = vadd.f32 0.0, %v9965
        %v9967 = vpop.f32.mrf.mxu0
        %9968 = vmatprep.mubr.bf16.mxu0 0
        %9969 = vmatmul.mubr.bf16.gmra.mxu0 %v9846
        %v9970 = vpop.f32.mrf.mxu0
        %v9971 = vadd.f32 0.0, %v9970
        %v9972 = vpop.f32.mrf.mxu0
        %v9973 = vpop.f32.mrf.mxu0
        %v9974 = vadd.f32 0.0, %v9973
        %v9975 = vpop.f32.mrf.mxu0
        %9976 = vmatprep.mubr.bf16.mxu0 0
        %9977 = vmatmul.mubr.bf16.gmra.mxu0 %v9849
        %v9978 = vpop.f32.mrf.mxu0
        %v9979 = vadd.f32 0.0, %v9978
        %v9980 = vpop.f32.mrf.mxu0
        %v9981 = vpop.f32.mrf.mxu0
        %v9982 = vadd.f32 0.0, %v9981
        %v9983 = vpop.f32.mrf.mxu0
        %9984 = vmatprep.mubr.bf16.mxu0 0
        %9985 = vmatmul.mubr.bf16.gmra.mxu0 %v9852
        %v9986 = vpop.f32.mrf.mxu0
        %v9987 = vadd.f32 0.0, %v9986
        %v9988 = vpop.f32.mrf.mxu0
        %v9989 = vpop.f32.mrf.mxu0
        %v9990 = vadd.f32 0.0, %v9989
        %v9991 = vpop.f32.mrf.mxu0
        %9992 = vmatprep.mubr.bf16.mxu0 0
        %9993 = vmatmul.mubr.bf16.gmra.mxu0 %v9855
        %v9994 = vpop.f32.mrf.mxu0
        %v9995 = vadd.f32 0.0, %v9994
        %v9996 = vpop.f32.mrf.mxu0
        %v9997 = vpop.f32.mrf.mxu0
        %v9998 = vadd.f32 0.0, %v9997
        %v9999 = vpop.f32.mrf.mxu0
        %10000 = vmatprep.mubr.bf16.mxu0 0
        %10001 = vmatmul.mubr.bf16.gmra.mxu0 %v9858
        %v10002 = vpop.f32.mrf.mxu0
        %v10003 = vadd.f32 0.0, %v10002
        %v10004 = vpop.f32.mrf.mxu0
        %v10005 = vpop.f32.mrf.mxu0
        %v10006 = vadd.f32 0.0, %v10005
        %v10007 = vpop.f32.mrf.mxu0
        %10008 = vmatprep.mubr.bf16.mxu0 0
        %10009 = vmatmul.mubr.bf16.gmra.mxu0 %v9861
        %v10010 = vpop.f32.mrf.mxu0
        %v10011 = vadd.f32 0.0, %v10010
        %v10012 = vpop.f32.mrf.mxu0
        %v10013 = vpop.f32.mrf.mxu0
        %v10014 = vadd.f32 0.0, %v10013
        %v10015 = vpop.f32.mrf.mxu0
        %10016 = vmatprep.mubr.bf16.mxu0 0
        %10017 = vmatmul.mubr.bf16.gmra.mxu0 %v9864
        %v10018 = vpop.f32.mrf.mxu0
        %v10019 = vadd.f32 0.0, %v10018
        %v10020 = vpop.f32.mrf.mxu0
        %v10021 = vpop.f32.mrf.mxu0
        %v10022 = vadd.f32 0.0, %v10021
        %v10023 = vpop.f32.mrf.mxu0
        %10024 = vmatprep.mubr.bf16.mxu0 0
        %10025 = vmatmul.mubr.bf16.gmra.mxu0 %v9867
        %v10026 = vpop.f32.mrf.mxu0
        %v10027 = vadd.f32 0.0, %v10026
        %v10028 = vpop.f32.mrf.mxu0
        %v10029 = vpop.f32.mrf.mxu0
        %v10030 = vadd.f32 0.0, %v10029
        %v10031 = vpop.f32.mrf.mxu0
        %10032 = vdwg.mxu0
        %v10033 = vadd.f32 %v9552, %v9907
        %v10034 = vadd.f32 %v9553, %v9910
        %v10035 = vadd.f32 %v9554, %v9915
        %v10036 = vadd.f32 %v9555, %v9918
        %v10037 = vadd.f32 %v9556, %v9923
        %v10038 = vadd.f32 %v9557, %v9926
        %v10039 = vadd.f32 %v9558, %v9931
        %v10040 = vadd.f32 %v9559, %v9934
        %v10041 = vadd.f32 %v9560, %v9939
        %v10042 = vadd.f32 %v9561, %v9942
        %v10043 = vadd.f32 %v9562, %v9947
        %v10044 = vadd.f32 %v9563, %v9950
        %v10045 = vadd.f32 %v9564, %v9955
        %v10046 = vadd.f32 %v9565, %v9958
        %v10047 = vadd.f32 %v9566, %v9963
        %v10048 = vadd.f32 %v9567, %v9966
        %v10049 = vadd.f32 %v9568, %v9971
        %v10050 = vadd.f32 %v9569, %v9974
        %v10051 = vadd.f32 %v9570, %v9979
        %v10052 = vadd.f32 %v9571, %v9982
        %v10053 = vadd.f32 %v9572, %v9987
        %v10054 = vadd.f32 %v9573, %v9990
        %v10055 = vadd.f32 %v9574, %v9995
        %v10056 = vadd.f32 %v9575, %v9998
        %v10057 = vadd.f32 %v9576, %v10003
        %v10058 = vadd.f32 %v9577, %v10006
        %v10059 = vadd.f32 %v9578, %v10011
        %v10060 = vadd.f32 %v9579, %v10014
        %v10061 = vadd.f32 %v9580, %v10019
        %v10062 = vadd.f32 %v9581, %v10022
        %v10063 = vadd.f32 %v9582, %v10027
        %v10064 = vadd.f32 %v9583, %v10030
        %s10065 = scalar_lea.vmem [#allocation3], 24
        %v10066 = vld [vmem:[%s10065] sm:$0xf]
        %v10067 = vld [vmem:[%s10065 + $0x4] sm:$0xf]
        %v10068 = vld [vmem:[%s10065 + $0xc] sm:$0xf]
        %v10069 = vld [vmem:[%s10065 + $0x10] sm:$0xf]
        %v10070 = vld [vmem:[%s10065 + $0x18] sm:$0xf]
        %v10071 = vld [vmem:[%s10065 + $0x1c] sm:$0xf]
        %v10072 = vld [vmem:[%s10065 + $0x24] sm:$0xf]
        %v10073 = vld [vmem:[%s10065 + $0x28] sm:$0xf]
        %v10074 = vld [vmem:[%s10065 + $0x30] sm:$0xf]
        %v10075 = vld [vmem:[%s10065 + $0x34] sm:$0xf]
        %v10076 = vld [vmem:[%s10065 + $0x3c] sm:$0xf]
        %v10077 = vld [vmem:[%s10065 + $0x40] sm:$0xf]
        %v10078 = vld [vmem:[%s10065 + $0x48] sm:$0xf]
        %v10079 = vld [vmem:[%s10065 + $0x4c] sm:$0xf]
        %v10080 = vld [vmem:[%s10065 + $0x54] sm:$0xf]
        %v10081 = vld [vmem:[%s10065 + $0x58] sm:$0xf]
        %v10082 = vld [vmem:[%s10065 + $0x60] sm:$0xf]
        %v10083 = vld [vmem:[%s10065 + $0x64] sm:$0xf]
        %v10084 = vld [vmem:[%s10065 + $0x6c] sm:$0xf]
        %v10085 = vld [vmem:[%s10065 + $0x70] sm:$0xf]
        %v10086 = vld [vmem:[%s10065 + $0x78] sm:$0xf]
        %v10087 = vld [vmem:[%s10065 + $0x7c] sm:$0xf]
        %v10088 = vld [vmem:[%s10065 + $0x84] sm:$0xf]
        %v10089 = vld [vmem:[%s10065 + $0x88] sm:$0xf]
        %v10090 = vld [vmem:[%s10065 + $0x90] sm:$0xf]
        %v10091 = vld [vmem:[%s10065 + $0x94] sm:$0xf]
        %v10092 = vld [vmem:[%s10065 + $0x9c] sm:$0xf]
        %v10093 = vld [vmem:[%s10065 + $0xa0] sm:$0xf]
        %v10094 = vld [vmem:[%s10065 + $0xa8] sm:$0xf]
        %v10095 = vld [vmem:[%s10065 + $0xac] sm:$0xf]
        %v10096 = vld [vmem:[%s10065 + $0xb4] sm:$0xf]
        %v10097 = vld [vmem:[%s10065 + $0xb8] sm:$0xf]
        %s10098 = scalar_lea.vmem %s3, 72
        %v10099 = vld [vmem:[%s10098] sm:$0xf]
        %v10100 = vld [vmem:[%s10098 + $0x4] sm:$0xf]
        %v10101 = vld [vmem:[%s10098 + $0x8] sm:$0xf]
        %v10134 = vunpack.c.l.b16 %v10066
        %v10135 = vunpack.c.l.b16 %v10067
        %v10136 = vunpack.c.l.b16 %v10068
        %v10137 = vunpack.c.l.b16 %v10069
        %v10138 = vunpack.c.l.b16 %v10070
        %v10139 = vunpack.c.l.b16 %v10071
        %v10140 = vunpack.c.l.b16 %v10072
        %v10141 = vunpack.c.l.b16 %v10073
        %v10142 = vunpack.c.l.b16 %v10074
        %v10143 = vunpack.c.l.b16 %v10075
        %v10144 = vunpack.c.l.b16 %v10076
        %v10145 = vunpack.c.l.b16 %v10077
        %v10146 = vunpack.c.l.b16 %v10078
        %v10147 = vunpack.c.l.b16 %v10079
        %v10148 = vunpack.c.l.b16 %v10080
        %v10149 = vunpack.c.l.b16 %v10081
        %v10150 = vunpack.c.l.b16 %v10082
        %v10151 = vunpack.c.l.b16 %v10083
        %v10152 = vunpack.c.l.b16 %v10084
        %v10153 = vunpack.c.l.b16 %v10085
        %v10154 = vunpack.c.l.b16 %v10086
        %v10155 = vunpack.c.l.b16 %v10087
        %v10156 = vunpack.c.l.b16 %v10088
        %v10157 = vunpack.c.l.b16 %v10089
        %v10158 = vunpack.c.l.b16 %v10090
        %v10159 = vunpack.c.l.b16 %v10091
        %v10160 = vunpack.c.l.b16 %v10092
        %v10161 = vunpack.c.l.b16 %v10093
        %v10162 = vunpack.c.l.b16 %v10094
        %v10163 = vunpack.c.l.b16 %v10095
        %v10164 = vunpack.c.l.b16 %v10096
        %v10165 = vunpack.c.l.b16 %v10097
        %v10166 = vpack.c.b16 %v10135, %v10134
        %v10167 = vpack.c.b16 %v10137, %v10136
        %v10168 = vpack.c.b16 %v10139, %v10138
        %v10169 = vpack.c.b16 %v10141, %v10140
        %v10170 = vpack.c.b16 %v10143, %v10142
        %v10171 = vpack.c.b16 %v10145, %v10144
        %v10172 = vpack.c.b16 %v10147, %v10146
        %v10173 = vpack.c.b16 %v10149, %v10148
        %v10174 = vpack.c.b16 %v10151, %v10150
        %v10175 = vpack.c.b16 %v10153, %v10152
        %v10176 = vpack.c.b16 %v10155, %v10154
        %v10177 = vpack.c.b16 %v10157, %v10156
        %v10178 = vpack.c.b16 %v10159, %v10158
        %v10179 = vpack.c.b16 %v10161, %v10160
        %v10180 = vpack.c.b16 %v10163, %v10162
        %v10181 = vpack.c.b16 %v10165, %v10164
        %v10185 = vunpack.c.l.b16 %v10099
        %v10186 = vunpack.c.l.b16 %v10100
        %v10187 = vunpack.c.l.b16 %v10101
        %v10188 = vpack.c.b16 %v10186, %v10185
        %v10189 = vpack.c.b16 %v10187, %v10187
        %v10192 = vsel %vm5511, %v10166, 0
        %v10195 = vsel %vm5511, %v10167, 0
        %v10198 = vsel %vm5511, %v10168, 0
        %v10201 = vsel %vm5511, %v10169, 0
        %v10204 = vsel %vm5511, %v10170, 0
        %v10207 = vsel %vm5511, %v10171, 0
        %v10210 = vsel %vm5511, %v10172, 0
        %v10213 = vsel %vm5511, %v10173, 0
        %v10216 = vsel %vm5511, %v10174, 0
        %v10219 = vsel %vm5511, %v10175, 0
        %v10222 = vsel %vm5511, %v10176, 0
        %v10225 = vsel %vm5511, %v10177, 0
        %v10228 = vsel %vm5511, %v10178, 0
        %v10231 = vsel %vm5511, %v10179, 0
        %v10234 = vsel %vm5511, %v10180, 0
        %v10237 = vsel %vm5511, %v10181, 0
        %v10240 = vsel %vm7547, %v10189, 0
        %10242 = vmatprep.subr.bf16.mxu0 0
        %10243 = vmatpush1.bf16.msra.mxu0 0
        %10244 = vmatprep.subr.bf16.mxu0 0
        %10245 = vmatpush1.bf16.msra.mxu0 0
        %10246 = vmatprep.subr.bf16.mxu0 0
        %10247 = vmatpush1.bf16.msra.mxu0 0
        %10248 = vmatprep.subr.bf16.mxu0 0
        %10249 = vmatpush1.bf16.msra.mxu0 0
        %10250 = vmatprep.subr.bf16.mxu0 0
        %10251 = vmatpush1.bf16.msra.mxu0 0
        %10252 = vmatprep.subr.bf16.mxu0 0
        %10253 = vmatpush1.bf16.msra.mxu0 0
        %10254 = vmatprep.subr.bf16.mxu0 0
        %10255 = vmatpush1.bf16.msra.mxu0 %v10240
        %10256 = vmatprep.subr.bf16.mxu0 0
        %10257 = vmatpush1.bf16.msra.mxu0 %v10188
        %10258 = vmatprep.subr.bf16.mxu0 0
        %10259 = vmatpush2.bf16.msra.mxu0 0
        %10260 = vmatprep.subr.bf16.mxu0 0
        %10261 = vmatpush2.bf16.msra.mxu0 0
        %10262 = vmatprep.subr.bf16.mxu0 0
        %10263 = vmatpush2.bf16.msra.mxu0 0
        %10264 = vmatprep.subr.bf16.mxu0 0
        %10265 = vmatpush2.bf16.msra.mxu0 0
        %10266 = vmatprep.subr.bf16.mxu0 0
        %10267 = vmatpush2.bf16.msra.mxu0 0
        %10268 = vmatprep.subr.bf16.mxu0 0
        %10269 = vmatpush2.bf16.msra.mxu0 0
        %10270 = vmatprep.subr.bf16.mxu0 0
        %10271 = vmatpush2.bf16.msra.mxu0 0
        %10272 = vmatprep.subr.bf16.mxu0 0
        %10273 = vmatpush2.bf16.msra.mxu0 0
        %10274 = vmatprep.mubr.bf16.mxu0 0
        %10275 = vmatmul.mubr.bf16.gmra.mxu0 %v10192
        %v10276 = vpop.f32.mrf.mxu0
        %v10277 = vadd.f32 0.0, %v10276
        %v10278 = vpop.f32.mrf.mxu0
        %v10279 = vpop.f32.mrf.mxu0
        %v10280 = vadd.f32 0.0, %v10279
        %v10281 = vpop.f32.mrf.mxu0
        %10282 = vmatprep.mubr.bf16.mxu0 0
        %10283 = vmatmul.mubr.bf16.gmra.mxu0 %v10195
        %v10284 = vpop.f32.mrf.mxu0
        %v10285 = vadd.f32 0.0, %v10284
        %v10286 = vpop.f32.mrf.mxu0
        %v10287 = vpop.f32.mrf.mxu0
        %v10288 = vadd.f32 0.0, %v10287
        %v10289 = vpop.f32.mrf.mxu0
        %10290 = vmatprep.mubr.bf16.mxu0 0
        %10291 = vmatmul.mubr.bf16.gmra.mxu0 %v10198
        %v10292 = vpop.f32.mrf.mxu0
        %v10293 = vadd.f32 0.0, %v10292
        %v10294 = vpop.f32.mrf.mxu0
        %v10295 = vpop.f32.mrf.mxu0
        %v10296 = vadd.f32 0.0, %v10295
        %v10297 = vpop.f32.mrf.mxu0
        %10298 = vmatprep.mubr.bf16.mxu0 0
        %10299 = vmatmul.mubr.bf16.gmra.mxu0 %v10201
        %v10300 = vpop.f32.mrf.mxu0
        %v10301 = vadd.f32 0.0, %v10300
        %v10302 = vpop.f32.mrf.mxu0
        %v10303 = vpop.f32.mrf.mxu0
        %v10304 = vadd.f32 0.0, %v10303
        %v10305 = vpop.f32.mrf.mxu0
        %10306 = vmatprep.mubr.bf16.mxu0 0
        %10307 = vmatmul.mubr.bf16.gmra.mxu0 %v10204
        %v10308 = vpop.f32.mrf.mxu0
        %v10309 = vadd.f32 0.0, %v10308
        %v10310 = vpop.f32.mrf.mxu0
        %v10311 = vpop.f32.mrf.mxu0
        %v10312 = vadd.f32 0.0, %v10311
        %v10313 = vpop.f32.mrf.mxu0
        %10314 = vmatprep.mubr.bf16.mxu0 0
        %10315 = vmatmul.mubr.bf16.gmra.mxu0 %v10207
        %v10316 = vpop.f32.mrf.mxu0
        %v10317 = vadd.f32 0.0, %v10316
        %v10318 = vpop.f32.mrf.mxu0
        %v10319 = vpop.f32.mrf.mxu0
        %v10320 = vadd.f32 0.0, %v10319
        %v10321 = vpop.f32.mrf.mxu0
        %10322 = vmatprep.mubr.bf16.mxu0 0
        %10323 = vmatmul.mubr.bf16.gmra.mxu0 %v10210
        %v10324 = vpop.f32.mrf.mxu0
        %v10325 = vadd.f32 0.0, %v10324
        %v10326 = vpop.f32.mrf.mxu0
        %v10327 = vpop.f32.mrf.mxu0
        %v10328 = vadd.f32 0.0, %v10327
        %v10329 = vpop.f32.mrf.mxu0
        %10330 = vmatprep.mubr.bf16.mxu0 0
        %10331 = vmatmul.mubr.bf16.gmra.mxu0 %v10213
        %v10332 = vpop.f32.mrf.mxu0
        %v10333 = vadd.f32 0.0, %v10332
        %v10334 = vpop.f32.mrf.mxu0
        %v10335 = vpop.f32.mrf.mxu0
        %v10336 = vadd.f32 0.0, %v10335
        %v10337 = vpop.f32.mrf.mxu0
        %10338 = vmatprep.mubr.bf16.mxu0 0
        %10339 = vmatmul.mubr.bf16.gmra.mxu0 %v10216
        %v10340 = vpop.f32.mrf.mxu0
        %v10341 = vadd.f32 0.0, %v10340
        %v10342 = vpop.f32.mrf.mxu0
        %v10343 = vpop.f32.mrf.mxu0
        %v10344 = vadd.f32 0.0, %v10343
        %v10345 = vpop.f32.mrf.mxu0
        %10346 = vmatprep.mubr.bf16.mxu0 0
        %10347 = vmatmul.mubr.bf16.gmra.mxu0 %v10219
        %v10348 = vpop.f32.mrf.mxu0
        %v10349 = vadd.f32 0.0, %v10348
        %v10350 = vpop.f32.mrf.mxu0
        %v10351 = vpop.f32.mrf.mxu0
        %v10352 = vadd.f32 0.0, %v10351
        %v10353 = vpop.f32.mrf.mxu0
        %10354 = vmatprep.mubr.bf16.mxu0 0
        %10355 = vmatmul.mubr.bf16.gmra.mxu0 %v10222
        %v10356 = vpop.f32.mrf.mxu0
        %v10357 = vadd.f32 0.0, %v10356
        %v10358 = vpop.f32.mrf.mxu0
        %v10359 = vpop.f32.mrf.mxu0
        %v10360 = vadd.f32 0.0, %v10359
        %v10361 = vpop.f32.mrf.mxu0
        %10362 = vmatprep.mubr.bf16.mxu0 0
        %10363 = vmatmul.mubr.bf16.gmra.mxu0 %v10225
        %v10364 = vpop.f32.mrf.mxu0
        %v10365 = vadd.f32 0.0, %v10364
        %v10366 = vpop.f32.mrf.mxu0
        %v10367 = vpop.f32.mrf.mxu0
        %v10368 = vadd.f32 0.0, %v10367
        %v10369 = vpop.f32.mrf.mxu0
        %10370 = vmatprep.mubr.bf16.mxu0 0
        %10371 = vmatmul.mubr.bf16.gmra.mxu0 %v10228
        %v10372 = vpop.f32.mrf.mxu0
        %v10373 = vadd.f32 0.0, %v10372
        %v10374 = vpop.f32.mrf.mxu0
        %v10375 = vpop.f32.mrf.mxu0
        %v10376 = vadd.f32 0.0, %v10375
        %v10377 = vpop.f32.mrf.mxu0
        %10378 = vmatprep.mubr.bf16.mxu0 0
        %10379 = vmatmul.mubr.bf16.gmra.mxu0 %v10231
        %v10380 = vpop.f32.mrf.mxu0
        %v10381 = vadd.f32 0.0, %v10380
        %v10382 = vpop.f32.mrf.mxu0
        %v10383 = vpop.f32.mrf.mxu0
        %v10384 = vadd.f32 0.0, %v10383
        %v10385 = vpop.f32.mrf.mxu0
        %10386 = vmatprep.mubr.bf16.mxu0 0
        %10387 = vmatmul.mubr.bf16.gmra.mxu0 %v10234
        %v10388 = vpop.f32.mrf.mxu0
        %v10389 = vadd.f32 0.0, %v10388
        %v10390 = vpop.f32.mrf.mxu0
        %v10391 = vpop.f32.mrf.mxu0
        %v10392 = vadd.f32 0.0, %v10391
        %v10393 = vpop.f32.mrf.mxu0
        %10394 = vmatprep.mubr.bf16.mxu0 0
        %10395 = vmatmul.mubr.bf16.gmra.mxu0 %v10237
        %v10396 = vpop.f32.mrf.mxu0
        %v10397 = vadd.f32 0.0, %v10396
        %v10398 = vpop.f32.mrf.mxu0
        %v10399 = vpop.f32.mrf.mxu0
        %v10400 = vadd.f32 0.0, %v10399
        %v10401 = vpop.f32.mrf.mxu0
        %10402 = vdwg.mxu0
        %v10403 = vadd.f32 %v10033, %v10277
        %v10404 = vadd.f32 %v10034, %v10280
        %v10405 = vadd.f32 %v10035, %v10285
        %v10406 = vadd.f32 %v10036, %v10288
        %v10407 = vadd.f32 %v10037, %v10293
        %v10408 = vadd.f32 %v10038, %v10296
        %v10409 = vadd.f32 %v10039, %v10301
        %v10410 = vadd.f32 %v10040, %v10304
        %v10411 = vadd.f32 %v10041, %v10309
        %v10412 = vadd.f32 %v10042, %v10312
        %v10413 = vadd.f32 %v10043, %v10317
        %v10414 = vadd.f32 %v10044, %v10320
        %v10415 = vadd.f32 %v10045, %v10325
        %v10416 = vadd.f32 %v10046, %v10328
        %v10417 = vadd.f32 %v10047, %v10333
        %v10418 = vadd.f32 %v10048, %v10336
        %v10419 = vadd.f32 %v10049, %v10341
        %v10420 = vadd.f32 %v10050, %v10344
        %v10421 = vadd.f32 %v10051, %v10349
        %v10422 = vadd.f32 %v10052, %v10352
        %v10423 = vadd.f32 %v10053, %v10357
        %v10424 = vadd.f32 %v10054, %v10360
        %v10425 = vadd.f32 %v10055, %v10365
        %v10426 = vadd.f32 %v10056, %v10368
        %v10427 = vadd.f32 %v10057, %v10373
        %v10428 = vadd.f32 %v10058, %v10376
        %v10429 = vadd.f32 %v10059, %v10381
        %v10430 = vadd.f32 %v10060, %v10384
        %v10431 = vadd.f32 %v10061, %v10389
        %v10432 = vadd.f32 %v10062, %v10392
        %v10433 = vadd.f32 %v10063, %v10397
        %v10434 = vadd.f32 %v10064, %v10400
        %v10435 = vld [vmem:[%s10065] sm:$0xf]
        %v10436 = vld [vmem:[%s10065 + $0x4] sm:$0xf]
        %v10437 = vld [vmem:[%s10065 + $0x8] sm:$0x1]
        %v10438 = vld [vmem:[%s10065 + $0xc] sm:$0xf]
        %v10439 = vld [vmem:[%s10065 + $0x10] sm:$0xf]
        %v10440 = vld [vmem:[%s10065 + $0x14] sm:$0x1]
        %v10441 = vld [vmem:[%s10065 + $0x18] sm:$0xf]
        %v10442 = vld [vmem:[%s10065 + $0x1c] sm:$0xf]
        %v10443 = vld [vmem:[%s10065 + $0x20] sm:$0x1]
        %v10444 = vld [vmem:[%s10065 + $0x24] sm:$0xf]
        %v10445 = vld [vmem:[%s10065 + $0x28] sm:$0xf]
        %v10446 = vld [vmem:[%s10065 + $0x2c] sm:$0x1]
        %v10447 = vld [vmem:[%s10065 + $0x30] sm:$0xf]
        %v10448 = vld [vmem:[%s10065 + $0x34] sm:$0xf]
        %v10449 = vld [vmem:[%s10065 + $0x38] sm:$0x1]
        %v10450 = vld [vmem:[%s10065 + $0x3c] sm:$0xf]
        %v10451 = vld [vmem:[%s10065 + $0x40] sm:$0xf]
        %v10452 = vld [vmem:[%s10065 + $0x44] sm:$0x1]
        %v10453 = vld [vmem:[%s10065 + $0x48] sm:$0xf]
        %v10454 = vld [vmem:[%s10065 + $0x4c] sm:$0xf]
        %v10455 = vld [vmem:[%s10065 + $0x50] sm:$0x1]
        %v10456 = vld [vmem:[%s10065 + $0x54] sm:$0xf]
        %v10457 = vld [vmem:[%s10065 + $0x58] sm:$0xf]
        %v10458 = vld [vmem:[%s10065 + $0x5c] sm:$0x1]
        %v10459 = vld [vmem:[%s10065 + $0x60] sm:$0xf]
        %v10460 = vld [vmem:[%s10065 + $0x64] sm:$0xf]
        %v10461 = vld [vmem:[%s10065 + $0x68] sm:$0x1]
        %v10462 = vld [vmem:[%s10065 + $0x6c] sm:$0xf]
        %v10463 = vld [vmem:[%s10065 + $0x70] sm:$0xf]
        %v10464 = vld [vmem:[%s10065 + $0x74] sm:$0x1]
        %v10465 = vld [vmem:[%s10065 + $0x78] sm:$0xf]
        %v10466 = vld [vmem:[%s10065 + $0x7c] sm:$0xf]
        %v10467 = vld [vmem:[%s10065 + $0x80] sm:$0x1]
        %v10468 = vld [vmem:[%s10065 + $0x84] sm:$0xf]
        %v10469 = vld [vmem:[%s10065 + $0x88] sm:$0xf]
        %v10470 = vld [vmem:[%s10065 + $0x8c] sm:$0x1]
        %v10471 = vld [vmem:[%s10065 + $0x90] sm:$0xf]
        %v10472 = vld [vmem:[%s10065 + $0x94] sm:$0xf]
        %v10473 = vld [vmem:[%s10065 + $0x98] sm:$0x1]
        %v10474 = vld [vmem:[%s10065 + $0x9c] sm:$0xf]
        %v10475 = vld [vmem:[%s10065 + $0xa0] sm:$0xf]
        %v10476 = vld [vmem:[%s10065 + $0xa4] sm:$0x1]
        %v10477 = vld [vmem:[%s10065 + $0xa8] sm:$0xf]
        %v10478 = vld [vmem:[%s10065 + $0xac] sm:$0xf]
        %v10479 = vld [vmem:[%s10065 + $0xb0] sm:$0x1]
        %v10480 = vld [vmem:[%s10065 + $0xb4] sm:$0xf]
        %v10481 = vld [vmem:[%s10065 + $0xb8] sm:$0xf]
        %v10482 = vld [vmem:[%s10065 + $0xbc] sm:$0x1]
        %v10484 = vshrl.u32 %v10435, 16
        %v10486 = vrot.slane %v10484, 4
        %v10487 = vshll.u32 %v10435, 16
        %v10489 = vrot.slane %v10487, 5
        %v10490 = vor.u32 %v10486, %v10489
        %v10491 = vrot.slane %v10490, 4
        %v10493 = vshll.u32 %v10436, 16
        %v10495 = vrot.slane %v10493, 5
        %v10496 = vsel %vm962, %v10491, %v10495
        %v10497 = vshrl.u32 %v10436, 16
        %v10499 = vrot.slane %v10497, 4
        %v10500 = vor.u32 %v10499, %v10495
        %v10501 = vrot.slane %v10500, 4
        %v10503 = vshll.u32 %v10437, 16
        %v10505 = vrot.slane %v10503, 5
        %v10506 = vsel %vm962, %v10501, %v10505
        %v10508 = vshrl.u32 %v10438, 16
        %v10510 = vrot.slane %v10508, 4
        %v10511 = vshll.u32 %v10438, 16
        %v10513 = vrot.slane %v10511, 5
        %v10514 = vor.u32 %v10510, %v10513
        %v10515 = vrot.slane %v10514, 4
        %v10517 = vshll.u32 %v10439, 16
        %v10519 = vrot.slane %v10517, 5
        %v10520 = vsel %vm962, %v10515, %v10519
        %v10521 = vshrl.u32 %v10439, 16
        %v10523 = vrot.slane %v10521, 4
        %v10524 = vor.u32 %v10523, %v10519
        %v10525 = vrot.slane %v10524, 4
        %v10527 = vshll.u32 %v10440, 16
        %v10529 = vrot.slane %v10527, 5
        %v10530 = vsel %vm962, %v10525, %v10529
        %v10532 = vshrl.u32 %v10441, 16
        %v10534 = vrot.slane %v10532, 4
        %v10535 = vshll.u32 %v10441, 16
        %v10537 = vrot.slane %v10535, 5
        %v10538 = vor.u32 %v10534, %v10537
        %v10539 = vrot.slane %v10538, 4
        %v10541 = vshll.u32 %v10442, 16
        %v10543 = vrot.slane %v10541, 5
        %v10544 = vsel %vm962, %v10539, %v10543
        %v10545 = vshrl.u32 %v10442, 16
        %v10547 = vrot.slane %v10545, 4
        %v10548 = vor.u32 %v10547, %v10543
        %v10549 = vrot.slane %v10548, 4
        %v10551 = vshll.u32 %v10443, 16
        %v10553 = vrot.slane %v10551, 5
        %v10554 = vsel %vm962, %v10549, %v10553
        %v10556 = vshrl.u32 %v10444, 16
        %v10558 = vrot.slane %v10556, 4
        %v10559 = vshll.u32 %v10444, 16
        %v10561 = vrot.slane %v10559, 5
        %v10562 = vor.u32 %v10558, %v10561
        %v10563 = vrot.slane %v10562, 4
        %v10565 = vshll.u32 %v10445, 16
        %v10567 = vrot.slane %v10565, 5
        %v10568 = vsel %vm962, %v10563, %v10567
        %v10569 = vshrl.u32 %v10445, 16
        %v10571 = vrot.slane %v10569, 4
        %v10572 = vor.u32 %v10571, %v10567
        %v10573 = vrot.slane %v10572, 4
        %v10575 = vshll.u32 %v10446, 16
        %v10577 = vrot.slane %v10575, 5
        %v10578 = vsel %vm962, %v10573, %v10577
        %v10580 = vshrl.u32 %v10447, 16
        %v10582 = vrot.slane %v10580, 4
        %v10583 = vshll.u32 %v10447, 16
        %v10585 = vrot.slane %v10583, 5
        %v10586 = vor.u32 %v10582, %v10585
        %v10587 = vrot.slane %v10586, 4
        %v10589 = vshll.u32 %v10448, 16
        %v10591 = vrot.slane %v10589, 5
        %v10592 = vsel %vm962, %v10587, %v10591
        %v10593 = vshrl.u32 %v10448, 16
        %v10595 = vrot.slane %v10593, 4
        %v10596 = vor.u32 %v10595, %v10591
        %v10597 = vrot.slane %v10596, 4
        %v10599 = vshll.u32 %v10449, 16
        %v10601 = vrot.slane %v10599, 5
        %v10602 = vsel %vm962, %v10597, %v10601
        %v10604 = vshrl.u32 %v10450, 16
        %v10606 = vrot.slane %v10604, 4
        %v10607 = vshll.u32 %v10450, 16
        %v10609 = vrot.slane %v10607, 5
        %v10610 = vor.u32 %v10606, %v10609
        %v10611 = vrot.slane %v10610, 4
        %v10613 = vshll.u32 %v10451, 16
        %v10615 = vrot.slane %v10613, 5
        %v10616 = vsel %vm962, %v10611, %v10615
        %v10617 = vshrl.u32 %v10451, 16
        %v10619 = vrot.slane %v10617, 4
        %v10620 = vor.u32 %v10619, %v10615
        %v10621 = vrot.slane %v10620, 4
        %v10623 = vshll.u32 %v10452, 16
        %v10625 = vrot.slane %v10623, 5
        %v10626 = vsel %vm962, %v10621, %v10625
        %v10628 = vshrl.u32 %v10453, 16
        %v10630 = vrot.slane %v10628, 4
        %v10631 = vshll.u32 %v10453, 16
        %v10633 = vrot.slane %v10631, 5
        %v10634 = vor.u32 %v10630, %v10633
        %v10635 = vrot.slane %v10634, 4
        %v10637 = vshll.u32 %v10454, 16
        %v10639 = vrot.slane %v10637, 5
        %v10640 = vsel %vm962, %v10635, %v10639
        %v10641 = vshrl.u32 %v10454, 16
        %v10643 = vrot.slane %v10641, 4
        %v10644 = vor.u32 %v10643, %v10639
        %v10645 = vrot.slane %v10644, 4
        %v10647 = vshll.u32 %v10455, 16
        %v10649 = vrot.slane %v10647, 5
        %v10650 = vsel %vm962, %v10645, %v10649
        %v10652 = vshrl.u32 %v10456, 16
        %v10654 = vrot.slane %v10652, 4
        %v10655 = vshll.u32 %v10456, 16
        %v10657 = vrot.slane %v10655, 5
        %v10658 = vor.u32 %v10654, %v10657
        %v10659 = vrot.slane %v10658, 4
        %v10661 = vshll.u32 %v10457, 16
        %v10663 = vrot.slane %v10661, 5
        %v10664 = vsel %vm962, %v10659, %v10663
        %v10665 = vshrl.u32 %v10457, 16
        %v10667 = vrot.slane %v10665, 4
        %v10668 = vor.u32 %v10667, %v10663
        %v10669 = vrot.slane %v10668, 4
        %v10671 = vshll.u32 %v10458, 16
        %v10673 = vrot.slane %v10671, 5
        %v10674 = vsel %vm962, %v10669, %v10673
        %v10676 = vshrl.u32 %v10459, 16
        %v10678 = vrot.slane %v10676, 4
        %v10679 = vshll.u32 %v10459, 16
        %v10681 = vrot.slane %v10679, 5
        %v10682 = vor.u32 %v10678, %v10681
        %v10683 = vrot.slane %v10682, 4
        %v10685 = vshll.u32 %v10460, 16
        %v10687 = vrot.slane %v10685, 5
        %v10688 = vsel %vm962, %v10683, %v10687
        %v10689 = vshrl.u32 %v10460, 16
        %v10691 = vrot.slane %v10689, 4
        %v10692 = vor.u32 %v10691, %v10687
        %v10693 = vrot.slane %v10692, 4
        %v10695 = vshll.u32 %v10461, 16
        %v10697 = vrot.slane %v10695, 5
        %v10698 = vsel %vm962, %v10693, %v10697
        %v10700 = vshrl.u32 %v10462, 16
        %v10702 = vrot.slane %v10700, 4
        %v10703 = vshll.u32 %v10462, 16
        %v10705 = vrot.slane %v10703, 5
        %v10706 = vor.u32 %v10702, %v10705
        %v10707 = vrot.slane %v10706, 4
        %v10709 = vshll.u32 %v10463, 16
        %v10711 = vrot.slane %v10709, 5
        %v10712 = vsel %vm962, %v10707, %v10711
        %v10713 = vshrl.u32 %v10463, 16
        %v10715 = vrot.slane %v10713, 4
        %v10716 = vor.u32 %v10715, %v10711
        %v10717 = vrot.slane %v10716, 4
        %v10719 = vshll.u32 %v10464, 16
        %v10721 = vrot.slane %v10719, 5
        %v10722 = vsel %vm962, %v10717, %v10721
        %v10724 = vshrl.u32 %v10465, 16
        %v10726 = vrot.slane %v10724, 4
        %v10727 = vshll.u32 %v10465, 16
        %v10729 = vrot.slane %v10727, 5
        %v10730 = vor.u32 %v10726, %v10729
        %v10731 = vrot.slane %v10730, 4
        %v10733 = vshll.u32 %v10466, 16
        %v10735 = vrot.slane %v10733, 5
        %v10736 = vsel %vm962, %v10731, %v10735
        %v10737 = vshrl.u32 %v10466, 16
        %v10739 = vrot.slane %v10737, 4
        %v10740 = vor.u32 %v10739, %v10735
        %v10741 = vrot.slane %v10740, 4
        %v10743 = vshll.u32 %v10467, 16
        %v10745 = vrot.slane %v10743, 5
        %v10746 = vsel %vm962, %v10741, %v10745
        %v10748 = vshrl.u32 %v10468, 16
        %v10750 = vrot.slane %v10748, 4
        %v10751 = vshll.u32 %v10468, 16
        %v10753 = vrot.slane %v10751, 5
        %v10754 = vor.u32 %v10750, %v10753
        %v10755 = vrot.slane %v10754, 4
        %v10757 = vshll.u32 %v10469, 16
        %v10759 = vrot.slane %v10757, 5
        %v10760 = vsel %vm962, %v10755, %v10759
        %v10761 = vshrl.u32 %v10469, 16
        %v10763 = vrot.slane %v10761, 4
        %v10764 = vor.u32 %v10763, %v10759
        %v10765 = vrot.slane %v10764, 4
        %v10767 = vshll.u32 %v10470, 16
        %v10769 = vrot.slane %v10767, 5
        %v10770 = vsel %vm962, %v10765, %v10769
        %v10772 = vshrl.u32 %v10471, 16
        %v10774 = vrot.slane %v10772, 4
        %v10775 = vshll.u32 %v10471, 16
        %v10777 = vrot.slane %v10775, 5
        %v10778 = vor.u32 %v10774, %v10777
        %v10779 = vrot.slane %v10778, 4
        %v10781 = vshll.u32 %v10472, 16
        %v10783 = vrot.slane %v10781, 5
        %v10784 = vsel %vm962, %v10779, %v10783
        %v10785 = vshrl.u32 %v10472, 16
        %v10787 = vrot.slane %v10785, 4
        %v10788 = vor.u32 %v10787, %v10783
        %v10789 = vrot.slane %v10788, 4
        %v10791 = vshll.u32 %v10473, 16
        %v10793 = vrot.slane %v10791, 5
        %v10794 = vsel %vm962, %v10789, %v10793
        %v10796 = vshrl.u32 %v10474, 16
        %v10798 = vrot.slane %v10796, 4
        %v10799 = vshll.u32 %v10474, 16
        %v10801 = vrot.slane %v10799, 5
        %v10802 = vor.u32 %v10798, %v10801
        %v10803 = vrot.slane %v10802, 4
        %v10805 = vshll.u32 %v10475, 16
        %v10807 = vrot.slane %v10805, 5
        %v10808 = vsel %vm962, %v10803, %v10807
        %v10809 = vshrl.u32 %v10475, 16
        %v10811 = vrot.slane %v10809, 4
        %v10812 = vor.u32 %v10811, %v10807
        %v10813 = vrot.slane %v10812, 4
        %v10815 = vshll.u32 %v10476, 16
        %v10817 = vrot.slane %v10815, 5
        %v10818 = vsel %vm962, %v10813, %v10817
        %v10820 = vshrl.u32 %v10477, 16
        %v10822 = vrot.slane %v10820, 4
        %v10823 = vshll.u32 %v10477, 16
        %v10825 = vrot.slane %v10823, 5
        %v10826 = vor.u32 %v10822, %v10825
        %v10827 = vrot.slane %v10826, 4
        %v10829 = vshll.u32 %v10478, 16
        %v10831 = vrot.slane %v10829, 5
        %v10832 = vsel %vm962, %v10827, %v10831
        %v10833 = vshrl.u32 %v10478, 16
        %v10835 = vrot.slane %v10833, 4
        %v10836 = vor.u32 %v10835, %v10831
        %v10837 = vrot.slane %v10836, 4
        %v10839 = vshll.u32 %v10479, 16
        %v10841 = vrot.slane %v10839, 5
        %v10842 = vsel %vm962, %v10837, %v10841
        %v10844 = vshrl.u32 %v10480, 16
        %v10846 = vrot.slane %v10844, 4
        %v10847 = vshll.u32 %v10480, 16
        %v10849 = vrot.slane %v10847, 5
        %v10850 = vor.u32 %v10846, %v10849
        %v10851 = vrot.slane %v10850, 4
        %v10853 = vshll.u32 %v10481, 16
        %v10855 = vrot.slane %v10853, 5
        %v10856 = vsel %vm962, %v10851, %v10855
        %v10857 = vshrl.u32 %v10481, 16
        %v10859 = vrot.slane %v10857, 4
        %v10860 = vor.u32 %v10859, %v10855
        %v10861 = vrot.slane %v10860, 4
        %v10863 = vshll.u32 %v10482, 16
        %v10865 = vrot.slane %v10863, 5
        %v10866 = vsel %vm962, %v10861, %v10865
        %s10867 = scalar_lea.vmem %s3, 84
        %v10868 = vld [vmem:[%s10867] sm:$0xf]
        %v10869 = vld [vmem:[%s10867 + $0x4] sm:$0xf]
        %v10870 = vld [vmem:[%s10867 + $0x8] sm:$0xf]
        %v10871 = vunpack.c.l.b16 %v10496
        %v10872 = vunpack.c.l.b16 %v10506
        %v10873 = vunpack.c.l.b16 %v10520
        %v10874 = vunpack.c.l.b16 %v10530
        %v10875 = vunpack.c.l.b16 %v10544
        %v10876 = vunpack.c.l.b16 %v10554
        %v10877 = vunpack.c.l.b16 %v10568
        %v10878 = vunpack.c.l.b16 %v10578
        %v10879 = vunpack.c.l.b16 %v10592
        %v10880 = vunpack.c.l.b16 %v10602
        %v10881 = vunpack.c.l.b16 %v10616
        %v10882 = vunpack.c.l.b16 %v10626
        %v10883 = vunpack.c.l.b16 %v10640
        %v10884 = vunpack.c.l.b16 %v10650
        %v10885 = vunpack.c.l.b16 %v10664
        %v10886 = vunpack.c.l.b16 %v10674
        %v10887 = vunpack.c.l.b16 %v10688
        %v10888 = vunpack.c.l.b16 %v10698
        %v10889 = vunpack.c.l.b16 %v10712
        %v10890 = vunpack.c.l.b16 %v10722
        %v10891 = vunpack.c.l.b16 %v10736
        %v10892 = vunpack.c.l.b16 %v10746
        %v10893 = vunpack.c.l.b16 %v10760
        %v10894 = vunpack.c.l.b16 %v10770
        %v10895 = vunpack.c.l.b16 %v10784
        %v10896 = vunpack.c.l.b16 %v10794
        %v10897 = vunpack.c.l.b16 %v10808
        %v10898 = vunpack.c.l.b16 %v10818
        %v10899 = vunpack.c.l.b16 %v10832
        %v10900 = vunpack.c.l.b16 %v10842
        %v10901 = vunpack.c.l.b16 %v10856
        %v10902 = vunpack.c.l.b16 %v10866
        %v10903 = vpack.c.b16 %v10872, %v10871
        %v10904 = vpack.c.b16 %v10874, %v10873
        %v10905 = vpack.c.b16 %v10876, %v10875
        %v10906 = vpack.c.b16 %v10878, %v10877
        %v10907 = vpack.c.b16 %v10880, %v10879
        %v10908 = vpack.c.b16 %v10882, %v10881
        %v10909 = vpack.c.b16 %v10884, %v10883
        %v10910 = vpack.c.b16 %v10886, %v10885
        %v10911 = vpack.c.b16 %v10888, %v10887
        %v10912 = vpack.c.b16 %v10890, %v10889
        %v10913 = vpack.c.b16 %v10892, %v10891
        %v10914 = vpack.c.b16 %v10894, %v10893
        %v10915 = vpack.c.b16 %v10896, %v10895
        %v10916 = vpack.c.b16 %v10898, %v10897
        %v10917 = vpack.c.b16 %v10900, %v10899
        %v10918 = vpack.c.b16 %v10902, %v10901
        %v10922 = vunpack.c.l.b16 %v10868
        %v10923 = vunpack.c.l.b16 %v10869
        %v10924 = vunpack.c.l.b16 %v10870
        %v10925 = vpack.c.b16 %v10923, %v10922
        %v10926 = vpack.c.b16 %v10924, %v10924
        %v10929 = vsel %vm5511, %v10903, 0
        %v10932 = vsel %vm5511, %v10904, 0
        %v10935 = vsel %vm5511, %v10905, 0
        %v10938 = vsel %vm5511, %v10906, 0
        %v10941 = vsel %vm5511, %v10907, 0
        %v10944 = vsel %vm5511, %v10908, 0
        %v10947 = vsel %vm5511, %v10909, 0
        %v10950 = vsel %vm5511, %v10910, 0
        %v10953 = vsel %vm5511, %v10911, 0
        %v10956 = vsel %vm5511, %v10912, 0
        %v10959 = vsel %vm5511, %v10913, 0
        %v10962 = vsel %vm5511, %v10914, 0
        %v10965 = vsel %vm5511, %v10915, 0
        %v10968 = vsel %vm5511, %v10916, 0
        %v10971 = vsel %vm5511, %v10917, 0
        %v10974 = vsel %vm5511, %v10918, 0
        %v10977 = vsel %vm7547, %v10926, 0
        %10979 = vmatprep.subr.bf16.mxu0 0
        %10980 = vmatpush1.bf16.msra.mxu0 0
        %10981 = vmatprep.subr.bf16.mxu0 0
        %10982 = vmatpush1.bf16.msra.mxu0 0
        %10983 = vmatprep.subr.bf16.mxu0 0
        %10984 = vmatpush1.bf16.msra.mxu0 0
        %10985 = vmatprep.subr.bf16.mxu0 0
        %10986 = vmatpush1.bf16.msra.mxu0 0
        %10987 = vmatprep.subr.bf16.mxu0 0
        %10988 = vmatpush1.bf16.msra.mxu0 0
        %10989 = vmatprep.subr.bf16.mxu0 0
        %10990 = vmatpush1.bf16.msra.mxu0 0
        %10991 = vmatprep.subr.bf16.mxu0 0
        %10992 = vmatpush1.bf16.msra.mxu0 %v10977
        %10993 = vmatprep.subr.bf16.mxu0 0
        %10994 = vmatpush1.bf16.msra.mxu0 %v10925
        %10995 = vmatprep.subr.bf16.mxu0 0
        %10996 = vmatpush2.bf16.msra.mxu0 0
        %10997 = vmatprep.subr.bf16.mxu0 0
        %10998 = vmatpush2.bf16.msra.mxu0 0
        %10999 = vmatprep.subr.bf16.mxu0 0
        %11000 = vmatpush2.bf16.msra.mxu0 0
        %11001 = vmatprep.subr.bf16.mxu0 0
        %11002 = vmatpush2.bf16.msra.mxu0 0
        %11003 = vmatprep.subr.bf16.mxu0 0
        %11004 = vmatpush2.bf16.msra.mxu0 0
        %11005 = vmatprep.subr.bf16.mxu0 0
        %11006 = vmatpush2.bf16.msra.mxu0 0
        %11007 = vmatprep.subr.bf16.mxu0 0
        %11008 = vmatpush2.bf16.msra.mxu0 0
        %11009 = vmatprep.subr.bf16.mxu0 0
        %11010 = vmatpush2.bf16.msra.mxu0 0
        %11011 = vmatprep.mubr.bf16.mxu0 0
        %11012 = vmatmul.mubr.bf16.gmra.mxu0 %v10929
        %v11013 = vpop.f32.mrf.mxu0
        %v11014 = vadd.f32 0.0, %v11013
        %v11015 = vpop.f32.mrf.mxu0
        %v11016 = vpop.f32.mrf.mxu0
        %v11017 = vadd.f32 0.0, %v11016
        %v11018 = vpop.f32.mrf.mxu0
        %11019 = vmatprep.mubr.bf16.mxu0 0
        %11020 = vmatmul.mubr.bf16.gmra.mxu0 %v10932
        %v11021 = vpop.f32.mrf.mxu0
        %v11022 = vadd.f32 0.0, %v11021
        %v11023 = vpop.f32.mrf.mxu0
        %v11024 = vpop.f32.mrf.mxu0
        %v11025 = vadd.f32 0.0, %v11024
        %v11026 = vpop.f32.mrf.mxu0
        %11027 = vmatprep.mubr.bf16.mxu0 0
        %11028 = vmatmul.mubr.bf16.gmra.mxu0 %v10935
        %v11029 = vpop.f32.mrf.mxu0
        %v11030 = vadd.f32 0.0, %v11029
        %v11031 = vpop.f32.mrf.mxu0
        %v11032 = vpop.f32.mrf.mxu0
        %v11033 = vadd.f32 0.0, %v11032
        %v11034 = vpop.f32.mrf.mxu0
        %11035 = vmatprep.mubr.bf16.mxu0 0
        %11036 = vmatmul.mubr.bf16.gmra.mxu0 %v10938
        %v11037 = vpop.f32.mrf.mxu0
        %v11038 = vadd.f32 0.0, %v11037
        %v11039 = vpop.f32.mrf.mxu0
        %v11040 = vpop.f32.mrf.mxu0
        %v11041 = vadd.f32 0.0, %v11040
        %v11042 = vpop.f32.mrf.mxu0
        %11043 = vmatprep.mubr.bf16.mxu0 0
        %11044 = vmatmul.mubr.bf16.gmra.mxu0 %v10941
        %v11045 = vpop.f32.mrf.mxu0
        %v11046 = vadd.f32 0.0, %v11045
        %v11047 = vpop.f32.mrf.mxu0
        %v11048 = vpop.f32.mrf.mxu0
        %v11049 = vadd.f32 0.0, %v11048
        %v11050 = vpop.f32.mrf.mxu0
        %11051 = vmatprep.mubr.bf16.mxu0 0
        %11052 = vmatmul.mubr.bf16.gmra.mxu0 %v10944
        %v11053 = vpop.f32.mrf.mxu0
        %v11054 = vadd.f32 0.0, %v11053
        %v11055 = vpop.f32.mrf.mxu0
        %v11056 = vpop.f32.mrf.mxu0
        %v11057 = vadd.f32 0.0, %v11056
        %v11058 = vpop.f32.mrf.mxu0
        %11059 = vmatprep.mubr.bf16.mxu0 0
        %11060 = vmatmul.mubr.bf16.gmra.mxu0 %v10947
        %v11061 = vpop.f32.mrf.mxu0
        %v11062 = vadd.f32 0.0, %v11061
        %v11063 = vpop.f32.mrf.mxu0
        %v11064 = vpop.f32.mrf.mxu0
        %v11065 = vadd.f32 0.0, %v11064
        %v11066 = vpop.f32.mrf.mxu0
        %11067 = vmatprep.mubr.bf16.mxu0 0
        %11068 = vmatmul.mubr.bf16.gmra.mxu0 %v10950
        %v11069 = vpop.f32.mrf.mxu0
        %v11070 = vadd.f32 0.0, %v11069
        %v11071 = vpop.f32.mrf.mxu0
        %v11072 = vpop.f32.mrf.mxu0
        %v11073 = vadd.f32 0.0, %v11072
        %v11074 = vpop.f32.mrf.mxu0
        %11075 = vmatprep.mubr.bf16.mxu0 0
        %11076 = vmatmul.mubr.bf16.gmra.mxu0 %v10953
        %v11077 = vpop.f32.mrf.mxu0
        %v11078 = vadd.f32 0.0, %v11077
        %v11079 = vpop.f32.mrf.mxu0
        %v11080 = vpop.f32.mrf.mxu0
        %v11081 = vadd.f32 0.0, %v11080
        %v11082 = vpop.f32.mrf.mxu0
        %11083 = vmatprep.mubr.bf16.mxu0 0
        %11084 = vmatmul.mubr.bf16.gmra.mxu0 %v10956
        %v11085 = vpop.f32.mrf.mxu0
        %v11086 = vadd.f32 0.0, %v11085
        %v11087 = vpop.f32.mrf.mxu0
        %v11088 = vpop.f32.mrf.mxu0
        %v11089 = vadd.f32 0.0, %v11088
        %v11090 = vpop.f32.mrf.mxu0
        %11091 = vmatprep.mubr.bf16.mxu0 0
        %11092 = vmatmul.mubr.bf16.gmra.mxu0 %v10959
        %v11093 = vpop.f32.mrf.mxu0
        %v11094 = vadd.f32 0.0, %v11093
        %v11095 = vpop.f32.mrf.mxu0
        %v11096 = vpop.f32.mrf.mxu0
        %v11097 = vadd.f32 0.0, %v11096
        %v11098 = vpop.f32.mrf.mxu0
        %11099 = vmatprep.mubr.bf16.mxu0 0
        %11100 = vmatmul.mubr.bf16.gmra.mxu0 %v10962
        %v11101 = vpop.f32.mrf.mxu0
        %v11102 = vadd.f32 0.0, %v11101
        %v11103 = vpop.f32.mrf.mxu0
        %v11104 = vpop.f32.mrf.mxu0
        %v11105 = vadd.f32 0.0, %v11104
        %v11106 = vpop.f32.mrf.mxu0
        %11107 = vmatprep.mubr.bf16.mxu0 0
        %11108 = vmatmul.mubr.bf16.gmra.mxu0 %v10965
        %v11109 = vpop.f32.mrf.mxu0
        %v11110 = vadd.f32 0.0, %v11109
        %v11111 = vpop.f32.mrf.mxu0
        %v11112 = vpop.f32.mrf.mxu0
        %v11113 = vadd.f32 0.0, %v11112
        %v11114 = vpop.f32.mrf.mxu0
        %11115 = vmatprep.mubr.bf16.mxu0 0
        %11116 = vmatmul.mubr.bf16.gmra.mxu0 %v10968
        %v11117 = vpop.f32.mrf.mxu0
        %v11118 = vadd.f32 0.0, %v11117
        %v11119 = vpop.f32.mrf.mxu0
        %v11120 = vpop.f32.mrf.mxu0
        %v11121 = vadd.f32 0.0, %v11120
        %v11122 = vpop.f32.mrf.mxu0
        %11123 = vmatprep.mubr.bf16.mxu0 0
        %11124 = vmatmul.mubr.bf16.gmra.mxu0 %v10971
        %v11125 = vpop.f32.mrf.mxu0
        %v11126 = vadd.f32 0.0, %v11125
        %v11127 = vpop.f32.mrf.mxu0
        %v11128 = vpop.f32.mrf.mxu0
        %v11129 = vadd.f32 0.0, %v11128
        %v11130 = vpop.f32.mrf.mxu0
        %11131 = vmatprep.mubr.bf16.mxu0 0
        %11132 = vmatmul.mubr.bf16.gmra.mxu0 %v10974
        %v11133 = vpop.f32.mrf.mxu0
        %v11134 = vadd.f32 0.0, %v11133
        %v11135 = vpop.f32.mrf.mxu0
        %v11136 = vpop.f32.mrf.mxu0
        %v11137 = vadd.f32 0.0, %v11136
        %v11138 = vpop.f32.mrf.mxu0
        %11139 = vdwg.mxu0
        %v11140 = vadd.f32 %v10403, %v11014
        %v11141 = vadd.f32 %v10404, %v11017
        %v11142 = vadd.f32 %v10405, %v11022
        %v11143 = vadd.f32 %v10406, %v11025
        %v11144 = vadd.f32 %v10407, %v11030
        %v11145 = vadd.f32 %v10408, %v11033
        %v11146 = vadd.f32 %v10409, %v11038
        %v11147 = vadd.f32 %v10410, %v11041
        %v11148 = vadd.f32 %v10411, %v11046
        %v11149 = vadd.f32 %v10412, %v11049
        %v11150 = vadd.f32 %v10413, %v11054
        %v11151 = vadd.f32 %v10414, %v11057
        %v11152 = vadd.f32 %v10415, %v11062
        %v11153 = vadd.f32 %v10416, %v11065
        %v11154 = vadd.f32 %v10417, %v11070
        %v11155 = vadd.f32 %v10418, %v11073
        %v11156 = vadd.f32 %v10419, %v11078
        %v11157 = vadd.f32 %v10420, %v11081
        %v11158 = vadd.f32 %v10421, %v11086
        %v11159 = vadd.f32 %v10422, %v11089
        %v11160 = vadd.f32 %v10423, %v11094
        %v11161 = vadd.f32 %v10424, %v11097
        %v11162 = vadd.f32 %v10425, %v11102
        %v11163 = vadd.f32 %v10426, %v11105
        %v11164 = vadd.f32 %v10427, %v11110
        %v11165 = vadd.f32 %v10428, %v11113
        %v11166 = vadd.f32 %v10429, %v11118
        %v11167 = vadd.f32 %v10430, %v11121
        %v11168 = vadd.f32 %v10431, %v11126
        %v11169 = vadd.f32 %v10432, %v11129
        %v11170 = vadd.f32 %v10433, %v11134
        %v11171 = vadd.f32 %v10434, %v11137
        %v11172 = vld [vmem:[%s10065] sm:$0xe]
        %v11173 = vld [vmem:[%s10065 + $0xc] sm:$0xe]
        %v11174 = vld [vmem:[%s10065 + $0x18] sm:$0xe]
        %v11175 = vld [vmem:[%s10065 + $0x24] sm:$0xe]
        %v11176 = vld [vmem:[%s10065 + $0x30] sm:$0xe]
        %v11177 = vld [vmem:[%s10065 + $0x3c] sm:$0xe]
        %v11178 = vld [vmem:[%s10065 + $0x48] sm:$0xe]
        %v11179 = vld [vmem:[%s10065 + $0x54] sm:$0xe]
        %v11180 = vld [vmem:[%s10065 + $0x60] sm:$0xe]
        %v11181 = vld [vmem:[%s10065 + $0x6c] sm:$0xe]
        %v11182 = vld [vmem:[%s10065 + $0x78] sm:$0xe]
        %v11183 = vld [vmem:[%s10065 + $0x84] sm:$0xe]
        %v11184 = vld [vmem:[%s10065 + $0x90] sm:$0xe]
        %v11185 = vld [vmem:[%s10065 + $0x9c] sm:$0xe]
        %v11186 = vld [vmem:[%s10065 + $0xa8] sm:$0xe]
        %v11187 = vld [vmem:[%s10065 + $0xb4] sm:$0xe]
        %v11236 = vrot.slane %v11172, 5
        %v11237 = vrot.slane %v11236, 4
        %v11238 = vrot.slane %v10436, 5
        %v11239 = vsel %vm1956, %v11237, %v11238
        %v11240 = vrot.slane %v11238, 4
        %v11241 = vrot.slane %v10437, 5
        %v11242 = vsel %vm1956, %v11240, %v11241
        %v11243 = vrot.slane %v11173, 5
        %v11244 = vrot.slane %v11243, 4
        %v11245 = vrot.slane %v10439, 5
        %v11246 = vsel %vm1956, %v11244, %v11245
        %v11247 = vrot.slane %v11245, 4
        %v11248 = vrot.slane %v10440, 5
        %v11249 = vsel %vm1956, %v11247, %v11248
        %v11250 = vrot.slane %v11174, 5
        %v11251 = vrot.slane %v11250, 4
        %v11252 = vrot.slane %v10442, 5
        %v11253 = vsel %vm1956, %v11251, %v11252
        %v11254 = vrot.slane %v11252, 4
        %v11255 = vrot.slane %v10443, 5
        %v11256 = vsel %vm1956, %v11254, %v11255
        %v11257 = vrot.slane %v11175, 5
        %v11258 = vrot.slane %v11257, 4
        %v11259 = vrot.slane %v10445, 5
        %v11260 = vsel %vm1956, %v11258, %v11259
        %v11261 = vrot.slane %v11259, 4
        %v11262 = vrot.slane %v10446, 5
        %v11263 = vsel %vm1956, %v11261, %v11262
        %v11264 = vrot.slane %v11176, 5
        %v11265 = vrot.slane %v11264, 4
        %v11266 = vrot.slane %v10448, 5
        %v11267 = vsel %vm1956, %v11265, %v11266
        %v11268 = vrot.slane %v11266, 4
        %v11269 = vrot.slane %v10449, 5
        %v11270 = vsel %vm1956, %v11268, %v11269
        %v11271 = vrot.slane %v11177, 5
        %v11272 = vrot.slane %v11271, 4
        %v11273 = vrot.slane %v10451, 5
        %v11274 = vsel %vm1956, %v11272, %v11273
        %v11275 = vrot.slane %v11273, 4
        %v11276 = vrot.slane %v10452, 5
        %v11277 = vsel %vm1956, %v11275, %v11276
        %v11278 = vrot.slane %v11178, 5
        %v11279 = vrot.slane %v11278, 4
        %v11280 = vrot.slane %v10454, 5
        %v11281 = vsel %vm1956, %v11279, %v11280
        %v11282 = vrot.slane %v11280, 4
        %v11283 = vrot.slane %v10455, 5
        %v11284 = vsel %vm1956, %v11282, %v11283
        %v11285 = vrot.slane %v11179, 5
        %v11286 = vrot.slane %v11285, 4
        %v11287 = vrot.slane %v10457, 5
        %v11288 = vsel %vm1956, %v11286, %v11287
        %v11289 = vrot.slane %v11287, 4
        %v11290 = vrot.slane %v10458, 5
        %v11291 = vsel %vm1956, %v11289, %v11290
        %v11292 = vrot.slane %v11180, 5
        %v11293 = vrot.slane %v11292, 4
        %v11294 = vrot.slane %v10460, 5
        %v11295 = vsel %vm1956, %v11293, %v11294
        %v11296 = vrot.slane %v11294, 4
        %v11297 = vrot.slane %v10461, 5
        %v11298 = vsel %vm1956, %v11296, %v11297
        %v11299 = vrot.slane %v11181, 5
        %v11300 = vrot.slane %v11299, 4
        %v11301 = vrot.slane %v10463, 5
        %v11302 = vsel %vm1956, %v11300, %v11301
        %v11303 = vrot.slane %v11301, 4
        %v11304 = vrot.slane %v10464, 5
        %v11305 = vsel %vm1956, %v11303, %v11304
        %v11306 = vrot.slane %v11182, 5
        %v11307 = vrot.slane %v11306, 4
        %v11308 = vrot.slane %v10466, 5
        %v11309 = vsel %vm1956, %v11307, %v11308
        %v11310 = vrot.slane %v11308, 4
        %v11311 = vrot.slane %v10467, 5
        %v11312 = vsel %vm1956, %v11310, %v11311
        %v11313 = vrot.slane %v11183, 5
        %v11314 = vrot.slane %v11313, 4
        %v11315 = vrot.slane %v10469, 5
        %v11316 = vsel %vm1956, %v11314, %v11315
        %v11317 = vrot.slane %v11315, 4
        %v11318 = vrot.slane %v10470, 5
        %v11319 = vsel %vm1956, %v11317, %v11318
        %v11320 = vrot.slane %v11184, 5
        %v11321 = vrot.slane %v11320, 4
        %v11322 = vrot.slane %v10472, 5
        %v11323 = vsel %vm1956, %v11321, %v11322
        %v11324 = vrot.slane %v11322, 4
        %v11325 = vrot.slane %v10473, 5
        %v11326 = vsel %vm1956, %v11324, %v11325
        %v11327 = vrot.slane %v11185, 5
        %v11328 = vrot.slane %v11327, 4
        %v11329 = vrot.slane %v10475, 5
        %v11330 = vsel %vm1956, %v11328, %v11329
        %v11331 = vrot.slane %v11329, 4
        %v11332 = vrot.slane %v10476, 5
        %v11333 = vsel %vm1956, %v11331, %v11332
        %v11334 = vrot.slane %v11186, 5
        %v11335 = vrot.slane %v11334, 4
        %v11336 = vrot.slane %v10478, 5
        %v11337 = vsel %vm1956, %v11335, %v11336
        %v11338 = vrot.slane %v11336, 4
        %v11339 = vrot.slane %v10479, 5
        %v11340 = vsel %vm1956, %v11338, %v11339
        %v11341 = vrot.slane %v11187, 5
        %v11342 = vrot.slane %v11341, 4
        %v11343 = vrot.slane %v10481, 5
        %v11344 = vsel %vm1956, %v11342, %v11343
        %v11345 = vrot.slane %v11343, 4
        %v11346 = vrot.slane %v10482, 5
        %v11347 = vsel %vm1956, %v11345, %v11346
        %s11348 = scalar_lea.vmem %s3, 96
        %v11349 = vld [vmem:[%s11348] sm:$0xf]
        %v11350 = vld [vmem:[%s11348 + $0x4] sm:$0xf]
        %v11351 = vld [vmem:[%s11348 + $0x8] sm:$0xf]
        %v11352 = vunpack.c.l.b16 %v11239
        %v11353 = vunpack.c.l.b16 %v11242
        %v11354 = vunpack.c.l.b16 %v11246
        %v11355 = vunpack.c.l.b16 %v11249
        %v11356 = vunpack.c.l.b16 %v11253
        %v11357 = vunpack.c.l.b16 %v11256
        %v11358 = vunpack.c.l.b16 %v11260
        %v11359 = vunpack.c.l.b16 %v11263
        %v11360 = vunpack.c.l.b16 %v11267
        %v11361 = vunpack.c.l.b16 %v11270
        %v11362 = vunpack.c.l.b16 %v11274
        %v11363 = vunpack.c.l.b16 %v11277
        %v11364 = vunpack.c.l.b16 %v11281
        %v11365 = vunpack.c.l.b16 %v11284
        %v11366 = vunpack.c.l.b16 %v11288
        %v11367 = vunpack.c.l.b16 %v11291
        %v11368 = vunpack.c.l.b16 %v11295
        %v11369 = vunpack.c.l.b16 %v11298
        %v11370 = vunpack.c.l.b16 %v11302
        %v11371 = vunpack.c.l.b16 %v11305
        %v11372 = vunpack.c.l.b16 %v11309
        %v11373 = vunpack.c.l.b16 %v11312
        %v11374 = vunpack.c.l.b16 %v11316
        %v11375 = vunpack.c.l.b16 %v11319
        %v11376 = vunpack.c.l.b16 %v11323
        %v11377 = vunpack.c.l.b16 %v11326
        %v11378 = vunpack.c.l.b16 %v11330
        %v11379 = vunpack.c.l.b16 %v11333
        %v11380 = vunpack.c.l.b16 %v11337
        %v11381 = vunpack.c.l.b16 %v11340
        %v11382 = vunpack.c.l.b16 %v11344
        %v11383 = vunpack.c.l.b16 %v11347
        %v11384 = vpack.c.b16 %v11353, %v11352
        %v11385 = vpack.c.b16 %v11355, %v11354
        %v11386 = vpack.c.b16 %v11357, %v11356
        %v11387 = vpack.c.b16 %v11359, %v11358
        %v11388 = vpack.c.b16 %v11361, %v11360
        %v11389 = vpack.c.b16 %v11363, %v11362
        %v11390 = vpack.c.b16 %v11365, %v11364
        %v11391 = vpack.c.b16 %v11367, %v11366
        %v11392 = vpack.c.b16 %v11369, %v11368
        %v11393 = vpack.c.b16 %v11371, %v11370
        %v11394 = vpack.c.b16 %v11373, %v11372
        %v11395 = vpack.c.b16 %v11375, %v11374
        %v11396 = vpack.c.b16 %v11377, %v11376
        %v11397 = vpack.c.b16 %v11379, %v11378
        %v11398 = vpack.c.b16 %v11381, %v11380
        %v11399 = vpack.c.b16 %v11383, %v11382
        %v11403 = vunpack.c.l.b16 %v11349
        %v11404 = vunpack.c.l.b16 %v11350
        %v11405 = vunpack.c.l.b16 %v11351
        %v11406 = vpack.c.b16 %v11404, %v11403
        %v11407 = vpack.c.b16 %v11405, %v11405
        %v11410 = vsel %vm5511, %v11384, 0
        %v11413 = vsel %vm5511, %v11385, 0
        %v11416 = vsel %vm5511, %v11386, 0
        %v11419 = vsel %vm5511, %v11387, 0
        %v11422 = vsel %vm5511, %v11388, 0
        %v11425 = vsel %vm5511, %v11389, 0
        %v11428 = vsel %vm5511, %v11390, 0
        %v11431 = vsel %vm5511, %v11391, 0
        %v11434 = vsel %vm5511, %v11392, 0
        %v11437 = vsel %vm5511, %v11393, 0
        %v11440 = vsel %vm5511, %v11394, 0
        %v11443 = vsel %vm5511, %v11395, 0
        %v11446 = vsel %vm5511, %v11396, 0
        %v11449 = vsel %vm5511, %v11397, 0
        %v11452 = vsel %vm5511, %v11398, 0
        %v11455 = vsel %vm5511, %v11399, 0
        %v11458 = vsel %vm7547, %v11407, 0
        %11460 = vmatprep.subr.bf16.mxu0 0
        %11461 = vmatpush1.bf16.msra.mxu0 0
        %11462 = vmatprep.subr.bf16.mxu0 0
        %11463 = vmatpush1.bf16.msra.mxu0 0
        %11464 = vmatprep.subr.bf16.mxu0 0
        %11465 = vmatpush1.bf16.msra.mxu0 0
        %11466 = vmatprep.subr.bf16.mxu0 0
        %11467 = vmatpush1.bf16.msra.mxu0 0
        %11468 = vmatprep.subr.bf16.mxu0 0
        %11469 = vmatpush1.bf16.msra.mxu0 0
        %11470 = vmatprep.subr.bf16.mxu0 0
        %11471 = vmatpush1.bf16.msra.mxu0 0
        %11472 = vmatprep.subr.bf16.mxu0 0
        %11473 = vmatpush1.bf16.msra.mxu0 %v11458
        %11474 = vmatprep.subr.bf16.mxu0 0
        %11475 = vmatpush1.bf16.msra.mxu0 %v11406
        %11476 = vmatprep.subr.bf16.mxu0 0
        %11477 = vmatpush2.bf16.msra.mxu0 0
        %11478 = vmatprep.subr.bf16.mxu0 0
        %11479 = vmatpush2.bf16.msra.mxu0 0
        %11480 = vmatprep.subr.bf16.mxu0 0
        %11481 = vmatpush2.bf16.msra.mxu0 0
        %11482 = vmatprep.subr.bf16.mxu0 0
        %11483 = vmatpush2.bf16.msra.mxu0 0
        %11484 = vmatprep.subr.bf16.mxu0 0
        %11485 = vmatpush2.bf16.msra.mxu0 0
        %11486 = vmatprep.subr.bf16.mxu0 0
        %11487 = vmatpush2.bf16.msra.mxu0 0
        %11488 = vmatprep.subr.bf16.mxu0 0
        %11489 = vmatpush2.bf16.msra.mxu0 0
        %11490 = vmatprep.subr.bf16.mxu0 0
        %11491 = vmatpush2.bf16.msra.mxu0 0
        %11492 = vmatprep.mubr.bf16.mxu0 0
        %11493 = vmatmul.mubr.bf16.gmra.mxu0 %v11410
        %v11494 = vpop.f32.mrf.mxu0
        %v11495 = vadd.f32 0.0, %v11494
        %v11496 = vpop.f32.mrf.mxu0
        %v11497 = vpop.f32.mrf.mxu0
        %v11498 = vadd.f32 0.0, %v11497
        %v11499 = vpop.f32.mrf.mxu0
        %11500 = vmatprep.mubr.bf16.mxu0 0
        %11501 = vmatmul.mubr.bf16.gmra.mxu0 %v11413
        %v11502 = vpop.f32.mrf.mxu0
        %v11503 = vadd.f32 0.0, %v11502
        %v11504 = vpop.f32.mrf.mxu0
        %v11505 = vpop.f32.mrf.mxu0
        %v11506 = vadd.f32 0.0, %v11505
        %v11507 = vpop.f32.mrf.mxu0
        %11508 = vmatprep.mubr.bf16.mxu0 0
        %11509 = vmatmul.mubr.bf16.gmra.mxu0 %v11416
        %v11510 = vpop.f32.mrf.mxu0
        %v11511 = vadd.f32 0.0, %v11510
        %v11512 = vpop.f32.mrf.mxu0
        %v11513 = vpop.f32.mrf.mxu0
        %v11514 = vadd.f32 0.0, %v11513
        %v11515 = vpop.f32.mrf.mxu0
        %11516 = vmatprep.mubr.bf16.mxu0 0
        %11517 = vmatmul.mubr.bf16.gmra.mxu0 %v11419
        %v11518 = vpop.f32.mrf.mxu0
        %v11519 = vadd.f32 0.0, %v11518
        %v11520 = vpop.f32.mrf.mxu0
        %v11521 = vpop.f32.mrf.mxu0
        %v11522 = vadd.f32 0.0, %v11521
        %v11523 = vpop.f32.mrf.mxu0
        %11524 = vmatprep.mubr.bf16.mxu0 0
        %11525 = vmatmul.mubr.bf16.gmra.mxu0 %v11422
        %v11526 = vpop.f32.mrf.mxu0
        %v11527 = vadd.f32 0.0, %v11526
        %v11528 = vpop.f32.mrf.mxu0
        %v11529 = vpop.f32.mrf.mxu0
        %v11530 = vadd.f32 0.0, %v11529
        %v11531 = vpop.f32.mrf.mxu0
        %11532 = vmatprep.mubr.bf16.mxu0 0
        %11533 = vmatmul.mubr.bf16.gmra.mxu0 %v11425
        %v11534 = vpop.f32.mrf.mxu0
        %v11535 = vadd.f32 0.0, %v11534
        %v11536 = vpop.f32.mrf.mxu0
        %v11537 = vpop.f32.mrf.mxu0
        %v11538 = vadd.f32 0.0, %v11537
        %v11539 = vpop.f32.mrf.mxu0
        %11540 = vmatprep.mubr.bf16.mxu0 0
        %11541 = vmatmul.mubr.bf16.gmra.mxu0 %v11428
        %v11542 = vpop.f32.mrf.mxu0
        %v11543 = vadd.f32 0.0, %v11542
        %v11544 = vpop.f32.mrf.mxu0
        %v11545 = vpop.f32.mrf.mxu0
        %v11546 = vadd.f32 0.0, %v11545
        %v11547 = vpop.f32.mrf.mxu0
        %11548 = vmatprep.mubr.bf16.mxu0 0
        %11549 = vmatmul.mubr.bf16.gmra.mxu0 %v11431
        %v11550 = vpop.f32.mrf.mxu0
        %v11551 = vadd.f32 0.0, %v11550
        %v11552 = vpop.f32.mrf.mxu0
        %v11553 = vpop.f32.mrf.mxu0
        %v11554 = vadd.f32 0.0, %v11553
        %v11555 = vpop.f32.mrf.mxu0
        %11556 = vmatprep.mubr.bf16.mxu0 0
        %11557 = vmatmul.mubr.bf16.gmra.mxu0 %v11434
        %v11558 = vpop.f32.mrf.mxu0
        %v11559 = vadd.f32 0.0, %v11558
        %v11560 = vpop.f32.mrf.mxu0
        %v11561 = vpop.f32.mrf.mxu0
        %v11562 = vadd.f32 0.0, %v11561
        %v11563 = vpop.f32.mrf.mxu0
        %11564 = vmatprep.mubr.bf16.mxu0 0
        %11565 = vmatmul.mubr.bf16.gmra.mxu0 %v11437
        %v11566 = vpop.f32.mrf.mxu0
        %v11567 = vadd.f32 0.0, %v11566
        %v11568 = vpop.f32.mrf.mxu0
        %v11569 = vpop.f32.mrf.mxu0
        %v11570 = vadd.f32 0.0, %v11569
        %v11571 = vpop.f32.mrf.mxu0
        %11572 = vmatprep.mubr.bf16.mxu0 0
        %11573 = vmatmul.mubr.bf16.gmra.mxu0 %v11440
        %v11574 = vpop.f32.mrf.mxu0
        %v11575 = vadd.f32 0.0, %v11574
        %v11576 = vpop.f32.mrf.mxu0
        %v11577 = vpop.f32.mrf.mxu0
        %v11578 = vadd.f32 0.0, %v11577
        %v11579 = vpop.f32.mrf.mxu0
        %11580 = vmatprep.mubr.bf16.mxu0 0
        %11581 = vmatmul.mubr.bf16.gmra.mxu0 %v11443
        %v11582 = vpop.f32.mrf.mxu0
        %v11583 = vadd.f32 0.0, %v11582
        %v11584 = vpop.f32.mrf.mxu0
        %v11585 = vpop.f32.mrf.mxu0
        %v11586 = vadd.f32 0.0, %v11585
        %v11587 = vpop.f32.mrf.mxu0
        %11588 = vmatprep.mubr.bf16.mxu0 0
        %11589 = vmatmul.mubr.bf16.gmra.mxu0 %v11446
        %v11590 = vpop.f32.mrf.mxu0
        %v11591 = vadd.f32 0.0, %v11590
        %v11592 = vpop.f32.mrf.mxu0
        %v11593 = vpop.f32.mrf.mxu0
        %v11594 = vadd.f32 0.0, %v11593
        %v11595 = vpop.f32.mrf.mxu0
        %11596 = vmatprep.mubr.bf16.mxu0 0
        %11597 = vmatmul.mubr.bf16.gmra.mxu0 %v11449
        %v11598 = vpop.f32.mrf.mxu0
        %v11599 = vadd.f32 0.0, %v11598
        %v11600 = vpop.f32.mrf.mxu0
        %v11601 = vpop.f32.mrf.mxu0
        %v11602 = vadd.f32 0.0, %v11601
        %v11603 = vpop.f32.mrf.mxu0
        %11604 = vmatprep.mubr.bf16.mxu0 0
        %11605 = vmatmul.mubr.bf16.gmra.mxu0 %v11452
        %v11606 = vpop.f32.mrf.mxu0
        %v11607 = vadd.f32 0.0, %v11606
        %v11608 = vpop.f32.mrf.mxu0
        %v11609 = vpop.f32.mrf.mxu0
        %v11610 = vadd.f32 0.0, %v11609
        %v11611 = vpop.f32.mrf.mxu0
        %11612 = vmatprep.mubr.bf16.mxu0 0
        %11613 = vmatmul.mubr.bf16.gmra.mxu0 %v11455
        %v11614 = vpop.f32.mrf.mxu0
        %v11615 = vadd.f32 0.0, %v11614
        %v11616 = vpop.f32.mrf.mxu0
        %v11617 = vpop.f32.mrf.mxu0
        %v11618 = vadd.f32 0.0, %v11617
        %v11619 = vpop.f32.mrf.mxu0
        %11620 = vdwg.mxu0
        %v11621 = vadd.f32 %v11140, %v11495
        %v11622 = vadd.f32 %v11141, %v11498
        %v11623 = vadd.f32 %v11142, %v11503
        %v11624 = vadd.f32 %v11143, %v11506
        %v11625 = vadd.f32 %v11144, %v11511
        %v11626 = vadd.f32 %v11145, %v11514
        %v11627 = vadd.f32 %v11146, %v11519
        %v11628 = vadd.f32 %v11147, %v11522
        %v11629 = vadd.f32 %v11148, %v11527
        %v11630 = vadd.f32 %v11149, %v11530
        %v11631 = vadd.f32 %v11150, %v11535
        %v11632 = vadd.f32 %v11151, %v11538
        %v11633 = vadd.f32 %v11152, %v11543
        %v11634 = vadd.f32 %v11153, %v11546
        %v11635 = vadd.f32 %v11154, %v11551
        %v11636 = vadd.f32 %v11155, %v11554
        %v11637 = vadd.f32 %v11156, %v11559
        %v11638 = vadd.f32 %v11157, %v11562
        %v11639 = vadd.f32 %v11158, %v11567
        %v11640 = vadd.f32 %v11159, %v11570
        %v11641 = vadd.f32 %v11160, %v11575
        %v11642 = vadd.f32 %v11161, %v11578
        %v11643 = vadd.f32 %v11162, %v11583
        %v11644 = vadd.f32 %v11163, %v11586
        %v11645 = vadd.f32 %v11164, %v11591
        %v11646 = vadd.f32 %v11165, %v11594
        %v11647 = vadd.f32 %v11166, %v11599
        %v11648 = vadd.f32 %v11167, %v11602
        %v11649 = vadd.f32 %v11168, %v11607
        %v11650 = vadd.f32 %v11169, %v11610
        %v11651 = vadd.f32 %v11170, %v11615
        %v11652 = vadd.f32 %v11171, %v11618
        %v11653 = vld [vmem:[%s4] sm:$0x1]
        %v11654 = vld [vmem:[%s4 + $0x1] sm:$0x1]
        %v11655 = vld [vmem:[%s4 + $0x2] sm:$0x1]
        %v11656 = vlaneseq
        %v11657 = vshrl.u32 %v11656, 7
        %v11658 = vsub.s32 0, %v11657
        %v11659 = vrot.slane %v11653, %v11658
        %v11660 = vadd.f32 %v11621, %v11659
        %v11661 = vadd.f32 %v11622, %v11659
        %v11662 = vadd.f32 %v11623, %v11659
        %v11663 = vadd.f32 %v11624, %v11659
        %v11664 = vadd.f32 %v11625, %v11659
        %v11665 = vadd.f32 %v11626, %v11659
        %v11666 = vadd.f32 %v11627, %v11659
        %v11667 = vadd.f32 %v11628, %v11659
        %v11668 = vadd.f32 %v11629, %v11659
        %v11669 = vadd.f32 %v11630, %v11659
        %v11670 = vadd.f32 %v11631, %v11659
        %v11671 = vadd.f32 %v11632, %v11659
        %v11672 = vadd.f32 %v11633, %v11659
        %v11673 = vadd.f32 %v11634, %v11659
        %v11674 = vadd.f32 %v11635, %v11659
        %v11675 = vadd.f32 %v11636, %v11659
        %v11676 = vadd.f32 %v11637, %v11659
        %v11677 = vadd.f32 %v11638, %v11659
        %v11678 = vadd.f32 %v11639, %v11659
        %v11679 = vadd.f32 %v11640, %v11659
        %v11680 = vadd.f32 %v11641, %v11659
        %v11681 = vadd.f32 %v11642, %v11659
        %v11682 = vadd.f32 %v11643, %v11659
        %v11683 = vadd.f32 %v11644, %v11659
        %v11684 = vadd.f32 %v11645, %v11659
        %v11685 = vadd.f32 %v11646, %v11659
        %v11686 = vadd.f32 %v11647, %v11659
        %v11687 = vadd.f32 %v11648, %v11659
        %v11688 = vadd.f32 %v11649, %v11659
        %v11689 = vadd.f32 %v11650, %v11659
        %v11690 = vadd.f32 %v11651, %v11659
        %v11691 = vadd.f32 %v11652, %v11659
        %vm11692 = vcmask 392192
        %v11693 = vsel %vm11692, %v11660, 0.0
        %11694 = vadd.xlane.f32.xlu0 %v11693
        %v11695 = vpop.xlane.xlu0 %11694
        %v11696 = vsel %vm11692, %v11661, 0.0
        %11697 = vadd.xlane.f32.xlu0 %v11696
        %v11698 = vpop.xlane.xlu0 %11697
        %v11699 = vsel %vm11692, %v11662, 0.0
        %11700 = vadd.xlane.f32.xlu0 %v11699
        %v11701 = vpop.xlane.xlu0 %11700
        %v11702 = vsel %vm11692, %v11663, 0.0
        %11703 = vadd.xlane.f32.xlu0 %v11702
        %v11704 = vpop.xlane.xlu0 %11703
        %v11705 = vsel %vm11692, %v11664, 0.0
        %11706 = vadd.xlane.f32.xlu0 %v11705
        %v11707 = vpop.xlane.xlu0 %11706
        %v11708 = vsel %vm11692, %v11665, 0.0
        %11709 = vadd.xlane.f32.xlu0 %v11708
        %v11710 = vpop.xlane.xlu0 %11709
        %v11711 = vsel %vm11692, %v11666, 0.0
        %11712 = vadd.xlane.f32.xlu0 %v11711
        %v11713 = vpop.xlane.xlu0 %11712
        %v11714 = vsel %vm11692, %v11667, 0.0
        %11715 = vadd.xlane.f32.xlu0 %v11714
        %v11716 = vpop.xlane.xlu0 %11715
        %v11717 = vsel %vm11692, %v11668, 0.0
        %11718 = vadd.xlane.f32.xlu0 %v11717
        %v11719 = vpop.xlane.xlu0 %11718
        %v11720 = vsel %vm11692, %v11669, 0.0
        %11721 = vadd.xlane.f32.xlu0 %v11720
        %v11722 = vpop.xlane.xlu0 %11721
        %v11723 = vsel %vm11692, %v11670, 0.0
        %11724 = vadd.xlane.f32.xlu0 %v11723
        %v11725 = vpop.xlane.xlu0 %11724
        %v11726 = vsel %vm11692, %v11671, 0.0
        %11727 = vadd.xlane.f32.xlu0 %v11726
        %v11728 = vpop.xlane.xlu0 %11727
        %v11729 = vsel %vm11692, %v11672, 0.0
        %11730 = vadd.xlane.f32.xlu0 %v11729
        %v11731 = vpop.xlane.xlu0 %11730
        %v11732 = vsel %vm11692, %v11673, 0.0
        %11733 = vadd.xlane.f32.xlu0 %v11732
        %v11734 = vpop.xlane.xlu0 %11733
        %v11735 = vsel %vm11692, %v11674, 0.0
        %11736 = vadd.xlane.f32.xlu0 %v11735
        %v11737 = vpop.xlane.xlu0 %11736
        %v11738 = vsel %vm11692, %v11675, 0.0
        %11739 = vadd.xlane.f32.xlu0 %v11738
        %v11740 = vpop.xlane.xlu0 %11739
        %v11741 = vsel %vm11692, %v11676, 0.0
        %11742 = vadd.xlane.f32.xlu0 %v11741
        %v11743 = vpop.xlane.xlu0 %11742
        %v11744 = vsel %vm11692, %v11677, 0.0
        %11745 = vadd.xlane.f32.xlu0 %v11744
        %v11746 = vpop.xlane.xlu0 %11745
        %v11747 = vsel %vm11692, %v11678, 0.0
        %11748 = vadd.xlane.f32.xlu0 %v11747
        %v11749 = vpop.xlane.xlu0 %11748
        %v11750 = vsel %vm11692, %v11679, 0.0
        %11751 = vadd.xlane.f32.xlu0 %v11750
        %v11752 = vpop.xlane.xlu0 %11751
        %v11753 = vsel %vm11692, %v11680, 0.0
        %11754 = vadd.xlane.f32.xlu0 %v11753
        %v11755 = vpop.xlane.xlu0 %11754
        %v11756 = vsel %vm11692, %v11681, 0.0
        %11757 = vadd.xlane.f32.xlu0 %v11756
        %v11758 = vpop.xlane.xlu0 %11757
        %v11759 = vsel %vm11692, %v11682, 0.0
        %11760 = vadd.xlane.f32.xlu0 %v11759
        %v11761 = vpop.xlane.xlu0 %11760
        %v11762 = vsel %vm11692, %v11683, 0.0
        %11763 = vadd.xlane.f32.xlu0 %v11762
        %v11764 = vpop.xlane.xlu0 %11763
        %v11765 = vsel %vm11692, %v11684, 0.0
        %11766 = vadd.xlane.f32.xlu0 %v11765
        %v11767 = vpop.xlane.xlu0 %11766
        %v11768 = vsel %vm11692, %v11685, 0.0
        %11769 = vadd.xlane.f32.xlu0 %v11768
        %v11770 = vpop.xlane.xlu0 %11769
        %v11771 = vsel %vm11692, %v11686, 0.0
        %11772 = vadd.xlane.f32.xlu0 %v11771
        %v11773 = vpop.xlane.xlu0 %11772
        %v11774 = vsel %vm11692, %v11687, 0.0
        %11775 = vadd.xlane.f32.xlu0 %v11774
        %v11776 = vpop.xlane.xlu0 %11775
        %v11777 = vsel %vm11692, %v11688, 0.0
        %11778 = vadd.xlane.f32.xlu0 %v11777
        %v11779 = vpop.xlane.xlu0 %11778
        %v11780 = vsel %vm11692, %v11689, 0.0
        %11781 = vadd.xlane.f32.xlu0 %v11780
        %v11782 = vpop.xlane.xlu0 %11781
        %v11783 = vsel %vm11692, %v11690, 0.0
        %11784 = vadd.xlane.f32.xlu0 %v11783
        %v11785 = vpop.xlane.xlu0 %11784
        %v11786 = vsel %vm11692, %v11691, 0.0
        %11787 = vadd.xlane.f32.xlu0 %v11786
        %v11788 = vpop.xlane.xlu0 %11787
        %v11789 = vmul.f32 %v11660, %v11660
        %v11790 = vmul.f32 %v11661, %v11661
        %v11791 = vmul.f32 %v11662, %v11662
        %v11792 = vmul.f32 %v11663, %v11663
        %v11793 = vmul.f32 %v11664, %v11664
        %v11794 = vmul.f32 %v11665, %v11665
        %v11795 = vmul.f32 %v11666, %v11666
        %v11796 = vmul.f32 %v11667, %v11667
        %v11797 = vmul.f32 %v11668, %v11668
        %v11798 = vmul.f32 %v11669, %v11669
        %v11799 = vmul.f32 %v11670, %v11670
        %v11800 = vmul.f32 %v11671, %v11671
        %v11801 = vmul.f32 %v11672, %v11672
        %v11802 = vmul.f32 %v11673, %v11673
        %v11803 = vmul.f32 %v11674, %v11674
        %v11804 = vmul.f32 %v11675, %v11675
        %v11805 = vmul.f32 %v11676, %v11676
        %v11806 = vmul.f32 %v11677, %v11677
        %v11807 = vmul.f32 %v11678, %v11678
        %v11808 = vmul.f32 %v11679, %v11679
        %v11809 = vmul.f32 %v11680, %v11680
        %v11810 = vmul.f32 %v11681, %v11681
        %v11811 = vmul.f32 %v11682, %v11682
        %v11812 = vmul.f32 %v11683, %v11683
        %v11813 = vmul.f32 %v11684, %v11684
        %v11814 = vmul.f32 %v11685, %v11685
        %v11815 = vmul.f32 %v11686, %v11686
        %v11816 = vmul.f32 %v11687, %v11687
        %v11817 = vmul.f32 %v11688, %v11688
        %v11818 = vmul.f32 %v11689, %v11689
        %v11819 = vmul.f32 %v11690, %v11690
        %v11820 = vmul.f32 %v11691, %v11691
        %v11821 = vsel %vm11692, %v11789, 0.0
        %11822 = vadd.xlane.f32.xlu0 %v11821
        %v11823 = vpop.xlane.xlu0 %11822
        %v11824 = vsel %vm11692, %v11790, 0.0
        %11825 = vadd.xlane.f32.xlu0 %v11824
        %v11826 = vpop.xlane.xlu0 %11825
        %v11827 = vsel %vm11692, %v11791, 0.0
        %11828 = vadd.xlane.f32.xlu0 %v11827
        %v11829 = vpop.xlane.xlu0 %11828
        %v11830 = vsel %vm11692, %v11792, 0.0
        %11831 = vadd.xlane.f32.xlu0 %v11830
        %v11832 = vpop.xlane.xlu0 %11831
        %v11833 = vsel %vm11692, %v11793, 0.0
        %11834 = vadd.xlane.f32.xlu0 %v11833
        %v11835 = vpop.xlane.xlu0 %11834
        %v11836 = vsel %vm11692, %v11794, 0.0
        %11837 = vadd.xlane.f32.xlu0 %v11836
        %v11838 = vpop.xlane.xlu0 %11837
        %v11839 = vsel %vm11692, %v11795, 0.0
        %11840 = vadd.xlane.f32.xlu0 %v11839
        %v11841 = vpop.xlane.xlu0 %11840
        %v11842 = vsel %vm11692, %v11796, 0.0
        %11843 = vadd.xlane.f32.xlu0 %v11842
        %v11844 = vpop.xlane.xlu0 %11843
        %v11845 = vsel %vm11692, %v11797, 0.0
        %11846 = vadd.xlane.f32.xlu0 %v11845
        %v11847 = vpop.xlane.xlu0 %11846
        %v11848 = vsel %vm11692, %v11798, 0.0
        %11849 = vadd.xlane.f32.xlu0 %v11848
        %v11850 = vpop.xlane.xlu0 %11849
        %v11851 = vsel %vm11692, %v11799, 0.0
        %11852 = vadd.xlane.f32.xlu0 %v11851
        %v11853 = vpop.xlane.xlu0 %11852
        %v11854 = vsel %vm11692, %v11800, 0.0
        %11855 = vadd.xlane.f32.xlu0 %v11854
        %v11856 = vpop.xlane.xlu0 %11855
        %v11857 = vsel %vm11692, %v11801, 0.0
        %11858 = vadd.xlane.f32.xlu0 %v11857
        %v11859 = vpop.xlane.xlu0 %11858
        %v11860 = vsel %vm11692, %v11802, 0.0
        %11861 = vadd.xlane.f32.xlu0 %v11860
        %v11862 = vpop.xlane.xlu0 %11861
        %v11863 = vsel %vm11692, %v11803, 0.0
        %11864 = vadd.xlane.f32.xlu0 %v11863
        %v11865 = vpop.xlane.xlu0 %11864
        %v11866 = vsel %vm11692, %v11804, 0.0
        %11867 = vadd.xlane.f32.xlu0 %v11866
        %v11868 = vpop.xlane.xlu0 %11867
        %v11869 = vsel %vm11692, %v11805, 0.0
        %11870 = vadd.xlane.f32.xlu0 %v11869
        %v11871 = vpop.xlane.xlu0 %11870
        %v11872 = vsel %vm11692, %v11806, 0.0
        %11873 = vadd.xlane.f32.xlu0 %v11872
        %v11874 = vpop.xlane.xlu0 %11873
        %v11875 = vsel %vm11692, %v11807, 0.0
        %11876 = vadd.xlane.f32.xlu0 %v11875
        %v11877 = vpop.xlane.xlu0 %11876
        %v11878 = vsel %vm11692, %v11808, 0.0
        %11879 = vadd.xlane.f32.xlu0 %v11878
        %v11880 = vpop.xlane.xlu0 %11879
        %v11881 = vsel %vm11692, %v11809, 0.0
        %11882 = vadd.xlane.f32.xlu0 %v11881
        %v11883 = vpop.xlane.xlu0 %11882
        %v11884 = vsel %vm11692, %v11810, 0.0
        %11885 = vadd.xlane.f32.xlu0 %v11884
        %v11886 = vpop.xlane.xlu0 %11885
        %v11887 = vsel %vm11692, %v11811, 0.0
        %11888 = vadd.xlane.f32.xlu0 %v11887
        %v11889 = vpop.xlane.xlu0 %11888
        %v11890 = vsel %vm11692, %v11812, 0.0
        %11891 = vadd.xlane.f32.xlu0 %v11890
        %v11892 = vpop.xlane.xlu0 %11891
        %v11893 = vsel %vm11692, %v11813, 0.0
        %11894 = vadd.xlane.f32.xlu0 %v11893
        %v11895 = vpop.xlane.xlu0 %11894
        %v11896 = vsel %vm11692, %v11814, 0.0
        %11897 = vadd.xlane.f32.xlu0 %v11896
        %v11898 = vpop.xlane.xlu0 %11897
        %v11899 = vsel %vm11692, %v11815, 0.0
        %11900 = vadd.xlane.f32.xlu0 %v11899
        %v11901 = vpop.xlane.xlu0 %11900
        %v11902 = vsel %vm11692, %v11816, 0.0
        %11903 = vadd.xlane.f32.xlu0 %v11902
        %v11904 = vpop.xlane.xlu0 %11903
        %v11905 = vsel %vm11692, %v11817, 0.0
        %11906 = vadd.xlane.f32.xlu0 %v11905
        %v11907 = vpop.xlane.xlu0 %11906
        %v11908 = vsel %vm11692, %v11818, 0.0
        %11909 = vadd.xlane.f32.xlu0 %v11908
        %v11910 = vpop.xlane.xlu0 %11909
        %v11911 = vsel %vm11692, %v11819, 0.0
        %11912 = vadd.xlane.f32.xlu0 %v11911
        %v11913 = vpop.xlane.xlu0 %11912
        %v11914 = vsel %vm11692, %v11820, 0.0
        %11915 = vadd.xlane.f32.xlu0 %v11914
        %v11916 = vpop.xlane.xlu0 %11915
        %v11917 = vmul.f32 %v11695, 0.020833334
        %v11918 = vmul.f32 %v11698, 0.020833334
        %v11919 = vmul.f32 %v11701, 0.020833334
        %v11920 = vmul.f32 %v11704, 0.020833334
        %v11921 = vmul.f32 %v11707, 0.020833334
        %v11922 = vmul.f32 %v11710, 0.020833334
        %v11923 = vmul.f32 %v11713, 0.020833334
        %v11924 = vmul.f32 %v11716, 0.020833334
        %v11925 = vmul.f32 %v11719, 0.020833334
        %v11926 = vmul.f32 %v11722, 0.020833334
        %v11927 = vmul.f32 %v11725, 0.020833334
        %v11928 = vmul.f32 %v11728, 0.020833334
        %v11929 = vmul.f32 %v11731, 0.020833334
        %v11930 = vmul.f32 %v11734, 0.020833334
        %v11931 = vmul.f32 %v11737, 0.020833334
        %v11932 = vmul.f32 %v11740, 0.020833334
        %v11933 = vmul.f32 %v11743, 0.020833334
        %v11934 = vmul.f32 %v11746, 0.020833334
        %v11935 = vmul.f32 %v11749, 0.020833334
        %v11936 = vmul.f32 %v11752, 0.020833334
        %v11937 = vmul.f32 %v11755, 0.020833334
        %v11938 = vmul.f32 %v11758, 0.020833334
        %v11939 = vmul.f32 %v11761, 0.020833334
        %v11940 = vmul.f32 %v11764, 0.020833334
        %v11941 = vmul.f32 %v11767, 0.020833334
        %v11942 = vmul.f32 %v11770, 0.020833334
        %v11943 = vmul.f32 %v11773, 0.020833334
        %v11944 = vmul.f32 %v11776, 0.020833334
        %v11945 = vmul.f32 %v11779, 0.020833334
        %v11946 = vmul.f32 %v11782, 0.020833334
        %v11947 = vmul.f32 %v11785, 0.020833334
        %v11948 = vmul.f32 %v11788, 0.020833334
        %v11949 = vmul.f32 %v11823, 0.020833334
        %v11950 = vmul.f32 %v11826, 0.020833334
        %v11951 = vmul.f32 %v11829, 0.020833334
        %v11952 = vmul.f32 %v11832, 0.020833334
        %v11953 = vmul.f32 %v11835, 0.020833334
        %v11954 = vmul.f32 %v11838, 0.020833334
        %v11955 = vmul.f32 %v11841, 0.020833334
        %v11956 = vmul.f32 %v11844, 0.020833334
        %v11957 = vmul.f32 %v11847, 0.020833334
        %v11958 = vmul.f32 %v11850, 0.020833334
        %v11959 = vmul.f32 %v11853, 0.020833334
        %v11960 = vmul.f32 %v11856, 0.020833334
        %v11961 = vmul.f32 %v11859, 0.020833334
        %v11962 = vmul.f32 %v11862, 0.020833334
        %v11963 = vmul.f32 %v11865, 0.020833334
        %v11964 = vmul.f32 %v11868, 0.020833334
        %v11965 = vmul.f32 %v11871, 0.020833334
        %v11966 = vmul.f32 %v11874, 0.020833334
        %v11967 = vmul.f32 %v11877, 0.020833334
        %v11968 = vmul.f32 %v11880, 0.020833334
        %v11969 = vmul.f32 %v11883, 0.020833334
        %v11970 = vmul.f32 %v11886, 0.020833334
        %v11971 = vmul.f32 %v11889, 0.020833334
        %v11972 = vmul.f32 %v11892, 0.020833334
        %v11973 = vmul.f32 %v11895, 0.020833334
        %v11974 = vmul.f32 %v11898, 0.020833334
        %v11975 = vmul.f32 %v11901, 0.020833334
        %v11976 = vmul.f32 %v11904, 0.020833334
        %v11977 = vmul.f32 %v11907, 0.020833334
        %v11978 = vmul.f32 %v11910, 0.020833334
        %v11979 = vmul.f32 %v11913, 0.020833334
        %v11980 = vmul.f32 %v11916, 0.020833334
        %v11981 = vmul.f32 %v11917, %v11917
        %v11982 = vmul.f32 %v11918, %v11918
        %v11983 = vmul.f32 %v11919, %v11919
        %v11984 = vmul.f32 %v11920, %v11920
        %v11985 = vmul.f32 %v11921, %v11921
        %v11986 = vmul.f32 %v11922, %v11922
        %v11987 = vmul.f32 %v11923, %v11923
        %v11988 = vmul.f32 %v11924, %v11924
        %v11989 = vmul.f32 %v11925, %v11925
        %v11990 = vmul.f32 %v11926, %v11926
        %v11991 = vmul.f32 %v11927, %v11927
        %v11992 = vmul.f32 %v11928, %v11928
        %v11993 = vmul.f32 %v11929, %v11929
        %v11994 = vmul.f32 %v11930, %v11930
        %v11995 = vmul.f32 %v11931, %v11931
        %v11996 = vmul.f32 %v11932, %v11932
        %v11997 = vmul.f32 %v11933, %v11933
        %v11998 = vmul.f32 %v11934, %v11934
        %v11999 = vmul.f32 %v11935, %v11935
        %v12000 = vmul.f32 %v11936, %v11936
        %v12001 = vmul.f32 %v11937, %v11937
        %v12002 = vmul.f32 %v11938, %v11938
        %v12003 = vmul.f32 %v11939, %v11939
        %v12004 = vmul.f32 %v11940, %v11940
        %v12005 = vmul.f32 %v11941, %v11941
        %v12006 = vmul.f32 %v11942, %v11942
        %v12007 = vmul.f32 %v11943, %v11943
        %v12008 = vmul.f32 %v11944, %v11944
        %v12009 = vmul.f32 %v11945, %v11945
        %v12010 = vmul.f32 %v11946, %v11946
        %v12011 = vmul.f32 %v11947, %v11947
        %v12012 = vmul.f32 %v11948, %v11948
        %v12013 = vsub.f32 %v11949, %v11981
        %v12014 = vsub.f32 %v11950, %v11982
        %v12015 = vsub.f32 %v11951, %v11983
        %v12016 = vsub.f32 %v11952, %v11984
        %v12017 = vsub.f32 %v11953, %v11985
        %v12018 = vsub.f32 %v11954, %v11986
        %v12019 = vsub.f32 %v11955, %v11987
        %v12020 = vsub.f32 %v11956, %v11988
        %v12021 = vsub.f32 %v11957, %v11989
        %v12022 = vsub.f32 %v11958, %v11990
        %v12023 = vsub.f32 %v11959, %v11991
        %v12024 = vsub.f32 %v11960, %v11992
        %v12025 = vsub.f32 %v11961, %v11993
        %v12026 = vsub.f32 %v11962, %v11994
        %v12027 = vsub.f32 %v11963, %v11995
        %v12028 = vsub.f32 %v11964, %v11996
        %v12029 = vsub.f32 %v11965, %v11997
        %v12030 = vsub.f32 %v11966, %v11998
        %v12031 = vsub.f32 %v11967, %v11999
        %v12032 = vsub.f32 %v11968, %v12000
        %v12033 = vsub.f32 %v11969, %v12001
        %v12034 = vsub.f32 %v11970, %v12002
        %v12035 = vsub.f32 %v11971, %v12003
        %v12036 = vsub.f32 %v11972, %v12004
        %v12037 = vsub.f32 %v11973, %v12005
        %v12038 = vsub.f32 %v11974, %v12006
        %v12039 = vsub.f32 %v11975, %v12007
        %v12040 = vsub.f32 %v11976, %v12008
        %v12041 = vsub.f32 %v11977, %v12009
        %v12042 = vsub.f32 %v11978, %v12010
        %v12043 = vsub.f32 %v11979, %v12011
        %v12044 = vsub.f32 %v11980, %v12012
        %v12045 = vsub.f32 %v11660, %v11917
        %v12046 = vsub.f32 %v11661, %v11918
        %v12047 = vsub.f32 %v11662, %v11919
        %v12048 = vsub.f32 %v11663, %v11920
        %v12049 = vsub.f32 %v11664, %v11921
        %v12050 = vsub.f32 %v11665, %v11922
        %v12051 = vsub.f32 %v11666, %v11923
        %v12052 = vsub.f32 %v11667, %v11924
        %v12053 = vsub.f32 %v11668, %v11925
        %v12054 = vsub.f32 %v11669, %v11926
        %v12055 = vsub.f32 %v11670, %v11927
        %v12056 = vsub.f32 %v11671, %v11928
        %v12057 = vsub.f32 %v11672, %v11929
        %v12058 = vsub.f32 %v11673, %v11930
        %v12059 = vsub.f32 %v11674, %v11931
        %v12060 = vsub.f32 %v11675, %v11932
        %v12061 = vsub.f32 %v11676, %v11933
        %v12062 = vsub.f32 %v11677, %v11934
        %v12063 = vsub.f32 %v11678, %v11935
        %v12064 = vsub.f32 %v11679, %v11936
        %v12065 = vsub.f32 %v11680, %v11937
        %v12066 = vsub.f32 %v11681, %v11938
        %v12067 = vsub.f32 %v11682, %v11939
        %v12068 = vsub.f32 %v11683, %v11940
        %v12069 = vsub.f32 %v11684, %v11941
        %v12070 = vsub.f32 %v11685, %v11942
        %v12071 = vsub.f32 %v11686, %v11943
        %v12072 = vsub.f32 %v11687, %v11944
        %v12073 = vsub.f32 %v11688, %v11945
        %v12074 = vsub.f32 %v11689, %v11946
        %v12075 = vsub.f32 %v11690, %v11947
        %v12076 = vsub.f32 %v11691, %v11948
        %v12077 = vadd.f32 %v12013, 1e-06
        %v12078 = vadd.f32 %v12014, 1e-06
        %v12079 = vadd.f32 %v12015, 1e-06
        %v12080 = vadd.f32 %v12016, 1e-06
        %v12081 = vadd.f32 %v12017, 1e-06
        %v12082 = vadd.f32 %v12018, 1e-06
        %v12083 = vadd.f32 %v12019, 1e-06
        %v12084 = vadd.f32 %v12020, 1e-06
        %v12085 = vadd.f32 %v12021, 1e-06
        %v12086 = vadd.f32 %v12022, 1e-06
        %v12087 = vadd.f32 %v12023, 1e-06
        %v12088 = vadd.f32 %v12024, 1e-06
        %v12089 = vadd.f32 %v12025, 1e-06
        %v12090 = vadd.f32 %v12026, 1e-06
        %v12091 = vadd.f32 %v12027, 1e-06
        %v12092 = vadd.f32 %v12028, 1e-06
        %v12093 = vadd.f32 %v12029, 1e-06
        %v12094 = vadd.f32 %v12030, 1e-06
        %v12095 = vadd.f32 %v12031, 1e-06
        %v12096 = vadd.f32 %v12032, 1e-06
        %v12097 = vadd.f32 %v12033, 1e-06
        %v12098 = vadd.f32 %v12034, 1e-06
        %v12099 = vadd.f32 %v12035, 1e-06
        %v12100 = vadd.f32 %v12036, 1e-06
        %v12101 = vadd.f32 %v12037, 1e-06
        %v12102 = vadd.f32 %v12038, 1e-06
        %v12103 = vadd.f32 %v12039, 1e-06
        %v12104 = vadd.f32 %v12040, 1e-06
        %v12105 = vadd.f32 %v12041, 1e-06
        %v12106 = vadd.f32 %v12042, 1e-06
        %v12107 = vadd.f32 %v12043, 1e-06
        %v12108 = vadd.f32 %v12044, 1e-06
        %v12109 = vrsqrt.pop %v12077
        %v12110 = vrsqrt.pop %v12078
        %v12111 = vrsqrt.pop %v12079
        %v12112 = vrsqrt.pop %v12080
        %v12113 = vrsqrt.pop %v12081
        %v12114 = vrsqrt.pop %v12082
        %v12115 = vrsqrt.pop %v12083
        %v12116 = vrsqrt.pop %v12084
        %v12117 = vrsqrt.pop %v12085
        %v12118 = vrsqrt.pop %v12086
        %v12119 = vrsqrt.pop %v12087
        %v12120 = vrsqrt.pop %v12088
        %v12121 = vrsqrt.pop %v12089
        %v12122 = vrsqrt.pop %v12090
        %v12123 = vrsqrt.pop %v12091
        %v12124 = vrsqrt.pop %v12092
        %v12125 = vrsqrt.pop %v12093
        %v12126 = vrsqrt.pop %v12094
        %v12127 = vrsqrt.pop %v12095
        %v12128 = vrsqrt.pop %v12096
        %v12129 = vrsqrt.pop %v12097
        %v12130 = vrsqrt.pop %v12098
        %v12131 = vrsqrt.pop %v12099
        %v12132 = vrsqrt.pop %v12100
        %v12133 = vrsqrt.pop %v12101
        %v12134 = vrsqrt.pop %v12102
        %v12135 = vrsqrt.pop %v12103
        %v12136 = vrsqrt.pop %v12104
        %v12137 = vrsqrt.pop %v12105
        %v12138 = vrsqrt.pop %v12106
        %v12139 = vrsqrt.pop %v12107
        %v12140 = vrsqrt.pop %v12108
        %v12141 = vmul.f32 %v12045, %v12109
        %v12142 = vmul.f32 %v12046, %v12110
        %v12143 = vmul.f32 %v12047, %v12111
        %v12144 = vmul.f32 %v12048, %v12112
        %v12145 = vmul.f32 %v12049, %v12113
        %v12146 = vmul.f32 %v12050, %v12114
        %v12147 = vmul.f32 %v12051, %v12115
        %v12148 = vmul.f32 %v12052, %v12116
        %v12149 = vmul.f32 %v12053, %v12117
        %v12150 = vmul.f32 %v12054, %v12118
        %v12151 = vmul.f32 %v12055, %v12119
        %v12152 = vmul.f32 %v12056, %v12120
        %v12153 = vmul.f32 %v12057, %v12121
        %v12154 = vmul.f32 %v12058, %v12122
        %v12155 = vmul.f32 %v12059, %v12123
        %v12156 = vmul.f32 %v12060, %v12124
        %v12157 = vmul.f32 %v12061, %v12125
        %v12158 = vmul.f32 %v12062, %v12126
        %v12159 = vmul.f32 %v12063, %v12127
        %v12160 = vmul.f32 %v12064, %v12128
        %v12161 = vmul.f32 %v12065, %v12129
        %v12162 = vmul.f32 %v12066, %v12130
        %v12163 = vmul.f32 %v12067, %v12131
        %v12164 = vmul.f32 %v12068, %v12132
        %v12165 = vmul.f32 %v12069, %v12133
        %v12166 = vmul.f32 %v12070, %v12134
        %v12167 = vmul.f32 %v12071, %v12135
        %v12168 = vmul.f32 %v12072, %v12136
        %v12169 = vmul.f32 %v12073, %v12137
        %v12170 = vmul.f32 %v12074, %v12138
        %v12171 = vmul.f32 %v12075, %v12139
        %v12172 = vmul.f32 %v12076, %v12140
        %v12173 = vlaneseq
        %v12174 = vshrl.u32 %v12173, 7
        %v12175 = vsub.s32 0, %v12174
        %v12176 = vrot.slane %v11654, %v12175
        %v12177 = vmul.f32 %v12141, %v12176
        %v12178 = vmul.f32 %v12142, %v12176
        %v12179 = vmul.f32 %v12143, %v12176
        %v12180 = vmul.f32 %v12144, %v12176
        %v12181 = vmul.f32 %v12145, %v12176
        %v12182 = vmul.f32 %v12146, %v12176
        %v12183 = vmul.f32 %v12147, %v12176
        %v12184 = vmul.f32 %v12148, %v12176
        %v12185 = vmul.f32 %v12149, %v12176
        %v12186 = vmul.f32 %v12150, %v12176
        %v12187 = vmul.f32 %v12151, %v12176
        %v12188 = vmul.f32 %v12152, %v12176
        %v12189 = vmul.f32 %v12153, %v12176
        %v12190 = vmul.f32 %v12154, %v12176
        %v12191 = vmul.f32 %v12155, %v12176
        %v12192 = vmul.f32 %v12156, %v12176
        %v12193 = vmul.f32 %v12157, %v12176
        %v12194 = vmul.f32 %v12158, %v12176
        %v12195 = vmul.f32 %v12159, %v12176
        %v12196 = vmul.f32 %v12160, %v12176
        %v12197 = vmul.f32 %v12161, %v12176
        %v12198 = vmul.f32 %v12162, %v12176
        %v12199 = vmul.f32 %v12163, %v12176
        %v12200 = vmul.f32 %v12164, %v12176
        %v12201 = vmul.f32 %v12165, %v12176
        %v12202 = vmul.f32 %v12166, %v12176
        %v12203 = vmul.f32 %v12167, %v12176
        %v12204 = vmul.f32 %v12168, %v12176
        %v12205 = vmul.f32 %v12169, %v12176
        %v12206 = vmul.f32 %v12170, %v12176
        %v12207 = vmul.f32 %v12171, %v12176
        %v12208 = vmul.f32 %v12172, %v12176
        %v12209 = vlaneseq
        %v12210 = vshrl.u32 %v12209, 7
        %v12211 = vsub.s32 0, %v12210
        %v12212 = vrot.slane %v11655, %v12211
        %v12213 = vadd.f32 %v12177, %v12212
        %v12214 = vadd.f32 %v12178, %v12212
        %v12215 = vadd.f32 %v12179, %v12212
        %v12216 = vadd.f32 %v12180, %v12212
        %v12217 = vadd.f32 %v12181, %v12212
        %v12218 = vadd.f32 %v12182, %v12212
        %v12219 = vadd.f32 %v12183, %v12212
        %v12220 = vadd.f32 %v12184, %v12212
        %v12221 = vadd.f32 %v12185, %v12212
        %v12222 = vadd.f32 %v12186, %v12212
        %v12223 = vadd.f32 %v12187, %v12212
        %v12224 = vadd.f32 %v12188, %v12212
        %v12225 = vadd.f32 %v12189, %v12212
        %v12226 = vadd.f32 %v12190, %v12212
        %v12227 = vadd.f32 %v12191, %v12212
        %v12228 = vadd.f32 %v12192, %v12212
        %v12229 = vadd.f32 %v12193, %v12212
        %v12230 = vadd.f32 %v12194, %v12212
        %v12231 = vadd.f32 %v12195, %v12212
        %v12232 = vadd.f32 %v12196, %v12212
        %v12233 = vadd.f32 %v12197, %v12212
        %v12234 = vadd.f32 %v12198, %v12212
        %v12235 = vadd.f32 %v12199, %v12212
        %v12236 = vadd.f32 %v12200, %v12212
        %v12237 = vadd.f32 %v12201, %v12212
        %v12238 = vadd.f32 %v12202, %v12212
        %v12239 = vadd.f32 %v12203, %v12212
        %v12240 = vadd.f32 %v12204, %v12212
        %v12241 = vadd.f32 %v12205, %v12212
        %v12242 = vadd.f32 %v12206, %v12212
        %v12243 = vadd.f32 %v12207, %v12212
        %v12244 = vadd.f32 %v12208, %v12212
        %12245 = vst.msk [vmem:[%s217] sm:$0xff] %vm11692, %v12213
        %12246 = vst.msk [vmem:[%s217 + $0x8] sm:$0xff] %vm11692, %v12214
        %12247 = vst.msk [vmem:[%s217 + $0x10] sm:$0xff] %vm11692, %v12215
        %12248 = vst.msk [vmem:[%s217 + $0x18] sm:$0xff] %vm11692, %v12216
        %12249 = vst.msk [vmem:[%s217 + $0x20] sm:$0xff] %vm11692, %v12217
        %12250 = vst.msk [vmem:[%s217 + $0x28] sm:$0xff] %vm11692, %v12218
        %12251 = vst.msk [vmem:[%s217 + $0x30] sm:$0xff] %vm11692, %v12219
        %12252 = vst.msk [vmem:[%s217 + $0x38] sm:$0xff] %vm11692, %v12220
        %12253 = vst.msk [vmem:[%s217 + $0x40] sm:$0xff] %vm11692, %v12221
        %12254 = vst.msk [vmem:[%s217 + $0x48] sm:$0xff] %vm11692, %v12222
        %12255 = vst.msk [vmem:[%s217 + $0x50] sm:$0xff] %vm11692, %v12223
        %12256 = vst.msk [vmem:[%s217 + $0x58] sm:$0xff] %vm11692, %v12224
        %12257 = vst.msk [vmem:[%s217 + $0x60] sm:$0xff] %vm11692, %v12225
        %12258 = vst.msk [vmem:[%s217 + $0x68] sm:$0xff] %vm11692, %v12226
        %12259 = vst.msk [vmem:[%s217 + $0x70] sm:$0xff] %vm11692, %v12227
        %12260 = vst.msk [vmem:[%s217 + $0x78] sm:$0xff] %vm11692, %v12228
        %12261 = vst.msk [vmem:[%s217 + $0x80] sm:$0xff] %vm11692, %v12229
        %12262 = vst.msk [vmem:[%s217 + $0x88] sm:$0xff] %vm11692, %v12230
        %12263 = vst.msk [vmem:[%s217 + $0x90] sm:$0xff] %vm11692, %v12231
        %12264 = vst.msk [vmem:[%s217 + $0x98] sm:$0xff] %vm11692, %v12232
        %12265 = vst.msk [vmem:[%s217 + $0xa0] sm:$0xff] %vm11692, %v12233
        %12266 = vst.msk [vmem:[%s217 + $0xa8] sm:$0xff] %vm11692, %v12234
        %12267 = vst.msk [vmem:[%s217 + $0xb0] sm:$0xff] %vm11692, %v12235
        %12268 = vst.msk [vmem:[%s217 + $0xb8] sm:$0xff] %vm11692, %v12236
        %12269 = vst.msk [vmem:[%s217 + $0xc0] sm:$0xff] %vm11692, %v12237
        %12270 = vst.msk [vmem:[%s217 + $0xc8] sm:$0xff] %vm11692, %v12238
        %12271 = vst.msk [vmem:[%s217 + $0xd0] sm:$0xff] %vm11692, %v12239
        %12272 = vst.msk [vmem:[%s217 + $0xd8] sm:$0xff] %vm11692, %v12240
        %12273 = vst.msk [vmem:[%s217 + $0xe0] sm:$0xff] %vm11692, %v12241
        %12274 = vst.msk [vmem:[%s217 + $0xe8] sm:$0xff] %vm11692, %v12242
        %12275 = vst.msk [vmem:[%s217 + $0xf0] sm:$0xff] %vm11692, %v12243
        %12276 = vst.msk [vmem:[%s217 + $0xf8] sm:$0xff] %vm11692, %v12244
        %s12277 = sand.u32 %s137, 1
        %s12278 = scalar_lea.sflag [#allocation5], %s12277
        %s12279 = sand.u32 %s137, 1
        %s12280 = smul.addr %s12279, 256
        %s12281 = scalar_lea.vmem [#allocation4], %s12280
        // Predicated region
        $region41: #{stem_layer.1} parent=39 // pred_check
          %p12282 = pneg %p147
        $region42: #{stem_layer.1} parent=39 // pred_check_branch
          %12284 = sbr.rel (%p12282) target = $region44
        $region43: #{stem_layer.1} parent=39 // pred_region
          %s12286 = ssub.s32 4096, 4096
          %12287 = vsyncadd %s12278, %s12286
          %s12288 = smul.addr %s19, 32
          %s12289 = smul.addr %s12288, 128
          %s12290 = scalar_lea.hbm %s5, %s12289
          %s12291 = sshll.u32 %s12281, 4
          %s12292 = int_to_ptr.vmem [resolvable:$true] %s12291
          %12297 = dma.vmem_to_hbm [thread:$0]  %s12292, 4096, %s12290, %s12278, 128, 128, 8
        $region44: #{stem_layer.1} parent=39 // pred_fallthru
          _
      $region40: #{stem_layer.1} parent=5 // pred_fallthru
        _
      %p12298 = scmp.le.s32.totalorder 2, %s14
      // Predicated region
      $region45: #{stem_layer.1} parent=5 // pred_check
        %p12299 = pneg %p12298
      $region46: #{stem_layer.1} parent=5 // pred_check_branch
        %12301 = sbr.rel (%p12299) target = $region48
      $region47: #{stem_layer.1} parent=5 // pred_region
        %s12302 = ssub.s32 %s14, 2
        // Predicated region
        $region49: #{stem_layer.1} parent=47 // pred_check
          %p12303 = pneg %p153
        $region50: #{stem_layer.1} parent=47 // pred_check_branch
          %12305 = sbr.rel (%p12303) target = $region52
        $region51: #{stem_layer.1} parent=47 // pred_region
          %s12306 = sand.u32 %s138, 1
          %s12307 = scalar_lea.sflag [#allocation5], %s12306
          %s12308 = sand.u32 %s138, 1
          %s12309 = smul.addr %s12308, 256
          %s12310 = scalar_lea.vmem [#allocation4], %s12309
          %12311 = dma.done %s12307, 4096
        $region52: #{stem_layer.1} parent=47 // pred_fallthru
          _
      $region48: #{stem_layer.1} parent=5 // pred_fallthru
        _
    $region6: #{stem_layer.1} parent=1 // loop_footer
      %s18 = sadd.s32 1, %s14
    $region7: #{stem_layer.1} parent=1 // loop_footer_branch
      %13 = sbr.rel target = $region3
    $region8: #{stem_layer.1} parent=1 // loop_exit
      _
    %12312 = vsyncpa [#allocation5], 1
    %s12313 = scalar_lea.sflag [#allocation5], 1
    %12314 = vsyncpa %s12313, 1

</llo_original>
